<compile_context>
chip_gen: v7x
topology: tpu7x:2x2x1
jax: 0.10.0
libtpu: 0.0.40
codegen_flags: <defaults>
</compile_context>

<pallas_src>
import functools
import math

import numpy as np
import jax
import jax.numpy as jnp
from jax import lax
from jax.experimental import pallas as pl
from jax.experimental.pallas import tpu as pltpu

BN_EPS = 1e-5


def _round_up(x, m):
    return (x + m - 1) // m * m


# -----------------------------------------------------------------------------
# Kernel 1: conv (Farkas mean-channel folded into the weights) + bias +
#           nonlinearity + per-tile centered BN statistics.
#           One grid step == one image.  Everything lane-dense.
# -----------------------------------------------------------------------------
def _farkas_conv_kernel(x_ref, w_ref, b_ref, mask_ref,
                        y_ref, mu_ref, m2_ref, *,
                        kh, kw, wp, wa, n_valid, nonlinear, f32_dot):
    """
    x_ref   : (Cin, WX)          mxu_dtype  flattened padded image + zero tail
    w_ref   : (kh*kw, Cout, Cin) mxu_dtype  per-tap weights (Farkas row folded)
    b_ref   : (Cout, 1)          f32        Farkas-adjusted bias
    mask_ref: (1, WA)            f32        1.0 on valid output columns else 0.0
    y_ref   : (Cout, WA)         f32        pre-BN activation on the padded grid
    mu_ref  : (Cout, 1)          f32        per-image per-channel mean (valid)
    m2_ref  : (Cout, 1)          f32        per-image sum of squared deviations
    """
    cout = y_ref.shape[0]
    dot_kwargs = dict(preferred_element_type=jnp.float32)
    if f32_dot:
        dot_kwargs['precision'] = lax.Precision.HIGHEST

    # Conv as kh*kw accumulated small MXU dots -- no im2col scratch, canonical
    # (Cout,Cin) x (Cin, WA) orientation, spatial (WA, multiple of 128) on the
    # lane axis.  Each tap is a static lane-offset window of the same row.
    acc = jnp.zeros((cout, wa), jnp.float32)
    for dy in range(kh):
        for dx in range(kw):
            t = dy * kw + dx
            s = dy * wp + dx                       # static lane offset of tap
            acc = acc + jnp.dot(w_ref[t], x_ref[:, s:s + wa], **dot_kwargs)

    # Farkas-adjusted bias (per-channel column), broadcast along lanes.
    y = acc + b_ref[...]

    # nonlinearity (module default: ReLU)
    if nonlinear == 'leaky_relu':
        y = jnp.where(y >= 0.0, y, 0.01 * y)
    elif nonlinear == 'elu':
        y = jnp.where(y > 0.0, y, jnp.exp(jnp.minimum(y, 0.0)) - 1.0)
    elif nonlinear == 'selu':
        alpha, scale = 1.6732632423543772, 1.0507009873554805
        y = scale * jnp.where(y > 0.0, y,
                              alpha * (jnp.exp(jnp.minimum(y, 0.0)) - 1.0))
    elif nonlinear:
        y = jnp.maximum(y, 0.0)

    y_ref[...] = y                                 # lane-dense, unmasked store

    # Per-tile centered BN statistics over the valid output columns only.
    mask = mask_ref[...]                           # (1, WA)
    inv_cnt = 1.0 / float(n_valid)
    mu_t = jnp.sum(y * mask, axis=1, keepdims=True) * inv_cnt
    d = (y - mu_t) * mask
    mu_ref[...] = mu_t
    m2_ref[...] = jnp.sum(d * d, axis=1, keepdims=True)


# -----------------------------------------------------------------------------
# Kernel 2: apply BatchNorm2d(affine=False) with the merged batch statistics.
# -----------------------------------------------------------------------------
def _bn_apply_kernel(y_ref, mu_ref, inv_ref, o_ref):
    o_ref[...] = (y_ref[...] - mu_ref[...]) * inv_ref[...]


# -----------------------------------------------------------------------------
# Wrapper (parameter prep + pad/reshape layout plumbing only; no transposes)
# -----------------------------------------------------------------------------
def _farkas_conv_fwd(x_nchw, weight, bias, *, stride=1, padding=None,
                     kernel_size=(3, 3), bn=True, nonlinear=True,
                     mxu_dtype=jnp.float32):
    """FarkasConv.forward.  x_nchw: (N, Cin, H, W), weight: (Cout-1, Cin, kh, kw),
    bias: (Cout,).  Returns (N, Cout, Ho, Wo) f32 (training-mode BN output)."""
    if stride != 1:
        # TODO(synk): stride > 1 not implemented in the fused kernels.
        raise NotImplementedError("fused FarkasConv kernel covers stride=1")
    N, Cin, H, W = x_nchw.shape
    Cconv, Cin_w, kh, kw = weight.shape
    assert Cin_w == Cin and (kh, kw) == tuple(kernel_size)
    Cout = Cconv + 1
    if padding is None:
        ph, pw = kh // 2, kw // 2
    elif isinstance(padding, tuple):
        ph, pw = int(padding[0]), int(padding[1])
    else:
        ph = pw = int(padding)
    Hp, Wp = H + 2 * ph, W + 2 * pw
    Ho, Wo = Hp - kh + 1, Wp - kw + 1
    HpWp = Hp * Wp
    T = kh * kw
    n_valid = Ho * Wo
    # lane-dense padded-grid widths (multiples of 128 -> unmasked stores)
    WA = _round_up(HpWp, 128)                        # accumulator / output width
    S = (kh - 1) * Wp + (kw - 1)                     # max tap lane offset
    WX = _round_up(WA + S, 128)                      # input row width (zero tail)

    f32_dot = (np.dtype(mxu_dtype) == np.dtype(np.float32))

    # ---- one-time parameter prep (tiny, cached under jit) -------------------
    # per-tap weights (T, Cconv, Cin); fold the "-channel-mean" Farkas channel
    # as an extra output row = -mean over output channels.
    w32 = weight.astype(jnp.float32)
    w_tap = jnp.transpose(w32, (2, 3, 0, 1)).reshape(T, Cconv, Cin)
    w_aug = jnp.concatenate(
        [w_tap, -jnp.mean(w_tap, axis=1, keepdims=True)], axis=1)    # (T,Cout,Cin)
    # Farkas bias: b = [bias[:-1], max(-mean(bias[:-1]), bias[-1])]
    b32 = bias.astype(jnp.float32)
    head = b32[:-1]
    bbar = jnp.maximum(-jnp.mean(head), b32[-1])
    b_adj = jnp.concatenate([head, bbar[None]], axis=0).reshape(Cout, 1)

    # ---- input layout: NCHW is already channel-first; pad H/W, flatten the
    # padded grid onto lanes, zero-extend the tail so every conv tap is a
    # static, in-bounds lane slice.  bf16 feed halves this DMA when requested.
    xp = jnp.pad(x_nchw.astype(jnp.float32), ((0, 0), (0, 0), (ph, ph), (pw, pw)))
    x2 = xp.reshape(N, Cin, HpWp)
    x2 = jnp.pad(x2, ((0, 0), (0, 0), (0, WX - HpWp))).astype(mxu_dtype)

    # valid-output-column mask on the padded grid (built once, tiny)
    cols = jnp.arange(WA, dtype=jnp.int32)
    mask = ((cols < Ho * Wp) & (cols % Wp < Wo)).astype(jnp.float32).reshape(1, WA)

    # ---- VMEM budget + cost estimate ----------------------------------------
    isz = np.dtype(mxu_dtype).itemsize
    blk_bytes = (Cin * WX * isz            # input block
                 + Cout * WA * 4           # y block
                 + T * Cout * Cin * isz    # weights
                 + Cout * 4 * 3 + WA * 4)  # bias, stats, mask
    vmem_bytes = int(min(48 << 20, max(8 << 20, 4 * blk_bytes)))
    cparams = pltpu.CompilerParams(dimension_semantics=("parallel",),
                                   vmem_limit_bytes=vmem_bytes)
    cost = pl.CostEstimate(
        flops=2 * N * T * Cout * Cin * WA + 8 * N * Cout * WA,
        transcendentals=(N * Cout * WA if nonlinear in ('elu', 'selu') else 0),
        bytes_accessed=int(N * Cin * WX * isz + 3 * N * Cout * WA * 4))

    kernel = functools.partial(
        _farkas_conv_kernel, kh=kh, kw=kw, wp=Wp, wa=WA, n_valid=n_valid,
        nonlinear=nonlinear, f32_dot=f32_dot)

    y, mu_t, m2_t = pl.pallas_call(
        kernel,
        grid=(N,),
        in_specs=[
            pl.BlockSpec((None, Cin, WX), lambda n: (n, 0, 0)),   # x (per image)
            pl.BlockSpec((T, Cout, Cin), lambda n: (0, 0, 0)),    # weights
            pl.BlockSpec((Cout, 1), lambda n: (0, 0)),            # bias
            pl.BlockSpec((1, WA), lambda n: (0, 0)),              # valid mask
        ],
        out_specs=[
            pl.BlockSpec((None, Cout, WA), lambda n: (n, 0, 0)),  # y (pre-BN)
            pl.BlockSpec((None, Cout, 1), lambda n: (n, 0, 0)),   # per-tile mean
            pl.BlockSpec((None, Cout, 1), lambda n: (n, 0, 0)),   # per-tile M2
        ],
        out_shape=[
            jax.ShapeDtypeStruct((N, Cout, WA), jnp.float32),
            jax.ShapeDtypeStruct((N, Cout, 1), jnp.float32),
            jax.ShapeDtypeStruct((N, Cout, 1), jnp.float32),
        ],
        compiler_params=cparams,
        cost_estimate=cost,
    )(x2, w_aug.astype(mxu_dtype), b_adj, mask)

    if bn:
        # Exact merge of per-tile centered stats (equal counts per tile).
        cnt = float(n_valid)
        mu_n = mu_t[:, :, 0]                              # (N, Cout)
        m2_n = m2_t[:, :, 0]
        mu = jnp.mean(mu_n, axis=0)                       # (Cout,)
        m2 = jnp.sum(m2_n, axis=0) + cnt * jnp.sum(jnp.square(mu_n - mu), axis=0)
        var = m2 / (N * cnt)                              # biased (training BN)
        invstd = lax.rsqrt(var + BN_EPS)

        y = pl.pallas_call(
            _bn_apply_kernel,
            grid=(N,),
            in_specs=[
                pl.BlockSpec((None, Cout, WA), lambda n: (n, 0, 0)),
                pl.BlockSpec((Cout, 1), lambda n: (0, 0)),
                pl.BlockSpec((Cout, 1), lambda n: (0, 0)),
            ],
            out_specs=pl.BlockSpec((None, Cout, WA), lambda n: (n, 0, 0)),
            out_shape=jax.ShapeDtypeStruct((N, Cout, WA), jnp.float32),
            compiler_params=cparams,
        )(y, mu.reshape(Cout, 1), invstd.reshape(Cout, 1))

    # padded-grid (N, Cout, WA) -> (N, Cout, Ho, Wo): slice + reshape only.
    return y[:, :, :HpWp].reshape(N, Cout, Hp, Wp)[:, :, :Ho, :Wo]


farkas_conv = jax.jit(
    _farkas_conv_fwd,
    static_argnames=('stride', 'padding', 'kernel_size', 'bn', 'nonlinear',
                     'mxu_dtype'))


# -----------------------------------------------------------------------------
# Pure-JAX reference (correctness check only)
# -----------------------------------------------------------------------------
def _ref_farkas_conv(x_nchw, weight, bias, *, stride=1, padding=None,
                     kernel_size=(3, 3), bn=True, nonlinear=True):
    kh, kw = kernel_size
    if padding is None:
        ph, pw = kh // 2, kw // 2
    elif isinstance(padding, tuple):
        ph, pw = padding
    else:
        ph = pw = int(padding)
    y = lax.conv_general_dilated(
        x_nchw.astype(jnp.float32), weight.astype(jnp.float32),
        window_strides=(stride, stride), padding=[(ph, ph), (pw, pw)],
        dimension_numbers=('NCHW', 'OIHW', 'NCHW'),
        precision=lax.Precision.HIGHEST)
    ybar = -jnp.mean(y, axis=1, keepdims=True)
    y = jnp.concatenate([y, ybar], axis=1)
    b32 = bias.astype(jnp.float32)
    bbar = jnp.maximum(-jnp.mean(b32[:-1]), b32[-1])
    b = jnp.concatenate([b32[:-1], bbar[None]], axis=0)
    y = y + b.reshape(1, -1, 1, 1)
    if nonlinear == 'leaky_relu':
        y = jnp.where(y >= 0.0, y, 0.01 * y)
    elif nonlinear == 'elu':
        y = jnp.where(y > 0.0, y, jnp.exp(jnp.minimum(y, 0.0)) - 1.0)
    elif nonlinear == 'selu':
        alpha, scale = 1.6732632423543772, 1.0507009873554805
        y = scale * jnp.where(y > 0.0, y,
                              alpha * (jnp.exp(jnp.minimum(y, 0.0)) - 1.0))
    elif nonlinear:
        y = jnp.maximum(y, 0.0)
    if bn:
        mu = jnp.mean(y, axis=(0, 2, 3), keepdims=True)
        var = jnp.mean(jnp.square(y - mu), axis=(0, 2, 3), keepdims=True)
        y = (y - mu) / jnp.sqrt(var + BN_EPS)
    return y


if __name__ == "__main__":
    key = jax.random.PRNGKey(0)
    wkey, bkey, xkey = jax.random.split(key, 3)

    # FarkasConv(in_channels=4, out_channels=8, kernel_size=(3,3), bn=True)
    N, Cin, H, W = 2, 4, 16, 16
    Cout, KH, KW = 8, 3, 3
    stdv = 1.0 / math.sqrt(Cin * KH * KW)          # reset_parameters() ('standard')
    weight = jax.random.uniform(wkey, (Cout - 1, Cin, KH, KW), jnp.float32,
                                -stdv, stdv)
    bias = jax.random.uniform(bkey, (Cout,), jnp.float32, -stdv, stdv)
    x = jax.random.normal(xkey, (N, Cin, H, W), jnp.float32)   # NCHW, like PyTorch

    out = jax.block_until_ready(farkas_conv(x, weight, bias))
    assert out.shape == (N, Cout, H, W), out.shape
    assert bool(jnp.all(jnp.isfinite(out)))

    ref = jax.block_until_ready(_ref_farkas_conv(x, weight, bias))
    err = float(jnp.max(jnp.abs(out - ref)))
    assert err < 2e-2, f"f32 mismatch: {err}"

    # bf16 MXU feed (memory/DMA optimization): bf16 operands, f32 accum/epilogue.
    out_bf16 = jax.block_until_ready(
        farkas_conv(x, weight, bias, mxu_dtype=jnp.bfloat16))
    err_bf16 = float(jnp.max(jnp.abs(out_bf16 - ref)))
    assert err_bf16 < 7e-2, f"bf16 mismatch: {err_bf16}"

    # no-BN path exercises the single-kernel variant.
    out_nobn = jax.block_until_ready(farkas_conv(x, weight, bias, bn=False))
    ref_nobn = _ref_farkas_conv(x, weight, bias, bn=False)
    assert float(jnp.max(jnp.abs(out_nobn - ref_nobn))) < 2e-2

    print("KERNEL_OK")
</pallas_src>

<mosaic_0001>
module attributes {stable_mosaic.version = 11 : i64} {
  func.func @_farkas_conv_kernel(%arg0: i32, %arg1: memref<1x4x512xf32, #tpu.memory_space<vmem>>, %arg2: memref<9x8x4xf32, #tpu.memory_space<vmem>>, %arg3: memref<8x1xf32, #tpu.memory_space<vmem>>, %arg4: memref<1x384xf32, #tpu.memory_space<vmem>>, %arg5: memref<1x8x384xf32, #tpu.memory_space<vmem>>, %arg6: memref<1x8x1xf32, #tpu.memory_space<vmem>>, %arg7: memref<1x8x1xf32, #tpu.memory_space<vmem>>) attributes {dimension_semantics = [#tpu.dimension_semantics<parallel>], iteration_bounds = array<i64: 2>, scalar_prefetch = 0 : i64, scratch_operands = 0 : i64, tpu.core_type = #tpu.core_type<tc>, window_params = [{transform_indices = @transform_0, window_bounds = array<i64: 1, 4, 512>}, {pipeline_mode = #tpu.pipeline_mode<synchronous>, transform_indices = @transform_1, window_bounds = array<i64: 9, 8, 4>}, {pipeline_mode = #tpu.pipeline_mode<synchronous>, transform_indices = @transform_2, window_bounds = array<i64: 8, 1>}, {pipeline_mode = #tpu.pipeline_mode<synchronous>, transform_indices = @transform_3, window_bounds = array<i64: 1, 384>}, {transform_indices = @transform_4, window_bounds = array<i64: 1, 8, 384>}, {transform_indices = @transform_5, window_bounds = array<i64: 1, 8, 1>}, {transform_indices = @transform_6, window_bounds = array<i64: 1, 8, 1>}]} {
    %cst = arith.constant 0.000000e+00 : f32
    %0 = vector.broadcast %cst : f32 to vector<8x384xf32>
    %c0 = arith.constant 0 : index
    %c0_0 = arith.constant 0 : index
    %c0_1 = arith.constant 0 : index
    %1 = vector.load %arg2[%c0, %c0_0, %c0_1] : memref<9x8x4xf32, #tpu.memory_space<vmem>>, vector<1x8x4xf32>
    %2 = vector.shape_cast %1 : vector<1x8x4xf32> to vector<8x4xf32>
    %c0_2 = arith.constant 0 : index
    %c0_3 = arith.constant 0 : index
    %c0_4 = arith.constant 0 : index
    %3 = vector.load %arg1[%c0_2, %c0_3, %c0_4] : memref<1x4x512xf32, #tpu.memory_space<vmem>>, vector<1x4x384xf32>
    %4 = vector.shape_cast %3 : vector<1x4x384xf32> to vector<4x384xf32>
    %cst_5 = arith.constant dense<0.000000e+00> : vector<8x384xf32>
    %5 = tpu.matmul %2, %4, %cst_5 {dimension_numbers = #tpu.dot_dimension_numbers<[1], [0], [0], [1], [0, 0, 1, 1], [], []>, precision = #tpu.contract_precision<fp32>} : vector<8x4xf32>, vector<4x384xf32>, vector<8x384xf32> -> vector<8x384xf32>
    %6 = arith.addf %0, %5 : vector<8x384xf32>
    %c1 = arith.constant 1 : index
    %c0_6 = arith.constant 0 : index
    %c0_7 = arith.constant 0 : index
    %7 = vector.load %arg2[%c1, %c0_6, %c0_7] : memref<9x8x4xf32, #tpu.memory_space<vmem>>, vector<1x8x4xf32>
    %8 = vector.shape_cast %7 : vector<1x8x4xf32> to vector<8x4xf32>
    %c0_8 = arith.constant 0 : index
    %c0_9 = arith.constant 0 : index
    %c1_10 = arith.constant 1 : index
    %9 = vector.load %arg1[%c0_8, %c0_9, %c1_10] : memref<1x4x512xf32, #tpu.memory_space<vmem>>, vector<1x4x384xf32>
    %10 = vector.shape_cast %9 : vector<1x4x384xf32> to vector<4x384xf32>
    %cst_11 = arith.constant dense<0.000000e+00> : vector<8x384xf32>
    %11 = tpu.matmul %8, %10, %cst_11 {dimension_numbers = #tpu.dot_dimension_numbers<[1], [0], [0], [1], [0, 0, 1, 1], [], []>, precision = #tpu.contract_precision<fp32>} : vector<8x4xf32>, vector<4x384xf32>, vector<8x384xf32> -> vector<8x384xf32>
    %12 = arith.addf %6, %11 : vector<8x384xf32>
    %c2 = arith.constant 2 : index
    %c0_12 = arith.constant 0 : index
    %c0_13 = arith.constant 0 : index
    %13 = vector.load %arg2[%c2, %c0_12, %c0_13] : memref<9x8x4xf32, #tpu.memory_space<vmem>>, vector<1x8x4xf32>
    %14 = vector.shape_cast %13 : vector<1x8x4xf32> to vector<8x4xf32>
    %c0_14 = arith.constant 0 : index
    %c0_15 = arith.constant 0 : index
    %c2_16 = arith.constant 2 : index
    %15 = vector.load %arg1[%c0_14, %c0_15, %c2_16] : memref<1x4x512xf32, #tpu.memory_space<vmem>>, vector<1x4x384xf32>
    %16 = vector.shape_cast %15 : vector<1x4x384xf32> to vector<4x384xf32>
    %cst_17 = arith.constant dense<0.000000e+00> : vector<8x384xf32>
    %17 = tpu.matmul %14, %16, %cst_17 {dimension_numbers = #tpu.dot_dimension_numbers<[1], [0], [0], [1], [0, 0, 1, 1], [], []>, precision = #tpu.contract_precision<fp32>} : vector<8x4xf32>, vector<4x384xf32>, vector<8x384xf32> -> vector<8x384xf32>
    %18 = arith.addf %12, %17 : vector<8x384xf32>
    %c3 = arith.constant 3 : index
    %c0_18 = arith.constant 0 : index
    %c0_19 = arith.constant 0 : index
    %19 = vector.load %arg2[%c3, %c0_18, %c0_19] : memref<9x8x4xf32, #tpu.memory_space<vmem>>, vector<1x8x4xf32>
    %20 = vector.shape_cast %19 : vector<1x8x4xf32> to vector<8x4xf32>
    %c0_20 = arith.constant 0 : index
    %c0_21 = arith.constant 0 : index
    %c18 = arith.constant 18 : index
    %21 = vector.load %arg1[%c0_20, %c0_21, %c18] : memref<1x4x512xf32, #tpu.memory_space<vmem>>, vector<1x4x384xf32>
    %22 = vector.shape_cast %21 : vector<1x4x384xf32> to vector<4x384xf32>
    %cst_22 = arith.constant dense<0.000000e+00> : vector<8x384xf32>
    %23 = tpu.matmul %20, %22, %cst_22 {dimension_numbers = #tpu.dot_dimension_numbers<[1], [0], [0], [1], [0, 0, 1, 1], [], []>, precision = #tpu.contract_precision<fp32>} : vector<8x4xf32>, vector<4x384xf32>, vector<8x384xf32> -> vector<8x384xf32>
    %24 = arith.addf %18, %23 : vector<8x384xf32>
    %c4 = arith.constant 4 : index
    %c0_23 = arith.constant 0 : index
    %c0_24 = arith.constant 0 : index
    %25 = vector.load %arg2[%c4, %c0_23, %c0_24] : memref<9x8x4xf32, #tpu.memory_space<vmem>>, vector<1x8x4xf32>
    %26 = vector.shape_cast %25 : vector<1x8x4xf32> to vector<8x4xf32>
    %c0_25 = arith.constant 0 : index
    %c0_26 = arith.constant 0 : index
    %c19 = arith.constant 19 : index
    %27 = vector.load %arg1[%c0_25, %c0_26, %c19] : memref<1x4x512xf32, #tpu.memory_space<vmem>>, vector<1x4x384xf32>
    %28 = vector.shape_cast %27 : vector<1x4x384xf32> to vector<4x384xf32>
    %cst_27 = arith.constant dense<0.000000e+00> : vector<8x384xf32>
    %29 = tpu.matmul %26, %28, %cst_27 {dimension_numbers = #tpu.dot_dimension_numbers<[1], [0], [0], [1], [0, 0, 1, 1], [], []>, precision = #tpu.contract_precision<fp32>} : vector<8x4xf32>, vector<4x384xf32>, vector<8x384xf32> -> vector<8x384xf32>
    %30 = arith.addf %24, %29 : vector<8x384xf32>
    %c5 = arith.constant 5 : index
    %c0_28 = arith.constant 0 : index
    %c0_29 = arith.constant 0 : index
    %31 = vector.load %arg2[%c5, %c0_28, %c0_29] : memref<9x8x4xf32, #tpu.memory_space<vmem>>, vector<1x8x4xf32>
    %32 = vector.shape_cast %31 : vector<1x8x4xf32> to vector<8x4xf32>
    %c0_30 = arith.constant 0 : index
    %c0_31 = arith.constant 0 : index
    %c20 = arith.constant 20 : index
    %33 = vector.load %arg1[%c0_30, %c0_31, %c20] : memref<1x4x512xf32, #tpu.memory_space<vmem>>, vector<1x4x384xf32>
    %34 = vector.shape_cast %33 : vector<1x4x384xf32> to vector<4x384xf32>
    %cst_32 = arith.constant dense<0.000000e+00> : vector<8x384xf32>
    %35 = tpu.matmul %32, %34, %cst_32 {dimension_numbers = #tpu.dot_dimension_numbers<[1], [0], [0], [1], [0, 0, 1, 1], [], []>, precision = #tpu.contract_precision<fp32>} : vector<8x4xf32>, vector<4x384xf32>, vector<8x384xf32> -> vector<8x384xf32>
    %36 = arith.addf %30, %35 : vector<8x384xf32>
    %c6 = arith.constant 6 : index
    %c0_33 = arith.constant 0 : index
    %c0_34 = arith.constant 0 : index
    %37 = vector.load %arg2[%c6, %c0_33, %c0_34] : memref<9x8x4xf32, #tpu.memory_space<vmem>>, vector<1x8x4xf32>
    %38 = vector.shape_cast %37 : vector<1x8x4xf32> to vector<8x4xf32>
    %c0_35 = arith.constant 0 : index
    %c0_36 = arith.constant 0 : index
    %c36 = arith.constant 36 : index
    %39 = vector.load %arg1[%c0_35, %c0_36, %c36] : memref<1x4x512xf32, #tpu.memory_space<vmem>>, vector<1x4x384xf32>
    %40 = vector.shape_cast %39 : vector<1x4x384xf32> to vector<4x384xf32>
    %cst_37 = arith.constant dense<0.000000e+00> : vector<8x384xf32>
    %41 = tpu.matmul %38, %40, %cst_37 {dimension_numbers = #tpu.dot_dimension_numbers<[1], [0], [0], [1], [0, 0, 1, 1], [], []>, precision = #tpu.contract_precision<fp32>} : vector<8x4xf32>, vector<4x384xf32>, vector<8x384xf32> -> vector<8x384xf32>
    %42 = arith.addf %36, %41 : vector<8x384xf32>
    %c7 = arith.constant 7 : index
    %c0_38 = arith.constant 0 : index
    %c0_39 = arith.constant 0 : index
    %43 = vector.load %arg2[%c7, %c0_38, %c0_39] : memref<9x8x4xf32, #tpu.memory_space<vmem>>, vector<1x8x4xf32>
    %44 = vector.shape_cast %43 : vector<1x8x4xf32> to vector<8x4xf32>
    %c0_40 = arith.constant 0 : index
    %c0_41 = arith.constant 0 : index
    %c37 = arith.constant 37 : index
    %45 = vector.load %arg1[%c0_40, %c0_41, %c37] : memref<1x4x512xf32, #tpu.memory_space<vmem>>, vector<1x4x384xf32>
    %46 = vector.shape_cast %45 : vector<1x4x384xf32> to vector<4x384xf32>
    %cst_42 = arith.constant dense<0.000000e+00> : vector<8x384xf32>
    %47 = tpu.matmul %44, %46, %cst_42 {dimension_numbers = #tpu.dot_dimension_numbers<[1], [0], [0], [1], [0, 0, 1, 1], [], []>, precision = #tpu.contract_precision<fp32>} : vector<8x4xf32>, vector<4x384xf32>, vector<8x384xf32> -> vector<8x384xf32>
    %48 = arith.addf %42, %47 : vector<8x384xf32>
    %c8 = arith.constant 8 : index
    %c0_43 = arith.constant 0 : index
    %c0_44 = arith.constant 0 : index
    %49 = vector.load %arg2[%c8, %c0_43, %c0_44] : memref<9x8x4xf32, #tpu.memory_space<vmem>>, vector<1x8x4xf32>
    %50 = vector.shape_cast %49 : vector<1x8x4xf32> to vector<8x4xf32>
    %c0_45 = arith.constant 0 : index
    %c0_46 = arith.constant 0 : index
    %c38 = arith.constant 38 : index
    %51 = vector.load %arg1[%c0_45, %c0_46, %c38] : memref<1x4x512xf32, #tpu.memory_space<vmem>>, vector<1x4x384xf32>
    %52 = vector.shape_cast %51 : vector<1x4x384xf32> to vector<4x384xf32>
    %cst_47 = arith.constant dense<0.000000e+00> : vector<8x384xf32>
    %53 = tpu.matmul %50, %52, %cst_47 {dimension_numbers = #tpu.dot_dimension_numbers<[1], [0], [0], [1], [0, 0, 1, 1], [], []>, precision = #tpu.contract_precision<fp32>} : vector<8x4xf32>, vector<4x384xf32>, vector<8x384xf32> -> vector<8x384xf32>
    %54 = arith.addf %48, %53 : vector<8x384xf32>
    %c0_48 = arith.constant 0 : index
    %c0_49 = arith.constant 0 : index
    %55 = vector.load %arg3[%c0_48, %c0_49] : memref<8x1xf32, #tpu.memory_space<vmem>>, vector<8x1xf32>
    %56 = vector.broadcast %55 : vector<8x1xf32> to vector<8x384xf32>
    %57 = arith.addf %54, %56 : vector<8x384xf32>
    %cst_50 = arith.constant 0.000000e+00 : f32
    %58 = vector.broadcast %cst_50 : f32 to vector<8x384xf32>
    %59 = arith.maximumf %57, %58 : vector<8x384xf32>
    %c0_51 = arith.constant 0 : index
    %c0_52 = arith.constant 0 : index
    %c0_53 = arith.constant 0 : index
    %60 = vector.load %arg5[%c0_51, %c0_52, %c0_53] : memref<1x8x384xf32, #tpu.memory_space<vmem>>, vector<1x8x384xf32>
    %61 = vector.shape_cast %60 : vector<1x8x384xf32> to vector<8x384xf32>
    %62 = vector.shape_cast %59 : vector<8x384xf32> to vector<1x8x384xf32>
    tpu.vector_store %arg5[%c0_51, %c0_52, %c0_53], %62 {strides = array<i32>} : memref<1x8x384xf32, #tpu.memory_space<vmem>>, vector<1x8x384xf32>,
    %c0_54 = arith.constant 0 : index
    %c0_55 = arith.constant 0 : index
    %63 = vector.load %arg4[%c0_54, %c0_55] : memref<1x384xf32, #tpu.memory_space<vmem>>, vector<1x384xf32>
    %64 = vector.broadcast %63 : vector<1x384xf32> to vector<8x384xf32>
    %65 = arith.mulf %59, %64 : vector<8x384xf32>
    %cst_56 = arith.constant dense<0.000000e+00> : vector<8xf32>
    %66 = vector.multi_reduction <add>, %65, %cst_56 [1] : vector<8x384xf32> to vector<8xf32>
    %67 = vector.shape_cast %66 : vector<8xf32> to vector<8x1xf32>
    %cst_57 = arith.constant 3.906250e-03 : f32
    %68 = vector.broadcast %cst_57 : f32 to vector<8x1xf32>
    %69 = arith.mulf %67, %68 : vector<8x1xf32>
    %70 = vector.broadcast %69 : vector<8x1xf32> to vector<8x384xf32>
    %71 = arith.subf %59, %70 : vector<8x384xf32>
    %72 = vector.broadcast %63 : vector<1x384xf32> to vector<8x384xf32>
    %73 = arith.mulf %71, %72 : vector<8x384xf32>
    %c0_58 = arith.constant 0 : index
    %c0_59 = arith.constant 0 : index
    %c0_60 = arith.constant 0 : index
    %74 = vector.load %arg6[%c0_58, %c0_59, %c0_60] : memref<1x8x1xf32, #tpu.memory_space<vmem>>, vector<1x8x1xf32>
    %75 = vector.shape_cast %74 : vector<1x8x1xf32> to vector<8x1xf32>
    %76 = vector.shape_cast %69 : vector<8x1xf32> to vector<1x8x1xf32>
    tpu.vector_store %arg6[%c0_58, %c0_59, %c0_60], %76 {strides = array<i32>} : memref<1x8x1xf32, #tpu.memory_space<vmem>>, vector<1x8x1xf32>,
    %77 = arith.mulf %73, %73 : vector<8x384xf32>
    %cst_61 = arith.constant dense<0.000000e+00> : vector<8xf32>
    %78 = vector.multi_reduction <add>, %77, %cst_61 [1] : vector<8x384xf32> to vector<8xf32>
    %79 = vector.shape_cast %78 : vector<8xf32> to vector<8x1xf32>
    %c0_62 = arith.constant 0 : index
    %c0_63 = arith.constant 0 : index
    %c0_64 = arith.constant 0 : index
    %80 = vector.load %arg7[%c0_62, %c0_63, %c0_64] : memref<1x8x1xf32, #tpu.memory_space<vmem>>, vector<1x8x1xf32>
    %81 = vector.shape_cast %80 : vector<1x8x1xf32> to vector<8x1xf32>
    %82 = vector.shape_cast %79 : vector<8x1xf32> to vector<1x8x1xf32>
    tpu.vector_store %arg7[%c0_62, %c0_63, %c0_64], %82 {strides = array<i32>} : memref<1x8x1xf32, #tpu.memory_space<vmem>>, vector<1x8x1xf32>,
    return
  }
  func.func @transform_0(%arg0: i32) -> (i32, i32, i32) {
    %c0_i32 = arith.constant 0 : i32
    %c0_i32_0 = arith.constant 0 : i32
    %c0_i32_1 = arith.constant 0 : i32
    return %arg0, %c0_i32, %c0_i32_0 : i32, i32, i32
  }
  func.func @transform_1(%arg0: i32) -> (i32, i32, i32) {
    %c0_i32 = arith.constant 0 : i32
    %c0_i32_0 = arith.constant 0 : i32
    %c0_i32_1 = arith.constant 0 : i32
    %c0_i32_2 = arith.constant 0 : i32
    return %c0_i32, %c0_i32_0, %c0_i32_1 : i32, i32, i32
  }
  func.func @transform_2(%arg0: i32) -> (i32, i32) {
    %c0_i32 = arith.constant 0 : i32
    %c0_i32_0 = arith.constant 0 : i32
    %c0_i32_1 = arith.constant 0 : i32
    return %c0_i32, %c0_i32_0 : i32, i32
  }
  func.func @transform_3(%arg0: i32) -> (i32, i32) {
    %c0_i32 = arith.constant 0 : i32
    %c0_i32_0 = arith.constant 0 : i32
    %c0_i32_1 = arith.constant 0 : i32
    return %c0_i32, %c0_i32_0 : i32, i32
  }
  func.func @transform_4(%arg0: i32) -> (i32, i32, i32) {
    %c0_i32 = arith.constant 0 : i32
    %c0_i32_0 = arith.constant 0 : i32
    %c0_i32_1 = arith.constant 0 : i32
    return %arg0, %c0_i32, %c0_i32_0 : i32, i32, i32
  }
  func.func @transform_5(%arg0: i32) -> (i32, i32, i32) {
    %c0_i32 = arith.constant 0 : i32
    %c0_i32_0 = arith.constant 0 : i32
    %c0_i32_1 = arith.constant 0 : i32
    return %arg0, %c0_i32, %c0_i32_0 : i32, i32, i32
  }
  func.func @transform_6(%arg0: i32) -> (i32, i32, i32) {
    %c0_i32 = arith.constant 0 : i32
    %c0_i32_0 = arith.constant 0 : i32
    %c0_i32_1 = arith.constant 0 : i32
    return %arg0, %c0_i32, %c0_i32_0 : i32, i32, i32
  }
}

module attributes {stable_mosaic.version = 11 : i64} {
  func.func @_bn_apply_kernel(%arg0: i32, %arg1: memref<1x8x384xf32, #tpu.memory_space<vmem>>, %arg2: memref<8x1xf32, #tpu.memory_space<vmem>>, %arg3: memref<8x1xf32, #tpu.memory_space<vmem>>, %arg4: memref<1x8x384xf32, #tpu.memory_space<vmem>>) attributes {dimension_semantics = [#tpu.dimension_semantics<parallel>], iteration_bounds = array<i64: 2>, scalar_prefetch = 0 : i64, scratch_operands = 0 : i64, tpu.core_type = #tpu.core_type<tc>, window_params = [{transform_indices = @transform_0, window_bounds = array<i64: 1, 8, 384>}, {pipeline_mode = #tpu.pipeline_mode<synchronous>, transform_indices = @transform_1, window_bounds = array<i64: 8, 1>}, {pipeline_mode = #tpu.pipeline_mode<synchronous>, transform_indices = @transform_2, window_bounds = array<i64: 8, 1>}, {transform_indices = @transform_3, window_bounds = array<i64: 1, 8, 384>}]} {
    %c0 = arith.constant 0 : index
    %c0_0 = arith.constant 0 : index
    %c0_1 = arith.constant 0 : index
    %0 = vector.load %arg1[%c0, %c0_0, %c0_1] : memref<1x8x384xf32, #tpu.memory_space<vmem>>, vector<1x8x384xf32>
    %1 = vector.shape_cast %0 : vector<1x8x384xf32> to vector<8x384xf32>
    %c0_2 = arith.constant 0 : index
    %c0_3 = arith.constant 0 : index
    %2 = vector.load %arg2[%c0_2, %c0_3] : memref<8x1xf32, #tpu.memory_space<vmem>>, vector<8x1xf32>
    %3 = vector.broadcast %2 : vector<8x1xf32> to vector<8x384xf32>
    %4 = arith.subf %1, %3 : vector<8x384xf32>
    %c0_4 = arith.constant 0 : index
    %c0_5 = arith.constant 0 : index
    %5 = vector.load %arg3[%c0_4, %c0_5] : memref<8x1xf32, #tpu.memory_space<vmem>>, vector<8x1xf32>
    %6 = vector.broadcast %5 : vector<8x1xf32> to vector<8x384xf32>
    %7 = arith.mulf %4, %6 : vector<8x384xf32>
    %c0_6 = arith.constant 0 : index
    %c0_7 = arith.constant 0 : index
    %c0_8 = arith.constant 0 : index
    %8 = vector.load %arg4[%c0_6, %c0_7, %c0_8] : memref<1x8x384xf32, #tpu.memory_space<vmem>>, vector<1x8x384xf32>
    %9 = vector.shape_cast %8 : vector<1x8x384xf32> to vector<8x384xf32>
    %10 = vector.shape_cast %7 : vector<8x384xf32> to vector<1x8x384xf32>
    tpu.vector_store %arg4[%c0_6, %c0_7, %c0_8], %10 {strides = array<i32>} : memref<1x8x384xf32, #tpu.memory_space<vmem>>, vector<1x8x384xf32>,
    return
  }
  func.func @transform_0(%arg0: i32) -> (i32, i32, i32) {
    %c0_i32 = arith.constant 0 : i32
    %c0_i32_0 = arith.constant 0 : i32
    %c0_i32_1 = arith.constant 0 : i32
    return %arg0, %c0_i32, %c0_i32_0 : i32, i32, i32
  }
  func.func @transform_1(%arg0: i32) -> (i32, i32) {
    %c0_i32 = arith.constant 0 : i32
    %c0_i32_0 = arith.constant 0 : i32
    %c0_i32_1 = arith.constant 0 : i32
    return %c0_i32, %c0_i32_0 : i32, i32
  }
  func.func @transform_2(%arg0: i32) -> (i32, i32) {
    %c0_i32 = arith.constant 0 : i32
    %c0_i32_0 = arith.constant 0 : i32
    %c0_i32_1 = arith.constant 0 : i32
    return %c0_i32, %c0_i32_0 : i32, i32
  }
  func.func @transform_3(%arg0: i32) -> (i32, i32, i32) {
    %c0_i32 = arith.constant 0 : i32
    %c0_i32_0 = arith.constant 0 : i32
    %c0_i32_1 = arith.constant 0 : i32
    return %arg0, %c0_i32, %c0_i32_0 : i32, i32, i32
  }
}

</mosaic_0001>

<llo_original>
// kernel: _farkas_conv_fwd.3
$region0: #{_farkas_conv_fwd.3}
  #allocation0 [shape = 'u32[]', space=smem, size = 0x4, offset = 0x4, fixed_abs, tag = 'smem constant byte address 0x4 - core index']
  #allocation1 [shape = 'u32[144,128]{1,0:T(1,128)}', space=vmem, size = 0x12000, scoped, tag = 'internal scratch']
  %s0 = inlined_call_operand.vmem [shape: f32[2,8,384], index: 0, kind: input, shape index: {}]
  %s1 = inlined_call_operand.vmem [shape: f32[8,1], index: 1, kind: input, shape index: {}]
  %s2 = inlined_call_operand.vmem [shape: f32[8,1], index: 2, kind: input, shape index: {}]
  %s3 = inlined_call_operand.vmem [shape: f32[2,8,384], index: 3, kind: output, shape index: {}]
  %s4 = sld [smem:[#allocation0]]
  $region45: #{_farkas_conv_fwd.3} parent=0
    _
  %s6 = ssub.s32 1, %s4
  %s7 = scalar_select 0, %s6, %s4
  loop: start=0, step=1, limit=4
  $region2: #{_farkas_conv_fwd.3} parent=0 // loop_pre_header
    _
  $region3: #{_farkas_conv_fwd.3} parent=0 // loop_header
    %s9 = sphi 0, %s13
    %p10 = scmp.ge.s32.totalorder %s9, 4
    %s19 = sphi 0, %s21
    %s22 = sphi 0, %s19
    %s23 = sphi 0, %s22
    %s39 = sphi 0, %s23
    %s43 = sphi 0, %s43
    %s45 = sphi 0, %s43
    %s46 = sphi 0, %s45
    %s60 = sphi 0, %s46
    %s64 = sphi 0, %s64
    %s66 = sphi 0, %s64
    %s67 = sphi 0, %s66
    %s81 = sphi 0, %s67
    %s87 = sphi 0, %s89
    %s90 = sphi 0, %s87
    %s91 = sphi 0, %s90
    %s107 = sphi 0, %s91
  $region4: #{_farkas_conv_fwd.3} parent=0 // loop_header_branch
    %12 = sbr.rel (%p10) target = $region8
  $region5: #{_farkas_conv_fwd.3} parent=0 // loop_body
    %s14 = ssub.s32 %s9, 1
    %s15 = ssub.s32 %s9, 2
    %s16 = sadd.s32 %s9, 1
    %s17 = ssub.s32 %s9, %s16
    %p18 = scmp.eq.s32.totalorder %s17, 0
    %s20 = sadd.s32 %s19, 1
    %s21 = scalar_select %p18, %s19, %s20
    %p24 = pneg %p18
    %p25 = scmp.eq.s32.totalorder %s9, 1
    %p26 = por %p24, %p25
    %p27 = scmp.ne.s32.totalorder %s19, %s22
    %p28 = scmp.eq.s32.totalorder %s9, 0
    %p29 = por %p27, %p28
    %p30 = scmp.ne.s32.totalorder %s19, %s22
    %p31 = scmp.eq.s32.totalorder %s14, 1
    %p32 = por %p30, %p31
    %p33 = scmp.ne.s32.totalorder %s22, %s23
    %p34 = scmp.eq.s32.totalorder %s14, 0
    %p35 = por %p33, %p34
    %p36 = scmp.ne.s32.totalorder %s22, %s23
    %p37 = scmp.eq.s32.totalorder %s15, 1
    %p38 = por %p36, %p37
    %p40 = scmp.ne.s32.totalorder %s23, %s39
    %p41 = scmp.eq.s32.totalorder %s15, 0
    %p42 = por %p40, %p41
    %s44 = sadd.s32 %s43, 1
    %p47 = scmp.eq.s32.totalorder %s9, 1
    %p48 = scmp.ne.s32.totalorder %s43, %s45
    %p49 = scmp.eq.s32.totalorder %s9, 0
    %p50 = por %p48, %p49
    %p51 = scmp.ne.s32.totalorder %s43, %s45
    %p52 = scmp.eq.s32.totalorder %s14, 1
    %p53 = por %p51, %p52
    %p54 = scmp.ne.s32.totalorder %s45, %s46
    %p55 = scmp.eq.s32.totalorder %s14, 0
    %p56 = por %p54, %p55
    %p57 = scmp.ne.s32.totalorder %s45, %s46
    %p58 = scmp.eq.s32.totalorder %s15, 1
    %p59 = por %p57, %p58
    %p61 = scmp.ne.s32.totalorder %s46, %s60
    %p62 = scmp.eq.s32.totalorder %s15, 0
    %p63 = por %p61, %p62
    %s65 = sadd.s32 %s64, 1
    %p68 = scmp.eq.s32.totalorder %s9, 1
    %p69 = scmp.ne.s32.totalorder %s64, %s66
    %p70 = scmp.eq.s32.totalorder %s9, 0
    %p71 = por %p69, %p70
    %p72 = scmp.ne.s32.totalorder %s64, %s66
    %p73 = scmp.eq.s32.totalorder %s14, 1
    %p74 = por %p72, %p73
    %p75 = scmp.ne.s32.totalorder %s66, %s67
    %p76 = scmp.eq.s32.totalorder %s14, 0
    %p77 = por %p75, %p76
    %p78 = scmp.ne.s32.totalorder %s66, %s67
    %p79 = scmp.eq.s32.totalorder %s15, 1
    %p80 = por %p78, %p79
    %p82 = scmp.ne.s32.totalorder %s67, %s81
    %p83 = scmp.eq.s32.totalorder %s15, 0
    %p84 = por %p82, %p83
    %s85 = ssub.s32 %s9, %s16
    %p86 = scmp.eq.s32.totalorder %s85, 0
    %s88 = sadd.s32 %s87, 1
    %s89 = scalar_select %p86, %s87, %s88
    %p92 = pneg %p86
    %p93 = scmp.eq.s32.totalorder %s9, 1
    %p94 = por %p92, %p93
    %p95 = scmp.ne.s32.totalorder %s87, %s90
    %p96 = scmp.eq.s32.totalorder %s9, 0
    %p97 = por %p95, %p96
    %p98 = scmp.ne.s32.totalorder %s87, %s90
    %p99 = scmp.eq.s32.totalorder %s14, 1
    %p100 = por %p98, %p99
    %p101 = scmp.ne.s32.totalorder %s90, %s91
    %p102 = scmp.eq.s32.totalorder %s14, 0
    %p103 = por %p101, %p102
    %p104 = scmp.ne.s32.totalorder %s90, %s91
    %p105 = scmp.eq.s32.totalorder %s15, 1
    %p106 = por %p104, %p105
    %p108 = scmp.ne.s32.totalorder %s91, %s107
    %p109 = scmp.eq.s32.totalorder %s15, 0
    %p110 = por %p108, %p109
    %p111 = scmp.le.s32.totalorder 1, %s9
    %p112 = scmp.lt.s32.totalorder %s9, 3
    %p113 = pnand %p111, %p112
    %p114 = pneg %p113
    // Predicated region
    $region9: #{_farkas_conv_fwd.3} parent=5 // pred_check
      _
    $region10: #{_farkas_conv_fwd.3} parent=5 // pred_check_branch
      %116 = sbr.rel (%p113) target = $region12
    $region11: #{_farkas_conv_fwd.3} parent=5 // pred_region
      %s117 = ssub.s32 %s9, 1
      // Predicated region
      $region13: #{_farkas_conv_fwd.3} parent=11 // pred_check
        %p118 = pneg %p56
      $region14: #{_farkas_conv_fwd.3} parent=11 // pred_check_branch
        %120 = sbr.rel (%p118) target = $region16
      $region15: #{_farkas_conv_fwd.3} parent=11 // pred_region
        _
      $region16: #{_farkas_conv_fwd.3} parent=11 // pred_fallthru
        _
      // Predicated region
      $region17: #{_farkas_conv_fwd.3} parent=11 // pred_check
        %p121 = pneg %p77
      $region18: #{_farkas_conv_fwd.3} parent=11 // pred_check_branch
        %123 = sbr.rel (%p121) target = $region20
      $region19: #{_farkas_conv_fwd.3} parent=11 // pred_region
        _
      $region20: #{_farkas_conv_fwd.3} parent=11 // pred_fallthru
        _
    $region12: #{_farkas_conv_fwd.3} parent=5 // pred_fallthru
      _
    %p124 = scmp.lt.s32.totalorder %s9, 2
    // Predicated region
    $region21: #{_farkas_conv_fwd.3} parent=5 // pred_check
      %p125 = pneg %p124
    $region22: #{_farkas_conv_fwd.3} parent=5 // pred_check_branch
      %127 = sbr.rel (%p125) target = $region24
    $region23: #{_farkas_conv_fwd.3} parent=5 // pred_region
      // Predicated region
      $region25: #{_farkas_conv_fwd.3} parent=23 // pred_check
        %p128 = pneg %p29
      $region26: #{_farkas_conv_fwd.3} parent=23 // pred_check_branch
        %130 = sbr.rel (%p128) target = $region28
      $region27: #{_farkas_conv_fwd.3} parent=23 // pred_region
        %p131 = scmp.lt.s32.totalorder %s9, 1
        %s132 = scalar_select %p131, %s9, 1
        %s133 = smul.addr %s132, 3
        %s134 = smul.addr %s133, 8
        %s135 = scalar_lea.vmem %s0, %s134
      $region28: #{_farkas_conv_fwd.3} parent=23 // pred_fallthru
        _
    $region24: #{_farkas_conv_fwd.3} parent=5 // pred_fallthru
      _
    %p136 = scmp.le.s32.totalorder 1, %s9
    %p137 = scmp.lt.s32.totalorder %s9, 3
    %p138 = pnand %p136, %p137
    %p139 = pneg %p138
    // Predicated region
    $region29: #{_farkas_conv_fwd.3} parent=5 // pred_check
      _
    $region30: #{_farkas_conv_fwd.3} parent=5 // pred_check_branch
      %141 = sbr.rel (%p138) target = $region32
    $region31: #{_farkas_conv_fwd.3} parent=5 // pred_region
      %s142 = ssub.s32 %s9, 1
      %p143 = scmp.lt.s32.totalorder %s14, 1
      %s144 = scalar_select %p143, %s14, 1
      %s145 = smul.addr %s144, 3
      %s146 = smul.addr %s145, 8
      %s147 = scalar_lea.vmem %s0, %s146
      %p148 = pneg %p35
      %p149 = pneg %p32
      %p150 = pneg %p56
      %p151 = pneg %p53
      %p152 = pneg %p77
      %p153 = pneg %p74
      %p154 = pneg %p103
      %p155 = pneg %p100
      %p156 = scmp.lt.s32.totalorder %s14, 1
      %s157 = scalar_select %p156, %s14, 1
      %s158 = smul.addr %s157, 3
      %s159 = smul.addr %s158, 8
      %s160 = scalar_lea.vmem %s3, %s159
      %p161 = scmp.lt.s32.totalorder %s14, 1
      %s162 = scalar_select %p161, %s14, 1
      %s163 = smul.addr %s162, 3
      %s164 = smul.addr %s163, 8
      %s165 = scalar_lea.vmem %s0, %s164
      %p166 = scmp.lt.s32.totalorder %s14, 1
      %s167 = scalar_select %p166, %s14, 1
      %s168 = smul.addr %s167, 3
      %s169 = smul.addr %s168, 8
      %s170 = scalar_lea.vmem %s3, %s169
      %v171 = vld [vmem:[%s165] sm:$0xff]
      %v172 = vld [vmem:[%s165 + $0x8] sm:$0xff]
      %v173 = vld [vmem:[%s165 + $0x10] sm:$0xff]
      %v174 = vld [vmem:[%s1] sm:$0xff]
      %176 = vset.pattern.permute.xlu0 0
      %177 = vperm.xlu0 %176, %v174
      %v178 = vpop.permute.xlu0 %177
      %v180 = vsub.f32 %v171, %v178
      %v181 = vsub.f32 %v172, %v178
      %v182 = vsub.f32 %v173, %v178
      %v183 = vld [vmem:[%s2] sm:$0xff]
      %185 = vset.pattern.permute.xlu0 0
      %186 = vperm.xlu0 %185, %v183
      %v187 = vpop.permute.xlu0 %186
      %v189 = vmul.f32 %v180, %v187
      %v190 = vmul.f32 %v181, %v187
      %v191 = vmul.f32 %v182, %v187
      %192 = vst [vmem:[%s170] sm:$0xff] %v189
      %193 = vst [vmem:[%s170 + $0x8] sm:$0xff] %v190
      %194 = vst [vmem:[%s170 + $0x10] sm:$0xff] %v191
      %p195 = scmp.lt.s32.totalorder %s14, 1
      %s196 = scalar_select %p195, %s14, 1
      %s197 = smul.addr %s196, 3
      %s198 = smul.addr %s197, 8
      %s199 = scalar_lea.vmem %s3, %s198
      // Predicated region
      $region33: #{_farkas_conv_fwd.3} parent=31 // pred_check
        %p200 = pneg %p100
      $region34: #{_farkas_conv_fwd.3} parent=31 // pred_check_branch
        %202 = sbr.rel (%p200) target = $region36
      $region35: #{_farkas_conv_fwd.3} parent=31 // pred_region
        _
      $region36: #{_farkas_conv_fwd.3} parent=31 // pred_fallthru
        _
    $region32: #{_farkas_conv_fwd.3} parent=5 // pred_fallthru
      _
    %p203 = scmp.le.s32.totalorder 2, %s9
    // Predicated region
    $region37: #{_farkas_conv_fwd.3} parent=5 // pred_check
      %p204 = pneg %p203
    $region38: #{_farkas_conv_fwd.3} parent=5 // pred_check_branch
      %206 = sbr.rel (%p204) target = $region40
    $region39: #{_farkas_conv_fwd.3} parent=5 // pred_region
      %s207 = ssub.s32 %s9, 2
      // Predicated region
      $region41: #{_farkas_conv_fwd.3} parent=39 // pred_check
        %p208 = pneg %p106
      $region42: #{_farkas_conv_fwd.3} parent=39 // pred_check_branch
        %210 = sbr.rel (%p208) target = $region44
      $region43: #{_farkas_conv_fwd.3} parent=39 // pred_region
        %p211 = scmp.lt.s32.totalorder %s15, 1
        %s212 = scalar_select %p211, %s15, 1
        %s213 = smul.addr %s212, 3
        %s214 = smul.addr %s213, 8
        %s215 = scalar_lea.vmem %s3, %s214
      $region44: #{_farkas_conv_fwd.3} parent=39 // pred_fallthru
        _
    $region40: #{_farkas_conv_fwd.3} parent=5 // pred_fallthru
      _
  $region6: #{_farkas_conv_fwd.3} parent=0 // loop_footer
    %s13 = sadd.s32 1, %s9
  $region7: #{_farkas_conv_fwd.3} parent=0 // loop_footer_branch
    %8 = sbr.rel target = $region3
  $region8: #{_farkas_conv_fwd.3} parent=0 // loop_exit
    _

// kernel: _farkas_conv_fwd.2
$region0: #{_farkas_conv_fwd.2}
  #allocation0 [shape = 'u32[]', space=smem, size = 0x4, offset = 0x4, fixed_abs, tag = 'smem constant byte address 0x4 - core index']
  #allocation1 [shape = 'u32[144,128]{1,0:T(1,128)}', space=vmem, size = 0x12000, scoped, tag = 'internal scratch']
  %s0 = inlined_call_operand.vmem [shape: f32[2,4,512], index: 0, kind: input, shape index: {}]
  %s1 = inlined_call_operand.vmem [shape: f32[9,8,4], index: 1, kind: input, shape index: {}]
  %s2 = inlined_call_operand.vmem [shape: f32[8,1], index: 2, kind: input, shape index: {}]
  %s3 = inlined_call_operand.vmem [shape: f32[1,384], index: 3, kind: input, shape index: {}]
  %s4 = inlined_call_operand.vmem [shape: f32[2,8,384], index: 4, kind: output, shape index: {0}]
  %s5 = inlined_call_operand.vmem [shape: f32[2,8,1], index: 5, kind: output, shape index: {1}]
  %s6 = inlined_call_operand.vmem [shape: f32[2,8,1], index: 6, kind: output, shape index: {2}]
  %7 = xla_tuple %s4, %s5, %s6
  %s8 = sld [smem:[#allocation0]]
  $region65: #{_farkas_conv_fwd.2} parent=0
    _
  %s10 = ssub.s32 1, %s8
  %s11 = scalar_select 0, %s10, %s8
  loop: start=0, step=1, limit=4
  $region2: #{_farkas_conv_fwd.2} parent=0 // loop_pre_header
    _
  $region3: #{_farkas_conv_fwd.2} parent=0 // loop_header
    %s13 = sphi 0, %s17
    %p14 = scmp.ge.s32.totalorder %s13, 4
    %s23 = sphi 0, %s25
    %s26 = sphi 0, %s23
    %s27 = sphi 0, %s26
    %s43 = sphi 0, %s27
    %s47 = sphi 0, %s47
    %s49 = sphi 0, %s47
    %s50 = sphi 0, %s49
    %s64 = sphi 0, %s50
    %s68 = sphi 0, %s68
    %s70 = sphi 0, %s68
    %s71 = sphi 0, %s70
    %s85 = sphi 0, %s71
    %s89 = sphi 0, %s89
    %s91 = sphi 0, %s89
    %s92 = sphi 0, %s91
    %s106 = sphi 0, %s92
    %s112 = sphi 0, %s114
    %s115 = sphi 0, %s112
    %s116 = sphi 0, %s115
    %s132 = sphi 0, %s116
    %s138 = sphi 0, %s140
    %s141 = sphi 0, %s138
    %s142 = sphi 0, %s141
    %s158 = sphi 0, %s142
    %s164 = sphi 0, %s166
    %s167 = sphi 0, %s164
    %s168 = sphi 0, %s167
    %s184 = sphi 0, %s168
  $region4: #{_farkas_conv_fwd.2} parent=0 // loop_header_branch
    %16 = sbr.rel (%p14) target = $region8
  $region5: #{_farkas_conv_fwd.2} parent=0 // loop_body
    %s18 = ssub.s32 %s13, 1
    %s19 = ssub.s32 %s13, 2
    %s20 = sadd.s32 %s13, 1
    %s21 = ssub.s32 %s13, %s20
    %p22 = scmp.eq.s32.totalorder %s21, 0
    %s24 = sadd.s32 %s23, 1
    %s25 = scalar_select %p22, %s23, %s24
    %p28 = pneg %p22
    %p29 = scmp.eq.s32.totalorder %s13, 1
    %p30 = por %p28, %p29
    %p31 = scmp.ne.s32.totalorder %s23, %s26
    %p32 = scmp.eq.s32.totalorder %s13, 0
    %p33 = por %p31, %p32
    %p34 = scmp.ne.s32.totalorder %s23, %s26
    %p35 = scmp.eq.s32.totalorder %s18, 1
    %p36 = por %p34, %p35
    %p37 = scmp.ne.s32.totalorder %s26, %s27
    %p38 = scmp.eq.s32.totalorder %s18, 0
    %p39 = por %p37, %p38
    %p40 = scmp.ne.s32.totalorder %s26, %s27
    %p41 = scmp.eq.s32.totalorder %s19, 1
    %p42 = por %p40, %p41
    %p44 = scmp.ne.s32.totalorder %s27, %s43
    %p45 = scmp.eq.s32.totalorder %s19, 0
    %p46 = por %p44, %p45
    %s48 = sadd.s32 %s47, 1
    %p51 = scmp.eq.s32.totalorder %s13, 1
    %p52 = scmp.ne.s32.totalorder %s47, %s49
    %p53 = scmp.eq.s32.totalorder %s13, 0
    %p54 = por %p52, %p53
    %p55 = scmp.ne.s32.totalorder %s47, %s49
    %p56 = scmp.eq.s32.totalorder %s18, 1
    %p57 = por %p55, %p56
    %p58 = scmp.ne.s32.totalorder %s49, %s50
    %p59 = scmp.eq.s32.totalorder %s18, 0
    %p60 = por %p58, %p59
    %p61 = scmp.ne.s32.totalorder %s49, %s50
    %p62 = scmp.eq.s32.totalorder %s19, 1
    %p63 = por %p61, %p62
    %p65 = scmp.ne.s32.totalorder %s50, %s64
    %p66 = scmp.eq.s32.totalorder %s19, 0
    %p67 = por %p65, %p66
    %s69 = sadd.s32 %s68, 1
    %p72 = scmp.eq.s32.totalorder %s13, 1
    %p73 = scmp.ne.s32.totalorder %s68, %s70
    %p74 = scmp.eq.s32.totalorder %s13, 0
    %p75 = por %p73, %p74
    %p76 = scmp.ne.s32.totalorder %s68, %s70
    %p77 = scmp.eq.s32.totalorder %s18, 1
    %p78 = por %p76, %p77
    %p79 = scmp.ne.s32.totalorder %s70, %s71
    %p80 = scmp.eq.s32.totalorder %s18, 0
    %p81 = por %p79, %p80
    %p82 = scmp.ne.s32.totalorder %s70, %s71
    %p83 = scmp.eq.s32.totalorder %s19, 1
    %p84 = por %p82, %p83
    %p86 = scmp.ne.s32.totalorder %s71, %s85
    %p87 = scmp.eq.s32.totalorder %s19, 0
    %p88 = por %p86, %p87
    %s90 = sadd.s32 %s89, 1
    %p93 = scmp.eq.s32.totalorder %s13, 1
    %p94 = scmp.ne.s32.totalorder %s89, %s91
    %p95 = scmp.eq.s32.totalorder %s13, 0
    %p96 = por %p94, %p95
    %p97 = scmp.ne.s32.totalorder %s89, %s91
    %p98 = scmp.eq.s32.totalorder %s18, 1
    %p99 = por %p97, %p98
    %p100 = scmp.ne.s32.totalorder %s91, %s92
    %p101 = scmp.eq.s32.totalorder %s18, 0
    %p102 = por %p100, %p101
    %p103 = scmp.ne.s32.totalorder %s91, %s92
    %p104 = scmp.eq.s32.totalorder %s19, 1
    %p105 = por %p103, %p104
    %p107 = scmp.ne.s32.totalorder %s92, %s106
    %p108 = scmp.eq.s32.totalorder %s19, 0
    %p109 = por %p107, %p108
    %s110 = ssub.s32 %s13, %s20
    %p111 = scmp.eq.s32.totalorder %s110, 0
    %s113 = sadd.s32 %s112, 1
    %s114 = scalar_select %p111, %s112, %s113
    %p117 = pneg %p111
    %p118 = scmp.eq.s32.totalorder %s13, 1
    %p119 = por %p117, %p118
    %p120 = scmp.ne.s32.totalorder %s112, %s115
    %p121 = scmp.eq.s32.totalorder %s13, 0
    %p122 = por %p120, %p121
    %p123 = scmp.ne.s32.totalorder %s112, %s115
    %p124 = scmp.eq.s32.totalorder %s18, 1
    %p125 = por %p123, %p124
    %p126 = scmp.ne.s32.totalorder %s115, %s116
    %p127 = scmp.eq.s32.totalorder %s18, 0
    %p128 = por %p126, %p127
    %p129 = scmp.ne.s32.totalorder %s115, %s116
    %p130 = scmp.eq.s32.totalorder %s19, 1
    %p131 = por %p129, %p130
    %p133 = scmp.ne.s32.totalorder %s116, %s132
    %p134 = scmp.eq.s32.totalorder %s19, 0
    %p135 = por %p133, %p134
    %s136 = ssub.s32 %s13, %s20
    %p137 = scmp.eq.s32.totalorder %s136, 0
    %s139 = sadd.s32 %s138, 1
    %s140 = scalar_select %p137, %s138, %s139
    %p143 = pneg %p137
    %p144 = scmp.eq.s32.totalorder %s13, 1
    %p145 = por %p143, %p144
    %p146 = scmp.ne.s32.totalorder %s138, %s141
    %p147 = scmp.eq.s32.totalorder %s13, 0
    %p148 = por %p146, %p147
    %p149 = scmp.ne.s32.totalorder %s138, %s141
    %p150 = scmp.eq.s32.totalorder %s18, 1
    %p151 = por %p149, %p150
    %p152 = scmp.ne.s32.totalorder %s141, %s142
    %p153 = scmp.eq.s32.totalorder %s18, 0
    %p154 = por %p152, %p153
    %p155 = scmp.ne.s32.totalorder %s141, %s142
    %p156 = scmp.eq.s32.totalorder %s19, 1
    %p157 = por %p155, %p156
    %p159 = scmp.ne.s32.totalorder %s142, %s158
    %p160 = scmp.eq.s32.totalorder %s19, 0
    %p161 = por %p159, %p160
    %s162 = ssub.s32 %s13, %s20
    %p163 = scmp.eq.s32.totalorder %s162, 0
    %s165 = sadd.s32 %s164, 1
    %s166 = scalar_select %p163, %s164, %s165
    %p169 = pneg %p163
    %p170 = scmp.eq.s32.totalorder %s13, 1
    %p171 = por %p169, %p170
    %p172 = scmp.ne.s32.totalorder %s164, %s167
    %p173 = scmp.eq.s32.totalorder %s13, 0
    %p174 = por %p172, %p173
    %p175 = scmp.ne.s32.totalorder %s164, %s167
    %p176 = scmp.eq.s32.totalorder %s18, 1
    %p177 = por %p175, %p176
    %p178 = scmp.ne.s32.totalorder %s167, %s168
    %p179 = scmp.eq.s32.totalorder %s18, 0
    %p180 = por %p178, %p179
    %p181 = scmp.ne.s32.totalorder %s167, %s168
    %p182 = scmp.eq.s32.totalorder %s19, 1
    %p183 = por %p181, %p182
    %p185 = scmp.ne.s32.totalorder %s168, %s184
    %p186 = scmp.eq.s32.totalorder %s19, 0
    %p187 = por %p185, %p186
    %p188 = scmp.le.s32.totalorder 1, %s13
    %p189 = scmp.lt.s32.totalorder %s13, 3
    %p190 = pnand %p188, %p189
    %p191 = pneg %p190
    // Predicated region
    $region9: #{_farkas_conv_fwd.2} parent=5 // pred_check
      _
    $region10: #{_farkas_conv_fwd.2} parent=5 // pred_check_branch
      %193 = sbr.rel (%p190) target = $region12
    $region11: #{_farkas_conv_fwd.2} parent=5 // pred_region
      %s194 = ssub.s32 %s13, 1
      // Predicated region
      $region13: #{_farkas_conv_fwd.2} parent=11 // pred_check
        %p195 = pneg %p60
      $region14: #{_farkas_conv_fwd.2} parent=11 // pred_check_branch
        %197 = sbr.rel (%p195) target = $region16
      $region15: #{_farkas_conv_fwd.2} parent=11 // pred_region
        _
      $region16: #{_farkas_conv_fwd.2} parent=11 // pred_fallthru
        _
      // Predicated region
      $region17: #{_farkas_conv_fwd.2} parent=11 // pred_check
        %p198 = pneg %p81
      $region18: #{_farkas_conv_fwd.2} parent=11 // pred_check_branch
        %200 = sbr.rel (%p198) target = $region20
      $region19: #{_farkas_conv_fwd.2} parent=11 // pred_region
        _
      $region20: #{_farkas_conv_fwd.2} parent=11 // pred_fallthru
        _
      // Predicated region
      $region21: #{_farkas_conv_fwd.2} parent=11 // pred_check
        %p201 = pneg %p102
      $region22: #{_farkas_conv_fwd.2} parent=11 // pred_check_branch
        %203 = sbr.rel (%p201) target = $region24
      $region23: #{_farkas_conv_fwd.2} parent=11 // pred_region
        _
      $region24: #{_farkas_conv_fwd.2} parent=11 // pred_fallthru
        _
    $region12: #{_farkas_conv_fwd.2} parent=5 // pred_fallthru
      _
    %p204 = scmp.lt.s32.totalorder %s13, 2
    // Predicated region
    $region25: #{_farkas_conv_fwd.2} parent=5 // pred_check
      %p205 = pneg %p204
    $region26: #{_farkas_conv_fwd.2} parent=5 // pred_check_branch
      %207 = sbr.rel (%p205) target = $region28
    $region27: #{_farkas_conv_fwd.2} parent=5 // pred_region
      // Predicated region
      $region29: #{_farkas_conv_fwd.2} parent=27 // pred_check
        %p208 = pneg %p33
      $region30: #{_farkas_conv_fwd.2} parent=27 // pred_check_branch
        %210 = sbr.rel (%p208) target = $region32
      $region31: #{_farkas_conv_fwd.2} parent=27 // pred_region
        %p211 = scmp.lt.s32.totalorder %s13, 1
        %s212 = scalar_select %p211, %s13, 1
        %s213 = smul.addr %s212, 4
        %s214 = smul.addr %s213, 4
        %s215 = scalar_lea.vmem %s0, %s214
      $region32: #{_farkas_conv_fwd.2} parent=27 // pred_fallthru
        _
    $region28: #{_farkas_conv_fwd.2} parent=5 // pred_fallthru
      _
    %p216 = scmp.le.s32.totalorder 1, %s13
    %p217 = scmp.lt.s32.totalorder %s13, 3
    %p218 = pnand %p216, %p217
    %p219 = pneg %p218
    // Predicated region
    $region33: #{_farkas_conv_fwd.2} parent=5 // pred_check
      _
    $region34: #{_farkas_conv_fwd.2} parent=5 // pred_check_branch
      %221 = sbr.rel (%p218) target = $region36
    $region35: #{_farkas_conv_fwd.2} parent=5 // pred_region
      %s222 = ssub.s32 %s13, 1
      %p223 = scmp.lt.s32.totalorder %s18, 1
      %s224 = scalar_select %p223, %s18, 1
      %s225 = smul.addr %s224, 4
      %s226 = smul.addr %s225, 4
      %s227 = scalar_lea.vmem %s0, %s226
      %p228 = pneg %p39
      %p229 = pneg %p36
      %p230 = pneg %p60
      %p231 = pneg %p57
      %p232 = pneg %p81
      %p233 = pneg %p78
      %p234 = pneg %p102
      %p235 = pneg %p99
      %p236 = pneg %p128
      %p237 = pneg %p125
      %p238 = scmp.lt.s32.totalorder %s18, 1
      %s239 = scalar_select %p238, %s18, 1
      %s240 = smul.addr %s239, 3
      %s241 = smul.addr %s240, 8
      %s242 = scalar_lea.vmem %s4, %s241
      %p243 = pneg %p154
      %p244 = pneg %p151
      %p245 = scmp.lt.s32.totalorder %s18, 1
      %s246 = scalar_select %p245, %s18, 1
      %s247 = smul.addr %s246, 8
      %s248 = scalar_lea.vmem %s5, %s247
      %p249 = pneg %p180
      %p250 = pneg %p177
      %p251 = scmp.lt.s32.totalorder %s18, 1
      %s252 = scalar_select %p251, %s18, 1
      %s253 = smul.addr %s252, 8
      %s254 = scalar_lea.vmem %s6, %s253
      %p255 = scmp.lt.s32.totalorder %s18, 1
      %s256 = scalar_select %p255, %s18, 1
      %s257 = smul.addr %s256, 4
      %s258 = smul.addr %s257, 4
      %s259 = scalar_lea.vmem %s0, %s258
      %p260 = scmp.lt.s32.totalorder %s18, 1
      %s261 = scalar_select %p260, %s18, 1
      %s262 = smul.addr %s261, 3
      %s263 = smul.addr %s262, 8
      %s264 = scalar_lea.vmem %s4, %s263
      %p265 = scmp.lt.s32.totalorder %s18, 1
      %s266 = scalar_select %p265, %s18, 1
      %s267 = smul.addr %s266, 8
      %s268 = scalar_lea.vmem %s5, %s267
      %p269 = scmp.lt.s32.totalorder %s18, 1
      %s270 = scalar_select %p269, %s18, 1
      %s271 = smul.addr %s270, 8
      %s272 = scalar_lea.vmem %s6, %s271
      %v273 = vld [vmem:[%s1] sm:$0xff]
      %v274 = vld [vmem:[%s259] sm:$0xff]
      %v275 = vld [vmem:[%s259 + $0x8] sm:$0xf]
      %s276 = scalar_lea.vmem %s1, 8
      %v277 = vld [vmem:[%s276] sm:$0xff]
      %v278 = vld [vmem:[%s259] sm:$0xff]
      %v279 = vld [vmem:[%s259 + $0x8] sm:$0xff]
      %v282 = vcombine.high %v278, %v278
      %v283 = vcombine.high %v279, %v279
      %284 = vrot.lane.b32.xlu0 %v278, 127
      %v285 = vpop.permute.xlu0 %284
      %286 = vrot.lane.b32.xlu0 %v282, 127
      %v287 = vpop.permute.xlu0 %286
      %288 = vrot.lane.b32.xlu0 %v279, 127
      %v289 = vpop.permute.xlu0 %288
      %290 = vrot.lane.b32.xlu0 %v283, 127
      %v291 = vpop.permute.xlu0 %290
      %vm292 = vcmask 1039360
      %v293 = vsel %vm292, %v285, %v287
      %v294 = vsel %vm292, %v287, %v289
      %v295 = vsel %vm292, %v289, %v291
      %vm296 = vcmask 31744
      %v298 = vsel %vm296, %v277, 0
      %vm300 = vcmask 1043456
      %v301 = vsel %vm300, %v293, 0
      %v303 = vsel %vm300, %v294, 0
      %v305 = vsel %vm300, %v295, 0
      %v307 = vand.u32 %v303, 4294901760
      %308 = vmatprep.subr.mxu0 %v307
      %v309 = vand.u32 %v301, 4294901760
      %310 = vmatpush1.msra.mxu0 %v309
      %311 = vmatprep.subr.mxu0 0.0
      %312 = vmatpush1.msra.mxu0 0.0
      %313 = vmatprep.subr.mxu0 0.0
      %314 = vmatpush1.msra.mxu0 0.0
      %315 = vmatprep.subr.mxu0 0.0
      %316 = vmatpush1.msra.mxu0 0.0
      %317 = vmatprep.subr.mxu0 0.0
      %318 = vmatpush1.msra.mxu0 0.0
      %319 = vmatprep.subr.mxu0 0.0
      %320 = vmatpush1.msra.mxu0 0.0
      %321 = vmatprep.subr.mxu0 0.0
      %322 = vmatpush1.msra.mxu0 0.0
      %323 = vmatprep.subr.mxu0 0.0
      %324 = vmatpush1.msra.mxu0 0.0
      %325 = vmatprep.subr.mxu0 0.0
      %326 = vmatpush1.msra.mxu0 0.0
      %327 = vmatprep.subr.mxu0 0.0
      %328 = vmatpush1.msra.mxu0 0.0
      %329 = vmatprep.subr.mxu0 0.0
      %330 = vmatpush1.msra.mxu0 0.0
      %331 = vmatprep.subr.mxu0 0.0
      %332 = vmatpush1.msra.mxu0 0.0
      %333 = vmatprep.subr.mxu0 0.0
      %334 = vmatpush1.msra.mxu0 0.0
      %335 = vmatprep.subr.mxu0 0.0
      %336 = vmatpush1.msra.mxu0 0.0
      %337 = vmatprep.subr.mxu0 0.0
      %338 = vmatpush1.msra.mxu0 0.0
      %339 = vmatprep.subr.mxu0 0.0
      %340 = vmatpush1.msra.mxu0 0.0
      %341 = vmatprep.subr.mxu0 0.0
      %342 = vmatpush1.msra.mxu0 0.0
      %343 = vmatprep.subr.mxu0 0.0
      %344 = vmatpush1.msra.mxu0 0.0
      %345 = vmatprep.subr.mxu0 0.0
      %346 = vmatpush1.msra.mxu0 0.0
      %347 = vmatprep.subr.mxu0 0.0
      %348 = vmatpush1.msra.mxu0 0.0
      %349 = vmatprep.subr.mxu0 0.0
      %350 = vmatpush1.msra.mxu0 0.0
      %351 = vmatprep.subr.mxu0 0.0
      %352 = vmatpush1.msra.mxu0 0.0
      %353 = vmatprep.subr.mxu0 0.0
      %354 = vmatpush1.msra.mxu0 0.0
      %355 = vmatprep.subr.mxu0 0.0
      %356 = vmatpush1.msra.mxu0 0.0
      %357 = vmatprep.subr.mxu0 0.0
      %358 = vmatpush1.msra.mxu0 0.0
      %359 = vmatprep.subr.mxu0 0.0
      %360 = vmatpush1.msra.mxu0 0.0
      %361 = vmatprep.subr.mxu0 0.0
      %362 = vmatpush1.msra.mxu0 0.0
      %363 = vmatprep.subr.mxu0 0.0
      %364 = vmatpush1.msra.mxu0 0.0
      %365 = vmatprep.subr.mxu0 0.0
      %366 = vmatpush1.msra.mxu0 0.0
      %367 = vmatprep.subr.mxu0 0.0
      %368 = vmatpush1.msra.mxu0 0.0
      %369 = vmatprep.subr.mxu0 0.0
      %370 = vmatpush1.msra.mxu0 0.0
      %371 = vmatprep.subr.mxu0 0.0
      %372 = vmatpush1.msra.mxu0 0.0
      %373 = vmatprep.mubr.f32.mxu0 0.0
      %v374 = vand.u32 %v298, 4294901760
      %v375 = vsub.f32 %v298, %v374
      %v376 = vand.u32 %v375, 4294901760
      %v377 = vsub.f32 %v375, %v376
      %v378 = vand.u32 %v377, 4294901760
      %379 = vmatmul.mubr.f32.gmra.mrb[0].mxu0 %v378
      %v380 = vpop.f32.mrb[0].mxu0
      %v381 = vadd.f32 0.0, %v380
      %v382 = vpop.f32.mrb[0].mxu0
      %v383 = vadd.f32 0.0, %v382
      %384 = vdwg.mxu0
      %v385 = vand.u32 %v303, 4294901760
      %v386 = vsub.f32 %v303, %v385
      %v387 = vand.u32 %v386, 4294901760
      %v388 = vsub.f32 %v386, %v387
      %v389 = vand.u32 %v388, 4294901760
      %390 = vmatprep.subr.mxu0 %v389
      %v391 = vand.u32 %v301, 4294901760
      %v392 = vsub.f32 %v301, %v391
      %v393 = vand.u32 %v392, 4294901760
      %v394 = vsub.f32 %v392, %v393
      %v395 = vand.u32 %v394, 4294901760
      %396 = vmatpush1.msra.mxu0 %v395
      %397 = vmatprep.subr.mxu0 0.0
      %398 = vmatpush1.msra.mxu0 0.0
      %399 = vmatprep.subr.mxu0 0.0
      %400 = vmatpush1.msra.mxu0 0.0
      %401 = vmatprep.subr.mxu0 0.0
      %402 = vmatpush1.msra.mxu0 0.0
      %403 = vmatprep.subr.mxu0 0.0
      %404 = vmatpush1.msra.mxu0 0.0
      %405 = vmatprep.subr.mxu0 0.0
      %406 = vmatpush1.msra.mxu0 0.0
      %407 = vmatprep.subr.mxu0 0.0
      %408 = vmatpush1.msra.mxu0 0.0
      %409 = vmatprep.subr.mxu0 0.0
      %410 = vmatpush1.msra.mxu0 0.0
      %411 = vmatprep.subr.mxu0 0.0
      %412 = vmatpush1.msra.mxu0 0.0
      %413 = vmatprep.subr.mxu0 0.0
      %414 = vmatpush1.msra.mxu0 0.0
      %415 = vmatprep.subr.mxu0 0.0
      %416 = vmatpush1.msra.mxu0 0.0
      %417 = vmatprep.subr.mxu0 0.0
      %418 = vmatpush1.msra.mxu0 0.0
      %419 = vmatprep.subr.mxu0 0.0
      %420 = vmatpush1.msra.mxu0 0.0
      %421 = vmatprep.subr.mxu0 0.0
      %422 = vmatpush1.msra.mxu0 0.0
      %423 = vmatprep.subr.mxu0 0.0
      %424 = vmatpush1.msra.mxu0 0.0
      %425 = vmatprep.subr.mxu0 0.0
      %426 = vmatpush1.msra.mxu0 0.0
      %427 = vmatprep.subr.mxu0 0.0
      %428 = vmatpush1.msra.mxu0 0.0
      %429 = vmatprep.subr.mxu0 0.0
      %430 = vmatpush1.msra.mxu0 0.0
      %431 = vmatprep.subr.mxu0 0.0
      %432 = vmatpush1.msra.mxu0 0.0
      %433 = vmatprep.subr.mxu0 0.0
      %434 = vmatpush1.msra.mxu0 0.0
      %435 = vmatprep.subr.mxu0 0.0
      %436 = vmatpush1.msra.mxu0 0.0
      %437 = vmatprep.subr.mxu0 0.0
      %438 = vmatpush1.msra.mxu0 0.0
      %439 = vmatprep.subr.mxu0 0.0
      %440 = vmatpush1.msra.mxu0 0.0
      %441 = vmatprep.subr.mxu0 0.0
      %442 = vmatpush1.msra.mxu0 0.0
      %443 = vmatprep.subr.mxu0 0.0
      %444 = vmatpush1.msra.mxu0 0.0
      %445 = vmatprep.subr.mxu0 0.0
      %446 = vmatpush1.msra.mxu0 0.0
      %447 = vmatprep.subr.mxu0 0.0
      %448 = vmatpush1.msra.mxu0 0.0
      %449 = vmatprep.subr.mxu0 0.0
      %450 = vmatpush1.msra.mxu0 0.0
      %451 = vmatprep.subr.mxu0 0.0
      %452 = vmatpush1.msra.mxu0 0.0
      %453 = vmatprep.subr.mxu0 0.0
      %454 = vmatpush1.msra.mxu0 0.0
      %455 = vmatprep.subr.mxu0 0.0
      %456 = vmatpush1.msra.mxu0 0.0
      %457 = vmatprep.subr.mxu0 0.0
      %458 = vmatpush1.msra.mxu0 0.0
      %459 = vmatprep.mubr.f32.mxu0 0.0
      %v460 = vand.u32 %v298, 4294901760
      %461 = vmatmul.mubr.f32.gmra.mrb[0].mxu0 %v460
      %v462 = vpop.f32.mrb[0].mxu0
      %v463 = vadd.f32 %v381, %v462
      %v464 = vpop.f32.mrb[0].mxu0
      %v465 = vadd.f32 %v383, %v464
      %466 = vdwg.mxu0
      %v467 = vand.u32 %v303, 4294901760
      %v468 = vsub.f32 %v303, %v467
      %469 = vmatprep.subr.mxu0 %v468
      %v470 = vand.u32 %v301, 4294901760
      %v471 = vsub.f32 %v301, %v470
      %472 = vmatpush1.msra.mxu0 %v471
      %473 = vmatprep.subr.mxu0 0.0
      %474 = vmatpush1.msra.mxu0 0.0
      %475 = vmatprep.subr.mxu0 0.0
      %476 = vmatpush1.msra.mxu0 0.0
      %477 = vmatprep.subr.mxu0 0.0
      %478 = vmatpush1.msra.mxu0 0.0
      %479 = vmatprep.subr.mxu0 0.0
      %480 = vmatpush1.msra.mxu0 0.0
      %481 = vmatprep.subr.mxu0 0.0
      %482 = vmatpush1.msra.mxu0 0.0
      %483 = vmatprep.subr.mxu0 0.0
      %484 = vmatpush1.msra.mxu0 0.0
      %485 = vmatprep.subr.mxu0 0.0
      %486 = vmatpush1.msra.mxu0 0.0
      %487 = vmatprep.subr.mxu0 0.0
      %488 = vmatpush1.msra.mxu0 0.0
      %489 = vmatprep.subr.mxu0 0.0
      %490 = vmatpush1.msra.mxu0 0.0
      %491 = vmatprep.subr.mxu0 0.0
      %492 = vmatpush1.msra.mxu0 0.0
      %493 = vmatprep.subr.mxu0 0.0
      %494 = vmatpush1.msra.mxu0 0.0
      %495 = vmatprep.subr.mxu0 0.0
      %496 = vmatpush1.msra.mxu0 0.0
      %497 = vmatprep.subr.mxu0 0.0
      %498 = vmatpush1.msra.mxu0 0.0
      %499 = vmatprep.subr.mxu0 0.0
      %500 = vmatpush1.msra.mxu0 0.0
      %501 = vmatprep.subr.mxu0 0.0
      %502 = vmatpush1.msra.mxu0 0.0
      %503 = vmatprep.subr.mxu0 0.0
      %504 = vmatpush1.msra.mxu0 0.0
      %505 = vmatprep.subr.mxu0 0.0
      %506 = vmatpush1.msra.mxu0 0.0
      %507 = vmatprep.subr.mxu0 0.0
      %508 = vmatpush1.msra.mxu0 0.0
      %509 = vmatprep.subr.mxu0 0.0
      %510 = vmatpush1.msra.mxu0 0.0
      %511 = vmatprep.subr.mxu0 0.0
      %512 = vmatpush1.msra.mxu0 0.0
      %513 = vmatprep.subr.mxu0 0.0
      %514 = vmatpush1.msra.mxu0 0.0
      %515 = vmatprep.subr.mxu0 0.0
      %516 = vmatpush1.msra.mxu0 0.0
      %517 = vmatprep.subr.mxu0 0.0
      %518 = vmatpush1.msra.mxu0 0.0
      %519 = vmatprep.subr.mxu0 0.0
      %520 = vmatpush1.msra.mxu0 0.0
      %521 = vmatprep.subr.mxu0 0.0
      %522 = vmatpush1.msra.mxu0 0.0
      %523 = vmatprep.subr.mxu0 0.0
      %524 = vmatpush1.msra.mxu0 0.0
      %525 = vmatprep.subr.mxu0 0.0
      %526 = vmatpush1.msra.mxu0 0.0
      %527 = vmatprep.subr.mxu0 0.0
      %528 = vmatpush1.msra.mxu0 0.0
      %529 = vmatprep.subr.mxu0 0.0
      %530 = vmatpush1.msra.mxu0 0.0
      %531 = vmatprep.subr.mxu0 0.0
      %532 = vmatpush1.msra.mxu0 0.0
      %533 = vmatprep.subr.mxu0 0.0
      %534 = vmatpush1.msra.mxu0 0.0
      %535 = vmatprep.mubr.f32.mxu0 0.0
      %v536 = vand.u32 %v298, 4294901760
      %v537 = vsub.f32 %v298, %v536
      %538 = vmatmul.mubr.f32.gmra.mrb[0].mxu0 %v537
      %v539 = vpop.f32.mrb[0].mxu0
      %v540 = vadd.f32 %v463, %v539
      %v541 = vpop.f32.mrb[0].mxu0
      %v542 = vadd.f32 %v465, %v541
      %543 = vdwg.mxu0
      %v544 = vand.u32 %v303, 4294901760
      %545 = vmatprep.subr.mxu0 %v544
      %v546 = vand.u32 %v301, 4294901760
      %547 = vmatpush1.msra.mxu0 %v546
      %548 = vmatprep.subr.mxu0 0.0
      %549 = vmatpush1.msra.mxu0 0.0
      %550 = vmatprep.subr.mxu0 0.0
      %551 = vmatpush1.msra.mxu0 0.0
      %552 = vmatprep.subr.mxu0 0.0
      %553 = vmatpush1.msra.mxu0 0.0
      %554 = vmatprep.subr.mxu0 0.0
      %555 = vmatpush1.msra.mxu0 0.0
      %556 = vmatprep.subr.mxu0 0.0
      %557 = vmatpush1.msra.mxu0 0.0
      %558 = vmatprep.subr.mxu0 0.0
      %559 = vmatpush1.msra.mxu0 0.0
      %560 = vmatprep.subr.mxu0 0.0
      %561 = vmatpush1.msra.mxu0 0.0
      %562 = vmatprep.subr.mxu0 0.0
      %563 = vmatpush1.msra.mxu0 0.0
      %564 = vmatprep.subr.mxu0 0.0
      %565 = vmatpush1.msra.mxu0 0.0
      %566 = vmatprep.subr.mxu0 0.0
      %567 = vmatpush1.msra.mxu0 0.0
      %568 = vmatprep.subr.mxu0 0.0
      %569 = vmatpush1.msra.mxu0 0.0
      %570 = vmatprep.subr.mxu0 0.0
      %571 = vmatpush1.msra.mxu0 0.0
      %572 = vmatprep.subr.mxu0 0.0
      %573 = vmatpush1.msra.mxu0 0.0
      %574 = vmatprep.subr.mxu0 0.0
      %575 = vmatpush1.msra.mxu0 0.0
      %576 = vmatprep.subr.mxu0 0.0
      %577 = vmatpush1.msra.mxu0 0.0
      %578 = vmatprep.subr.mxu0 0.0
      %579 = vmatpush1.msra.mxu0 0.0
      %580 = vmatprep.subr.mxu0 0.0
      %581 = vmatpush1.msra.mxu0 0.0
      %582 = vmatprep.subr.mxu0 0.0
      %583 = vmatpush1.msra.mxu0 0.0
      %584 = vmatprep.subr.mxu0 0.0
      %585 = vmatpush1.msra.mxu0 0.0
      %586 = vmatprep.subr.mxu0 0.0
      %587 = vmatpush1.msra.mxu0 0.0
      %588 = vmatprep.subr.mxu0 0.0
      %589 = vmatpush1.msra.mxu0 0.0
      %590 = vmatprep.subr.mxu0 0.0
      %591 = vmatpush1.msra.mxu0 0.0
      %592 = vmatprep.subr.mxu0 0.0
      %593 = vmatpush1.msra.mxu0 0.0
      %594 = vmatprep.subr.mxu0 0.0
      %595 = vmatpush1.msra.mxu0 0.0
      %596 = vmatprep.subr.mxu0 0.0
      %597 = vmatpush1.msra.mxu0 0.0
      %598 = vmatprep.subr.mxu0 0.0
      %599 = vmatpush1.msra.mxu0 0.0
      %600 = vmatprep.subr.mxu0 0.0
      %601 = vmatpush1.msra.mxu0 0.0
      %602 = vmatprep.subr.mxu0 0.0
      %603 = vmatpush1.msra.mxu0 0.0
      %604 = vmatprep.subr.mxu0 0.0
      %605 = vmatpush1.msra.mxu0 0.0
      %606 = vmatprep.subr.mxu0 0.0
      %607 = vmatpush1.msra.mxu0 0.0
      %608 = vmatprep.subr.mxu0 0.0
      %609 = vmatpush1.msra.mxu0 0.0
      %610 = vmatprep.mubr.f32.mxu0 0.0
      %v611 = vand.u32 %v298, 4294901760
      %v612 = vsub.f32 %v298, %v611
      %v613 = vand.u32 %v612, 4294901760
      %614 = vmatmul.mubr.f32.gmra.mrb[0].mxu0 %v613
      %v615 = vpop.f32.mrb[0].mxu0
      %v616 = vadd.f32 %v540, %v615
      %v617 = vpop.f32.mrb[0].mxu0
      %v618 = vadd.f32 %v542, %v617
      %619 = vdwg.mxu0
      %v620 = vand.u32 %v303, 4294901760
      %v621 = vsub.f32 %v303, %v620
      %v622 = vand.u32 %v621, 4294901760
      %623 = vmatprep.subr.mxu0 %v622
      %v624 = vand.u32 %v301, 4294901760
      %v625 = vsub.f32 %v301, %v624
      %v626 = vand.u32 %v625, 4294901760
      %627 = vmatpush1.msra.mxu0 %v626
      %628 = vmatprep.subr.mxu0 0.0
      %629 = vmatpush1.msra.mxu0 0.0
      %630 = vmatprep.subr.mxu0 0.0
      %631 = vmatpush1.msra.mxu0 0.0
      %632 = vmatprep.subr.mxu0 0.0
      %633 = vmatpush1.msra.mxu0 0.0
      %634 = vmatprep.subr.mxu0 0.0
      %635 = vmatpush1.msra.mxu0 0.0
      %636 = vmatprep.subr.mxu0 0.0
      %637 = vmatpush1.msra.mxu0 0.0
      %638 = vmatprep.subr.mxu0 0.0
      %639 = vmatpush1.msra.mxu0 0.0
      %640 = vmatprep.subr.mxu0 0.0
      %641 = vmatpush1.msra.mxu0 0.0
      %642 = vmatprep.subr.mxu0 0.0
      %643 = vmatpush1.msra.mxu0 0.0
      %644 = vmatprep.subr.mxu0 0.0
      %645 = vmatpush1.msra.mxu0 0.0
      %646 = vmatprep.subr.mxu0 0.0
      %647 = vmatpush1.msra.mxu0 0.0
      %648 = vmatprep.subr.mxu0 0.0
      %649 = vmatpush1.msra.mxu0 0.0
      %650 = vmatprep.subr.mxu0 0.0
      %651 = vmatpush1.msra.mxu0 0.0
      %652 = vmatprep.subr.mxu0 0.0
      %653 = vmatpush1.msra.mxu0 0.0
      %654 = vmatprep.subr.mxu0 0.0
      %655 = vmatpush1.msra.mxu0 0.0
      %656 = vmatprep.subr.mxu0 0.0
      %657 = vmatpush1.msra.mxu0 0.0
      %658 = vmatprep.subr.mxu0 0.0
      %659 = vmatpush1.msra.mxu0 0.0
      %660 = vmatprep.subr.mxu0 0.0
      %661 = vmatpush1.msra.mxu0 0.0
      %662 = vmatprep.subr.mxu0 0.0
      %663 = vmatpush1.msra.mxu0 0.0
      %664 = vmatprep.subr.mxu0 0.0
      %665 = vmatpush1.msra.mxu0 0.0
      %666 = vmatprep.subr.mxu0 0.0
      %667 = vmatpush1.msra.mxu0 0.0
      %668 = vmatprep.subr.mxu0 0.0
      %669 = vmatpush1.msra.mxu0 0.0
      %670 = vmatprep.subr.mxu0 0.0
      %671 = vmatpush1.msra.mxu0 0.0
      %672 = vmatprep.subr.mxu0 0.0
      %673 = vmatpush1.msra.mxu0 0.0
      %674 = vmatprep.subr.mxu0 0.0
      %675 = vmatpush1.msra.mxu0 0.0
      %676 = vmatprep.subr.mxu0 0.0
      %677 = vmatpush1.msra.mxu0 0.0
      %678 = vmatprep.subr.mxu0 0.0
      %679 = vmatpush1.msra.mxu0 0.0
      %680 = vmatprep.subr.mxu0 0.0
      %681 = vmatpush1.msra.mxu0 0.0
      %682 = vmatprep.subr.mxu0 0.0
      %683 = vmatpush1.msra.mxu0 0.0
      %684 = vmatprep.subr.mxu0 0.0
      %685 = vmatpush1.msra.mxu0 0.0
      %686 = vmatprep.subr.mxu0 0.0
      %687 = vmatpush1.msra.mxu0 0.0
      %688 = vmatprep.subr.mxu0 0.0
      %689 = vmatpush1.msra.mxu0 0.0
      %690 = vmatprep.mubr.f32.mxu0 0.0
      %v691 = vand.u32 %v298, 4294901760
      %692 = vmatmul.mubr.f32.gmra.mrb[0].mxu0 %v691
      %v693 = vpop.f32.mrb[0].mxu0
      %v694 = vadd.f32 %v616, %v693
      %v695 = vpop.f32.mrb[0].mxu0
      %v696 = vadd.f32 %v618, %v695
      %697 = vdwg.mxu0
      %v698 = vand.u32 %v303, 4294901760
      %699 = vmatprep.subr.mxu0 %v698
      %v700 = vand.u32 %v301, 4294901760
      %701 = vmatpush1.msra.mxu0 %v700
      %702 = vmatprep.subr.mxu0 0.0
      %703 = vmatpush1.msra.mxu0 0.0
      %704 = vmatprep.subr.mxu0 0.0
      %705 = vmatpush1.msra.mxu0 0.0
      %706 = vmatprep.subr.mxu0 0.0
      %707 = vmatpush1.msra.mxu0 0.0
      %708 = vmatprep.subr.mxu0 0.0
      %709 = vmatpush1.msra.mxu0 0.0
      %710 = vmatprep.subr.mxu0 0.0
      %711 = vmatpush1.msra.mxu0 0.0
      %712 = vmatprep.subr.mxu0 0.0
      %713 = vmatpush1.msra.mxu0 0.0
      %714 = vmatprep.subr.mxu0 0.0
      %715 = vmatpush1.msra.mxu0 0.0
      %716 = vmatprep.subr.mxu0 0.0
      %717 = vmatpush1.msra.mxu0 0.0
      %718 = vmatprep.subr.mxu0 0.0
      %719 = vmatpush1.msra.mxu0 0.0
      %720 = vmatprep.subr.mxu0 0.0
      %721 = vmatpush1.msra.mxu0 0.0
      %722 = vmatprep.subr.mxu0 0.0
      %723 = vmatpush1.msra.mxu0 0.0
      %724 = vmatprep.subr.mxu0 0.0
      %725 = vmatpush1.msra.mxu0 0.0
      %726 = vmatprep.subr.mxu0 0.0
      %727 = vmatpush1.msra.mxu0 0.0
      %728 = vmatprep.subr.mxu0 0.0
      %729 = vmatpush1.msra.mxu0 0.0
      %730 = vmatprep.subr.mxu0 0.0
      %731 = vmatpush1.msra.mxu0 0.0
      %732 = vmatprep.subr.mxu0 0.0
      %733 = vmatpush1.msra.mxu0 0.0
      %734 = vmatprep.subr.mxu0 0.0
      %735 = vmatpush1.msra.mxu0 0.0
      %736 = vmatprep.subr.mxu0 0.0
      %737 = vmatpush1.msra.mxu0 0.0
      %738 = vmatprep.subr.mxu0 0.0
      %739 = vmatpush1.msra.mxu0 0.0
      %740 = vmatprep.subr.mxu0 0.0
      %741 = vmatpush1.msra.mxu0 0.0
      %742 = vmatprep.subr.mxu0 0.0
      %743 = vmatpush1.msra.mxu0 0.0
      %744 = vmatprep.subr.mxu0 0.0
      %745 = vmatpush1.msra.mxu0 0.0
      %746 = vmatprep.subr.mxu0 0.0
      %747 = vmatpush1.msra.mxu0 0.0
      %748 = vmatprep.subr.mxu0 0.0
      %749 = vmatpush1.msra.mxu0 0.0
      %750 = vmatprep.subr.mxu0 0.0
      %751 = vmatpush1.msra.mxu0 0.0
      %752 = vmatprep.subr.mxu0 0.0
      %753 = vmatpush1.msra.mxu0 0.0
      %754 = vmatprep.subr.mxu0 0.0
      %755 = vmatpush1.msra.mxu0 0.0
      %756 = vmatprep.subr.mxu0 0.0
      %757 = vmatpush1.msra.mxu0 0.0
      %758 = vmatprep.subr.mxu0 0.0
      %759 = vmatpush1.msra.mxu0 0.0
      %760 = vmatprep.subr.mxu0 0.0
      %761 = vmatpush1.msra.mxu0 0.0
      %762 = vmatprep.subr.mxu0 0.0
      %763 = vmatpush1.msra.mxu0 0.0
      %764 = vmatprep.mubr.f32.mxu0 0.0
      %v765 = vand.u32 %v298, 4294901760
      %766 = vmatmul.mubr.f32.gmra.mrb[0].mxu0 %v765
      %v767 = vpop.f32.mrb[0].mxu0
      %v768 = vadd.f32 %v694, %v767
      %v769 = vpop.f32.mrb[0].mxu0
      %v770 = vadd.f32 %v696, %v769
      %771 = vdwg.mxu0
      %772 = vmatprep.subr.mxu0 0.0
      %v773 = vand.u32 %v305, 4294901760
      %774 = vmatpush1.msra.mxu0 %v773
      %775 = vmatprep.subr.mxu0 0.0
      %776 = vmatpush1.msra.mxu0 0.0
      %777 = vmatprep.subr.mxu0 0.0
      %778 = vmatpush1.msra.mxu0 0.0
      %779 = vmatprep.subr.mxu0 0.0
      %780 = vmatpush1.msra.mxu0 0.0
      %781 = vmatprep.subr.mxu0 0.0
      %782 = vmatpush1.msra.mxu0 0.0
      %783 = vmatprep.subr.mxu0 0.0
      %784 = vmatpush1.msra.mxu0 0.0
      %785 = vmatprep.subr.mxu0 0.0
      %786 = vmatpush1.msra.mxu0 0.0
      %787 = vmatprep.subr.mxu0 0.0
      %788 = vmatpush1.msra.mxu0 0.0
      %789 = vmatprep.subr.mxu0 0.0
      %790 = vmatpush1.msra.mxu0 0.0
      %791 = vmatprep.subr.mxu0 0.0
      %792 = vmatpush1.msra.mxu0 0.0
      %793 = vmatprep.subr.mxu0 0.0
      %794 = vmatpush1.msra.mxu0 0.0
      %795 = vmatprep.subr.mxu0 0.0
      %796 = vmatpush1.msra.mxu0 0.0
      %797 = vmatprep.subr.mxu0 0.0
      %798 = vmatpush1.msra.mxu0 0.0
      %799 = vmatprep.subr.mxu0 0.0
      %800 = vmatpush1.msra.mxu0 0.0
      %801 = vmatprep.subr.mxu0 0.0
      %802 = vmatpush1.msra.mxu0 0.0
      %803 = vmatprep.subr.mxu0 0.0
      %804 = vmatpush1.msra.mxu0 0.0
      %805 = vmatprep.subr.mxu0 0.0
      %806 = vmatpush1.msra.mxu0 0.0
      %807 = vmatprep.subr.mxu0 0.0
      %808 = vmatpush1.msra.mxu0 0.0
      %809 = vmatprep.subr.mxu0 0.0
      %810 = vmatpush1.msra.mxu0 0.0
      %811 = vmatprep.subr.mxu0 0.0
      %812 = vmatpush1.msra.mxu0 0.0
      %813 = vmatprep.subr.mxu0 0.0
      %814 = vmatpush1.msra.mxu0 0.0
      %815 = vmatprep.subr.mxu0 0.0
      %816 = vmatpush1.msra.mxu0 0.0
      %817 = vmatprep.subr.mxu0 0.0
      %818 = vmatpush1.msra.mxu0 0.0
      %819 = vmatprep.subr.mxu0 0.0
      %820 = vmatpush1.msra.mxu0 0.0
      %821 = vmatprep.subr.mxu0 0.0
      %822 = vmatpush1.msra.mxu0 0.0
      %823 = vmatprep.subr.mxu0 0.0
      %824 = vmatpush1.msra.mxu0 0.0
      %825 = vmatprep.subr.mxu0 0.0
      %826 = vmatpush1.msra.mxu0 0.0
      %827 = vmatprep.subr.mxu0 0.0
      %828 = vmatpush1.msra.mxu0 0.0
      %829 = vmatprep.subr.mxu0 0.0
      %830 = vmatpush1.msra.mxu0 0.0
      %831 = vmatprep.subr.mxu0 0.0
      %832 = vmatpush1.msra.mxu0 0.0
      %833 = vmatprep.subr.mxu0 0.0
      %834 = vmatpush1.msra.mxu0 0.0
      %835 = vmatprep.subr.mxu0 0.0
      %836 = vmatpush1.msra.mxu0 0.0
      %837 = vmatprep.mubr.f32.mxu0 0.0
      %v838 = vand.u32 %v298, 4294901760
      %v839 = vsub.f32 %v298, %v838
      %v840 = vand.u32 %v839, 4294901760
      %v841 = vsub.f32 %v839, %v840
      %v842 = vand.u32 %v841, 4294901760
      %843 = vmatmul.mubr.f32.gmra.mrb[0].mxu0 %v842
      %v844 = vpop.f32.mrb[0].mxu0
      %v845 = vadd.f32 0.0, %v844
      %v846 = vpop.f32.mrb[0].mxu0
      %847 = vdwg.mxu0
      %848 = vmatprep.subr.mxu0 0.0
      %v849 = vand.u32 %v305, 4294901760
      %v850 = vsub.f32 %v305, %v849
      %v851 = vand.u32 %v850, 4294901760
      %v852 = vsub.f32 %v850, %v851
      %v853 = vand.u32 %v852, 4294901760
      %854 = vmatpush1.msra.mxu0 %v853
      %855 = vmatprep.subr.mxu0 0.0
      %856 = vmatpush1.msra.mxu0 0.0
      %857 = vmatprep.subr.mxu0 0.0
      %858 = vmatpush1.msra.mxu0 0.0
      %859 = vmatprep.subr.mxu0 0.0
      %860 = vmatpush1.msra.mxu0 0.0
      %861 = vmatprep.subr.mxu0 0.0
      %862 = vmatpush1.msra.mxu0 0.0
      %863 = vmatprep.subr.mxu0 0.0
      %864 = vmatpush1.msra.mxu0 0.0
      %865 = vmatprep.subr.mxu0 0.0
      %866 = vmatpush1.msra.mxu0 0.0
      %867 = vmatprep.subr.mxu0 0.0
      %868 = vmatpush1.msra.mxu0 0.0
      %869 = vmatprep.subr.mxu0 0.0
      %870 = vmatpush1.msra.mxu0 0.0
      %871 = vmatprep.subr.mxu0 0.0
      %872 = vmatpush1.msra.mxu0 0.0
      %873 = vmatprep.subr.mxu0 0.0
      %874 = vmatpush1.msra.mxu0 0.0
      %875 = vmatprep.subr.mxu0 0.0
      %876 = vmatpush1.msra.mxu0 0.0
      %877 = vmatprep.subr.mxu0 0.0
      %878 = vmatpush1.msra.mxu0 0.0
      %879 = vmatprep.subr.mxu0 0.0
      %880 = vmatpush1.msra.mxu0 0.0
      %881 = vmatprep.subr.mxu0 0.0
      %882 = vmatpush1.msra.mxu0 0.0
      %883 = vmatprep.subr.mxu0 0.0
      %884 = vmatpush1.msra.mxu0 0.0
      %885 = vmatprep.subr.mxu0 0.0
      %886 = vmatpush1.msra.mxu0 0.0
      %887 = vmatprep.subr.mxu0 0.0
      %888 = vmatpush1.msra.mxu0 0.0
      %889 = vmatprep.subr.mxu0 0.0
      %890 = vmatpush1.msra.mxu0 0.0
      %891 = vmatprep.subr.mxu0 0.0
      %892 = vmatpush1.msra.mxu0 0.0
      %893 = vmatprep.subr.mxu0 0.0
      %894 = vmatpush1.msra.mxu0 0.0
      %895 = vmatprep.subr.mxu0 0.0
      %896 = vmatpush1.msra.mxu0 0.0
      %897 = vmatprep.subr.mxu0 0.0
      %898 = vmatpush1.msra.mxu0 0.0
      %899 = vmatprep.subr.mxu0 0.0
      %900 = vmatpush1.msra.mxu0 0.0
      %901 = vmatprep.subr.mxu0 0.0
      %902 = vmatpush1.msra.mxu0 0.0
      %903 = vmatprep.subr.mxu0 0.0
      %904 = vmatpush1.msra.mxu0 0.0
      %905 = vmatprep.subr.mxu0 0.0
      %906 = vmatpush1.msra.mxu0 0.0
      %907 = vmatprep.subr.mxu0 0.0
      %908 = vmatpush1.msra.mxu0 0.0
      %909 = vmatprep.subr.mxu0 0.0
      %910 = vmatpush1.msra.mxu0 0.0
      %911 = vmatprep.subr.mxu0 0.0
      %912 = vmatpush1.msra.mxu0 0.0
      %913 = vmatprep.subr.mxu0 0.0
      %914 = vmatpush1.msra.mxu0 0.0
      %915 = vmatprep.subr.mxu0 0.0
      %916 = vmatpush1.msra.mxu0 0.0
      %917 = vmatprep.mubr.f32.mxu0 0.0
      %v918 = vand.u32 %v298, 4294901760
      %919 = vmatmul.mubr.f32.gmra.mrb[0].mxu0 %v918
      %v920 = vpop.f32.mrb[0].mxu0
      %v921 = vadd.f32 %v845, %v920
      %v922 = vpop.f32.mrb[0].mxu0
      %923 = vdwg.mxu0
      %924 = vmatprep.subr.mxu0 0.0
      %v925 = vand.u32 %v305, 4294901760
      %v926 = vsub.f32 %v305, %v925
      %927 = vmatpush1.msra.mxu0 %v926
      %928 = vmatprep.subr.mxu0 0.0
      %929 = vmatpush1.msra.mxu0 0.0
      %930 = vmatprep.subr.mxu0 0.0
      %931 = vmatpush1.msra.mxu0 0.0
      %932 = vmatprep.subr.mxu0 0.0
      %933 = vmatpush1.msra.mxu0 0.0
      %934 = vmatprep.subr.mxu0 0.0
      %935 = vmatpush1.msra.mxu0 0.0
      %936 = vmatprep.subr.mxu0 0.0
      %937 = vmatpush1.msra.mxu0 0.0
      %938 = vmatprep.subr.mxu0 0.0
      %939 = vmatpush1.msra.mxu0 0.0
      %940 = vmatprep.subr.mxu0 0.0
      %941 = vmatpush1.msra.mxu0 0.0
      %942 = vmatprep.subr.mxu0 0.0
      %943 = vmatpush1.msra.mxu0 0.0
      %944 = vmatprep.subr.mxu0 0.0
      %945 = vmatpush1.msra.mxu0 0.0
      %946 = vmatprep.subr.mxu0 0.0
      %947 = vmatpush1.msra.mxu0 0.0
      %948 = vmatprep.subr.mxu0 0.0
      %949 = vmatpush1.msra.mxu0 0.0
      %950 = vmatprep.subr.mxu0 0.0
      %951 = vmatpush1.msra.mxu0 0.0
      %952 = vmatprep.subr.mxu0 0.0
      %953 = vmatpush1.msra.mxu0 0.0
      %954 = vmatprep.subr.mxu0 0.0
      %955 = vmatpush1.msra.mxu0 0.0
      %956 = vmatprep.subr.mxu0 0.0
      %957 = vmatpush1.msra.mxu0 0.0
      %958 = vmatprep.subr.mxu0 0.0
      %959 = vmatpush1.msra.mxu0 0.0
      %960 = vmatprep.subr.mxu0 0.0
      %961 = vmatpush1.msra.mxu0 0.0
      %962 = vmatprep.subr.mxu0 0.0
      %963 = vmatpush1.msra.mxu0 0.0
      %964 = vmatprep.subr.mxu0 0.0
      %965 = vmatpush1.msra.mxu0 0.0
      %966 = vmatprep.subr.mxu0 0.0
      %967 = vmatpush1.msra.mxu0 0.0
      %968 = vmatprep.subr.mxu0 0.0
      %969 = vmatpush1.msra.mxu0 0.0
      %970 = vmatprep.subr.mxu0 0.0
      %971 = vmatpush1.msra.mxu0 0.0
      %972 = vmatprep.subr.mxu0 0.0
      %973 = vmatpush1.msra.mxu0 0.0
      %974 = vmatprep.subr.mxu0 0.0
      %975 = vmatpush1.msra.mxu0 0.0
      %976 = vmatprep.subr.mxu0 0.0
      %977 = vmatpush1.msra.mxu0 0.0
      %978 = vmatprep.subr.mxu0 0.0
      %979 = vmatpush1.msra.mxu0 0.0
      %980 = vmatprep.subr.mxu0 0.0
      %981 = vmatpush1.msra.mxu0 0.0
      %982 = vmatprep.subr.mxu0 0.0
      %983 = vmatpush1.msra.mxu0 0.0
      %984 = vmatprep.subr.mxu0 0.0
      %985 = vmatpush1.msra.mxu0 0.0
      %986 = vmatprep.subr.mxu0 0.0
      %987 = vmatpush1.msra.mxu0 0.0
      %988 = vmatprep.subr.mxu0 0.0
      %989 = vmatpush1.msra.mxu0 0.0
      %990 = vmatprep.mubr.f32.mxu0 0.0
      %v991 = vand.u32 %v298, 4294901760
      %v992 = vsub.f32 %v298, %v991
      %993 = vmatmul.mubr.f32.gmra.mrb[0].mxu0 %v992
      %v994 = vpop.f32.mrb[0].mxu0
      %v995 = vadd.f32 %v921, %v994
      %v996 = vpop.f32.mrb[0].mxu0
      %997 = vdwg.mxu0
      %998 = vmatprep.subr.mxu0 0.0
      %v999 = vand.u32 %v305, 4294901760
      %1000 = vmatpush1.msra.mxu0 %v999
      %1001 = vmatprep.subr.mxu0 0.0
      %1002 = vmatpush1.msra.mxu0 0.0
      %1003 = vmatprep.subr.mxu0 0.0
      %1004 = vmatpush1.msra.mxu0 0.0
      %1005 = vmatprep.subr.mxu0 0.0
      %1006 = vmatpush1.msra.mxu0 0.0
      %1007 = vmatprep.subr.mxu0 0.0
      %1008 = vmatpush1.msra.mxu0 0.0
      %1009 = vmatprep.subr.mxu0 0.0
      %1010 = vmatpush1.msra.mxu0 0.0
      %1011 = vmatprep.subr.mxu0 0.0
      %1012 = vmatpush1.msra.mxu0 0.0
      %1013 = vmatprep.subr.mxu0 0.0
      %1014 = vmatpush1.msra.mxu0 0.0
      %1015 = vmatprep.subr.mxu0 0.0
      %1016 = vmatpush1.msra.mxu0 0.0
      %1017 = vmatprep.subr.mxu0 0.0
      %1018 = vmatpush1.msra.mxu0 0.0
      %1019 = vmatprep.subr.mxu0 0.0
      %1020 = vmatpush1.msra.mxu0 0.0
      %1021 = vmatprep.subr.mxu0 0.0
      %1022 = vmatpush1.msra.mxu0 0.0
      %1023 = vmatprep.subr.mxu0 0.0
      %1024 = vmatpush1.msra.mxu0 0.0
      %1025 = vmatprep.subr.mxu0 0.0
      %1026 = vmatpush1.msra.mxu0 0.0
      %1027 = vmatprep.subr.mxu0 0.0
      %1028 = vmatpush1.msra.mxu0 0.0
      %1029 = vmatprep.subr.mxu0 0.0
      %1030 = vmatpush1.msra.mxu0 0.0
      %1031 = vmatprep.subr.mxu0 0.0
      %1032 = vmatpush1.msra.mxu0 0.0
      %1033 = vmatprep.subr.mxu0 0.0
      %1034 = vmatpush1.msra.mxu0 0.0
      %1035 = vmatprep.subr.mxu0 0.0
      %1036 = vmatpush1.msra.mxu0 0.0
      %1037 = vmatprep.subr.mxu0 0.0
      %1038 = vmatpush1.msra.mxu0 0.0
      %1039 = vmatprep.subr.mxu0 0.0
      %1040 = vmatpush1.msra.mxu0 0.0
      %1041 = vmatprep.subr.mxu0 0.0
      %1042 = vmatpush1.msra.mxu0 0.0
      %1043 = vmatprep.subr.mxu0 0.0
      %1044 = vmatpush1.msra.mxu0 0.0
      %1045 = vmatprep.subr.mxu0 0.0
      %1046 = vmatpush1.msra.mxu0 0.0
      %1047 = vmatprep.subr.mxu0 0.0
      %1048 = vmatpush1.msra.mxu0 0.0
      %1049 = vmatprep.subr.mxu0 0.0
      %1050 = vmatpush1.msra.mxu0 0.0
      %1051 = vmatprep.subr.mxu0 0.0
      %1052 = vmatpush1.msra.mxu0 0.0
      %1053 = vmatprep.subr.mxu0 0.0
      %1054 = vmatpush1.msra.mxu0 0.0
      %1055 = vmatprep.subr.mxu0 0.0
      %1056 = vmatpush1.msra.mxu0 0.0
      %1057 = vmatprep.subr.mxu0 0.0
      %1058 = vmatpush1.msra.mxu0 0.0
      %1059 = vmatprep.subr.mxu0 0.0
      %1060 = vmatpush1.msra.mxu0 0.0
      %1061 = vmatprep.subr.mxu0 0.0
      %1062 = vmatpush1.msra.mxu0 0.0
      %1063 = vmatprep.mubr.f32.mxu0 0.0
      %v1064 = vand.u32 %v298, 4294901760
      %v1065 = vsub.f32 %v298, %v1064
      %v1066 = vand.u32 %v1065, 4294901760
      %1067 = vmatmul.mubr.f32.gmra.mrb[0].mxu0 %v1066
      %v1068 = vpop.f32.mrb[0].mxu0
      %v1069 = vadd.f32 %v995, %v1068
      %v1070 = vpop.f32.mrb[0].mxu0
      %1071 = vdwg.mxu0
      %1072 = vmatprep.subr.mxu0 0.0
      %v1073 = vand.u32 %v305, 4294901760
      %v1074 = vsub.f32 %v305, %v1073
      %v1075 = vand.u32 %v1074, 4294901760
      %1076 = vmatpush1.msra.mxu0 %v1075
      %1077 = vmatprep.subr.mxu0 0.0
      %1078 = vmatpush1.msra.mxu0 0.0
      %1079 = vmatprep.subr.mxu0 0.0
      %1080 = vmatpush1.msra.mxu0 0.0
      %1081 = vmatprep.subr.mxu0 0.0
      %1082 = vmatpush1.msra.mxu0 0.0
      %1083 = vmatprep.subr.mxu0 0.0
      %1084 = vmatpush1.msra.mxu0 0.0
      %1085 = vmatprep.subr.mxu0 0.0
      %1086 = vmatpush1.msra.mxu0 0.0
      %1087 = vmatprep.subr.mxu0 0.0
      %1088 = vmatpush1.msra.mxu0 0.0
      %1089 = vmatprep.subr.mxu0 0.0
      %1090 = vmatpush1.msra.mxu0 0.0
      %1091 = vmatprep.subr.mxu0 0.0
      %1092 = vmatpush1.msra.mxu0 0.0
      %1093 = vmatprep.subr.mxu0 0.0
      %1094 = vmatpush1.msra.mxu0 0.0
      %1095 = vmatprep.subr.mxu0 0.0
      %1096 = vmatpush1.msra.mxu0 0.0
      %1097 = vmatprep.subr.mxu0 0.0
      %1098 = vmatpush1.msra.mxu0 0.0
      %1099 = vmatprep.subr.mxu0 0.0
      %1100 = vmatpush1.msra.mxu0 0.0
      %1101 = vmatprep.subr.mxu0 0.0
      %1102 = vmatpush1.msra.mxu0 0.0
      %1103 = vmatprep.subr.mxu0 0.0
      %1104 = vmatpush1.msra.mxu0 0.0
      %1105 = vmatprep.subr.mxu0 0.0
      %1106 = vmatpush1.msra.mxu0 0.0
      %1107 = vmatprep.subr.mxu0 0.0
      %1108 = vmatpush1.msra.mxu0 0.0
      %1109 = vmatprep.subr.mxu0 0.0
      %1110 = vmatpush1.msra.mxu0 0.0
      %1111 = vmatprep.subr.mxu0 0.0
      %1112 = vmatpush1.msra.mxu0 0.0
      %1113 = vmatprep.subr.mxu0 0.0
      %1114 = vmatpush1.msra.mxu0 0.0
      %1115 = vmatprep.subr.mxu0 0.0
      %1116 = vmatpush1.msra.mxu0 0.0
      %1117 = vmatprep.subr.mxu0 0.0
      %1118 = vmatpush1.msra.mxu0 0.0
      %1119 = vmatprep.subr.mxu0 0.0
      %1120 = vmatpush1.msra.mxu0 0.0
      %1121 = vmatprep.subr.mxu0 0.0
      %1122 = vmatpush1.msra.mxu0 0.0
      %1123 = vmatprep.subr.mxu0 0.0
      %1124 = vmatpush1.msra.mxu0 0.0
      %1125 = vmatprep.subr.mxu0 0.0
      %1126 = vmatpush1.msra.mxu0 0.0
      %1127 = vmatprep.subr.mxu0 0.0
      %1128 = vmatpush1.msra.mxu0 0.0
      %1129 = vmatprep.subr.mxu0 0.0
      %1130 = vmatpush1.msra.mxu0 0.0
      %1131 = vmatprep.subr.mxu0 0.0
      %1132 = vmatpush1.msra.mxu0 0.0
      %1133 = vmatprep.subr.mxu0 0.0
      %1134 = vmatpush1.msra.mxu0 0.0
      %1135 = vmatprep.subr.mxu0 0.0
      %1136 = vmatpush1.msra.mxu0 0.0
      %1137 = vmatprep.subr.mxu0 0.0
      %1138 = vmatpush1.msra.mxu0 0.0
      %1139 = vmatprep.mubr.f32.mxu0 0.0
      %v1140 = vand.u32 %v298, 4294901760
      %1141 = vmatmul.mubr.f32.gmra.mrb[0].mxu0 %v1140
      %v1142 = vpop.f32.mrb[0].mxu0
      %v1143 = vadd.f32 %v1069, %v1142
      %v1144 = vpop.f32.mrb[0].mxu0
      %1145 = vdwg.mxu0
      %1146 = vmatprep.subr.mxu0 0.0
      %v1147 = vand.u32 %v305, 4294901760
      %1148 = vmatpush1.msra.mxu0 %v1147
      %1149 = vmatprep.subr.mxu0 0.0
      %1150 = vmatpush1.msra.mxu0 0.0
      %1151 = vmatprep.subr.mxu0 0.0
      %1152 = vmatpush1.msra.mxu0 0.0
      %1153 = vmatprep.subr.mxu0 0.0
      %1154 = vmatpush1.msra.mxu0 0.0
      %1155 = vmatprep.subr.mxu0 0.0
      %1156 = vmatpush1.msra.mxu0 0.0
      %1157 = vmatprep.subr.mxu0 0.0
      %1158 = vmatpush1.msra.mxu0 0.0
      %1159 = vmatprep.subr.mxu0 0.0
      %1160 = vmatpush1.msra.mxu0 0.0
      %1161 = vmatprep.subr.mxu0 0.0
      %1162 = vmatpush1.msra.mxu0 0.0
      %1163 = vmatprep.subr.mxu0 0.0
      %1164 = vmatpush1.msra.mxu0 0.0
      %1165 = vmatprep.subr.mxu0 0.0
      %1166 = vmatpush1.msra.mxu0 0.0
      %1167 = vmatprep.subr.mxu0 0.0
      %1168 = vmatpush1.msra.mxu0 0.0
      %1169 = vmatprep.subr.mxu0 0.0
      %1170 = vmatpush1.msra.mxu0 0.0
      %1171 = vmatprep.subr.mxu0 0.0
      %1172 = vmatpush1.msra.mxu0 0.0
      %1173 = vmatprep.subr.mxu0 0.0
      %1174 = vmatpush1.msra.mxu0 0.0
      %1175 = vmatprep.subr.mxu0 0.0
      %1176 = vmatpush1.msra.mxu0 0.0
      %1177 = vmatprep.subr.mxu0 0.0
      %1178 = vmatpush1.msra.mxu0 0.0
      %1179 = vmatprep.subr.mxu0 0.0
      %1180 = vmatpush1.msra.mxu0 0.0
      %1181 = vmatprep.subr.mxu0 0.0
      %1182 = vmatpush1.msra.mxu0 0.0
      %1183 = vmatprep.subr.mxu0 0.0
      %1184 = vmatpush1.msra.mxu0 0.0
      %1185 = vmatprep.subr.mxu0 0.0
      %1186 = vmatpush1.msra.mxu0 0.0
      %1187 = vmatprep.subr.mxu0 0.0
      %1188 = vmatpush1.msra.mxu0 0.0
      %1189 = vmatprep.subr.mxu0 0.0
      %1190 = vmatpush1.msra.mxu0 0.0
      %1191 = vmatprep.subr.mxu0 0.0
      %1192 = vmatpush1.msra.mxu0 0.0
      %1193 = vmatprep.subr.mxu0 0.0
      %1194 = vmatpush1.msra.mxu0 0.0
      %1195 = vmatprep.subr.mxu0 0.0
      %1196 = vmatpush1.msra.mxu0 0.0
      %1197 = vmatprep.subr.mxu0 0.0
      %1198 = vmatpush1.msra.mxu0 0.0
      %1199 = vmatprep.subr.mxu0 0.0
      %1200 = vmatpush1.msra.mxu0 0.0
      %1201 = vmatprep.subr.mxu0 0.0
      %1202 = vmatpush1.msra.mxu0 0.0
      %1203 = vmatprep.subr.mxu0 0.0
      %1204 = vmatpush1.msra.mxu0 0.0
      %1205 = vmatprep.subr.mxu0 0.0
      %1206 = vmatpush1.msra.mxu0 0.0
      %1207 = vmatprep.subr.mxu0 0.0
      %1208 = vmatpush1.msra.mxu0 0.0
      %1209 = vmatprep.subr.mxu0 0.0
      %1210 = vmatpush1.msra.mxu0 0.0
      %1211 = vmatprep.mubr.f32.mxu0 0.0
      %v1212 = vand.u32 %v298, 4294901760
      %1213 = vmatmul.mubr.f32.gmra.mrb[0].mxu0 %v1212
      %v1214 = vpop.f32.mrb[0].mxu0
      %v1215 = vadd.f32 %v1143, %v1214
      %v1216 = vpop.f32.mrb[0].mxu0
      %1217 = vdwg.mxu0
      %v1220 = vcombine.high %v274, %v274
      %v1222 = vsel %vm296, %v273, 0
      %v1224 = vsel %vm300, %v274, 0
      %v1226 = vsel %vm300, %v1220, 0
      %v1228 = vsel %vm300, %v275, 0
      %v1230 = vand.u32 %v1226, 4294901760
      %1231 = vmatprep.subr.mxu0 %v1230
      %v1232 = vand.u32 %v1224, 4294901760
      %1233 = vmatpush1.msra.mxu0 %v1232
      %1234 = vmatprep.subr.mxu0 0.0
      %1235 = vmatpush1.msra.mxu0 0.0
      %1236 = vmatprep.subr.mxu0 0.0
      %1237 = vmatpush1.msra.mxu0 0.0
      %1238 = vmatprep.subr.mxu0 0.0
      %1239 = vmatpush1.msra.mxu0 0.0
      %1240 = vmatprep.subr.mxu0 0.0
      %1241 = vmatpush1.msra.mxu0 0.0
      %1242 = vmatprep.subr.mxu0 0.0
      %1243 = vmatpush1.msra.mxu0 0.0
      %1244 = vmatprep.subr.mxu0 0.0
      %1245 = vmatpush1.msra.mxu0 0.0
      %1246 = vmatprep.subr.mxu0 0.0
      %1247 = vmatpush1.msra.mxu0 0.0
      %1248 = vmatprep.subr.mxu0 0.0
      %1249 = vmatpush1.msra.mxu0 0.0
      %1250 = vmatprep.subr.mxu0 0.0
      %1251 = vmatpush1.msra.mxu0 0.0
      %1252 = vmatprep.subr.mxu0 0.0
      %1253 = vmatpush1.msra.mxu0 0.0
      %1254 = vmatprep.subr.mxu0 0.0
      %1255 = vmatpush1.msra.mxu0 0.0
      %1256 = vmatprep.subr.mxu0 0.0
      %1257 = vmatpush1.msra.mxu0 0.0
      %1258 = vmatprep.subr.mxu0 0.0
      %1259 = vmatpush1.msra.mxu0 0.0
      %1260 = vmatprep.subr.mxu0 0.0
      %1261 = vmatpush1.msra.mxu0 0.0
      %1262 = vmatprep.subr.mxu0 0.0
      %1263 = vmatpush1.msra.mxu0 0.0
      %1264 = vmatprep.subr.mxu0 0.0
      %1265 = vmatpush1.msra.mxu0 0.0
      %1266 = vmatprep.subr.mxu0 0.0
      %1267 = vmatpush1.msra.mxu0 0.0
      %1268 = vmatprep.subr.mxu0 0.0
      %1269 = vmatpush1.msra.mxu0 0.0
      %1270 = vmatprep.subr.mxu0 0.0
      %1271 = vmatpush1.msra.mxu0 0.0
      %1272 = vmatprep.subr.mxu0 0.0
      %1273 = vmatpush1.msra.mxu0 0.0
      %1274 = vmatprep.subr.mxu0 0.0
      %1275 = vmatpush1.msra.mxu0 0.0
      %1276 = vmatprep.subr.mxu0 0.0
      %1277 = vmatpush1.msra.mxu0 0.0
      %1278 = vmatprep.subr.mxu0 0.0
      %1279 = vmatpush1.msra.mxu0 0.0
      %1280 = vmatprep.subr.mxu0 0.0
      %1281 = vmatpush1.msra.mxu0 0.0
      %1282 = vmatprep.subr.mxu0 0.0
      %1283 = vmatpush1.msra.mxu0 0.0
      %1284 = vmatprep.subr.mxu0 0.0
      %1285 = vmatpush1.msra.mxu0 0.0
      %1286 = vmatprep.subr.mxu0 0.0
      %1287 = vmatpush1.msra.mxu0 0.0
      %1288 = vmatprep.subr.mxu0 0.0
      %1289 = vmatpush1.msra.mxu0 0.0
      %1290 = vmatprep.subr.mxu0 0.0
      %1291 = vmatpush1.msra.mxu0 0.0
      %1292 = vmatprep.subr.mxu0 0.0
      %1293 = vmatpush1.msra.mxu0 0.0
      %1294 = vmatprep.subr.mxu0 0.0
      %1295 = vmatpush1.msra.mxu0 0.0
      %1296 = vmatprep.mubr.f32.mxu0 0.0
      %v1297 = vand.u32 %v1222, 4294901760
      %v1298 = vsub.f32 %v1222, %v1297
      %v1299 = vand.u32 %v1298, 4294901760
      %v1300 = vsub.f32 %v1298, %v1299
      %v1301 = vand.u32 %v1300, 4294901760
      %1302 = vmatmul.mubr.f32.gmra.mrb[0].mxu0 %v1301
      %v1303 = vpop.f32.mrb[0].mxu0
      %v1304 = vadd.f32 %v768, %v1303
      %v1305 = vpop.f32.mrb[0].mxu0
      %v1306 = vadd.f32 %v770, %v1305
      %1307 = vdwg.mxu0
      %v1308 = vand.u32 %v1226, 4294901760
      %v1309 = vsub.f32 %v1226, %v1308
      %v1310 = vand.u32 %v1309, 4294901760
      %v1311 = vsub.f32 %v1309, %v1310
      %v1312 = vand.u32 %v1311, 4294901760
      %1313 = vmatprep.subr.mxu0 %v1312
      %v1314 = vand.u32 %v1224, 4294901760
      %v1315 = vsub.f32 %v1224, %v1314
      %v1316 = vand.u32 %v1315, 4294901760
      %v1317 = vsub.f32 %v1315, %v1316
      %v1318 = vand.u32 %v1317, 4294901760
      %1319 = vmatpush1.msra.mxu0 %v1318
      %1320 = vmatprep.subr.mxu0 0.0
      %1321 = vmatpush1.msra.mxu0 0.0
      %1322 = vmatprep.subr.mxu0 0.0
      %1323 = vmatpush1.msra.mxu0 0.0
      %1324 = vmatprep.subr.mxu0 0.0
      %1325 = vmatpush1.msra.mxu0 0.0
      %1326 = vmatprep.subr.mxu0 0.0
      %1327 = vmatpush1.msra.mxu0 0.0
      %1328 = vmatprep.subr.mxu0 0.0
      %1329 = vmatpush1.msra.mxu0 0.0
      %1330 = vmatprep.subr.mxu0 0.0
      %1331 = vmatpush1.msra.mxu0 0.0
      %1332 = vmatprep.subr.mxu0 0.0
      %1333 = vmatpush1.msra.mxu0 0.0
      %1334 = vmatprep.subr.mxu0 0.0
      %1335 = vmatpush1.msra.mxu0 0.0
      %1336 = vmatprep.subr.mxu0 0.0
      %1337 = vmatpush1.msra.mxu0 0.0
      %1338 = vmatprep.subr.mxu0 0.0
      %1339 = vmatpush1.msra.mxu0 0.0
      %1340 = vmatprep.subr.mxu0 0.0
      %1341 = vmatpush1.msra.mxu0 0.0
      %1342 = vmatprep.subr.mxu0 0.0
      %1343 = vmatpush1.msra.mxu0 0.0
      %1344 = vmatprep.subr.mxu0 0.0
      %1345 = vmatpush1.msra.mxu0 0.0
      %1346 = vmatprep.subr.mxu0 0.0
      %1347 = vmatpush1.msra.mxu0 0.0
      %1348 = vmatprep.subr.mxu0 0.0
      %1349 = vmatpush1.msra.mxu0 0.0
      %1350 = vmatprep.subr.mxu0 0.0
      %1351 = vmatpush1.msra.mxu0 0.0
      %1352 = vmatprep.subr.mxu0 0.0
      %1353 = vmatpush1.msra.mxu0 0.0
      %1354 = vmatprep.subr.mxu0 0.0
      %1355 = vmatpush1.msra.mxu0 0.0
      %1356 = vmatprep.subr.mxu0 0.0
      %1357 = vmatpush1.msra.mxu0 0.0
      %1358 = vmatprep.subr.mxu0 0.0
      %1359 = vmatpush1.msra.mxu0 0.0
      %1360 = vmatprep.subr.mxu0 0.0
      %1361 = vmatpush1.msra.mxu0 0.0
      %1362 = vmatprep.subr.mxu0 0.0
      %1363 = vmatpush1.msra.mxu0 0.0
      %1364 = vmatprep.subr.mxu0 0.0
      %1365 = vmatpush1.msra.mxu0 0.0
      %1366 = vmatprep.subr.mxu0 0.0
      %1367 = vmatpush1.msra.mxu0 0.0
      %1368 = vmatprep.subr.mxu0 0.0
      %1369 = vmatpush1.msra.mxu0 0.0
      %1370 = vmatprep.subr.mxu0 0.0
      %1371 = vmatpush1.msra.mxu0 0.0
      %1372 = vmatprep.subr.mxu0 0.0
      %1373 = vmatpush1.msra.mxu0 0.0
      %1374 = vmatprep.subr.mxu0 0.0
      %1375 = vmatpush1.msra.mxu0 0.0
      %1376 = vmatprep.subr.mxu0 0.0
      %1377 = vmatpush1.msra.mxu0 0.0
      %1378 = vmatprep.subr.mxu0 0.0
      %1379 = vmatpush1.msra.mxu0 0.0
      %1380 = vmatprep.subr.mxu0 0.0
      %1381 = vmatpush1.msra.mxu0 0.0
      %1382 = vmatprep.mubr.f32.mxu0 0.0
      %v1383 = vand.u32 %v1222, 4294901760
      %1384 = vmatmul.mubr.f32.gmra.mrb[0].mxu0 %v1383
      %v1385 = vpop.f32.mrb[0].mxu0
      %v1386 = vadd.f32 %v1304, %v1385
      %v1387 = vpop.f32.mrb[0].mxu0
      %v1388 = vadd.f32 %v1306, %v1387
      %1389 = vdwg.mxu0
      %v1390 = vand.u32 %v1226, 4294901760
      %v1391 = vsub.f32 %v1226, %v1390
      %1392 = vmatprep.subr.mxu0 %v1391
      %v1393 = vand.u32 %v1224, 4294901760
      %v1394 = vsub.f32 %v1224, %v1393
      %1395 = vmatpush1.msra.mxu0 %v1394
      %1396 = vmatprep.subr.mxu0 0.0
      %1397 = vmatpush1.msra.mxu0 0.0
      %1398 = vmatprep.subr.mxu0 0.0
      %1399 = vmatpush1.msra.mxu0 0.0
      %1400 = vmatprep.subr.mxu0 0.0
      %1401 = vmatpush1.msra.mxu0 0.0
      %1402 = vmatprep.subr.mxu0 0.0
      %1403 = vmatpush1.msra.mxu0 0.0
      %1404 = vmatprep.subr.mxu0 0.0
      %1405 = vmatpush1.msra.mxu0 0.0
      %1406 = vmatprep.subr.mxu0 0.0
      %1407 = vmatpush1.msra.mxu0 0.0
      %1408 = vmatprep.subr.mxu0 0.0
      %1409 = vmatpush1.msra.mxu0 0.0
      %1410 = vmatprep.subr.mxu0 0.0
      %1411 = vmatpush1.msra.mxu0 0.0
      %1412 = vmatprep.subr.mxu0 0.0
      %1413 = vmatpush1.msra.mxu0 0.0
      %1414 = vmatprep.subr.mxu0 0.0
      %1415 = vmatpush1.msra.mxu0 0.0
      %1416 = vmatprep.subr.mxu0 0.0
      %1417 = vmatpush1.msra.mxu0 0.0
      %1418 = vmatprep.subr.mxu0 0.0
      %1419 = vmatpush1.msra.mxu0 0.0
      %1420 = vmatprep.subr.mxu0 0.0
      %1421 = vmatpush1.msra.mxu0 0.0
      %1422 = vmatprep.subr.mxu0 0.0
      %1423 = vmatpush1.msra.mxu0 0.0
      %1424 = vmatprep.subr.mxu0 0.0
      %1425 = vmatpush1.msra.mxu0 0.0
      %1426 = vmatprep.subr.mxu0 0.0
      %1427 = vmatpush1.msra.mxu0 0.0
      %1428 = vmatprep.subr.mxu0 0.0
      %1429 = vmatpush1.msra.mxu0 0.0
      %1430 = vmatprep.subr.mxu0 0.0
      %1431 = vmatpush1.msra.mxu0 0.0
      %1432 = vmatprep.subr.mxu0 0.0
      %1433 = vmatpush1.msra.mxu0 0.0
      %1434 = vmatprep.subr.mxu0 0.0
      %1435 = vmatpush1.msra.mxu0 0.0
      %1436 = vmatprep.subr.mxu0 0.0
      %1437 = vmatpush1.msra.mxu0 0.0
      %1438 = vmatprep.subr.mxu0 0.0
      %1439 = vmatpush1.msra.mxu0 0.0
      %1440 = vmatprep.subr.mxu0 0.0
      %1441 = vmatpush1.msra.mxu0 0.0
      %1442 = vmatprep.subr.mxu0 0.0
      %1443 = vmatpush1.msra.mxu0 0.0
      %1444 = vmatprep.subr.mxu0 0.0
      %1445 = vmatpush1.msra.mxu0 0.0
      %1446 = vmatprep.subr.mxu0 0.0
      %1447 = vmatpush1.msra.mxu0 0.0
      %1448 = vmatprep.subr.mxu0 0.0
      %1449 = vmatpush1.msra.mxu0 0.0
      %1450 = vmatprep.subr.mxu0 0.0
      %1451 = vmatpush1.msra.mxu0 0.0
      %1452 = vmatprep.subr.mxu0 0.0
      %1453 = vmatpush1.msra.mxu0 0.0
      %1454 = vmatprep.subr.mxu0 0.0
      %1455 = vmatpush1.msra.mxu0 0.0
      %1456 = vmatprep.subr.mxu0 0.0
      %1457 = vmatpush1.msra.mxu0 0.0
      %1458 = vmatprep.mubr.f32.mxu0 0.0
      %v1459 = vand.u32 %v1222, 4294901760
      %v1460 = vsub.f32 %v1222, %v1459
      %1461 = vmatmul.mubr.f32.gmra.mrb[0].mxu0 %v1460
      %v1462 = vpop.f32.mrb[0].mxu0
      %v1463 = vadd.f32 %v1386, %v1462
      %v1464 = vpop.f32.mrb[0].mxu0
      %v1465 = vadd.f32 %v1388, %v1464
      %1466 = vdwg.mxu0
      %v1467 = vand.u32 %v1226, 4294901760
      %1468 = vmatprep.subr.mxu0 %v1467
      %v1469 = vand.u32 %v1224, 4294901760
      %1470 = vmatpush1.msra.mxu0 %v1469
      %1471 = vmatprep.subr.mxu0 0.0
      %1472 = vmatpush1.msra.mxu0 0.0
      %1473 = vmatprep.subr.mxu0 0.0
      %1474 = vmatpush1.msra.mxu0 0.0
      %1475 = vmatprep.subr.mxu0 0.0
      %1476 = vmatpush1.msra.mxu0 0.0
      %1477 = vmatprep.subr.mxu0 0.0
      %1478 = vmatpush1.msra.mxu0 0.0
      %1479 = vmatprep.subr.mxu0 0.0
      %1480 = vmatpush1.msra.mxu0 0.0
      %1481 = vmatprep.subr.mxu0 0.0
      %1482 = vmatpush1.msra.mxu0 0.0
      %1483 = vmatprep.subr.mxu0 0.0
      %1484 = vmatpush1.msra.mxu0 0.0
      %1485 = vmatprep.subr.mxu0 0.0
      %1486 = vmatpush1.msra.mxu0 0.0
      %1487 = vmatprep.subr.mxu0 0.0
      %1488 = vmatpush1.msra.mxu0 0.0
      %1489 = vmatprep.subr.mxu0 0.0
      %1490 = vmatpush1.msra.mxu0 0.0
      %1491 = vmatprep.subr.mxu0 0.0
      %1492 = vmatpush1.msra.mxu0 0.0
      %1493 = vmatprep.subr.mxu0 0.0
      %1494 = vmatpush1.msra.mxu0 0.0
      %1495 = vmatprep.subr.mxu0 0.0
      %1496 = vmatpush1.msra.mxu0 0.0
      %1497 = vmatprep.subr.mxu0 0.0
      %1498 = vmatpush1.msra.mxu0 0.0
      %1499 = vmatprep.subr.mxu0 0.0
      %1500 = vmatpush1.msra.mxu0 0.0
      %1501 = vmatprep.subr.mxu0 0.0
      %1502 = vmatpush1.msra.mxu0 0.0
      %1503 = vmatprep.subr.mxu0 0.0
      %1504 = vmatpush1.msra.mxu0 0.0
      %1505 = vmatprep.subr.mxu0 0.0
      %1506 = vmatpush1.msra.mxu0 0.0
      %1507 = vmatprep.subr.mxu0 0.0
      %1508 = vmatpush1.msra.mxu0 0.0
      %1509 = vmatprep.subr.mxu0 0.0
      %1510 = vmatpush1.msra.mxu0 0.0
      %1511 = vmatprep.subr.mxu0 0.0
      %1512 = vmatpush1.msra.mxu0 0.0
      %1513 = vmatprep.subr.mxu0 0.0
      %1514 = vmatpush1.msra.mxu0 0.0
      %1515 = vmatprep.subr.mxu0 0.0
      %1516 = vmatpush1.msra.mxu0 0.0
      %1517 = vmatprep.subr.mxu0 0.0
      %1518 = vmatpush1.msra.mxu0 0.0
      %1519 = vmatprep.subr.mxu0 0.0
      %1520 = vmatpush1.msra.mxu0 0.0
      %1521 = vmatprep.subr.mxu0 0.0
      %1522 = vmatpush1.msra.mxu0 0.0
      %1523 = vmatprep.subr.mxu0 0.0
      %1524 = vmatpush1.msra.mxu0 0.0
      %1525 = vmatprep.subr.mxu0 0.0
      %1526 = vmatpush1.msra.mxu0 0.0
      %1527 = vmatprep.subr.mxu0 0.0
      %1528 = vmatpush1.msra.mxu0 0.0
      %1529 = vmatprep.subr.mxu0 0.0
      %1530 = vmatpush1.msra.mxu0 0.0
      %1531 = vmatprep.subr.mxu0 0.0
      %1532 = vmatpush1.msra.mxu0 0.0
      %1533 = vmatprep.mubr.f32.mxu0 0.0
      %v1534 = vand.u32 %v1222, 4294901760
      %v1535 = vsub.f32 %v1222, %v1534
      %v1536 = vand.u32 %v1535, 4294901760
      %1537 = vmatmul.mubr.f32.gmra.mrb[0].mxu0 %v1536
      %v1538 = vpop.f32.mrb[0].mxu0
      %v1539 = vadd.f32 %v1463, %v1538
      %v1540 = vpop.f32.mrb[0].mxu0
      %v1541 = vadd.f32 %v1465, %v1540
      %1542 = vdwg.mxu0
      %v1543 = vand.u32 %v1226, 4294901760
      %v1544 = vsub.f32 %v1226, %v1543
      %v1545 = vand.u32 %v1544, 4294901760
      %1546 = vmatprep.subr.mxu0 %v1545
      %v1547 = vand.u32 %v1224, 4294901760
      %v1548 = vsub.f32 %v1224, %v1547
      %v1549 = vand.u32 %v1548, 4294901760
      %1550 = vmatpush1.msra.mxu0 %v1549
      %1551 = vmatprep.subr.mxu0 0.0
      %1552 = vmatpush1.msra.mxu0 0.0
      %1553 = vmatprep.subr.mxu0 0.0
      %1554 = vmatpush1.msra.mxu0 0.0
      %1555 = vmatprep.subr.mxu0 0.0
      %1556 = vmatpush1.msra.mxu0 0.0
      %1557 = vmatprep.subr.mxu0 0.0
      %1558 = vmatpush1.msra.mxu0 0.0
      %1559 = vmatprep.subr.mxu0 0.0
      %1560 = vmatpush1.msra.mxu0 0.0
      %1561 = vmatprep.subr.mxu0 0.0
      %1562 = vmatpush1.msra.mxu0 0.0
      %1563 = vmatprep.subr.mxu0 0.0
      %1564 = vmatpush1.msra.mxu0 0.0
      %1565 = vmatprep.subr.mxu0 0.0
      %1566 = vmatpush1.msra.mxu0 0.0
      %1567 = vmatprep.subr.mxu0 0.0
      %1568 = vmatpush1.msra.mxu0 0.0
      %1569 = vmatprep.subr.mxu0 0.0
      %1570 = vmatpush1.msra.mxu0 0.0
      %1571 = vmatprep.subr.mxu0 0.0
      %1572 = vmatpush1.msra.mxu0 0.0
      %1573 = vmatprep.subr.mxu0 0.0
      %1574 = vmatpush1.msra.mxu0 0.0
      %1575 = vmatprep.subr.mxu0 0.0
      %1576 = vmatpush1.msra.mxu0 0.0
      %1577 = vmatprep.subr.mxu0 0.0
      %1578 = vmatpush1.msra.mxu0 0.0
      %1579 = vmatprep.subr.mxu0 0.0
      %1580 = vmatpush1.msra.mxu0 0.0
      %1581 = vmatprep.subr.mxu0 0.0
      %1582 = vmatpush1.msra.mxu0 0.0
      %1583 = vmatprep.subr.mxu0 0.0
      %1584 = vmatpush1.msra.mxu0 0.0
      %1585 = vmatprep.subr.mxu0 0.0
      %1586 = vmatpush1.msra.mxu0 0.0
      %1587 = vmatprep.subr.mxu0 0.0
      %1588 = vmatpush1.msra.mxu0 0.0
      %1589 = vmatprep.subr.mxu0 0.0
      %1590 = vmatpush1.msra.mxu0 0.0
      %1591 = vmatprep.subr.mxu0 0.0
      %1592 = vmatpush1.msra.mxu0 0.0
      %1593 = vmatprep.subr.mxu0 0.0
      %1594 = vmatpush1.msra.mxu0 0.0
      %1595 = vmatprep.subr.mxu0 0.0
      %1596 = vmatpush1.msra.mxu0 0.0
      %1597 = vmatprep.subr.mxu0 0.0
      %1598 = vmatpush1.msra.mxu0 0.0
      %1599 = vmatprep.subr.mxu0 0.0
      %1600 = vmatpush1.msra.mxu0 0.0
      %1601 = vmatprep.subr.mxu0 0.0
      %1602 = vmatpush1.msra.mxu0 0.0
      %1603 = vmatprep.subr.mxu0 0.0
      %1604 = vmatpush1.msra.mxu0 0.0
      %1605 = vmatprep.subr.mxu0 0.0
      %1606 = vmatpush1.msra.mxu0 0.0
      %1607 = vmatprep.subr.mxu0 0.0
      %1608 = vmatpush1.msra.mxu0 0.0
      %1609 = vmatprep.subr.mxu0 0.0
      %1610 = vmatpush1.msra.mxu0 0.0
      %1611 = vmatprep.subr.mxu0 0.0
      %1612 = vmatpush1.msra.mxu0 0.0
      %1613 = vmatprep.mubr.f32.mxu0 0.0
      %v1614 = vand.u32 %v1222, 4294901760
      %1615 = vmatmul.mubr.f32.gmra.mrb[0].mxu0 %v1614
      %v1616 = vpop.f32.mrb[0].mxu0
      %v1617 = vadd.f32 %v1539, %v1616
      %v1618 = vpop.f32.mrb[0].mxu0
      %v1619 = vadd.f32 %v1541, %v1618
      %1620 = vdwg.mxu0
      %v1621 = vand.u32 %v1226, 4294901760
      %1622 = vmatprep.subr.mxu0 %v1621
      %v1623 = vand.u32 %v1224, 4294901760
      %1624 = vmatpush1.msra.mxu0 %v1623
      %1625 = vmatprep.subr.mxu0 0.0
      %1626 = vmatpush1.msra.mxu0 0.0
      %1627 = vmatprep.subr.mxu0 0.0
      %1628 = vmatpush1.msra.mxu0 0.0
      %1629 = vmatprep.subr.mxu0 0.0
      %1630 = vmatpush1.msra.mxu0 0.0
      %1631 = vmatprep.subr.mxu0 0.0
      %1632 = vmatpush1.msra.mxu0 0.0
      %1633 = vmatprep.subr.mxu0 0.0
      %1634 = vmatpush1.msra.mxu0 0.0
      %1635 = vmatprep.subr.mxu0 0.0
      %1636 = vmatpush1.msra.mxu0 0.0
      %1637 = vmatprep.subr.mxu0 0.0
      %1638 = vmatpush1.msra.mxu0 0.0
      %1639 = vmatprep.subr.mxu0 0.0
      %1640 = vmatpush1.msra.mxu0 0.0
      %1641 = vmatprep.subr.mxu0 0.0
      %1642 = vmatpush1.msra.mxu0 0.0
      %1643 = vmatprep.subr.mxu0 0.0
      %1644 = vmatpush1.msra.mxu0 0.0
      %1645 = vmatprep.subr.mxu0 0.0
      %1646 = vmatpush1.msra.mxu0 0.0
      %1647 = vmatprep.subr.mxu0 0.0
      %1648 = vmatpush1.msra.mxu0 0.0
      %1649 = vmatprep.subr.mxu0 0.0
      %1650 = vmatpush1.msra.mxu0 0.0
      %1651 = vmatprep.subr.mxu0 0.0
      %1652 = vmatpush1.msra.mxu0 0.0
      %1653 = vmatprep.subr.mxu0 0.0
      %1654 = vmatpush1.msra.mxu0 0.0
      %1655 = vmatprep.subr.mxu0 0.0
      %1656 = vmatpush1.msra.mxu0 0.0
      %1657 = vmatprep.subr.mxu0 0.0
      %1658 = vmatpush1.msra.mxu0 0.0
      %1659 = vmatprep.subr.mxu0 0.0
      %1660 = vmatpush1.msra.mxu0 0.0
      %1661 = vmatprep.subr.mxu0 0.0
      %1662 = vmatpush1.msra.mxu0 0.0
      %1663 = vmatprep.subr.mxu0 0.0
      %1664 = vmatpush1.msra.mxu0 0.0
      %1665 = vmatprep.subr.mxu0 0.0
      %1666 = vmatpush1.msra.mxu0 0.0
      %1667 = vmatprep.subr.mxu0 0.0
      %1668 = vmatpush1.msra.mxu0 0.0
      %1669 = vmatprep.subr.mxu0 0.0
      %1670 = vmatpush1.msra.mxu0 0.0
      %1671 = vmatprep.subr.mxu0 0.0
      %1672 = vmatpush1.msra.mxu0 0.0
      %1673 = vmatprep.subr.mxu0 0.0
      %1674 = vmatpush1.msra.mxu0 0.0
      %1675 = vmatprep.subr.mxu0 0.0
      %1676 = vmatpush1.msra.mxu0 0.0
      %1677 = vmatprep.subr.mxu0 0.0
      %1678 = vmatpush1.msra.mxu0 0.0
      %1679 = vmatprep.subr.mxu0 0.0
      %1680 = vmatpush1.msra.mxu0 0.0
      %1681 = vmatprep.subr.mxu0 0.0
      %1682 = vmatpush1.msra.mxu0 0.0
      %1683 = vmatprep.subr.mxu0 0.0
      %1684 = vmatpush1.msra.mxu0 0.0
      %1685 = vmatprep.subr.mxu0 0.0
      %1686 = vmatpush1.msra.mxu0 0.0
      %1687 = vmatprep.mubr.f32.mxu0 0.0
      %v1688 = vand.u32 %v1222, 4294901760
      %1689 = vmatmul.mubr.f32.gmra.mrb[0].mxu0 %v1688
      %v1690 = vpop.f32.mrb[0].mxu0
      %v1691 = vadd.f32 %v1617, %v1690
      %v1692 = vpop.f32.mrb[0].mxu0
      %v1693 = vadd.f32 %v1619, %v1692
      %1694 = vdwg.mxu0
      %1695 = vmatprep.subr.mxu0 0.0
      %v1696 = vand.u32 %v1228, 4294901760
      %1697 = vmatpush1.msra.mxu0 %v1696
      %1698 = vmatprep.subr.mxu0 0.0
      %1699 = vmatpush1.msra.mxu0 0.0
      %1700 = vmatprep.subr.mxu0 0.0
      %1701 = vmatpush1.msra.mxu0 0.0
      %1702 = vmatprep.subr.mxu0 0.0
      %1703 = vmatpush1.msra.mxu0 0.0
      %1704 = vmatprep.subr.mxu0 0.0
      %1705 = vmatpush1.msra.mxu0 0.0
      %1706 = vmatprep.subr.mxu0 0.0
      %1707 = vmatpush1.msra.mxu0 0.0
      %1708 = vmatprep.subr.mxu0 0.0
      %1709 = vmatpush1.msra.mxu0 0.0
      %1710 = vmatprep.subr.mxu0 0.0
      %1711 = vmatpush1.msra.mxu0 0.0
      %1712 = vmatprep.subr.mxu0 0.0
      %1713 = vmatpush1.msra.mxu0 0.0
      %1714 = vmatprep.subr.mxu0 0.0
      %1715 = vmatpush1.msra.mxu0 0.0
      %1716 = vmatprep.subr.mxu0 0.0
      %1717 = vmatpush1.msra.mxu0 0.0
      %1718 = vmatprep.subr.mxu0 0.0
      %1719 = vmatpush1.msra.mxu0 0.0
      %1720 = vmatprep.subr.mxu0 0.0
      %1721 = vmatpush1.msra.mxu0 0.0
      %1722 = vmatprep.subr.mxu0 0.0
      %1723 = vmatpush1.msra.mxu0 0.0
      %1724 = vmatprep.subr.mxu0 0.0
      %1725 = vmatpush1.msra.mxu0 0.0
      %1726 = vmatprep.subr.mxu0 0.0
      %1727 = vmatpush1.msra.mxu0 0.0
      %1728 = vmatprep.subr.mxu0 0.0
      %1729 = vmatpush1.msra.mxu0 0.0
      %1730 = vmatprep.subr.mxu0 0.0
      %1731 = vmatpush1.msra.mxu0 0.0
      %1732 = vmatprep.subr.mxu0 0.0
      %1733 = vmatpush1.msra.mxu0 0.0
      %1734 = vmatprep.subr.mxu0 0.0
      %1735 = vmatpush1.msra.mxu0 0.0
      %1736 = vmatprep.subr.mxu0 0.0
      %1737 = vmatpush1.msra.mxu0 0.0
      %1738 = vmatprep.subr.mxu0 0.0
      %1739 = vmatpush1.msra.mxu0 0.0
      %1740 = vmatprep.subr.mxu0 0.0
      %1741 = vmatpush1.msra.mxu0 0.0
      %1742 = vmatprep.subr.mxu0 0.0
      %1743 = vmatpush1.msra.mxu0 0.0
      %1744 = vmatprep.subr.mxu0 0.0
      %1745 = vmatpush1.msra.mxu0 0.0
      %1746 = vmatprep.subr.mxu0 0.0
      %1747 = vmatpush1.msra.mxu0 0.0
      %1748 = vmatprep.subr.mxu0 0.0
      %1749 = vmatpush1.msra.mxu0 0.0
      %1750 = vmatprep.subr.mxu0 0.0
      %1751 = vmatpush1.msra.mxu0 0.0
      %1752 = vmatprep.subr.mxu0 0.0
      %1753 = vmatpush1.msra.mxu0 0.0
      %1754 = vmatprep.subr.mxu0 0.0
      %1755 = vmatpush1.msra.mxu0 0.0
      %1756 = vmatprep.subr.mxu0 0.0
      %1757 = vmatpush1.msra.mxu0 0.0
      %1758 = vmatprep.subr.mxu0 0.0
      %1759 = vmatpush1.msra.mxu0 0.0
      %1760 = vmatprep.mubr.f32.mxu0 0.0
      %v1761 = vand.u32 %v1222, 4294901760
      %v1762 = vsub.f32 %v1222, %v1761
      %v1763 = vand.u32 %v1762, 4294901760
      %v1764 = vsub.f32 %v1762, %v1763
      %v1765 = vand.u32 %v1764, 4294901760
      %1766 = vmatmul.mubr.f32.gmra.mrb[0].mxu0 %v1765
      %v1767 = vpop.f32.mrb[0].mxu0
      %v1768 = vadd.f32 %v1215, %v1767
      %v1769 = vpop.f32.mrb[0].mxu0
      %1770 = vdwg.mxu0
      %1771 = vmatprep.subr.mxu0 0.0
      %v1772 = vand.u32 %v1228, 4294901760
      %v1773 = vsub.f32 %v1228, %v1772
      %v1774 = vand.u32 %v1773, 4294901760
      %v1775 = vsub.f32 %v1773, %v1774
      %v1776 = vand.u32 %v1775, 4294901760
      %1777 = vmatpush1.msra.mxu0 %v1776
      %1778 = vmatprep.subr.mxu0 0.0
      %1779 = vmatpush1.msra.mxu0 0.0
      %1780 = vmatprep.subr.mxu0 0.0
      %1781 = vmatpush1.msra.mxu0 0.0
      %1782 = vmatprep.subr.mxu0 0.0
      %1783 = vmatpush1.msra.mxu0 0.0
      %1784 = vmatprep.subr.mxu0 0.0
      %1785 = vmatpush1.msra.mxu0 0.0
      %1786 = vmatprep.subr.mxu0 0.0
      %1787 = vmatpush1.msra.mxu0 0.0
      %1788 = vmatprep.subr.mxu0 0.0
      %1789 = vmatpush1.msra.mxu0 0.0
      %1790 = vmatprep.subr.mxu0 0.0
      %1791 = vmatpush1.msra.mxu0 0.0
      %1792 = vmatprep.subr.mxu0 0.0
      %1793 = vmatpush1.msra.mxu0 0.0
      %1794 = vmatprep.subr.mxu0 0.0
      %1795 = vmatpush1.msra.mxu0 0.0
      %1796 = vmatprep.subr.mxu0 0.0
      %1797 = vmatpush1.msra.mxu0 0.0
      %1798 = vmatprep.subr.mxu0 0.0
      %1799 = vmatpush1.msra.mxu0 0.0
      %1800 = vmatprep.subr.mxu0 0.0
      %1801 = vmatpush1.msra.mxu0 0.0
      %1802 = vmatprep.subr.mxu0 0.0
      %1803 = vmatpush1.msra.mxu0 0.0
      %1804 = vmatprep.subr.mxu0 0.0
      %1805 = vmatpush1.msra.mxu0 0.0
      %1806 = vmatprep.subr.mxu0 0.0
      %1807 = vmatpush1.msra.mxu0 0.0
      %1808 = vmatprep.subr.mxu0 0.0
      %1809 = vmatpush1.msra.mxu0 0.0
      %1810 = vmatprep.subr.mxu0 0.0
      %1811 = vmatpush1.msra.mxu0 0.0
      %1812 = vmatprep.subr.mxu0 0.0
      %1813 = vmatpush1.msra.mxu0 0.0
      %1814 = vmatprep.subr.mxu0 0.0
      %1815 = vmatpush1.msra.mxu0 0.0
      %1816 = vmatprep.subr.mxu0 0.0
      %1817 = vmatpush1.msra.mxu0 0.0
      %1818 = vmatprep.subr.mxu0 0.0
      %1819 = vmatpush1.msra.mxu0 0.0
      %1820 = vmatprep.subr.mxu0 0.0
      %1821 = vmatpush1.msra.mxu0 0.0
      %1822 = vmatprep.subr.mxu0 0.0
      %1823 = vmatpush1.msra.mxu0 0.0
      %1824 = vmatprep.subr.mxu0 0.0
      %1825 = vmatpush1.msra.mxu0 0.0
      %1826 = vmatprep.subr.mxu0 0.0
      %1827 = vmatpush1.msra.mxu0 0.0
      %1828 = vmatprep.subr.mxu0 0.0
      %1829 = vmatpush1.msra.mxu0 0.0
      %1830 = vmatprep.subr.mxu0 0.0
      %1831 = vmatpush1.msra.mxu0 0.0
      %1832 = vmatprep.subr.mxu0 0.0
      %1833 = vmatpush1.msra.mxu0 0.0
      %1834 = vmatprep.subr.mxu0 0.0
      %1835 = vmatpush1.msra.mxu0 0.0
      %1836 = vmatprep.subr.mxu0 0.0
      %1837 = vmatpush1.msra.mxu0 0.0
      %1838 = vmatprep.subr.mxu0 0.0
      %1839 = vmatpush1.msra.mxu0 0.0
      %1840 = vmatprep.mubr.f32.mxu0 0.0
      %v1841 = vand.u32 %v1222, 4294901760
      %1842 = vmatmul.mubr.f32.gmra.mrb[0].mxu0 %v1841
      %v1843 = vpop.f32.mrb[0].mxu0
      %v1844 = vadd.f32 %v1768, %v1843
      %v1845 = vpop.f32.mrb[0].mxu0
      %1846 = vdwg.mxu0
      %1847 = vmatprep.subr.mxu0 0.0
      %v1848 = vand.u32 %v1228, 4294901760
      %v1849 = vsub.f32 %v1228, %v1848
      %1850 = vmatpush1.msra.mxu0 %v1849
      %1851 = vmatprep.subr.mxu0 0.0
      %1852 = vmatpush1.msra.mxu0 0.0
      %1853 = vmatprep.subr.mxu0 0.0
      %1854 = vmatpush1.msra.mxu0 0.0
      %1855 = vmatprep.subr.mxu0 0.0
      %1856 = vmatpush1.msra.mxu0 0.0
      %1857 = vmatprep.subr.mxu0 0.0
      %1858 = vmatpush1.msra.mxu0 0.0
      %1859 = vmatprep.subr.mxu0 0.0
      %1860 = vmatpush1.msra.mxu0 0.0
      %1861 = vmatprep.subr.mxu0 0.0
      %1862 = vmatpush1.msra.mxu0 0.0
      %1863 = vmatprep.subr.mxu0 0.0
      %1864 = vmatpush1.msra.mxu0 0.0
      %1865 = vmatprep.subr.mxu0 0.0
      %1866 = vmatpush1.msra.mxu0 0.0
      %1867 = vmatprep.subr.mxu0 0.0
      %1868 = vmatpush1.msra.mxu0 0.0
      %1869 = vmatprep.subr.mxu0 0.0
      %1870 = vmatpush1.msra.mxu0 0.0
      %1871 = vmatprep.subr.mxu0 0.0
      %1872 = vmatpush1.msra.mxu0 0.0
      %1873 = vmatprep.subr.mxu0 0.0
      %1874 = vmatpush1.msra.mxu0 0.0
      %1875 = vmatprep.subr.mxu0 0.0
      %1876 = vmatpush1.msra.mxu0 0.0
      %1877 = vmatprep.subr.mxu0 0.0
      %1878 = vmatpush1.msra.mxu0 0.0
      %1879 = vmatprep.subr.mxu0 0.0
      %1880 = vmatpush1.msra.mxu0 0.0
      %1881 = vmatprep.subr.mxu0 0.0
      %1882 = vmatpush1.msra.mxu0 0.0
      %1883 = vmatprep.subr.mxu0 0.0
      %1884 = vmatpush1.msra.mxu0 0.0
      %1885 = vmatprep.subr.mxu0 0.0
      %1886 = vmatpush1.msra.mxu0 0.0
      %1887 = vmatprep.subr.mxu0 0.0
      %1888 = vmatpush1.msra.mxu0 0.0
      %1889 = vmatprep.subr.mxu0 0.0
      %1890 = vmatpush1.msra.mxu0 0.0
      %1891 = vmatprep.subr.mxu0 0.0
      %1892 = vmatpush1.msra.mxu0 0.0
      %1893 = vmatprep.subr.mxu0 0.0
      %1894 = vmatpush1.msra.mxu0 0.0
      %1895 = vmatprep.subr.mxu0 0.0
      %1896 = vmatpush1.msra.mxu0 0.0
      %1897 = vmatprep.subr.mxu0 0.0
      %1898 = vmatpush1.msra.mxu0 0.0
      %1899 = vmatprep.subr.mxu0 0.0
      %1900 = vmatpush1.msra.mxu0 0.0
      %1901 = vmatprep.subr.mxu0 0.0
      %1902 = vmatpush1.msra.mxu0 0.0
      %1903 = vmatprep.subr.mxu0 0.0
      %1904 = vmatpush1.msra.mxu0 0.0
      %1905 = vmatprep.subr.mxu0 0.0
      %1906 = vmatpush1.msra.mxu0 0.0
      %1907 = vmatprep.subr.mxu0 0.0
      %1908 = vmatpush1.msra.mxu0 0.0
      %1909 = vmatprep.subr.mxu0 0.0
      %1910 = vmatpush1.msra.mxu0 0.0
      %1911 = vmatprep.subr.mxu0 0.0
      %1912 = vmatpush1.msra.mxu0 0.0
      %1913 = vmatprep.mubr.f32.mxu0 0.0
      %v1914 = vand.u32 %v1222, 4294901760
      %v1915 = vsub.f32 %v1222, %v1914
      %1916 = vmatmul.mubr.f32.gmra.mrb[0].mxu0 %v1915
      %v1917 = vpop.f32.mrb[0].mxu0
      %v1918 = vadd.f32 %v1844, %v1917
      %v1919 = vpop.f32.mrb[0].mxu0
      %1920 = vdwg.mxu0
      %1921 = vmatprep.subr.mxu0 0.0
      %v1922 = vand.u32 %v1228, 4294901760
      %1923 = vmatpush1.msra.mxu0 %v1922
      %1924 = vmatprep.subr.mxu0 0.0
      %1925 = vmatpush1.msra.mxu0 0.0
      %1926 = vmatprep.subr.mxu0 0.0
      %1927 = vmatpush1.msra.mxu0 0.0
      %1928 = vmatprep.subr.mxu0 0.0
      %1929 = vmatpush1.msra.mxu0 0.0
      %1930 = vmatprep.subr.mxu0 0.0
      %1931 = vmatpush1.msra.mxu0 0.0
      %1932 = vmatprep.subr.mxu0 0.0
      %1933 = vmatpush1.msra.mxu0 0.0
      %1934 = vmatprep.subr.mxu0 0.0
      %1935 = vmatpush1.msra.mxu0 0.0
      %1936 = vmatprep.subr.mxu0 0.0
      %1937 = vmatpush1.msra.mxu0 0.0
      %1938 = vmatprep.subr.mxu0 0.0
      %1939 = vmatpush1.msra.mxu0 0.0
      %1940 = vmatprep.subr.mxu0 0.0
      %1941 = vmatpush1.msra.mxu0 0.0
      %1942 = vmatprep.subr.mxu0 0.0
      %1943 = vmatpush1.msra.mxu0 0.0
      %1944 = vmatprep.subr.mxu0 0.0
      %1945 = vmatpush1.msra.mxu0 0.0
      %1946 = vmatprep.subr.mxu0 0.0
      %1947 = vmatpush1.msra.mxu0 0.0
      %1948 = vmatprep.subr.mxu0 0.0
      %1949 = vmatpush1.msra.mxu0 0.0
      %1950 = vmatprep.subr.mxu0 0.0
      %1951 = vmatpush1.msra.mxu0 0.0
      %1952 = vmatprep.subr.mxu0 0.0
      %1953 = vmatpush1.msra.mxu0 0.0
      %1954 = vmatprep.subr.mxu0 0.0
      %1955 = vmatpush1.msra.mxu0 0.0
      %1956 = vmatprep.subr.mxu0 0.0
      %1957 = vmatpush1.msra.mxu0 0.0
      %1958 = vmatprep.subr.mxu0 0.0
      %1959 = vmatpush1.msra.mxu0 0.0
      %1960 = vmatprep.subr.mxu0 0.0
      %1961 = vmatpush1.msra.mxu0 0.0
      %1962 = vmatprep.subr.mxu0 0.0
      %1963 = vmatpush1.msra.mxu0 0.0
      %1964 = vmatprep.subr.mxu0 0.0
      %1965 = vmatpush1.msra.mxu0 0.0
      %1966 = vmatprep.subr.mxu0 0.0
      %1967 = vmatpush1.msra.mxu0 0.0
      %1968 = vmatprep.subr.mxu0 0.0
      %1969 = vmatpush1.msra.mxu0 0.0
      %1970 = vmatprep.subr.mxu0 0.0
      %1971 = vmatpush1.msra.mxu0 0.0
      %1972 = vmatprep.subr.mxu0 0.0
      %1973 = vmatpush1.msra.mxu0 0.0
      %1974 = vmatprep.subr.mxu0 0.0
      %1975 = vmatpush1.msra.mxu0 0.0
      %1976 = vmatprep.subr.mxu0 0.0
      %1977 = vmatpush1.msra.mxu0 0.0
      %1978 = vmatprep.subr.mxu0 0.0
      %1979 = vmatpush1.msra.mxu0 0.0
      %1980 = vmatprep.subr.mxu0 0.0
      %1981 = vmatpush1.msra.mxu0 0.0
      %1982 = vmatprep.subr.mxu0 0.0
      %1983 = vmatpush1.msra.mxu0 0.0
      %1984 = vmatprep.subr.mxu0 0.0
      %1985 = vmatpush1.msra.mxu0 0.0
      %1986 = vmatprep.mubr.f32.mxu0 0.0
      %v1987 = vand.u32 %v1222, 4294901760
      %v1988 = vsub.f32 %v1222, %v1987
      %v1989 = vand.u32 %v1988, 4294901760
      %1990 = vmatmul.mubr.f32.gmra.mrb[0].mxu0 %v1989
      %v1991 = vpop.f32.mrb[0].mxu0
      %v1992 = vadd.f32 %v1918, %v1991
      %v1993 = vpop.f32.mrb[0].mxu0
      %1994 = vdwg.mxu0
      %1995 = vmatprep.subr.mxu0 0.0
      %v1996 = vand.u32 %v1228, 4294901760
      %v1997 = vsub.f32 %v1228, %v1996
      %v1998 = vand.u32 %v1997, 4294901760
      %1999 = vmatpush1.msra.mxu0 %v1998
      %2000 = vmatprep.subr.mxu0 0.0
      %2001 = vmatpush1.msra.mxu0 0.0
      %2002 = vmatprep.subr.mxu0 0.0
      %2003 = vmatpush1.msra.mxu0 0.0
      %2004 = vmatprep.subr.mxu0 0.0
      %2005 = vmatpush1.msra.mxu0 0.0
      %2006 = vmatprep.subr.mxu0 0.0
      %2007 = vmatpush1.msra.mxu0 0.0
      %2008 = vmatprep.subr.mxu0 0.0
      %2009 = vmatpush1.msra.mxu0 0.0
      %2010 = vmatprep.subr.mxu0 0.0
      %2011 = vmatpush1.msra.mxu0 0.0
      %2012 = vmatprep.subr.mxu0 0.0
      %2013 = vmatpush1.msra.mxu0 0.0
      %2014 = vmatprep.subr.mxu0 0.0
      %2015 = vmatpush1.msra.mxu0 0.0
      %2016 = vmatprep.subr.mxu0 0.0
      %2017 = vmatpush1.msra.mxu0 0.0
      %2018 = vmatprep.subr.mxu0 0.0
      %2019 = vmatpush1.msra.mxu0 0.0
      %2020 = vmatprep.subr.mxu0 0.0
      %2021 = vmatpush1.msra.mxu0 0.0
      %2022 = vmatprep.subr.mxu0 0.0
      %2023 = vmatpush1.msra.mxu0 0.0
      %2024 = vmatprep.subr.mxu0 0.0
      %2025 = vmatpush1.msra.mxu0 0.0
      %2026 = vmatprep.subr.mxu0 0.0
      %2027 = vmatpush1.msra.mxu0 0.0
      %2028 = vmatprep.subr.mxu0 0.0
      %2029 = vmatpush1.msra.mxu0 0.0
      %2030 = vmatprep.subr.mxu0 0.0
      %2031 = vmatpush1.msra.mxu0 0.0
      %2032 = vmatprep.subr.mxu0 0.0
      %2033 = vmatpush1.msra.mxu0 0.0
      %2034 = vmatprep.subr.mxu0 0.0
      %2035 = vmatpush1.msra.mxu0 0.0
      %2036 = vmatprep.subr.mxu0 0.0
      %2037 = vmatpush1.msra.mxu0 0.0
      %2038 = vmatprep.subr.mxu0 0.0
      %2039 = vmatpush1.msra.mxu0 0.0
      %2040 = vmatprep.subr.mxu0 0.0
      %2041 = vmatpush1.msra.mxu0 0.0
      %2042 = vmatprep.subr.mxu0 0.0
      %2043 = vmatpush1.msra.mxu0 0.0
      %2044 = vmatprep.subr.mxu0 0.0
      %2045 = vmatpush1.msra.mxu0 0.0
      %2046 = vmatprep.subr.mxu0 0.0
      %2047 = vmatpush1.msra.mxu0 0.0
      %2048 = vmatprep.subr.mxu0 0.0
      %2049 = vmatpush1.msra.mxu0 0.0
      %2050 = vmatprep.subr.mxu0 0.0
      %2051 = vmatpush1.msra.mxu0 0.0
      %2052 = vmatprep.subr.mxu0 0.0
      %2053 = vmatpush1.msra.mxu0 0.0
      %2054 = vmatprep.subr.mxu0 0.0
      %2055 = vmatpush1.msra.mxu0 0.0
      %2056 = vmatprep.subr.mxu0 0.0
      %2057 = vmatpush1.msra.mxu0 0.0
      %2058 = vmatprep.subr.mxu0 0.0
      %2059 = vmatpush1.msra.mxu0 0.0
      %2060 = vmatprep.subr.mxu0 0.0
      %2061 = vmatpush1.msra.mxu0 0.0
      %2062 = vmatprep.mubr.f32.mxu0 0.0
      %v2063 = vand.u32 %v1222, 4294901760
      %2064 = vmatmul.mubr.f32.gmra.mrb[0].mxu0 %v2063
      %v2065 = vpop.f32.mrb[0].mxu0
      %v2066 = vadd.f32 %v1992, %v2065
      %v2067 = vpop.f32.mrb[0].mxu0
      %2068 = vdwg.mxu0
      %2069 = vmatprep.subr.mxu0 0.0
      %v2070 = vand.u32 %v1228, 4294901760
      %2071 = vmatpush1.msra.mxu0 %v2070
      %2072 = vmatprep.subr.mxu0 0.0
      %2073 = vmatpush1.msra.mxu0 0.0
      %2074 = vmatprep.subr.mxu0 0.0
      %2075 = vmatpush1.msra.mxu0 0.0
      %2076 = vmatprep.subr.mxu0 0.0
      %2077 = vmatpush1.msra.mxu0 0.0
      %2078 = vmatprep.subr.mxu0 0.0
      %2079 = vmatpush1.msra.mxu0 0.0
      %2080 = vmatprep.subr.mxu0 0.0
      %2081 = vmatpush1.msra.mxu0 0.0
      %2082 = vmatprep.subr.mxu0 0.0
      %2083 = vmatpush1.msra.mxu0 0.0
      %2084 = vmatprep.subr.mxu0 0.0
      %2085 = vmatpush1.msra.mxu0 0.0
      %2086 = vmatprep.subr.mxu0 0.0
      %2087 = vmatpush1.msra.mxu0 0.0
      %2088 = vmatprep.subr.mxu0 0.0
      %2089 = vmatpush1.msra.mxu0 0.0
      %2090 = vmatprep.subr.mxu0 0.0
      %2091 = vmatpush1.msra.mxu0 0.0
      %2092 = vmatprep.subr.mxu0 0.0
      %2093 = vmatpush1.msra.mxu0 0.0
      %2094 = vmatprep.subr.mxu0 0.0
      %2095 = vmatpush1.msra.mxu0 0.0
      %2096 = vmatprep.subr.mxu0 0.0
      %2097 = vmatpush1.msra.mxu0 0.0
      %2098 = vmatprep.subr.mxu0 0.0
      %2099 = vmatpush1.msra.mxu0 0.0
      %2100 = vmatprep.subr.mxu0 0.0
      %2101 = vmatpush1.msra.mxu0 0.0
      %2102 = vmatprep.subr.mxu0 0.0
      %2103 = vmatpush1.msra.mxu0 0.0
      %2104 = vmatprep.subr.mxu0 0.0
      %2105 = vmatpush1.msra.mxu0 0.0
      %2106 = vmatprep.subr.mxu0 0.0
      %2107 = vmatpush1.msra.mxu0 0.0
      %2108 = vmatprep.subr.mxu0 0.0
      %2109 = vmatpush1.msra.mxu0 0.0
      %2110 = vmatprep.subr.mxu0 0.0
      %2111 = vmatpush1.msra.mxu0 0.0
      %2112 = vmatprep.subr.mxu0 0.0
      %2113 = vmatpush1.msra.mxu0 0.0
      %2114 = vmatprep.subr.mxu0 0.0
      %2115 = vmatpush1.msra.mxu0 0.0
      %2116 = vmatprep.subr.mxu0 0.0
      %2117 = vmatpush1.msra.mxu0 0.0
      %2118 = vmatprep.subr.mxu0 0.0
      %2119 = vmatpush1.msra.mxu0 0.0
      %2120 = vmatprep.subr.mxu0 0.0
      %2121 = vmatpush1.msra.mxu0 0.0
      %2122 = vmatprep.subr.mxu0 0.0
      %2123 = vmatpush1.msra.mxu0 0.0
      %2124 = vmatprep.subr.mxu0 0.0
      %2125 = vmatpush1.msra.mxu0 0.0
      %2126 = vmatprep.subr.mxu0 0.0
      %2127 = vmatpush1.msra.mxu0 0.0
      %2128 = vmatprep.subr.mxu0 0.0
      %2129 = vmatpush1.msra.mxu0 0.0
      %2130 = vmatprep.subr.mxu0 0.0
      %2131 = vmatpush1.msra.mxu0 0.0
      %2132 = vmatprep.subr.mxu0 0.0
      %2133 = vmatpush1.msra.mxu0 0.0
      %2134 = vmatprep.mubr.f32.mxu0 0.0
      %v2135 = vand.u32 %v1222, 4294901760
      %2136 = vmatmul.mubr.f32.gmra.mrb[0].mxu0 %v2135
      %v2137 = vpop.f32.mrb[0].mxu0
      %v2138 = vadd.f32 %v2066, %v2137
      %v2139 = vpop.f32.mrb[0].mxu0
      %2140 = vdwg.mxu0
      %s2141 = scalar_lea.vmem %s1, 16
      %v2142 = vld [vmem:[%s2141] sm:$0xff]
      %v2143 = vld [vmem:[%s259] sm:$0xff]
      %v2144 = vld [vmem:[%s259 + $0x8] sm:$0xff]
      %v2147 = vcombine.high %v2143, %v2143
      %v2148 = vcombine.high %v2144, %v2144
      %2149 = vrot.lane.b32.xlu0 %v2143, 126
      %v2150 = vpop.permute.xlu0 %2149
      %2151 = vrot.lane.b32.xlu0 %v2147, 126
      %v2152 = vpop.permute.xlu0 %2151
      %2153 = vrot.lane.b32.xlu0 %v2144, 126
      %v2154 = vpop.permute.xlu0 %2153
      %2155 = vrot.lane.b32.xlu0 %v2148, 126
      %v2156 = vpop.permute.xlu0 %2155
      %vm2157 = vcmask 1031168
      %v2158 = vsel %vm2157, %v2150, %v2152
      %v2159 = vsel %vm2157, %v2152, %v2154
      %v2160 = vsel %vm2157, %v2154, %v2156
      %v2162 = vsel %vm296, %v2142, 0
      %v2164 = vsel %vm300, %v2158, 0
      %v2166 = vsel %vm300, %v2159, 0
      %v2168 = vsel %vm300, %v2160, 0
      %v2170 = vand.u32 %v2166, 4294901760
      %2171 = vmatprep.subr.mxu0 %v2170
      %v2172 = vand.u32 %v2164, 4294901760
      %2173 = vmatpush1.msra.mxu0 %v2172
      %2174 = vmatprep.subr.mxu0 0.0
      %2175 = vmatpush1.msra.mxu0 0.0
      %2176 = vmatprep.subr.mxu0 0.0
      %2177 = vmatpush1.msra.mxu0 0.0
      %2178 = vmatprep.subr.mxu0 0.0
      %2179 = vmatpush1.msra.mxu0 0.0
      %2180 = vmatprep.subr.mxu0 0.0
      %2181 = vmatpush1.msra.mxu0 0.0
      %2182 = vmatprep.subr.mxu0 0.0
      %2183 = vmatpush1.msra.mxu0 0.0
      %2184 = vmatprep.subr.mxu0 0.0
      %2185 = vmatpush1.msra.mxu0 0.0
      %2186 = vmatprep.subr.mxu0 0.0
      %2187 = vmatpush1.msra.mxu0 0.0
      %2188 = vmatprep.subr.mxu0 0.0
      %2189 = vmatpush1.msra.mxu0 0.0
      %2190 = vmatprep.subr.mxu0 0.0
      %2191 = vmatpush1.msra.mxu0 0.0
      %2192 = vmatprep.subr.mxu0 0.0
      %2193 = vmatpush1.msra.mxu0 0.0
      %2194 = vmatprep.subr.mxu0 0.0
      %2195 = vmatpush1.msra.mxu0 0.0
      %2196 = vmatprep.subr.mxu0 0.0
      %2197 = vmatpush1.msra.mxu0 0.0
      %2198 = vmatprep.subr.mxu0 0.0
      %2199 = vmatpush1.msra.mxu0 0.0
      %2200 = vmatprep.subr.mxu0 0.0
      %2201 = vmatpush1.msra.mxu0 0.0
      %2202 = vmatprep.subr.mxu0 0.0
      %2203 = vmatpush1.msra.mxu0 0.0
      %2204 = vmatprep.subr.mxu0 0.0
      %2205 = vmatpush1.msra.mxu0 0.0
      %2206 = vmatprep.subr.mxu0 0.0
      %2207 = vmatpush1.msra.mxu0 0.0
      %2208 = vmatprep.subr.mxu0 0.0
      %2209 = vmatpush1.msra.mxu0 0.0
      %2210 = vmatprep.subr.mxu0 0.0
      %2211 = vmatpush1.msra.mxu0 0.0
      %2212 = vmatprep.subr.mxu0 0.0
      %2213 = vmatpush1.msra.mxu0 0.0
      %2214 = vmatprep.subr.mxu0 0.0
      %2215 = vmatpush1.msra.mxu0 0.0
      %2216 = vmatprep.subr.mxu0 0.0
      %2217 = vmatpush1.msra.mxu0 0.0
      %2218 = vmatprep.subr.mxu0 0.0
      %2219 = vmatpush1.msra.mxu0 0.0
      %2220 = vmatprep.subr.mxu0 0.0
      %2221 = vmatpush1.msra.mxu0 0.0
      %2222 = vmatprep.subr.mxu0 0.0
      %2223 = vmatpush1.msra.mxu0 0.0
      %2224 = vmatprep.subr.mxu0 0.0
      %2225 = vmatpush1.msra.mxu0 0.0
      %2226 = vmatprep.subr.mxu0 0.0
      %2227 = vmatpush1.msra.mxu0 0.0
      %2228 = vmatprep.subr.mxu0 0.0
      %2229 = vmatpush1.msra.mxu0 0.0
      %2230 = vmatprep.subr.mxu0 0.0
      %2231 = vmatpush1.msra.mxu0 0.0
      %2232 = vmatprep.subr.mxu0 0.0
      %2233 = vmatpush1.msra.mxu0 0.0
      %2234 = vmatprep.subr.mxu0 0.0
      %2235 = vmatpush1.msra.mxu0 0.0
      %2236 = vmatprep.mubr.f32.mxu0 0.0
      %v2237 = vand.u32 %v2162, 4294901760
      %v2238 = vsub.f32 %v2162, %v2237
      %v2239 = vand.u32 %v2238, 4294901760
      %v2240 = vsub.f32 %v2238, %v2239
      %v2241 = vand.u32 %v2240, 4294901760
      %2242 = vmatmul.mubr.f32.gmra.mrb[0].mxu0 %v2241
      %v2243 = vpop.f32.mrb[0].mxu0
      %v2244 = vadd.f32 0.0, %v2243
      %v2245 = vpop.f32.mrb[0].mxu0
      %v2246 = vadd.f32 0.0, %v2245
      %2247 = vdwg.mxu0
      %v2248 = vand.u32 %v2166, 4294901760
      %v2249 = vsub.f32 %v2166, %v2248
      %v2250 = vand.u32 %v2249, 4294901760
      %v2251 = vsub.f32 %v2249, %v2250
      %v2252 = vand.u32 %v2251, 4294901760
      %2253 = vmatprep.subr.mxu0 %v2252
      %v2254 = vand.u32 %v2164, 4294901760
      %v2255 = vsub.f32 %v2164, %v2254
      %v2256 = vand.u32 %v2255, 4294901760
      %v2257 = vsub.f32 %v2255, %v2256
      %v2258 = vand.u32 %v2257, 4294901760
      %2259 = vmatpush1.msra.mxu0 %v2258
      %2260 = vmatprep.subr.mxu0 0.0
      %2261 = vmatpush1.msra.mxu0 0.0
      %2262 = vmatprep.subr.mxu0 0.0
      %2263 = vmatpush1.msra.mxu0 0.0
      %2264 = vmatprep.subr.mxu0 0.0
      %2265 = vmatpush1.msra.mxu0 0.0
      %2266 = vmatprep.subr.mxu0 0.0
      %2267 = vmatpush1.msra.mxu0 0.0
      %2268 = vmatprep.subr.mxu0 0.0
      %2269 = vmatpush1.msra.mxu0 0.0
      %2270 = vmatprep.subr.mxu0 0.0
      %2271 = vmatpush1.msra.mxu0 0.0
      %2272 = vmatprep.subr.mxu0 0.0
      %2273 = vmatpush1.msra.mxu0 0.0
      %2274 = vmatprep.subr.mxu0 0.0
      %2275 = vmatpush1.msra.mxu0 0.0
      %2276 = vmatprep.subr.mxu0 0.0
      %2277 = vmatpush1.msra.mxu0 0.0
      %2278 = vmatprep.subr.mxu0 0.0
      %2279 = vmatpush1.msra.mxu0 0.0
      %2280 = vmatprep.subr.mxu0 0.0
      %2281 = vmatpush1.msra.mxu0 0.0
      %2282 = vmatprep.subr.mxu0 0.0
      %2283 = vmatpush1.msra.mxu0 0.0
      %2284 = vmatprep.subr.mxu0 0.0
      %2285 = vmatpush1.msra.mxu0 0.0
      %2286 = vmatprep.subr.mxu0 0.0
      %2287 = vmatpush1.msra.mxu0 0.0
      %2288 = vmatprep.subr.mxu0 0.0
      %2289 = vmatpush1.msra.mxu0 0.0
      %2290 = vmatprep.subr.mxu0 0.0
      %2291 = vmatpush1.msra.mxu0 0.0
      %2292 = vmatprep.subr.mxu0 0.0
      %2293 = vmatpush1.msra.mxu0 0.0
      %2294 = vmatprep.subr.mxu0 0.0
      %2295 = vmatpush1.msra.mxu0 0.0
      %2296 = vmatprep.subr.mxu0 0.0
      %2297 = vmatpush1.msra.mxu0 0.0
      %2298 = vmatprep.subr.mxu0 0.0
      %2299 = vmatpush1.msra.mxu0 0.0
      %2300 = vmatprep.subr.mxu0 0.0
      %2301 = vmatpush1.msra.mxu0 0.0
      %2302 = vmatprep.subr.mxu0 0.0
      %2303 = vmatpush1.msra.mxu0 0.0
      %2304 = vmatprep.subr.mxu0 0.0
      %2305 = vmatpush1.msra.mxu0 0.0
      %2306 = vmatprep.subr.mxu0 0.0
      %2307 = vmatpush1.msra.mxu0 0.0
      %2308 = vmatprep.subr.mxu0 0.0
      %2309 = vmatpush1.msra.mxu0 0.0
      %2310 = vmatprep.subr.mxu0 0.0
      %2311 = vmatpush1.msra.mxu0 0.0
      %2312 = vmatprep.subr.mxu0 0.0
      %2313 = vmatpush1.msra.mxu0 0.0
      %2314 = vmatprep.subr.mxu0 0.0
      %2315 = vmatpush1.msra.mxu0 0.0
      %2316 = vmatprep.subr.mxu0 0.0
      %2317 = vmatpush1.msra.mxu0 0.0
      %2318 = vmatprep.subr.mxu0 0.0
      %2319 = vmatpush1.msra.mxu0 0.0
      %2320 = vmatprep.subr.mxu0 0.0
      %2321 = vmatpush1.msra.mxu0 0.0
      %2322 = vmatprep.mubr.f32.mxu0 0.0
      %v2323 = vand.u32 %v2162, 4294901760
      %2324 = vmatmul.mubr.f32.gmra.mrb[0].mxu0 %v2323
      %v2325 = vpop.f32.mrb[0].mxu0
      %v2326 = vadd.f32 %v2244, %v2325
      %v2327 = vpop.f32.mrb[0].mxu0
      %v2328 = vadd.f32 %v2246, %v2327
      %2329 = vdwg.mxu0
      %v2330 = vand.u32 %v2166, 4294901760
      %v2331 = vsub.f32 %v2166, %v2330
      %2332 = vmatprep.subr.mxu0 %v2331
      %v2333 = vand.u32 %v2164, 4294901760
      %v2334 = vsub.f32 %v2164, %v2333
      %2335 = vmatpush1.msra.mxu0 %v2334
      %2336 = vmatprep.subr.mxu0 0.0
      %2337 = vmatpush1.msra.mxu0 0.0
      %2338 = vmatprep.subr.mxu0 0.0
      %2339 = vmatpush1.msra.mxu0 0.0
      %2340 = vmatprep.subr.mxu0 0.0
      %2341 = vmatpush1.msra.mxu0 0.0
      %2342 = vmatprep.subr.mxu0 0.0
      %2343 = vmatpush1.msra.mxu0 0.0
      %2344 = vmatprep.subr.mxu0 0.0
      %2345 = vmatpush1.msra.mxu0 0.0
      %2346 = vmatprep.subr.mxu0 0.0
      %2347 = vmatpush1.msra.mxu0 0.0
      %2348 = vmatprep.subr.mxu0 0.0
      %2349 = vmatpush1.msra.mxu0 0.0
      %2350 = vmatprep.subr.mxu0 0.0
      %2351 = vmatpush1.msra.mxu0 0.0
      %2352 = vmatprep.subr.mxu0 0.0
      %2353 = vmatpush1.msra.mxu0 0.0
      %2354 = vmatprep.subr.mxu0 0.0
      %2355 = vmatpush1.msra.mxu0 0.0
      %2356 = vmatprep.subr.mxu0 0.0
      %2357 = vmatpush1.msra.mxu0 0.0
      %2358 = vmatprep.subr.mxu0 0.0
      %2359 = vmatpush1.msra.mxu0 0.0
      %2360 = vmatprep.subr.mxu0 0.0
      %2361 = vmatpush1.msra.mxu0 0.0
      %2362 = vmatprep.subr.mxu0 0.0
      %2363 = vmatpush1.msra.mxu0 0.0
      %2364 = vmatprep.subr.mxu0 0.0
      %2365 = vmatpush1.msra.mxu0 0.0
      %2366 = vmatprep.subr.mxu0 0.0
      %2367 = vmatpush1.msra.mxu0 0.0
      %2368 = vmatprep.subr.mxu0 0.0
      %2369 = vmatpush1.msra.mxu0 0.0
      %2370 = vmatprep.subr.mxu0 0.0
      %2371 = vmatpush1.msra.mxu0 0.0
      %2372 = vmatprep.subr.mxu0 0.0
      %2373 = vmatpush1.msra.mxu0 0.0
      %2374 = vmatprep.subr.mxu0 0.0
      %2375 = vmatpush1.msra.mxu0 0.0
      %2376 = vmatprep.subr.mxu0 0.0
      %2377 = vmatpush1.msra.mxu0 0.0
      %2378 = vmatprep.subr.mxu0 0.0
      %2379 = vmatpush1.msra.mxu0 0.0
      %2380 = vmatprep.subr.mxu0 0.0
      %2381 = vmatpush1.msra.mxu0 0.0
      %2382 = vmatprep.subr.mxu0 0.0
      %2383 = vmatpush1.msra.mxu0 0.0
      %2384 = vmatprep.subr.mxu0 0.0
      %2385 = vmatpush1.msra.mxu0 0.0
      %2386 = vmatprep.subr.mxu0 0.0
      %2387 = vmatpush1.msra.mxu0 0.0
      %2388 = vmatprep.subr.mxu0 0.0
      %2389 = vmatpush1.msra.mxu0 0.0
      %2390 = vmatprep.subr.mxu0 0.0
      %2391 = vmatpush1.msra.mxu0 0.0
      %2392 = vmatprep.subr.mxu0 0.0
      %2393 = vmatpush1.msra.mxu0 0.0
      %2394 = vmatprep.subr.mxu0 0.0
      %2395 = vmatpush1.msra.mxu0 0.0
      %2396 = vmatprep.subr.mxu0 0.0
      %2397 = vmatpush1.msra.mxu0 0.0
      %2398 = vmatprep.mubr.f32.mxu0 0.0
      %v2399 = vand.u32 %v2162, 4294901760
      %v2400 = vsub.f32 %v2162, %v2399
      %2401 = vmatmul.mubr.f32.gmra.mrb[0].mxu0 %v2400
      %v2402 = vpop.f32.mrb[0].mxu0
      %v2403 = vadd.f32 %v2326, %v2402
      %v2404 = vpop.f32.mrb[0].mxu0
      %v2405 = vadd.f32 %v2328, %v2404
      %2406 = vdwg.mxu0
      %v2407 = vand.u32 %v2166, 4294901760
      %2408 = vmatprep.subr.mxu0 %v2407
      %v2409 = vand.u32 %v2164, 4294901760
      %2410 = vmatpush1.msra.mxu0 %v2409
      %2411 = vmatprep.subr.mxu0 0.0
      %2412 = vmatpush1.msra.mxu0 0.0
      %2413 = vmatprep.subr.mxu0 0.0
      %2414 = vmatpush1.msra.mxu0 0.0
      %2415 = vmatprep.subr.mxu0 0.0
      %2416 = vmatpush1.msra.mxu0 0.0
      %2417 = vmatprep.subr.mxu0 0.0
      %2418 = vmatpush1.msra.mxu0 0.0
      %2419 = vmatprep.subr.mxu0 0.0
      %2420 = vmatpush1.msra.mxu0 0.0
      %2421 = vmatprep.subr.mxu0 0.0
      %2422 = vmatpush1.msra.mxu0 0.0
      %2423 = vmatprep.subr.mxu0 0.0
      %2424 = vmatpush1.msra.mxu0 0.0
      %2425 = vmatprep.subr.mxu0 0.0
      %2426 = vmatpush1.msra.mxu0 0.0
      %2427 = vmatprep.subr.mxu0 0.0
      %2428 = vmatpush1.msra.mxu0 0.0
      %2429 = vmatprep.subr.mxu0 0.0
      %2430 = vmatpush1.msra.mxu0 0.0
      %2431 = vmatprep.subr.mxu0 0.0
      %2432 = vmatpush1.msra.mxu0 0.0
      %2433 = vmatprep.subr.mxu0 0.0
      %2434 = vmatpush1.msra.mxu0 0.0
      %2435 = vmatprep.subr.mxu0 0.0
      %2436 = vmatpush1.msra.mxu0 0.0
      %2437 = vmatprep.subr.mxu0 0.0
      %2438 = vmatpush1.msra.mxu0 0.0
      %2439 = vmatprep.subr.mxu0 0.0
      %2440 = vmatpush1.msra.mxu0 0.0
      %2441 = vmatprep.subr.mxu0 0.0
      %2442 = vmatpush1.msra.mxu0 0.0
      %2443 = vmatprep.subr.mxu0 0.0
      %2444 = vmatpush1.msra.mxu0 0.0
      %2445 = vmatprep.subr.mxu0 0.0
      %2446 = vmatpush1.msra.mxu0 0.0
      %2447 = vmatprep.subr.mxu0 0.0
      %2448 = vmatpush1.msra.mxu0 0.0
      %2449 = vmatprep.subr.mxu0 0.0
      %2450 = vmatpush1.msra.mxu0 0.0
      %2451 = vmatprep.subr.mxu0 0.0
      %2452 = vmatpush1.msra.mxu0 0.0
      %2453 = vmatprep.subr.mxu0 0.0
      %2454 = vmatpush1.msra.mxu0 0.0
      %2455 = vmatprep.subr.mxu0 0.0
      %2456 = vmatpush1.msra.mxu0 0.0
      %2457 = vmatprep.subr.mxu0 0.0
      %2458 = vmatpush1.msra.mxu0 0.0
      %2459 = vmatprep.subr.mxu0 0.0
      %2460 = vmatpush1.msra.mxu0 0.0
      %2461 = vmatprep.subr.mxu0 0.0
      %2462 = vmatpush1.msra.mxu0 0.0
      %2463 = vmatprep.subr.mxu0 0.0
      %2464 = vmatpush1.msra.mxu0 0.0
      %2465 = vmatprep.subr.mxu0 0.0
      %2466 = vmatpush1.msra.mxu0 0.0
      %2467 = vmatprep.subr.mxu0 0.0
      %2468 = vmatpush1.msra.mxu0 0.0
      %2469 = vmatprep.subr.mxu0 0.0
      %2470 = vmatpush1.msra.mxu0 0.0
      %2471 = vmatprep.subr.mxu0 0.0
      %2472 = vmatpush1.msra.mxu0 0.0
      %2473 = vmatprep.mubr.f32.mxu0 0.0
      %v2474 = vand.u32 %v2162, 4294901760
      %v2475 = vsub.f32 %v2162, %v2474
      %v2476 = vand.u32 %v2475, 4294901760
      %2477 = vmatmul.mubr.f32.gmra.mrb[0].mxu0 %v2476
      %v2478 = vpop.f32.mrb[0].mxu0
      %v2479 = vadd.f32 %v2403, %v2478
      %v2480 = vpop.f32.mrb[0].mxu0
      %v2481 = vadd.f32 %v2405, %v2480
      %2482 = vdwg.mxu0
      %v2483 = vand.u32 %v2166, 4294901760
      %v2484 = vsub.f32 %v2166, %v2483
      %v2485 = vand.u32 %v2484, 4294901760
      %2486 = vmatprep.subr.mxu0 %v2485
      %v2487 = vand.u32 %v2164, 4294901760
      %v2488 = vsub.f32 %v2164, %v2487
      %v2489 = vand.u32 %v2488, 4294901760
      %2490 = vmatpush1.msra.mxu0 %v2489
      %2491 = vmatprep.subr.mxu0 0.0
      %2492 = vmatpush1.msra.mxu0 0.0
      %2493 = vmatprep.subr.mxu0 0.0
      %2494 = vmatpush1.msra.mxu0 0.0
      %2495 = vmatprep.subr.mxu0 0.0
      %2496 = vmatpush1.msra.mxu0 0.0
      %2497 = vmatprep.subr.mxu0 0.0
      %2498 = vmatpush1.msra.mxu0 0.0
      %2499 = vmatprep.subr.mxu0 0.0
      %2500 = vmatpush1.msra.mxu0 0.0
      %2501 = vmatprep.subr.mxu0 0.0
      %2502 = vmatpush1.msra.mxu0 0.0
      %2503 = vmatprep.subr.mxu0 0.0
      %2504 = vmatpush1.msra.mxu0 0.0
      %2505 = vmatprep.subr.mxu0 0.0
      %2506 = vmatpush1.msra.mxu0 0.0
      %2507 = vmatprep.subr.mxu0 0.0
      %2508 = vmatpush1.msra.mxu0 0.0
      %2509 = vmatprep.subr.mxu0 0.0
      %2510 = vmatpush1.msra.mxu0 0.0
      %2511 = vmatprep.subr.mxu0 0.0
      %2512 = vmatpush1.msra.mxu0 0.0
      %2513 = vmatprep.subr.mxu0 0.0
      %2514 = vmatpush1.msra.mxu0 0.0
      %2515 = vmatprep.subr.mxu0 0.0
      %2516 = vmatpush1.msra.mxu0 0.0
      %2517 = vmatprep.subr.mxu0 0.0
      %2518 = vmatpush1.msra.mxu0 0.0
      %2519 = vmatprep.subr.mxu0 0.0
      %2520 = vmatpush1.msra.mxu0 0.0
      %2521 = vmatprep.subr.mxu0 0.0
      %2522 = vmatpush1.msra.mxu0 0.0
      %2523 = vmatprep.subr.mxu0 0.0
      %2524 = vmatpush1.msra.mxu0 0.0
      %2525 = vmatprep.subr.mxu0 0.0
      %2526 = vmatpush1.msra.mxu0 0.0
      %2527 = vmatprep.subr.mxu0 0.0
      %2528 = vmatpush1.msra.mxu0 0.0
      %2529 = vmatprep.subr.mxu0 0.0
      %2530 = vmatpush1.msra.mxu0 0.0
      %2531 = vmatprep.subr.mxu0 0.0
      %2532 = vmatpush1.msra.mxu0 0.0
      %2533 = vmatprep.subr.mxu0 0.0
      %2534 = vmatpush1.msra.mxu0 0.0
      %2535 = vmatprep.subr.mxu0 0.0
      %2536 = vmatpush1.msra.mxu0 0.0
      %2537 = vmatprep.subr.mxu0 0.0
      %2538 = vmatpush1.msra.mxu0 0.0
      %2539 = vmatprep.subr.mxu0 0.0
      %2540 = vmatpush1.msra.mxu0 0.0
      %2541 = vmatprep.subr.mxu0 0.0
      %2542 = vmatpush1.msra.mxu0 0.0
      %2543 = vmatprep.subr.mxu0 0.0
      %2544 = vmatpush1.msra.mxu0 0.0
      %2545 = vmatprep.subr.mxu0 0.0
      %2546 = vmatpush1.msra.mxu0 0.0
      %2547 = vmatprep.subr.mxu0 0.0
      %2548 = vmatpush1.msra.mxu0 0.0
      %2549 = vmatprep.subr.mxu0 0.0
      %2550 = vmatpush1.msra.mxu0 0.0
      %2551 = vmatprep.subr.mxu0 0.0
      %2552 = vmatpush1.msra.mxu0 0.0
      %2553 = vmatprep.mubr.f32.mxu0 0.0
      %v2554 = vand.u32 %v2162, 4294901760
      %2555 = vmatmul.mubr.f32.gmra.mrb[0].mxu0 %v2554
      %v2556 = vpop.f32.mrb[0].mxu0
      %v2557 = vadd.f32 %v2479, %v2556
      %v2558 = vpop.f32.mrb[0].mxu0
      %v2559 = vadd.f32 %v2481, %v2558
      %2560 = vdwg.mxu0
      %v2561 = vand.u32 %v2166, 4294901760
      %2562 = vmatprep.subr.mxu0 %v2561
      %v2563 = vand.u32 %v2164, 4294901760
      %2564 = vmatpush1.msra.mxu0 %v2563
      %2565 = vmatprep.subr.mxu0 0.0
      %2566 = vmatpush1.msra.mxu0 0.0
      %2567 = vmatprep.subr.mxu0 0.0
      %2568 = vmatpush1.msra.mxu0 0.0
      %2569 = vmatprep.subr.mxu0 0.0
      %2570 = vmatpush1.msra.mxu0 0.0
      %2571 = vmatprep.subr.mxu0 0.0
      %2572 = vmatpush1.msra.mxu0 0.0
      %2573 = vmatprep.subr.mxu0 0.0
      %2574 = vmatpush1.msra.mxu0 0.0
      %2575 = vmatprep.subr.mxu0 0.0
      %2576 = vmatpush1.msra.mxu0 0.0
      %2577 = vmatprep.subr.mxu0 0.0
      %2578 = vmatpush1.msra.mxu0 0.0
      %2579 = vmatprep.subr.mxu0 0.0
      %2580 = vmatpush1.msra.mxu0 0.0
      %2581 = vmatprep.subr.mxu0 0.0
      %2582 = vmatpush1.msra.mxu0 0.0
      %2583 = vmatprep.subr.mxu0 0.0
      %2584 = vmatpush1.msra.mxu0 0.0
      %2585 = vmatprep.subr.mxu0 0.0
      %2586 = vmatpush1.msra.mxu0 0.0
      %2587 = vmatprep.subr.mxu0 0.0
      %2588 = vmatpush1.msra.mxu0 0.0
      %2589 = vmatprep.subr.mxu0 0.0
      %2590 = vmatpush1.msra.mxu0 0.0
      %2591 = vmatprep.subr.mxu0 0.0
      %2592 = vmatpush1.msra.mxu0 0.0
      %2593 = vmatprep.subr.mxu0 0.0
      %2594 = vmatpush1.msra.mxu0 0.0
      %2595 = vmatprep.subr.mxu0 0.0
      %2596 = vmatpush1.msra.mxu0 0.0
      %2597 = vmatprep.subr.mxu0 0.0
      %2598 = vmatpush1.msra.mxu0 0.0
      %2599 = vmatprep.subr.mxu0 0.0
      %2600 = vmatpush1.msra.mxu0 0.0
      %2601 = vmatprep.subr.mxu0 0.0
      %2602 = vmatpush1.msra.mxu0 0.0
      %2603 = vmatprep.subr.mxu0 0.0
      %2604 = vmatpush1.msra.mxu0 0.0
      %2605 = vmatprep.subr.mxu0 0.0
      %2606 = vmatpush1.msra.mxu0 0.0
      %2607 = vmatprep.subr.mxu0 0.0
      %2608 = vmatpush1.msra.mxu0 0.0
      %2609 = vmatprep.subr.mxu0 0.0
      %2610 = vmatpush1.msra.mxu0 0.0
      %2611 = vmatprep.subr.mxu0 0.0
      %2612 = vmatpush1.msra.mxu0 0.0
      %2613 = vmatprep.subr.mxu0 0.0
      %2614 = vmatpush1.msra.mxu0 0.0
      %2615 = vmatprep.subr.mxu0 0.0
      %2616 = vmatpush1.msra.mxu0 0.0
      %2617 = vmatprep.subr.mxu0 0.0
      %2618 = vmatpush1.msra.mxu0 0.0
      %2619 = vmatprep.subr.mxu0 0.0
      %2620 = vmatpush1.msra.mxu0 0.0
      %2621 = vmatprep.subr.mxu0 0.0
      %2622 = vmatpush1.msra.mxu0 0.0
      %2623 = vmatprep.subr.mxu0 0.0
      %2624 = vmatpush1.msra.mxu0 0.0
      %2625 = vmatprep.subr.mxu0 0.0
      %2626 = vmatpush1.msra.mxu0 0.0
      %2627 = vmatprep.mubr.f32.mxu0 0.0
      %v2628 = vand.u32 %v2162, 4294901760
      %2629 = vmatmul.mubr.f32.gmra.mrb[0].mxu0 %v2628
      %v2630 = vpop.f32.mrb[0].mxu0
      %v2631 = vadd.f32 %v2557, %v2630
      %v2632 = vpop.f32.mrb[0].mxu0
      %v2633 = vadd.f32 %v2559, %v2632
      %2634 = vdwg.mxu0
      %2635 = vmatprep.subr.mxu0 0.0
      %v2636 = vand.u32 %v2168, 4294901760
      %2637 = vmatpush1.msra.mxu0 %v2636
      %2638 = vmatprep.subr.mxu0 0.0
      %2639 = vmatpush1.msra.mxu0 0.0
      %2640 = vmatprep.subr.mxu0 0.0
      %2641 = vmatpush1.msra.mxu0 0.0
      %2642 = vmatprep.subr.mxu0 0.0
      %2643 = vmatpush1.msra.mxu0 0.0
      %2644 = vmatprep.subr.mxu0 0.0
      %2645 = vmatpush1.msra.mxu0 0.0
      %2646 = vmatprep.subr.mxu0 0.0
      %2647 = vmatpush1.msra.mxu0 0.0
      %2648 = vmatprep.subr.mxu0 0.0
      %2649 = vmatpush1.msra.mxu0 0.0
      %2650 = vmatprep.subr.mxu0 0.0
      %2651 = vmatpush1.msra.mxu0 0.0
      %2652 = vmatprep.subr.mxu0 0.0
      %2653 = vmatpush1.msra.mxu0 0.0
      %2654 = vmatprep.subr.mxu0 0.0
      %2655 = vmatpush1.msra.mxu0 0.0
      %2656 = vmatprep.subr.mxu0 0.0
      %2657 = vmatpush1.msra.mxu0 0.0
      %2658 = vmatprep.subr.mxu0 0.0
      %2659 = vmatpush1.msra.mxu0 0.0
      %2660 = vmatprep.subr.mxu0 0.0
      %2661 = vmatpush1.msra.mxu0 0.0
      %2662 = vmatprep.subr.mxu0 0.0
      %2663 = vmatpush1.msra.mxu0 0.0
      %2664 = vmatprep.subr.mxu0 0.0
      %2665 = vmatpush1.msra.mxu0 0.0
      %2666 = vmatprep.subr.mxu0 0.0
      %2667 = vmatpush1.msra.mxu0 0.0
      %2668 = vmatprep.subr.mxu0 0.0
      %2669 = vmatpush1.msra.mxu0 0.0
      %2670 = vmatprep.subr.mxu0 0.0
      %2671 = vmatpush1.msra.mxu0 0.0
      %2672 = vmatprep.subr.mxu0 0.0
      %2673 = vmatpush1.msra.mxu0 0.0
      %2674 = vmatprep.subr.mxu0 0.0
      %2675 = vmatpush1.msra.mxu0 0.0
      %2676 = vmatprep.subr.mxu0 0.0
      %2677 = vmatpush1.msra.mxu0 0.0
      %2678 = vmatprep.subr.mxu0 0.0
      %2679 = vmatpush1.msra.mxu0 0.0
      %2680 = vmatprep.subr.mxu0 0.0
      %2681 = vmatpush1.msra.mxu0 0.0
      %2682 = vmatprep.subr.mxu0 0.0
      %2683 = vmatpush1.msra.mxu0 0.0
      %2684 = vmatprep.subr.mxu0 0.0
      %2685 = vmatpush1.msra.mxu0 0.0
      %2686 = vmatprep.subr.mxu0 0.0
      %2687 = vmatpush1.msra.mxu0 0.0
      %2688 = vmatprep.subr.mxu0 0.0
      %2689 = vmatpush1.msra.mxu0 0.0
      %2690 = vmatprep.subr.mxu0 0.0
      %2691 = vmatpush1.msra.mxu0 0.0
      %2692 = vmatprep.subr.mxu0 0.0
      %2693 = vmatpush1.msra.mxu0 0.0
      %2694 = vmatprep.subr.mxu0 0.0
      %2695 = vmatpush1.msra.mxu0 0.0
      %2696 = vmatprep.subr.mxu0 0.0
      %2697 = vmatpush1.msra.mxu0 0.0
      %2698 = vmatprep.subr.mxu0 0.0
      %2699 = vmatpush1.msra.mxu0 0.0
      %2700 = vmatprep.mubr.f32.mxu0 0.0
      %v2701 = vand.u32 %v2162, 4294901760
      %v2702 = vsub.f32 %v2162, %v2701
      %v2703 = vand.u32 %v2702, 4294901760
      %v2704 = vsub.f32 %v2702, %v2703
      %v2705 = vand.u32 %v2704, 4294901760
      %2706 = vmatmul.mubr.f32.gmra.mrb[0].mxu0 %v2705
      %v2707 = vpop.f32.mrb[0].mxu0
      %v2708 = vadd.f32 0.0, %v2707
      %v2709 = vpop.f32.mrb[0].mxu0
      %2710 = vdwg.mxu0
      %2711 = vmatprep.subr.mxu0 0.0
      %v2712 = vand.u32 %v2168, 4294901760
      %v2713 = vsub.f32 %v2168, %v2712
      %v2714 = vand.u32 %v2713, 4294901760
      %v2715 = vsub.f32 %v2713, %v2714
      %v2716 = vand.u32 %v2715, 4294901760
      %2717 = vmatpush1.msra.mxu0 %v2716
      %2718 = vmatprep.subr.mxu0 0.0
      %2719 = vmatpush1.msra.mxu0 0.0
      %2720 = vmatprep.subr.mxu0 0.0
      %2721 = vmatpush1.msra.mxu0 0.0
      %2722 = vmatprep.subr.mxu0 0.0
      %2723 = vmatpush1.msra.mxu0 0.0
      %2724 = vmatprep.subr.mxu0 0.0
      %2725 = vmatpush1.msra.mxu0 0.0
      %2726 = vmatprep.subr.mxu0 0.0
      %2727 = vmatpush1.msra.mxu0 0.0
      %2728 = vmatprep.subr.mxu0 0.0
      %2729 = vmatpush1.msra.mxu0 0.0
      %2730 = vmatprep.subr.mxu0 0.0
      %2731 = vmatpush1.msra.mxu0 0.0
      %2732 = vmatprep.subr.mxu0 0.0
      %2733 = vmatpush1.msra.mxu0 0.0
      %2734 = vmatprep.subr.mxu0 0.0
      %2735 = vmatpush1.msra.mxu0 0.0
      %2736 = vmatprep.subr.mxu0 0.0
      %2737 = vmatpush1.msra.mxu0 0.0
      %2738 = vmatprep.subr.mxu0 0.0
      %2739 = vmatpush1.msra.mxu0 0.0
      %2740 = vmatprep.subr.mxu0 0.0
      %2741 = vmatpush1.msra.mxu0 0.0
      %2742 = vmatprep.subr.mxu0 0.0
      %2743 = vmatpush1.msra.mxu0 0.0
      %2744 = vmatprep.subr.mxu0 0.0
      %2745 = vmatpush1.msra.mxu0 0.0
      %2746 = vmatprep.subr.mxu0 0.0
      %2747 = vmatpush1.msra.mxu0 0.0
      %2748 = vmatprep.subr.mxu0 0.0
      %2749 = vmatpush1.msra.mxu0 0.0
      %2750 = vmatprep.subr.mxu0 0.0
      %2751 = vmatpush1.msra.mxu0 0.0
      %2752 = vmatprep.subr.mxu0 0.0
      %2753 = vmatpush1.msra.mxu0 0.0
      %2754 = vmatprep.subr.mxu0 0.0
      %2755 = vmatpush1.msra.mxu0 0.0
      %2756 = vmatprep.subr.mxu0 0.0
      %2757 = vmatpush1.msra.mxu0 0.0
      %2758 = vmatprep.subr.mxu0 0.0
      %2759 = vmatpush1.msra.mxu0 0.0
      %2760 = vmatprep.subr.mxu0 0.0
      %2761 = vmatpush1.msra.mxu0 0.0
      %2762 = vmatprep.subr.mxu0 0.0
      %2763 = vmatpush1.msra.mxu0 0.0
      %2764 = vmatprep.subr.mxu0 0.0
      %2765 = vmatpush1.msra.mxu0 0.0
      %2766 = vmatprep.subr.mxu0 0.0
      %2767 = vmatpush1.msra.mxu0 0.0
      %2768 = vmatprep.subr.mxu0 0.0
      %2769 = vmatpush1.msra.mxu0 0.0
      %2770 = vmatprep.subr.mxu0 0.0
      %2771 = vmatpush1.msra.mxu0 0.0
      %2772 = vmatprep.subr.mxu0 0.0
      %2773 = vmatpush1.msra.mxu0 0.0
      %2774 = vmatprep.subr.mxu0 0.0
      %2775 = vmatpush1.msra.mxu0 0.0
      %2776 = vmatprep.subr.mxu0 0.0
      %2777 = vmatpush1.msra.mxu0 0.0
      %2778 = vmatprep.subr.mxu0 0.0
      %2779 = vmatpush1.msra.mxu0 0.0
      %2780 = vmatprep.mubr.f32.mxu0 0.0
      %v2781 = vand.u32 %v2162, 4294901760
      %2782 = vmatmul.mubr.f32.gmra.mrb[0].mxu0 %v2781
      %v2783 = vpop.f32.mrb[0].mxu0
      %v2784 = vadd.f32 %v2708, %v2783
      %v2785 = vpop.f32.mrb[0].mxu0
      %2786 = vdwg.mxu0
      %2787 = vmatprep.subr.mxu0 0.0
      %v2788 = vand.u32 %v2168, 4294901760
      %v2789 = vsub.f32 %v2168, %v2788
      %2790 = vmatpush1.msra.mxu0 %v2789
      %2791 = vmatprep.subr.mxu0 0.0
      %2792 = vmatpush1.msra.mxu0 0.0
      %2793 = vmatprep.subr.mxu0 0.0
      %2794 = vmatpush1.msra.mxu0 0.0
      %2795 = vmatprep.subr.mxu0 0.0
      %2796 = vmatpush1.msra.mxu0 0.0
      %2797 = vmatprep.subr.mxu0 0.0
      %2798 = vmatpush1.msra.mxu0 0.0
      %2799 = vmatprep.subr.mxu0 0.0
      %2800 = vmatpush1.msra.mxu0 0.0
      %2801 = vmatprep.subr.mxu0 0.0
      %2802 = vmatpush1.msra.mxu0 0.0
      %2803 = vmatprep.subr.mxu0 0.0
      %2804 = vmatpush1.msra.mxu0 0.0
      %2805 = vmatprep.subr.mxu0 0.0
      %2806 = vmatpush1.msra.mxu0 0.0
      %2807 = vmatprep.subr.mxu0 0.0
      %2808 = vmatpush1.msra.mxu0 0.0
      %2809 = vmatprep.subr.mxu0 0.0
      %2810 = vmatpush1.msra.mxu0 0.0
      %2811 = vmatprep.subr.mxu0 0.0
      %2812 = vmatpush1.msra.mxu0 0.0
      %2813 = vmatprep.subr.mxu0 0.0
      %2814 = vmatpush1.msra.mxu0 0.0
      %2815 = vmatprep.subr.mxu0 0.0
      %2816 = vmatpush1.msra.mxu0 0.0
      %2817 = vmatprep.subr.mxu0 0.0
      %2818 = vmatpush1.msra.mxu0 0.0
      %2819 = vmatprep.subr.mxu0 0.0
      %2820 = vmatpush1.msra.mxu0 0.0
      %2821 = vmatprep.subr.mxu0 0.0
      %2822 = vmatpush1.msra.mxu0 0.0
      %2823 = vmatprep.subr.mxu0 0.0
      %2824 = vmatpush1.msra.mxu0 0.0
      %2825 = vmatprep.subr.mxu0 0.0
      %2826 = vmatpush1.msra.mxu0 0.0
      %2827 = vmatprep.subr.mxu0 0.0
      %2828 = vmatpush1.msra.mxu0 0.0
      %2829 = vmatprep.subr.mxu0 0.0
      %2830 = vmatpush1.msra.mxu0 0.0
      %2831 = vmatprep.subr.mxu0 0.0
      %2832 = vmatpush1.msra.mxu0 0.0
      %2833 = vmatprep.subr.mxu0 0.0
      %2834 = vmatpush1.msra.mxu0 0.0
      %2835 = vmatprep.subr.mxu0 0.0
      %2836 = vmatpush1.msra.mxu0 0.0
      %2837 = vmatprep.subr.mxu0 0.0
      %2838 = vmatpush1.msra.mxu0 0.0
      %2839 = vmatprep.subr.mxu0 0.0
      %2840 = vmatpush1.msra.mxu0 0.0
      %2841 = vmatprep.subr.mxu0 0.0
      %2842 = vmatpush1.msra.mxu0 0.0
      %2843 = vmatprep.subr.mxu0 0.0
      %2844 = vmatpush1.msra.mxu0 0.0
      %2845 = vmatprep.subr.mxu0 0.0
      %2846 = vmatpush1.msra.mxu0 0.0
      %2847 = vmatprep.subr.mxu0 0.0
      %2848 = vmatpush1.msra.mxu0 0.0
      %2849 = vmatprep.subr.mxu0 0.0
      %2850 = vmatpush1.msra.mxu0 0.0
      %2851 = vmatprep.subr.mxu0 0.0
      %2852 = vmatpush1.msra.mxu0 0.0
      %2853 = vmatprep.mubr.f32.mxu0 0.0
      %v2854 = vand.u32 %v2162, 4294901760
      %v2855 = vsub.f32 %v2162, %v2854
      %2856 = vmatmul.mubr.f32.gmra.mrb[0].mxu0 %v2855
      %v2857 = vpop.f32.mrb[0].mxu0
      %v2858 = vadd.f32 %v2784, %v2857
      %v2859 = vpop.f32.mrb[0].mxu0
      %2860 = vdwg.mxu0
      %2861 = vmatprep.subr.mxu0 0.0
      %v2862 = vand.u32 %v2168, 4294901760
      %2863 = vmatpush1.msra.mxu0 %v2862
      %2864 = vmatprep.subr.mxu0 0.0
      %2865 = vmatpush1.msra.mxu0 0.0
      %2866 = vmatprep.subr.mxu0 0.0
      %2867 = vmatpush1.msra.mxu0 0.0
      %2868 = vmatprep.subr.mxu0 0.0
      %2869 = vmatpush1.msra.mxu0 0.0
      %2870 = vmatprep.subr.mxu0 0.0
      %2871 = vmatpush1.msra.mxu0 0.0
      %2872 = vmatprep.subr.mxu0 0.0
      %2873 = vmatpush1.msra.mxu0 0.0
      %2874 = vmatprep.subr.mxu0 0.0
      %2875 = vmatpush1.msra.mxu0 0.0
      %2876 = vmatprep.subr.mxu0 0.0
      %2877 = vmatpush1.msra.mxu0 0.0
      %2878 = vmatprep.subr.mxu0 0.0
      %2879 = vmatpush1.msra.mxu0 0.0
      %2880 = vmatprep.subr.mxu0 0.0
      %2881 = vmatpush1.msra.mxu0 0.0
      %2882 = vmatprep.subr.mxu0 0.0
      %2883 = vmatpush1.msra.mxu0 0.0
      %2884 = vmatprep.subr.mxu0 0.0
      %2885 = vmatpush1.msra.mxu0 0.0
      %2886 = vmatprep.subr.mxu0 0.0
      %2887 = vmatpush1.msra.mxu0 0.0
      %2888 = vmatprep.subr.mxu0 0.0
      %2889 = vmatpush1.msra.mxu0 0.0
      %2890 = vmatprep.subr.mxu0 0.0
      %2891 = vmatpush1.msra.mxu0 0.0
      %2892 = vmatprep.subr.mxu0 0.0
      %2893 = vmatpush1.msra.mxu0 0.0
      %2894 = vmatprep.subr.mxu0 0.0
      %2895 = vmatpush1.msra.mxu0 0.0
      %2896 = vmatprep.subr.mxu0 0.0
      %2897 = vmatpush1.msra.mxu0 0.0
      %2898 = vmatprep.subr.mxu0 0.0
      %2899 = vmatpush1.msra.mxu0 0.0
      %2900 = vmatprep.subr.mxu0 0.0
      %2901 = vmatpush1.msra.mxu0 0.0
      %2902 = vmatprep.subr.mxu0 0.0
      %2903 = vmatpush1.msra.mxu0 0.0
      %2904 = vmatprep.subr.mxu0 0.0
      %2905 = vmatpush1.msra.mxu0 0.0
      %2906 = vmatprep.subr.mxu0 0.0
      %2907 = vmatpush1.msra.mxu0 0.0
      %2908 = vmatprep.subr.mxu0 0.0
      %2909 = vmatpush1.msra.mxu0 0.0
      %2910 = vmatprep.subr.mxu0 0.0
      %2911 = vmatpush1.msra.mxu0 0.0
      %2912 = vmatprep.subr.mxu0 0.0
      %2913 = vmatpush1.msra.mxu0 0.0
      %2914 = vmatprep.subr.mxu0 0.0
      %2915 = vmatpush1.msra.mxu0 0.0
      %2916 = vmatprep.subr.mxu0 0.0
      %2917 = vmatpush1.msra.mxu0 0.0
      %2918 = vmatprep.subr.mxu0 0.0
      %2919 = vmatpush1.msra.mxu0 0.0
      %2920 = vmatprep.subr.mxu0 0.0
      %2921 = vmatpush1.msra.mxu0 0.0
      %2922 = vmatprep.subr.mxu0 0.0
      %2923 = vmatpush1.msra.mxu0 0.0
      %2924 = vmatprep.subr.mxu0 0.0
      %2925 = vmatpush1.msra.mxu0 0.0
      %2926 = vmatprep.mubr.f32.mxu0 0.0
      %v2927 = vand.u32 %v2162, 4294901760
      %v2928 = vsub.f32 %v2162, %v2927
      %v2929 = vand.u32 %v2928, 4294901760
      %2930 = vmatmul.mubr.f32.gmra.mrb[0].mxu0 %v2929
      %v2931 = vpop.f32.mrb[0].mxu0
      %v2932 = vadd.f32 %v2858, %v2931
      %v2933 = vpop.f32.mrb[0].mxu0
      %2934 = vdwg.mxu0
      %2935 = vmatprep.subr.mxu0 0.0
      %v2936 = vand.u32 %v2168, 4294901760
      %v2937 = vsub.f32 %v2168, %v2936
      %v2938 = vand.u32 %v2937, 4294901760
      %2939 = vmatpush1.msra.mxu0 %v2938
      %2940 = vmatprep.subr.mxu0 0.0
      %2941 = vmatpush1.msra.mxu0 0.0
      %2942 = vmatprep.subr.mxu0 0.0
      %2943 = vmatpush1.msra.mxu0 0.0
      %2944 = vmatprep.subr.mxu0 0.0
      %2945 = vmatpush1.msra.mxu0 0.0
      %2946 = vmatprep.subr.mxu0 0.0
      %2947 = vmatpush1.msra.mxu0 0.0
      %2948 = vmatprep.subr.mxu0 0.0
      %2949 = vmatpush1.msra.mxu0 0.0
      %2950 = vmatprep.subr.mxu0 0.0
      %2951 = vmatpush1.msra.mxu0 0.0
      %2952 = vmatprep.subr.mxu0 0.0
      %2953 = vmatpush1.msra.mxu0 0.0
      %2954 = vmatprep.subr.mxu0 0.0
      %2955 = vmatpush1.msra.mxu0 0.0
      %2956 = vmatprep.subr.mxu0 0.0
      %2957 = vmatpush1.msra.mxu0 0.0
      %2958 = vmatprep.subr.mxu0 0.0
      %2959 = vmatpush1.msra.mxu0 0.0
      %2960 = vmatprep.subr.mxu0 0.0
      %2961 = vmatpush1.msra.mxu0 0.0
      %2962 = vmatprep.subr.mxu0 0.0
      %2963 = vmatpush1.msra.mxu0 0.0
      %2964 = vmatprep.subr.mxu0 0.0
      %2965 = vmatpush1.msra.mxu0 0.0
      %2966 = vmatprep.subr.mxu0 0.0
      %2967 = vmatpush1.msra.mxu0 0.0
      %2968 = vmatprep.subr.mxu0 0.0
      %2969 = vmatpush1.msra.mxu0 0.0
      %2970 = vmatprep.subr.mxu0 0.0
      %2971 = vmatpush1.msra.mxu0 0.0
      %2972 = vmatprep.subr.mxu0 0.0
      %2973 = vmatpush1.msra.mxu0 0.0
      %2974 = vmatprep.subr.mxu0 0.0
      %2975 = vmatpush1.msra.mxu0 0.0
      %2976 = vmatprep.subr.mxu0 0.0
      %2977 = vmatpush1.msra.mxu0 0.0
      %2978 = vmatprep.subr.mxu0 0.0
      %2979 = vmatpush1.msra.mxu0 0.0
      %2980 = vmatprep.subr.mxu0 0.0
      %2981 = vmatpush1.msra.mxu0 0.0
      %2982 = vmatprep.subr.mxu0 0.0
      %2983 = vmatpush1.msra.mxu0 0.0
      %2984 = vmatprep.subr.mxu0 0.0
      %2985 = vmatpush1.msra.mxu0 0.0
      %2986 = vmatprep.subr.mxu0 0.0
      %2987 = vmatpush1.msra.mxu0 0.0
      %2988 = vmatprep.subr.mxu0 0.0
      %2989 = vmatpush1.msra.mxu0 0.0
      %2990 = vmatprep.subr.mxu0 0.0
      %2991 = vmatpush1.msra.mxu0 0.0
      %2992 = vmatprep.subr.mxu0 0.0
      %2993 = vmatpush1.msra.mxu0 0.0
      %2994 = vmatprep.subr.mxu0 0.0
      %2995 = vmatpush1.msra.mxu0 0.0
      %2996 = vmatprep.subr.mxu0 0.0
      %2997 = vmatpush1.msra.mxu0 0.0
      %2998 = vmatprep.subr.mxu0 0.0
      %2999 = vmatpush1.msra.mxu0 0.0
      %3000 = vmatprep.subr.mxu0 0.0
      %3001 = vmatpush1.msra.mxu0 0.0
      %3002 = vmatprep.mubr.f32.mxu0 0.0
      %v3003 = vand.u32 %v2162, 4294901760
      %3004 = vmatmul.mubr.f32.gmra.mrb[0].mxu0 %v3003
      %v3005 = vpop.f32.mrb[0].mxu0
      %v3006 = vadd.f32 %v2932, %v3005
      %v3007 = vpop.f32.mrb[0].mxu0
      %3008 = vdwg.mxu0
      %3009 = vmatprep.subr.mxu0 0.0
      %v3010 = vand.u32 %v2168, 4294901760
      %3011 = vmatpush1.msra.mxu0 %v3010
      %3012 = vmatprep.subr.mxu0 0.0
      %3013 = vmatpush1.msra.mxu0 0.0
      %3014 = vmatprep.subr.mxu0 0.0
      %3015 = vmatpush1.msra.mxu0 0.0
      %3016 = vmatprep.subr.mxu0 0.0
      %3017 = vmatpush1.msra.mxu0 0.0
      %3018 = vmatprep.subr.mxu0 0.0
      %3019 = vmatpush1.msra.mxu0 0.0
      %3020 = vmatprep.subr.mxu0 0.0
      %3021 = vmatpush1.msra.mxu0 0.0
      %3022 = vmatprep.subr.mxu0 0.0
      %3023 = vmatpush1.msra.mxu0 0.0
      %3024 = vmatprep.subr.mxu0 0.0
      %3025 = vmatpush1.msra.mxu0 0.0
      %3026 = vmatprep.subr.mxu0 0.0
      %3027 = vmatpush1.msra.mxu0 0.0
      %3028 = vmatprep.subr.mxu0 0.0
      %3029 = vmatpush1.msra.mxu0 0.0
      %3030 = vmatprep.subr.mxu0 0.0
      %3031 = vmatpush1.msra.mxu0 0.0
      %3032 = vmatprep.subr.mxu0 0.0
      %3033 = vmatpush1.msra.mxu0 0.0
      %3034 = vmatprep.subr.mxu0 0.0
      %3035 = vmatpush1.msra.mxu0 0.0
      %3036 = vmatprep.subr.mxu0 0.0
      %3037 = vmatpush1.msra.mxu0 0.0
      %3038 = vmatprep.subr.mxu0 0.0
      %3039 = vmatpush1.msra.mxu0 0.0
      %3040 = vmatprep.subr.mxu0 0.0
      %3041 = vmatpush1.msra.mxu0 0.0
      %3042 = vmatprep.subr.mxu0 0.0
      %3043 = vmatpush1.msra.mxu0 0.0
      %3044 = vmatprep.subr.mxu0 0.0
      %3045 = vmatpush1.msra.mxu0 0.0
      %3046 = vmatprep.subr.mxu0 0.0
      %3047 = vmatpush1.msra.mxu0 0.0
      %3048 = vmatprep.subr.mxu0 0.0
      %3049 = vmatpush1.msra.mxu0 0.0
      %3050 = vmatprep.subr.mxu0 0.0
      %3051 = vmatpush1.msra.mxu0 0.0
      %3052 = vmatprep.subr.mxu0 0.0
      %3053 = vmatpush1.msra.mxu0 0.0
      %3054 = vmatprep.subr.mxu0 0.0
      %3055 = vmatpush1.msra.mxu0 0.0
      %3056 = vmatprep.subr.mxu0 0.0
      %3057 = vmatpush1.msra.mxu0 0.0
      %3058 = vmatprep.subr.mxu0 0.0
      %3059 = vmatpush1.msra.mxu0 0.0
      %3060 = vmatprep.subr.mxu0 0.0
      %3061 = vmatpush1.msra.mxu0 0.0
      %3062 = vmatprep.subr.mxu0 0.0
      %3063 = vmatpush1.msra.mxu0 0.0
      %3064 = vmatprep.subr.mxu0 0.0
      %3065 = vmatpush1.msra.mxu0 0.0
      %3066 = vmatprep.subr.mxu0 0.0
      %3067 = vmatpush1.msra.mxu0 0.0
      %3068 = vmatprep.subr.mxu0 0.0
      %3069 = vmatpush1.msra.mxu0 0.0
      %3070 = vmatprep.subr.mxu0 0.0
      %3071 = vmatpush1.msra.mxu0 0.0
      %3072 = vmatprep.subr.mxu0 0.0
      %3073 = vmatpush1.msra.mxu0 0.0
      %3074 = vmatprep.mubr.f32.mxu0 0.0
      %v3075 = vand.u32 %v2162, 4294901760
      %3076 = vmatmul.mubr.f32.gmra.mrb[0].mxu0 %v3075
      %v3077 = vpop.f32.mrb[0].mxu0
      %v3078 = vadd.f32 %v3006, %v3077
      %v3079 = vpop.f32.mrb[0].mxu0
      %3080 = vdwg.mxu0
      %v3081 = vadd.f32 %v1691, %v2631
      %v3082 = vadd.f32 %v1693, %v2633
      %v3083 = vadd.f32 %v2138, %v3078
      %s3084 = scalar_lea.vmem %s1, 24
      %v3085 = vld [vmem:[%s3084] sm:$0xff]
      %v3086 = vld [vmem:[%s259] sm:$0xff]
      %v3087 = vld [vmem:[%s259 + $0x8] sm:$0xff]
      %v3090 = vcombine.high %v3086, %v3086
      %v3091 = vcombine.high %v3087, %v3087
      %3092 = vrot.lane.b32.xlu0 %v3086, 110
      %v3093 = vpop.permute.xlu0 %3092
      %3094 = vrot.lane.b32.xlu0 %v3090, 110
      %v3095 = vpop.permute.xlu0 %3094
      %3096 = vrot.lane.b32.xlu0 %v3087, 110
      %v3097 = vpop.permute.xlu0 %3096
      %3098 = vrot.lane.b32.xlu0 %v3091, 110
      %v3099 = vpop.permute.xlu0 %3098
      %vm3100 = vcmask 900096
      %v3101 = vsel %vm3100, %v3093, %v3095
      %v3102 = vsel %vm3100, %v3095, %v3097
      %v3103 = vsel %vm3100, %v3097, %v3099
      %v3105 = vsel %vm296, %v3085, 0
      %v3107 = vsel %vm300, %v3101, 0
      %v3109 = vsel %vm300, %v3102, 0
      %v3111 = vsel %vm300, %v3103, 0
      %v3113 = vand.u32 %v3109, 4294901760
      %3114 = vmatprep.subr.mxu0 %v3113
      %v3115 = vand.u32 %v3107, 4294901760
      %3116 = vmatpush1.msra.mxu0 %v3115
      %3117 = vmatprep.subr.mxu0 0.0
      %3118 = vmatpush1.msra.mxu0 0.0
      %3119 = vmatprep.subr.mxu0 0.0
      %3120 = vmatpush1.msra.mxu0 0.0
      %3121 = vmatprep.subr.mxu0 0.0
      %3122 = vmatpush1.msra.mxu0 0.0
      %3123 = vmatprep.subr.mxu0 0.0
      %3124 = vmatpush1.msra.mxu0 0.0
      %3125 = vmatprep.subr.mxu0 0.0
      %3126 = vmatpush1.msra.mxu0 0.0
      %3127 = vmatprep.subr.mxu0 0.0
      %3128 = vmatpush1.msra.mxu0 0.0
      %3129 = vmatprep.subr.mxu0 0.0
      %3130 = vmatpush1.msra.mxu0 0.0
      %3131 = vmatprep.subr.mxu0 0.0
      %3132 = vmatpush1.msra.mxu0 0.0
      %3133 = vmatprep.subr.mxu0 0.0
      %3134 = vmatpush1.msra.mxu0 0.0
      %3135 = vmatprep.subr.mxu0 0.0
      %3136 = vmatpush1.msra.mxu0 0.0
      %3137 = vmatprep.subr.mxu0 0.0
      %3138 = vmatpush1.msra.mxu0 0.0
      %3139 = vmatprep.subr.mxu0 0.0
      %3140 = vmatpush1.msra.mxu0 0.0
      %3141 = vmatprep.subr.mxu0 0.0
      %3142 = vmatpush1.msra.mxu0 0.0
      %3143 = vmatprep.subr.mxu0 0.0
      %3144 = vmatpush1.msra.mxu0 0.0
      %3145 = vmatprep.subr.mxu0 0.0
      %3146 = vmatpush1.msra.mxu0 0.0
      %3147 = vmatprep.subr.mxu0 0.0
      %3148 = vmatpush1.msra.mxu0 0.0
      %3149 = vmatprep.subr.mxu0 0.0
      %3150 = vmatpush1.msra.mxu0 0.0
      %3151 = vmatprep.subr.mxu0 0.0
      %3152 = vmatpush1.msra.mxu0 0.0
      %3153 = vmatprep.subr.mxu0 0.0
      %3154 = vmatpush1.msra.mxu0 0.0
      %3155 = vmatprep.subr.mxu0 0.0
      %3156 = vmatpush1.msra.mxu0 0.0
      %3157 = vmatprep.subr.mxu0 0.0
      %3158 = vmatpush1.msra.mxu0 0.0
      %3159 = vmatprep.subr.mxu0 0.0
      %3160 = vmatpush1.msra.mxu0 0.0
      %3161 = vmatprep.subr.mxu0 0.0
      %3162 = vmatpush1.msra.mxu0 0.0
      %3163 = vmatprep.subr.mxu0 0.0
      %3164 = vmatpush1.msra.mxu0 0.0
      %3165 = vmatprep.subr.mxu0 0.0
      %3166 = vmatpush1.msra.mxu0 0.0
      %3167 = vmatprep.subr.mxu0 0.0
      %3168 = vmatpush1.msra.mxu0 0.0
      %3169 = vmatprep.subr.mxu0 0.0
      %3170 = vmatpush1.msra.mxu0 0.0
      %3171 = vmatprep.subr.mxu0 0.0
      %3172 = vmatpush1.msra.mxu0 0.0
      %3173 = vmatprep.subr.mxu0 0.0
      %3174 = vmatpush1.msra.mxu0 0.0
      %3175 = vmatprep.subr.mxu0 0.0
      %3176 = vmatpush1.msra.mxu0 0.0
      %3177 = vmatprep.subr.mxu0 0.0
      %3178 = vmatpush1.msra.mxu0 0.0
      %3179 = vmatprep.mubr.f32.mxu0 0.0
      %v3180 = vand.u32 %v3105, 4294901760
      %v3181 = vsub.f32 %v3105, %v3180
      %v3182 = vand.u32 %v3181, 4294901760
      %v3183 = vsub.f32 %v3181, %v3182
      %v3184 = vand.u32 %v3183, 4294901760
      %3185 = vmatmul.mubr.f32.gmra.mrb[0].mxu0 %v3184
      %v3186 = vpop.f32.mrb[0].mxu0
      %v3187 = vadd.f32 0.0, %v3186
      %v3188 = vpop.f32.mrb[0].mxu0
      %v3189 = vadd.f32 0.0, %v3188
      %3190 = vdwg.mxu0
      %v3191 = vand.u32 %v3109, 4294901760
      %v3192 = vsub.f32 %v3109, %v3191
      %v3193 = vand.u32 %v3192, 4294901760
      %v3194 = vsub.f32 %v3192, %v3193
      %v3195 = vand.u32 %v3194, 4294901760
      %3196 = vmatprep.subr.mxu0 %v3195
      %v3197 = vand.u32 %v3107, 4294901760
      %v3198 = vsub.f32 %v3107, %v3197
      %v3199 = vand.u32 %v3198, 4294901760
      %v3200 = vsub.f32 %v3198, %v3199
      %v3201 = vand.u32 %v3200, 4294901760
      %3202 = vmatpush1.msra.mxu0 %v3201
      %3203 = vmatprep.subr.mxu0 0.0
      %3204 = vmatpush1.msra.mxu0 0.0
      %3205 = vmatprep.subr.mxu0 0.0
      %3206 = vmatpush1.msra.mxu0 0.0
      %3207 = vmatprep.subr.mxu0 0.0
      %3208 = vmatpush1.msra.mxu0 0.0
      %3209 = vmatprep.subr.mxu0 0.0
      %3210 = vmatpush1.msra.mxu0 0.0
      %3211 = vmatprep.subr.mxu0 0.0
      %3212 = vmatpush1.msra.mxu0 0.0
      %3213 = vmatprep.subr.mxu0 0.0
      %3214 = vmatpush1.msra.mxu0 0.0
      %3215 = vmatprep.subr.mxu0 0.0
      %3216 = vmatpush1.msra.mxu0 0.0
      %3217 = vmatprep.subr.mxu0 0.0
      %3218 = vmatpush1.msra.mxu0 0.0
      %3219 = vmatprep.subr.mxu0 0.0
      %3220 = vmatpush1.msra.mxu0 0.0
      %3221 = vmatprep.subr.mxu0 0.0
      %3222 = vmatpush1.msra.mxu0 0.0
      %3223 = vmatprep.subr.mxu0 0.0
      %3224 = vmatpush1.msra.mxu0 0.0
      %3225 = vmatprep.subr.mxu0 0.0
      %3226 = vmatpush1.msra.mxu0 0.0
      %3227 = vmatprep.subr.mxu0 0.0
      %3228 = vmatpush1.msra.mxu0 0.0
      %3229 = vmatprep.subr.mxu0 0.0
      %3230 = vmatpush1.msra.mxu0 0.0
      %3231 = vmatprep.subr.mxu0 0.0
      %3232 = vmatpush1.msra.mxu0 0.0
      %3233 = vmatprep.subr.mxu0 0.0
      %3234 = vmatpush1.msra.mxu0 0.0
      %3235 = vmatprep.subr.mxu0 0.0
      %3236 = vmatpush1.msra.mxu0 0.0
      %3237 = vmatprep.subr.mxu0 0.0
      %3238 = vmatpush1.msra.mxu0 0.0
      %3239 = vmatprep.subr.mxu0 0.0
      %3240 = vmatpush1.msra.mxu0 0.0
      %3241 = vmatprep.subr.mxu0 0.0
      %3242 = vmatpush1.msra.mxu0 0.0
      %3243 = vmatprep.subr.mxu0 0.0
      %3244 = vmatpush1.msra.mxu0 0.0
      %3245 = vmatprep.subr.mxu0 0.0
      %3246 = vmatpush1.msra.mxu0 0.0
      %3247 = vmatprep.subr.mxu0 0.0
      %3248 = vmatpush1.msra.mxu0 0.0
      %3249 = vmatprep.subr.mxu0 0.0
      %3250 = vmatpush1.msra.mxu0 0.0
      %3251 = vmatprep.subr.mxu0 0.0
      %3252 = vmatpush1.msra.mxu0 0.0
      %3253 = vmatprep.subr.mxu0 0.0
      %3254 = vmatpush1.msra.mxu0 0.0
      %3255 = vmatprep.subr.mxu0 0.0
      %3256 = vmatpush1.msra.mxu0 0.0
      %3257 = vmatprep.subr.mxu0 0.0
      %3258 = vmatpush1.msra.mxu0 0.0
      %3259 = vmatprep.subr.mxu0 0.0
      %3260 = vmatpush1.msra.mxu0 0.0
      %3261 = vmatprep.subr.mxu0 0.0
      %3262 = vmatpush1.msra.mxu0 0.0
      %3263 = vmatprep.subr.mxu0 0.0
      %3264 = vmatpush1.msra.mxu0 0.0
      %3265 = vmatprep.mubr.f32.mxu0 0.0
      %v3266 = vand.u32 %v3105, 4294901760
      %3267 = vmatmul.mubr.f32.gmra.mrb[0].mxu0 %v3266
      %v3268 = vpop.f32.mrb[0].mxu0
      %v3269 = vadd.f32 %v3187, %v3268
      %v3270 = vpop.f32.mrb[0].mxu0
      %v3271 = vadd.f32 %v3189, %v3270
      %3272 = vdwg.mxu0
      %v3273 = vand.u32 %v3109, 4294901760
      %v3274 = vsub.f32 %v3109, %v3273
      %3275 = vmatprep.subr.mxu0 %v3274
      %v3276 = vand.u32 %v3107, 4294901760
      %v3277 = vsub.f32 %v3107, %v3276
      %3278 = vmatpush1.msra.mxu0 %v3277
      %3279 = vmatprep.subr.mxu0 0.0
      %3280 = vmatpush1.msra.mxu0 0.0
      %3281 = vmatprep.subr.mxu0 0.0
      %3282 = vmatpush1.msra.mxu0 0.0
      %3283 = vmatprep.subr.mxu0 0.0
      %3284 = vmatpush1.msra.mxu0 0.0
      %3285 = vmatprep.subr.mxu0 0.0
      %3286 = vmatpush1.msra.mxu0 0.0
      %3287 = vmatprep.subr.mxu0 0.0
      %3288 = vmatpush1.msra.mxu0 0.0
      %3289 = vmatprep.subr.mxu0 0.0
      %3290 = vmatpush1.msra.mxu0 0.0
      %3291 = vmatprep.subr.mxu0 0.0
      %3292 = vmatpush1.msra.mxu0 0.0
      %3293 = vmatprep.subr.mxu0 0.0
      %3294 = vmatpush1.msra.mxu0 0.0
      %3295 = vmatprep.subr.mxu0 0.0
      %3296 = vmatpush1.msra.mxu0 0.0
      %3297 = vmatprep.subr.mxu0 0.0
      %3298 = vmatpush1.msra.mxu0 0.0
      %3299 = vmatprep.subr.mxu0 0.0
      %3300 = vmatpush1.msra.mxu0 0.0
      %3301 = vmatprep.subr.mxu0 0.0
      %3302 = vmatpush1.msra.mxu0 0.0
      %3303 = vmatprep.subr.mxu0 0.0
      %3304 = vmatpush1.msra.mxu0 0.0
      %3305 = vmatprep.subr.mxu0 0.0
      %3306 = vmatpush1.msra.mxu0 0.0
      %3307 = vmatprep.subr.mxu0 0.0
      %3308 = vmatpush1.msra.mxu0 0.0
      %3309 = vmatprep.subr.mxu0 0.0
      %3310 = vmatpush1.msra.mxu0 0.0
      %3311 = vmatprep.subr.mxu0 0.0
      %3312 = vmatpush1.msra.mxu0 0.0
      %3313 = vmatprep.subr.mxu0 0.0
      %3314 = vmatpush1.msra.mxu0 0.0
      %3315 = vmatprep.subr.mxu0 0.0
      %3316 = vmatpush1.msra.mxu0 0.0
      %3317 = vmatprep.subr.mxu0 0.0
      %3318 = vmatpush1.msra.mxu0 0.0
      %3319 = vmatprep.subr.mxu0 0.0
      %3320 = vmatpush1.msra.mxu0 0.0
      %3321 = vmatprep.subr.mxu0 0.0
      %3322 = vmatpush1.msra.mxu0 0.0
      %3323 = vmatprep.subr.mxu0 0.0
      %3324 = vmatpush1.msra.mxu0 0.0
      %3325 = vmatprep.subr.mxu0 0.0
      %3326 = vmatpush1.msra.mxu0 0.0
      %3327 = vmatprep.subr.mxu0 0.0
      %3328 = vmatpush1.msra.mxu0 0.0
      %3329 = vmatprep.subr.mxu0 0.0
      %3330 = vmatpush1.msra.mxu0 0.0
      %3331 = vmatprep.subr.mxu0 0.0
      %3332 = vmatpush1.msra.mxu0 0.0
      %3333 = vmatprep.subr.mxu0 0.0
      %3334 = vmatpush1.msra.mxu0 0.0
      %3335 = vmatprep.subr.mxu0 0.0
      %3336 = vmatpush1.msra.mxu0 0.0
      %3337 = vmatprep.subr.mxu0 0.0
      %3338 = vmatpush1.msra.mxu0 0.0
      %3339 = vmatprep.subr.mxu0 0.0
      %3340 = vmatpush1.msra.mxu0 0.0
      %3341 = vmatprep.mubr.f32.mxu0 0.0
      %v3342 = vand.u32 %v3105, 4294901760
      %v3343 = vsub.f32 %v3105, %v3342
      %3344 = vmatmul.mubr.f32.gmra.mrb[0].mxu0 %v3343
      %v3345 = vpop.f32.mrb[0].mxu0
      %v3346 = vadd.f32 %v3269, %v3345
      %v3347 = vpop.f32.mrb[0].mxu0
      %v3348 = vadd.f32 %v3271, %v3347
      %3349 = vdwg.mxu0
      %v3350 = vand.u32 %v3109, 4294901760
      %3351 = vmatprep.subr.mxu0 %v3350
      %v3352 = vand.u32 %v3107, 4294901760
      %3353 = vmatpush1.msra.mxu0 %v3352
      %3354 = vmatprep.subr.mxu0 0.0
      %3355 = vmatpush1.msra.mxu0 0.0
      %3356 = vmatprep.subr.mxu0 0.0
      %3357 = vmatpush1.msra.mxu0 0.0
      %3358 = vmatprep.subr.mxu0 0.0
      %3359 = vmatpush1.msra.mxu0 0.0
      %3360 = vmatprep.subr.mxu0 0.0
      %3361 = vmatpush1.msra.mxu0 0.0
      %3362 = vmatprep.subr.mxu0 0.0
      %3363 = vmatpush1.msra.mxu0 0.0
      %3364 = vmatprep.subr.mxu0 0.0
      %3365 = vmatpush1.msra.mxu0 0.0
      %3366 = vmatprep.subr.mxu0 0.0
      %3367 = vmatpush1.msra.mxu0 0.0
      %3368 = vmatprep.subr.mxu0 0.0
      %3369 = vmatpush1.msra.mxu0 0.0
      %3370 = vmatprep.subr.mxu0 0.0
      %3371 = vmatpush1.msra.mxu0 0.0
      %3372 = vmatprep.subr.mxu0 0.0
      %3373 = vmatpush1.msra.mxu0 0.0
      %3374 = vmatprep.subr.mxu0 0.0
      %3375 = vmatpush1.msra.mxu0 0.0
      %3376 = vmatprep.subr.mxu0 0.0
      %3377 = vmatpush1.msra.mxu0 0.0
      %3378 = vmatprep.subr.mxu0 0.0
      %3379 = vmatpush1.msra.mxu0 0.0
      %3380 = vmatprep.subr.mxu0 0.0
      %3381 = vmatpush1.msra.mxu0 0.0
      %3382 = vmatprep.subr.mxu0 0.0
      %3383 = vmatpush1.msra.mxu0 0.0
      %3384 = vmatprep.subr.mxu0 0.0
      %3385 = vmatpush1.msra.mxu0 0.0
      %3386 = vmatprep.subr.mxu0 0.0
      %3387 = vmatpush1.msra.mxu0 0.0
      %3388 = vmatprep.subr.mxu0 0.0
      %3389 = vmatpush1.msra.mxu0 0.0
      %3390 = vmatprep.subr.mxu0 0.0
      %3391 = vmatpush1.msra.mxu0 0.0
      %3392 = vmatprep.subr.mxu0 0.0
      %3393 = vmatpush1.msra.mxu0 0.0
      %3394 = vmatprep.subr.mxu0 0.0
      %3395 = vmatpush1.msra.mxu0 0.0
      %3396 = vmatprep.subr.mxu0 0.0
      %3397 = vmatpush1.msra.mxu0 0.0
      %3398 = vmatprep.subr.mxu0 0.0
      %3399 = vmatpush1.msra.mxu0 0.0
      %3400 = vmatprep.subr.mxu0 0.0
      %3401 = vmatpush1.msra.mxu0 0.0
      %3402 = vmatprep.subr.mxu0 0.0
      %3403 = vmatpush1.msra.mxu0 0.0
      %3404 = vmatprep.subr.mxu0 0.0
      %3405 = vmatpush1.msra.mxu0 0.0
      %3406 = vmatprep.subr.mxu0 0.0
      %3407 = vmatpush1.msra.mxu0 0.0
      %3408 = vmatprep.subr.mxu0 0.0
      %3409 = vmatpush1.msra.mxu0 0.0
      %3410 = vmatprep.subr.mxu0 0.0
      %3411 = vmatpush1.msra.mxu0 0.0
      %3412 = vmatprep.subr.mxu0 0.0
      %3413 = vmatpush1.msra.mxu0 0.0
      %3414 = vmatprep.subr.mxu0 0.0
      %3415 = vmatpush1.msra.mxu0 0.0
      %3416 = vmatprep.mubr.f32.mxu0 0.0
      %v3417 = vand.u32 %v3105, 4294901760
      %v3418 = vsub.f32 %v3105, %v3417
      %v3419 = vand.u32 %v3418, 4294901760
      %3420 = vmatmul.mubr.f32.gmra.mrb[0].mxu0 %v3419
      %v3421 = vpop.f32.mrb[0].mxu0
      %v3422 = vadd.f32 %v3346, %v3421
      %v3423 = vpop.f32.mrb[0].mxu0
      %v3424 = vadd.f32 %v3348, %v3423
      %3425 = vdwg.mxu0
      %v3426 = vand.u32 %v3109, 4294901760
      %v3427 = vsub.f32 %v3109, %v3426
      %v3428 = vand.u32 %v3427, 4294901760
      %3429 = vmatprep.subr.mxu0 %v3428
      %v3430 = vand.u32 %v3107, 4294901760
      %v3431 = vsub.f32 %v3107, %v3430
      %v3432 = vand.u32 %v3431, 4294901760
      %3433 = vmatpush1.msra.mxu0 %v3432
      %3434 = vmatprep.subr.mxu0 0.0
      %3435 = vmatpush1.msra.mxu0 0.0
      %3436 = vmatprep.subr.mxu0 0.0
      %3437 = vmatpush1.msra.mxu0 0.0
      %3438 = vmatprep.subr.mxu0 0.0
      %3439 = vmatpush1.msra.mxu0 0.0
      %3440 = vmatprep.subr.mxu0 0.0
      %3441 = vmatpush1.msra.mxu0 0.0
      %3442 = vmatprep.subr.mxu0 0.0
      %3443 = vmatpush1.msra.mxu0 0.0
      %3444 = vmatprep.subr.mxu0 0.0
      %3445 = vmatpush1.msra.mxu0 0.0
      %3446 = vmatprep.subr.mxu0 0.0
      %3447 = vmatpush1.msra.mxu0 0.0
      %3448 = vmatprep.subr.mxu0 0.0
      %3449 = vmatpush1.msra.mxu0 0.0
      %3450 = vmatprep.subr.mxu0 0.0
      %3451 = vmatpush1.msra.mxu0 0.0
      %3452 = vmatprep.subr.mxu0 0.0
      %3453 = vmatpush1.msra.mxu0 0.0
      %3454 = vmatprep.subr.mxu0 0.0
      %3455 = vmatpush1.msra.mxu0 0.0
      %3456 = vmatprep.subr.mxu0 0.0
      %3457 = vmatpush1.msra.mxu0 0.0
      %3458 = vmatprep.subr.mxu0 0.0
      %3459 = vmatpush1.msra.mxu0 0.0
      %3460 = vmatprep.subr.mxu0 0.0
      %3461 = vmatpush1.msra.mxu0 0.0
      %3462 = vmatprep.subr.mxu0 0.0
      %3463 = vmatpush1.msra.mxu0 0.0
      %3464 = vmatprep.subr.mxu0 0.0
      %3465 = vmatpush1.msra.mxu0 0.0
      %3466 = vmatprep.subr.mxu0 0.0
      %3467 = vmatpush1.msra.mxu0 0.0
      %3468 = vmatprep.subr.mxu0 0.0
      %3469 = vmatpush1.msra.mxu0 0.0
      %3470 = vmatprep.subr.mxu0 0.0
      %3471 = vmatpush1.msra.mxu0 0.0
      %3472 = vmatprep.subr.mxu0 0.0
      %3473 = vmatpush1.msra.mxu0 0.0
      %3474 = vmatprep.subr.mxu0 0.0
      %3475 = vmatpush1.msra.mxu0 0.0
      %3476 = vmatprep.subr.mxu0 0.0
      %3477 = vmatpush1.msra.mxu0 0.0
      %3478 = vmatprep.subr.mxu0 0.0
      %3479 = vmatpush1.msra.mxu0 0.0
      %3480 = vmatprep.subr.mxu0 0.0
      %3481 = vmatpush1.msra.mxu0 0.0
      %3482 = vmatprep.subr.mxu0 0.0
      %3483 = vmatpush1.msra.mxu0 0.0
      %3484 = vmatprep.subr.mxu0 0.0
      %3485 = vmatpush1.msra.mxu0 0.0
      %3486 = vmatprep.subr.mxu0 0.0
      %3487 = vmatpush1.msra.mxu0 0.0
      %3488 = vmatprep.subr.mxu0 0.0
      %3489 = vmatpush1.msra.mxu0 0.0
      %3490 = vmatprep.subr.mxu0 0.0
      %3491 = vmatpush1.msra.mxu0 0.0
      %3492 = vmatprep.subr.mxu0 0.0
      %3493 = vmatpush1.msra.mxu0 0.0
      %3494 = vmatprep.subr.mxu0 0.0
      %3495 = vmatpush1.msra.mxu0 0.0
      %3496 = vmatprep.mubr.f32.mxu0 0.0
      %v3497 = vand.u32 %v3105, 4294901760
      %3498 = vmatmul.mubr.f32.gmra.mrb[0].mxu0 %v3497
      %v3499 = vpop.f32.mrb[0].mxu0
      %v3500 = vadd.f32 %v3422, %v3499
      %v3501 = vpop.f32.mrb[0].mxu0
      %v3502 = vadd.f32 %v3424, %v3501
      %3503 = vdwg.mxu0
      %v3504 = vand.u32 %v3109, 4294901760
      %3505 = vmatprep.subr.mxu0 %v3504
      %v3506 = vand.u32 %v3107, 4294901760
      %3507 = vmatpush1.msra.mxu0 %v3506
      %3508 = vmatprep.subr.mxu0 0.0
      %3509 = vmatpush1.msra.mxu0 0.0
      %3510 = vmatprep.subr.mxu0 0.0
      %3511 = vmatpush1.msra.mxu0 0.0
      %3512 = vmatprep.subr.mxu0 0.0
      %3513 = vmatpush1.msra.mxu0 0.0
      %3514 = vmatprep.subr.mxu0 0.0
      %3515 = vmatpush1.msra.mxu0 0.0
      %3516 = vmatprep.subr.mxu0 0.0
      %3517 = vmatpush1.msra.mxu0 0.0
      %3518 = vmatprep.subr.mxu0 0.0
      %3519 = vmatpush1.msra.mxu0 0.0
      %3520 = vmatprep.subr.mxu0 0.0
      %3521 = vmatpush1.msra.mxu0 0.0
      %3522 = vmatprep.subr.mxu0 0.0
      %3523 = vmatpush1.msra.mxu0 0.0
      %3524 = vmatprep.subr.mxu0 0.0
      %3525 = vmatpush1.msra.mxu0 0.0
      %3526 = vmatprep.subr.mxu0 0.0
      %3527 = vmatpush1.msra.mxu0 0.0
      %3528 = vmatprep.subr.mxu0 0.0
      %3529 = vmatpush1.msra.mxu0 0.0
      %3530 = vmatprep.subr.mxu0 0.0
      %3531 = vmatpush1.msra.mxu0 0.0
      %3532 = vmatprep.subr.mxu0 0.0
      %3533 = vmatpush1.msra.mxu0 0.0
      %3534 = vmatprep.subr.mxu0 0.0
      %3535 = vmatpush1.msra.mxu0 0.0
      %3536 = vmatprep.subr.mxu0 0.0
      %3537 = vmatpush1.msra.mxu0 0.0
      %3538 = vmatprep.subr.mxu0 0.0
      %3539 = vmatpush1.msra.mxu0 0.0
      %3540 = vmatprep.subr.mxu0 0.0
      %3541 = vmatpush1.msra.mxu0 0.0
      %3542 = vmatprep.subr.mxu0 0.0
      %3543 = vmatpush1.msra.mxu0 0.0
      %3544 = vmatprep.subr.mxu0 0.0
      %3545 = vmatpush1.msra.mxu0 0.0
      %3546 = vmatprep.subr.mxu0 0.0
      %3547 = vmatpush1.msra.mxu0 0.0
      %3548 = vmatprep.subr.mxu0 0.0
      %3549 = vmatpush1.msra.mxu0 0.0
      %3550 = vmatprep.subr.mxu0 0.0
      %3551 = vmatpush1.msra.mxu0 0.0
      %3552 = vmatprep.subr.mxu0 0.0
      %3553 = vmatpush1.msra.mxu0 0.0
      %3554 = vmatprep.subr.mxu0 0.0
      %3555 = vmatpush1.msra.mxu0 0.0
      %3556 = vmatprep.subr.mxu0 0.0
      %3557 = vmatpush1.msra.mxu0 0.0
      %3558 = vmatprep.subr.mxu0 0.0
      %3559 = vmatpush1.msra.mxu0 0.0
      %3560 = vmatprep.subr.mxu0 0.0
      %3561 = vmatpush1.msra.mxu0 0.0
      %3562 = vmatprep.subr.mxu0 0.0
      %3563 = vmatpush1.msra.mxu0 0.0
      %3564 = vmatprep.subr.mxu0 0.0
      %3565 = vmatpush1.msra.mxu0 0.0
      %3566 = vmatprep.subr.mxu0 0.0
      %3567 = vmatpush1.msra.mxu0 0.0
      %3568 = vmatprep.subr.mxu0 0.0
      %3569 = vmatpush1.msra.mxu0 0.0
      %3570 = vmatprep.mubr.f32.mxu0 0.0
      %v3571 = vand.u32 %v3105, 4294901760
      %3572 = vmatmul.mubr.f32.gmra.mrb[0].mxu0 %v3571
      %v3573 = vpop.f32.mrb[0].mxu0
      %v3574 = vadd.f32 %v3500, %v3573
      %v3575 = vpop.f32.mrb[0].mxu0
      %v3576 = vadd.f32 %v3502, %v3575
      %3577 = vdwg.mxu0
      %3578 = vmatprep.subr.mxu0 0.0
      %v3579 = vand.u32 %v3111, 4294901760
      %3580 = vmatpush1.msra.mxu0 %v3579
      %3581 = vmatprep.subr.mxu0 0.0
      %3582 = vmatpush1.msra.mxu0 0.0
      %3583 = vmatprep.subr.mxu0 0.0
      %3584 = vmatpush1.msra.mxu0 0.0
      %3585 = vmatprep.subr.mxu0 0.0
      %3586 = vmatpush1.msra.mxu0 0.0
      %3587 = vmatprep.subr.mxu0 0.0
      %3588 = vmatpush1.msra.mxu0 0.0
      %3589 = vmatprep.subr.mxu0 0.0
      %3590 = vmatpush1.msra.mxu0 0.0
      %3591 = vmatprep.subr.mxu0 0.0
      %3592 = vmatpush1.msra.mxu0 0.0
      %3593 = vmatprep.subr.mxu0 0.0
      %3594 = vmatpush1.msra.mxu0 0.0
      %3595 = vmatprep.subr.mxu0 0.0
      %3596 = vmatpush1.msra.mxu0 0.0
      %3597 = vmatprep.subr.mxu0 0.0
      %3598 = vmatpush1.msra.mxu0 0.0
      %3599 = vmatprep.subr.mxu0 0.0
      %3600 = vmatpush1.msra.mxu0 0.0
      %3601 = vmatprep.subr.mxu0 0.0
      %3602 = vmatpush1.msra.mxu0 0.0
      %3603 = vmatprep.subr.mxu0 0.0
      %3604 = vmatpush1.msra.mxu0 0.0
      %3605 = vmatprep.subr.mxu0 0.0
      %3606 = vmatpush1.msra.mxu0 0.0
      %3607 = vmatprep.subr.mxu0 0.0
      %3608 = vmatpush1.msra.mxu0 0.0
      %3609 = vmatprep.subr.mxu0 0.0
      %3610 = vmatpush1.msra.mxu0 0.0
      %3611 = vmatprep.subr.mxu0 0.0
      %3612 = vmatpush1.msra.mxu0 0.0
      %3613 = vmatprep.subr.mxu0 0.0
      %3614 = vmatpush1.msra.mxu0 0.0
      %3615 = vmatprep.subr.mxu0 0.0
      %3616 = vmatpush1.msra.mxu0 0.0
      %3617 = vmatprep.subr.mxu0 0.0
      %3618 = vmatpush1.msra.mxu0 0.0
      %3619 = vmatprep.subr.mxu0 0.0
      %3620 = vmatpush1.msra.mxu0 0.0
      %3621 = vmatprep.subr.mxu0 0.0
      %3622 = vmatpush1.msra.mxu0 0.0
      %3623 = vmatprep.subr.mxu0 0.0
      %3624 = vmatpush1.msra.mxu0 0.0
      %3625 = vmatprep.subr.mxu0 0.0
      %3626 = vmatpush1.msra.mxu0 0.0
      %3627 = vmatprep.subr.mxu0 0.0
      %3628 = vmatpush1.msra.mxu0 0.0
      %3629 = vmatprep.subr.mxu0 0.0
      %3630 = vmatpush1.msra.mxu0 0.0
      %3631 = vmatprep.subr.mxu0 0.0
      %3632 = vmatpush1.msra.mxu0 0.0
      %3633 = vmatprep.subr.mxu0 0.0
      %3634 = vmatpush1.msra.mxu0 0.0
      %3635 = vmatprep.subr.mxu0 0.0
      %3636 = vmatpush1.msra.mxu0 0.0
      %3637 = vmatprep.subr.mxu0 0.0
      %3638 = vmatpush1.msra.mxu0 0.0
      %3639 = vmatprep.subr.mxu0 0.0
      %3640 = vmatpush1.msra.mxu0 0.0
      %3641 = vmatprep.subr.mxu0 0.0
      %3642 = vmatpush1.msra.mxu0 0.0
      %3643 = vmatprep.mubr.f32.mxu0 0.0
      %v3644 = vand.u32 %v3105, 4294901760
      %v3645 = vsub.f32 %v3105, %v3644
      %v3646 = vand.u32 %v3645, 4294901760
      %v3647 = vsub.f32 %v3645, %v3646
      %v3648 = vand.u32 %v3647, 4294901760
      %3649 = vmatmul.mubr.f32.gmra.mrb[0].mxu0 %v3648
      %v3650 = vpop.f32.mrb[0].mxu0
      %v3651 = vadd.f32 0.0, %v3650
      %v3652 = vpop.f32.mrb[0].mxu0
      %3653 = vdwg.mxu0
      %3654 = vmatprep.subr.mxu0 0.0
      %v3655 = vand.u32 %v3111, 4294901760
      %v3656 = vsub.f32 %v3111, %v3655
      %v3657 = vand.u32 %v3656, 4294901760
      %v3658 = vsub.f32 %v3656, %v3657
      %v3659 = vand.u32 %v3658, 4294901760
      %3660 = vmatpush1.msra.mxu0 %v3659
      %3661 = vmatprep.subr.mxu0 0.0
      %3662 = vmatpush1.msra.mxu0 0.0
      %3663 = vmatprep.subr.mxu0 0.0
      %3664 = vmatpush1.msra.mxu0 0.0
      %3665 = vmatprep.subr.mxu0 0.0
      %3666 = vmatpush1.msra.mxu0 0.0
      %3667 = vmatprep.subr.mxu0 0.0
      %3668 = vmatpush1.msra.mxu0 0.0
      %3669 = vmatprep.subr.mxu0 0.0
      %3670 = vmatpush1.msra.mxu0 0.0
      %3671 = vmatprep.subr.mxu0 0.0
      %3672 = vmatpush1.msra.mxu0 0.0
      %3673 = vmatprep.subr.mxu0 0.0
      %3674 = vmatpush1.msra.mxu0 0.0
      %3675 = vmatprep.subr.mxu0 0.0
      %3676 = vmatpush1.msra.mxu0 0.0
      %3677 = vmatprep.subr.mxu0 0.0
      %3678 = vmatpush1.msra.mxu0 0.0
      %3679 = vmatprep.subr.mxu0 0.0
      %3680 = vmatpush1.msra.mxu0 0.0
      %3681 = vmatprep.subr.mxu0 0.0
      %3682 = vmatpush1.msra.mxu0 0.0
      %3683 = vmatprep.subr.mxu0 0.0
      %3684 = vmatpush1.msra.mxu0 0.0
      %3685 = vmatprep.subr.mxu0 0.0
      %3686 = vmatpush1.msra.mxu0 0.0
      %3687 = vmatprep.subr.mxu0 0.0
      %3688 = vmatpush1.msra.mxu0 0.0
      %3689 = vmatprep.subr.mxu0 0.0
      %3690 = vmatpush1.msra.mxu0 0.0
      %3691 = vmatprep.subr.mxu0 0.0
      %3692 = vmatpush1.msra.mxu0 0.0
      %3693 = vmatprep.subr.mxu0 0.0
      %3694 = vmatpush1.msra.mxu0 0.0
      %3695 = vmatprep.subr.mxu0 0.0
      %3696 = vmatpush1.msra.mxu0 0.0
      %3697 = vmatprep.subr.mxu0 0.0
      %3698 = vmatpush1.msra.mxu0 0.0
      %3699 = vmatprep.subr.mxu0 0.0
      %3700 = vmatpush1.msra.mxu0 0.0
      %3701 = vmatprep.subr.mxu0 0.0
      %3702 = vmatpush1.msra.mxu0 0.0
      %3703 = vmatprep.subr.mxu0 0.0
      %3704 = vmatpush1.msra.mxu0 0.0
      %3705 = vmatprep.subr.mxu0 0.0
      %3706 = vmatpush1.msra.mxu0 0.0
      %3707 = vmatprep.subr.mxu0 0.0
      %3708 = vmatpush1.msra.mxu0 0.0
      %3709 = vmatprep.subr.mxu0 0.0
      %3710 = vmatpush1.msra.mxu0 0.0
      %3711 = vmatprep.subr.mxu0 0.0
      %3712 = vmatpush1.msra.mxu0 0.0
      %3713 = vmatprep.subr.mxu0 0.0
      %3714 = vmatpush1.msra.mxu0 0.0
      %3715 = vmatprep.subr.mxu0 0.0
      %3716 = vmatpush1.msra.mxu0 0.0
      %3717 = vmatprep.subr.mxu0 0.0
      %3718 = vmatpush1.msra.mxu0 0.0
      %3719 = vmatprep.subr.mxu0 0.0
      %3720 = vmatpush1.msra.mxu0 0.0
      %3721 = vmatprep.subr.mxu0 0.0
      %3722 = vmatpush1.msra.mxu0 0.0
      %3723 = vmatprep.mubr.f32.mxu0 0.0
      %v3724 = vand.u32 %v3105, 4294901760
      %3725 = vmatmul.mubr.f32.gmra.mrb[0].mxu0 %v3724
      %v3726 = vpop.f32.mrb[0].mxu0
      %v3727 = vadd.f32 %v3651, %v3726
      %v3728 = vpop.f32.mrb[0].mxu0
      %3729 = vdwg.mxu0
      %3730 = vmatprep.subr.mxu0 0.0
      %v3731 = vand.u32 %v3111, 4294901760
      %v3732 = vsub.f32 %v3111, %v3731
      %3733 = vmatpush1.msra.mxu0 %v3732
      %3734 = vmatprep.subr.mxu0 0.0
      %3735 = vmatpush1.msra.mxu0 0.0
      %3736 = vmatprep.subr.mxu0 0.0
      %3737 = vmatpush1.msra.mxu0 0.0
      %3738 = vmatprep.subr.mxu0 0.0
      %3739 = vmatpush1.msra.mxu0 0.0
      %3740 = vmatprep.subr.mxu0 0.0
      %3741 = vmatpush1.msra.mxu0 0.0
      %3742 = vmatprep.subr.mxu0 0.0
      %3743 = vmatpush1.msra.mxu0 0.0
      %3744 = vmatprep.subr.mxu0 0.0
      %3745 = vmatpush1.msra.mxu0 0.0
      %3746 = vmatprep.subr.mxu0 0.0
      %3747 = vmatpush1.msra.mxu0 0.0
      %3748 = vmatprep.subr.mxu0 0.0
      %3749 = vmatpush1.msra.mxu0 0.0
      %3750 = vmatprep.subr.mxu0 0.0
      %3751 = vmatpush1.msra.mxu0 0.0
      %3752 = vmatprep.subr.mxu0 0.0
      %3753 = vmatpush1.msra.mxu0 0.0
      %3754 = vmatprep.subr.mxu0 0.0
      %3755 = vmatpush1.msra.mxu0 0.0
      %3756 = vmatprep.subr.mxu0 0.0
      %3757 = vmatpush1.msra.mxu0 0.0
      %3758 = vmatprep.subr.mxu0 0.0
      %3759 = vmatpush1.msra.mxu0 0.0
      %3760 = vmatprep.subr.mxu0 0.0
      %3761 = vmatpush1.msra.mxu0 0.0
      %3762 = vmatprep.subr.mxu0 0.0
      %3763 = vmatpush1.msra.mxu0 0.0
      %3764 = vmatprep.subr.mxu0 0.0
      %3765 = vmatpush1.msra.mxu0 0.0
      %3766 = vmatprep.subr.mxu0 0.0
      %3767 = vmatpush1.msra.mxu0 0.0
      %3768 = vmatprep.subr.mxu0 0.0
      %3769 = vmatpush1.msra.mxu0 0.0
      %3770 = vmatprep.subr.mxu0 0.0
      %3771 = vmatpush1.msra.mxu0 0.0
      %3772 = vmatprep.subr.mxu0 0.0
      %3773 = vmatpush1.msra.mxu0 0.0
      %3774 = vmatprep.subr.mxu0 0.0
      %3775 = vmatpush1.msra.mxu0 0.0
      %3776 = vmatprep.subr.mxu0 0.0
      %3777 = vmatpush1.msra.mxu0 0.0
      %3778 = vmatprep.subr.mxu0 0.0
      %3779 = vmatpush1.msra.mxu0 0.0
      %3780 = vmatprep.subr.mxu0 0.0
      %3781 = vmatpush1.msra.mxu0 0.0
      %3782 = vmatprep.subr.mxu0 0.0
      %3783 = vmatpush1.msra.mxu0 0.0
      %3784 = vmatprep.subr.mxu0 0.0
      %3785 = vmatpush1.msra.mxu0 0.0
      %3786 = vmatprep.subr.mxu0 0.0
      %3787 = vmatpush1.msra.mxu0 0.0
      %3788 = vmatprep.subr.mxu0 0.0
      %3789 = vmatpush1.msra.mxu0 0.0
      %3790 = vmatprep.subr.mxu0 0.0
      %3791 = vmatpush1.msra.mxu0 0.0
      %3792 = vmatprep.subr.mxu0 0.0
      %3793 = vmatpush1.msra.mxu0 0.0
      %3794 = vmatprep.subr.mxu0 0.0
      %3795 = vmatpush1.msra.mxu0 0.0
      %3796 = vmatprep.mubr.f32.mxu0 0.0
      %v3797 = vand.u32 %v3105, 4294901760
      %v3798 = vsub.f32 %v3105, %v3797
      %3799 = vmatmul.mubr.f32.gmra.mrb[0].mxu0 %v3798
      %v3800 = vpop.f32.mrb[0].mxu0
      %v3801 = vadd.f32 %v3727, %v3800
      %v3802 = vpop.f32.mrb[0].mxu0
      %3803 = vdwg.mxu0
      %3804 = vmatprep.subr.mxu0 0.0
      %v3805 = vand.u32 %v3111, 4294901760
      %3806 = vmatpush1.msra.mxu0 %v3805
      %3807 = vmatprep.subr.mxu0 0.0
      %3808 = vmatpush1.msra.mxu0 0.0
      %3809 = vmatprep.subr.mxu0 0.0
      %3810 = vmatpush1.msra.mxu0 0.0
      %3811 = vmatprep.subr.mxu0 0.0
      %3812 = vmatpush1.msra.mxu0 0.0
      %3813 = vmatprep.subr.mxu0 0.0
      %3814 = vmatpush1.msra.mxu0 0.0
      %3815 = vmatprep.subr.mxu0 0.0
      %3816 = vmatpush1.msra.mxu0 0.0
      %3817 = vmatprep.subr.mxu0 0.0
      %3818 = vmatpush1.msra.mxu0 0.0
      %3819 = vmatprep.subr.mxu0 0.0
      %3820 = vmatpush1.msra.mxu0 0.0
      %3821 = vmatprep.subr.mxu0 0.0
      %3822 = vmatpush1.msra.mxu0 0.0
      %3823 = vmatprep.subr.mxu0 0.0
      %3824 = vmatpush1.msra.mxu0 0.0
      %3825 = vmatprep.subr.mxu0 0.0
      %3826 = vmatpush1.msra.mxu0 0.0
      %3827 = vmatprep.subr.mxu0 0.0
      %3828 = vmatpush1.msra.mxu0 0.0
      %3829 = vmatprep.subr.mxu0 0.0
      %3830 = vmatpush1.msra.mxu0 0.0
      %3831 = vmatprep.subr.mxu0 0.0
      %3832 = vmatpush1.msra.mxu0 0.0
      %3833 = vmatprep.subr.mxu0 0.0
      %3834 = vmatpush1.msra.mxu0 0.0
      %3835 = vmatprep.subr.mxu0 0.0
      %3836 = vmatpush1.msra.mxu0 0.0
      %3837 = vmatprep.subr.mxu0 0.0
      %3838 = vmatpush1.msra.mxu0 0.0
      %3839 = vmatprep.subr.mxu0 0.0
      %3840 = vmatpush1.msra.mxu0 0.0
      %3841 = vmatprep.subr.mxu0 0.0
      %3842 = vmatpush1.msra.mxu0 0.0
      %3843 = vmatprep.subr.mxu0 0.0
      %3844 = vmatpush1.msra.mxu0 0.0
      %3845 = vmatprep.subr.mxu0 0.0
      %3846 = vmatpush1.msra.mxu0 0.0
      %3847 = vmatprep.subr.mxu0 0.0
      %3848 = vmatpush1.msra.mxu0 0.0
      %3849 = vmatprep.subr.mxu0 0.0
      %3850 = vmatpush1.msra.mxu0 0.0
      %3851 = vmatprep.subr.mxu0 0.0
      %3852 = vmatpush1.msra.mxu0 0.0
      %3853 = vmatprep.subr.mxu0 0.0
      %3854 = vmatpush1.msra.mxu0 0.0
      %3855 = vmatprep.subr.mxu0 0.0
      %3856 = vmatpush1.msra.mxu0 0.0
      %3857 = vmatprep.subr.mxu0 0.0
      %3858 = vmatpush1.msra.mxu0 0.0
      %3859 = vmatprep.subr.mxu0 0.0
      %3860 = vmatpush1.msra.mxu0 0.0
      %3861 = vmatprep.subr.mxu0 0.0
      %3862 = vmatpush1.msra.mxu0 0.0
      %3863 = vmatprep.subr.mxu0 0.0
      %3864 = vmatpush1.msra.mxu0 0.0
      %3865 = vmatprep.subr.mxu0 0.0
      %3866 = vmatpush1.msra.mxu0 0.0
      %3867 = vmatprep.subr.mxu0 0.0
      %3868 = vmatpush1.msra.mxu0 0.0
      %3869 = vmatprep.mubr.f32.mxu0 0.0
      %v3870 = vand.u32 %v3105, 4294901760
      %v3871 = vsub.f32 %v3105, %v3870
      %v3872 = vand.u32 %v3871, 4294901760
      %3873 = vmatmul.mubr.f32.gmra.mrb[0].mxu0 %v3872
      %v3874 = vpop.f32.mrb[0].mxu0
      %v3875 = vadd.f32 %v3801, %v3874
      %v3876 = vpop.f32.mrb[0].mxu0
      %3877 = vdwg.mxu0
      %3878 = vmatprep.subr.mxu0 0.0
      %v3879 = vand.u32 %v3111, 4294901760
      %v3880 = vsub.f32 %v3111, %v3879
      %v3881 = vand.u32 %v3880, 4294901760
      %3882 = vmatpush1.msra.mxu0 %v3881
      %3883 = vmatprep.subr.mxu0 0.0
      %3884 = vmatpush1.msra.mxu0 0.0
      %3885 = vmatprep.subr.mxu0 0.0
      %3886 = vmatpush1.msra.mxu0 0.0
      %3887 = vmatprep.subr.mxu0 0.0
      %3888 = vmatpush1.msra.mxu0 0.0
      %3889 = vmatprep.subr.mxu0 0.0
      %3890 = vmatpush1.msra.mxu0 0.0
      %3891 = vmatprep.subr.mxu0 0.0
      %3892 = vmatpush1.msra.mxu0 0.0
      %3893 = vmatprep.subr.mxu0 0.0
      %3894 = vmatpush1.msra.mxu0 0.0
      %3895 = vmatprep.subr.mxu0 0.0
      %3896 = vmatpush1.msra.mxu0 0.0
      %3897 = vmatprep.subr.mxu0 0.0
      %3898 = vmatpush1.msra.mxu0 0.0
      %3899 = vmatprep.subr.mxu0 0.0
      %3900 = vmatpush1.msra.mxu0 0.0
      %3901 = vmatprep.subr.mxu0 0.0
      %3902 = vmatpush1.msra.mxu0 0.0
      %3903 = vmatprep.subr.mxu0 0.0
      %3904 = vmatpush1.msra.mxu0 0.0
      %3905 = vmatprep.subr.mxu0 0.0
      %3906 = vmatpush1.msra.mxu0 0.0
      %3907 = vmatprep.subr.mxu0 0.0
      %3908 = vmatpush1.msra.mxu0 0.0
      %3909 = vmatprep.subr.mxu0 0.0
      %3910 = vmatpush1.msra.mxu0 0.0
      %3911 = vmatprep.subr.mxu0 0.0
      %3912 = vmatpush1.msra.mxu0 0.0
      %3913 = vmatprep.subr.mxu0 0.0
      %3914 = vmatpush1.msra.mxu0 0.0
      %3915 = vmatprep.subr.mxu0 0.0
      %3916 = vmatpush1.msra.mxu0 0.0
      %3917 = vmatprep.subr.mxu0 0.0
      %3918 = vmatpush1.msra.mxu0 0.0
      %3919 = vmatprep.subr.mxu0 0.0
      %3920 = vmatpush1.msra.mxu0 0.0
      %3921 = vmatprep.subr.mxu0 0.0
      %3922 = vmatpush1.msra.mxu0 0.0
      %3923 = vmatprep.subr.mxu0 0.0
      %3924 = vmatpush1.msra.mxu0 0.0
      %3925 = vmatprep.subr.mxu0 0.0
      %3926 = vmatpush1.msra.mxu0 0.0
      %3927 = vmatprep.subr.mxu0 0.0
      %3928 = vmatpush1.msra.mxu0 0.0
      %3929 = vmatprep.subr.mxu0 0.0
      %3930 = vmatpush1.msra.mxu0 0.0
      %3931 = vmatprep.subr.mxu0 0.0
      %3932 = vmatpush1.msra.mxu0 0.0
      %3933 = vmatprep.subr.mxu0 0.0
      %3934 = vmatpush1.msra.mxu0 0.0
      %3935 = vmatprep.subr.mxu0 0.0
      %3936 = vmatpush1.msra.mxu0 0.0
      %3937 = vmatprep.subr.mxu0 0.0
      %3938 = vmatpush1.msra.mxu0 0.0
      %3939 = vmatprep.subr.mxu0 0.0
      %3940 = vmatpush1.msra.mxu0 0.0
      %3941 = vmatprep.subr.mxu0 0.0
      %3942 = vmatpush1.msra.mxu0 0.0
      %3943 = vmatprep.subr.mxu0 0.0
      %3944 = vmatpush1.msra.mxu0 0.0
      %3945 = vmatprep.mubr.f32.mxu0 0.0
      %v3946 = vand.u32 %v3105, 4294901760
      %3947 = vmatmul.mubr.f32.gmra.mrb[0].mxu0 %v3946
      %v3948 = vpop.f32.mrb[0].mxu0
      %v3949 = vadd.f32 %v3875, %v3948
      %v3950 = vpop.f32.mrb[0].mxu0
      %3951 = vdwg.mxu0
      %3952 = vmatprep.subr.mxu0 0.0
      %v3953 = vand.u32 %v3111, 4294901760
      %3954 = vmatpush1.msra.mxu0 %v3953
      %3955 = vmatprep.subr.mxu0 0.0
      %3956 = vmatpush1.msra.mxu0 0.0
      %3957 = vmatprep.subr.mxu0 0.0
      %3958 = vmatpush1.msra.mxu0 0.0
      %3959 = vmatprep.subr.mxu0 0.0
      %3960 = vmatpush1.msra.mxu0 0.0
      %3961 = vmatprep.subr.mxu0 0.0
      %3962 = vmatpush1.msra.mxu0 0.0
      %3963 = vmatprep.subr.mxu0 0.0
      %3964 = vmatpush1.msra.mxu0 0.0
      %3965 = vmatprep.subr.mxu0 0.0
      %3966 = vmatpush1.msra.mxu0 0.0
      %3967 = vmatprep.subr.mxu0 0.0
      %3968 = vmatpush1.msra.mxu0 0.0
      %3969 = vmatprep.subr.mxu0 0.0
      %3970 = vmatpush1.msra.mxu0 0.0
      %3971 = vmatprep.subr.mxu0 0.0
      %3972 = vmatpush1.msra.mxu0 0.0
      %3973 = vmatprep.subr.mxu0 0.0
      %3974 = vmatpush1.msra.mxu0 0.0
      %3975 = vmatprep.subr.mxu0 0.0
      %3976 = vmatpush1.msra.mxu0 0.0
      %3977 = vmatprep.subr.mxu0 0.0
      %3978 = vmatpush1.msra.mxu0 0.0
      %3979 = vmatprep.subr.mxu0 0.0
      %3980 = vmatpush1.msra.mxu0 0.0
      %3981 = vmatprep.subr.mxu0 0.0
      %3982 = vmatpush1.msra.mxu0 0.0
      %3983 = vmatprep.subr.mxu0 0.0
      %3984 = vmatpush1.msra.mxu0 0.0
      %3985 = vmatprep.subr.mxu0 0.0
      %3986 = vmatpush1.msra.mxu0 0.0
      %3987 = vmatprep.subr.mxu0 0.0
      %3988 = vmatpush1.msra.mxu0 0.0
      %3989 = vmatprep.subr.mxu0 0.0
      %3990 = vmatpush1.msra.mxu0 0.0
      %3991 = vmatprep.subr.mxu0 0.0
      %3992 = vmatpush1.msra.mxu0 0.0
      %3993 = vmatprep.subr.mxu0 0.0
      %3994 = vmatpush1.msra.mxu0 0.0
      %3995 = vmatprep.subr.mxu0 0.0
      %3996 = vmatpush1.msra.mxu0 0.0
      %3997 = vmatprep.subr.mxu0 0.0
      %3998 = vmatpush1.msra.mxu0 0.0
      %3999 = vmatprep.subr.mxu0 0.0
      %4000 = vmatpush1.msra.mxu0 0.0
      %4001 = vmatprep.subr.mxu0 0.0
      %4002 = vmatpush1.msra.mxu0 0.0
      %4003 = vmatprep.subr.mxu0 0.0
      %4004 = vmatpush1.msra.mxu0 0.0
      %4005 = vmatprep.subr.mxu0 0.0
      %4006 = vmatpush1.msra.mxu0 0.0
      %4007 = vmatprep.subr.mxu0 0.0
      %4008 = vmatpush1.msra.mxu0 0.0
      %4009 = vmatprep.subr.mxu0 0.0
      %4010 = vmatpush1.msra.mxu0 0.0
      %4011 = vmatprep.subr.mxu0 0.0
      %4012 = vmatpush1.msra.mxu0 0.0
      %4013 = vmatprep.subr.mxu0 0.0
      %4014 = vmatpush1.msra.mxu0 0.0
      %4015 = vmatprep.subr.mxu0 0.0
      %4016 = vmatpush1.msra.mxu0 0.0
      %4017 = vmatprep.mubr.f32.mxu0 0.0
      %v4018 = vand.u32 %v3105, 4294901760
      %4019 = vmatmul.mubr.f32.gmra.mrb[0].mxu0 %v4018
      %v4020 = vpop.f32.mrb[0].mxu0
      %v4021 = vadd.f32 %v3949, %v4020
      %v4022 = vpop.f32.mrb[0].mxu0
      %4023 = vdwg.mxu0
      %v4024 = vadd.f32 %v3081, %v3574
      %v4025 = vadd.f32 %v3082, %v3576
      %v4026 = vadd.f32 %v3083, %v4021
      %s4027 = scalar_lea.vmem %s1, 32
      %v4028 = vld [vmem:[%s4027] sm:$0xff]
      %v4029 = vld [vmem:[%s259] sm:$0xff]
      %v4030 = vld [vmem:[%s259 + $0x8] sm:$0xff]
      %v4033 = vcombine.high %v4029, %v4029
      %v4034 = vcombine.high %v4030, %v4030
      %4035 = vrot.lane.b32.xlu0 %v4029, 109
      %v4036 = vpop.permute.xlu0 %4035
      %4037 = vrot.lane.b32.xlu0 %v4033, 109
      %v4038 = vpop.permute.xlu0 %4037
      %4039 = vrot.lane.b32.xlu0 %v4030, 109
      %v4040 = vpop.permute.xlu0 %4039
      %4041 = vrot.lane.b32.xlu0 %v4034, 109
      %v4042 = vpop.permute.xlu0 %4041
      %vm4043 = vcmask 891904
      %v4044 = vsel %vm4043, %v4036, %v4038
      %v4045 = vsel %vm4043, %v4038, %v4040
      %v4046 = vsel %vm4043, %v4040, %v4042
      %v4048 = vsel %vm296, %v4028, 0
      %v4050 = vsel %vm300, %v4044, 0
      %v4052 = vsel %vm300, %v4045, 0
      %v4054 = vsel %vm300, %v4046, 0
      %v4056 = vand.u32 %v4052, 4294901760
      %4057 = vmatprep.subr.mxu0 %v4056
      %v4058 = vand.u32 %v4050, 4294901760
      %4059 = vmatpush1.msra.mxu0 %v4058
      %4060 = vmatprep.subr.mxu0 0.0
      %4061 = vmatpush1.msra.mxu0 0.0
      %4062 = vmatprep.subr.mxu0 0.0
      %4063 = vmatpush1.msra.mxu0 0.0
      %4064 = vmatprep.subr.mxu0 0.0
      %4065 = vmatpush1.msra.mxu0 0.0
      %4066 = vmatprep.subr.mxu0 0.0
      %4067 = vmatpush1.msra.mxu0 0.0
      %4068 = vmatprep.subr.mxu0 0.0
      %4069 = vmatpush1.msra.mxu0 0.0
      %4070 = vmatprep.subr.mxu0 0.0
      %4071 = vmatpush1.msra.mxu0 0.0
      %4072 = vmatprep.subr.mxu0 0.0
      %4073 = vmatpush1.msra.mxu0 0.0
      %4074 = vmatprep.subr.mxu0 0.0
      %4075 = vmatpush1.msra.mxu0 0.0
      %4076 = vmatprep.subr.mxu0 0.0
      %4077 = vmatpush1.msra.mxu0 0.0
      %4078 = vmatprep.subr.mxu0 0.0
      %4079 = vmatpush1.msra.mxu0 0.0
      %4080 = vmatprep.subr.mxu0 0.0
      %4081 = vmatpush1.msra.mxu0 0.0
      %4082 = vmatprep.subr.mxu0 0.0
      %4083 = vmatpush1.msra.mxu0 0.0
      %4084 = vmatprep.subr.mxu0 0.0
      %4085 = vmatpush1.msra.mxu0 0.0
      %4086 = vmatprep.subr.mxu0 0.0
      %4087 = vmatpush1.msra.mxu0 0.0
      %4088 = vmatprep.subr.mxu0 0.0
      %4089 = vmatpush1.msra.mxu0 0.0
      %4090 = vmatprep.subr.mxu0 0.0
      %4091 = vmatpush1.msra.mxu0 0.0
      %4092 = vmatprep.subr.mxu0 0.0
      %4093 = vmatpush1.msra.mxu0 0.0
      %4094 = vmatprep.subr.mxu0 0.0
      %4095 = vmatpush1.msra.mxu0 0.0
      %4096 = vmatprep.subr.mxu0 0.0
      %4097 = vmatpush1.msra.mxu0 0.0
      %4098 = vmatprep.subr.mxu0 0.0
      %4099 = vmatpush1.msra.mxu0 0.0
      %4100 = vmatprep.subr.mxu0 0.0
      %4101 = vmatpush1.msra.mxu0 0.0
      %4102 = vmatprep.subr.mxu0 0.0
      %4103 = vmatpush1.msra.mxu0 0.0
      %4104 = vmatprep.subr.mxu0 0.0
      %4105 = vmatpush1.msra.mxu0 0.0
      %4106 = vmatprep.subr.mxu0 0.0
      %4107 = vmatpush1.msra.mxu0 0.0
      %4108 = vmatprep.subr.mxu0 0.0
      %4109 = vmatpush1.msra.mxu0 0.0
      %4110 = vmatprep.subr.mxu0 0.0
      %4111 = vmatpush1.msra.mxu0 0.0
      %4112 = vmatprep.subr.mxu0 0.0
      %4113 = vmatpush1.msra.mxu0 0.0
      %4114 = vmatprep.subr.mxu0 0.0
      %4115 = vmatpush1.msra.mxu0 0.0
      %4116 = vmatprep.subr.mxu0 0.0
      %4117 = vmatpush1.msra.mxu0 0.0
      %4118 = vmatprep.subr.mxu0 0.0
      %4119 = vmatpush1.msra.mxu0 0.0
      %4120 = vmatprep.subr.mxu0 0.0
      %4121 = vmatpush1.msra.mxu0 0.0
      %4122 = vmatprep.mubr.f32.mxu0 0.0
      %v4123 = vand.u32 %v4048, 4294901760
      %v4124 = vsub.f32 %v4048, %v4123
      %v4125 = vand.u32 %v4124, 4294901760
      %v4126 = vsub.f32 %v4124, %v4125
      %v4127 = vand.u32 %v4126, 4294901760
      %4128 = vmatmul.mubr.f32.gmra.mrb[0].mxu0 %v4127
      %v4129 = vpop.f32.mrb[0].mxu0
      %v4130 = vadd.f32 0.0, %v4129
      %v4131 = vpop.f32.mrb[0].mxu0
      %v4132 = vadd.f32 0.0, %v4131
      %4133 = vdwg.mxu0
      %v4134 = vand.u32 %v4052, 4294901760
      %v4135 = vsub.f32 %v4052, %v4134
      %v4136 = vand.u32 %v4135, 4294901760
      %v4137 = vsub.f32 %v4135, %v4136
      %v4138 = vand.u32 %v4137, 4294901760
      %4139 = vmatprep.subr.mxu0 %v4138
      %v4140 = vand.u32 %v4050, 4294901760
      %v4141 = vsub.f32 %v4050, %v4140
      %v4142 = vand.u32 %v4141, 4294901760
      %v4143 = vsub.f32 %v4141, %v4142
      %v4144 = vand.u32 %v4143, 4294901760
      %4145 = vmatpush1.msra.mxu0 %v4144
      %4146 = vmatprep.subr.mxu0 0.0
      %4147 = vmatpush1.msra.mxu0 0.0
      %4148 = vmatprep.subr.mxu0 0.0
      %4149 = vmatpush1.msra.mxu0 0.0
      %4150 = vmatprep.subr.mxu0 0.0
      %4151 = vmatpush1.msra.mxu0 0.0
      %4152 = vmatprep.subr.mxu0 0.0
      %4153 = vmatpush1.msra.mxu0 0.0
      %4154 = vmatprep.subr.mxu0 0.0
      %4155 = vmatpush1.msra.mxu0 0.0
      %4156 = vmatprep.subr.mxu0 0.0
      %4157 = vmatpush1.msra.mxu0 0.0
      %4158 = vmatprep.subr.mxu0 0.0
      %4159 = vmatpush1.msra.mxu0 0.0
      %4160 = vmatprep.subr.mxu0 0.0
      %4161 = vmatpush1.msra.mxu0 0.0
      %4162 = vmatprep.subr.mxu0 0.0
      %4163 = vmatpush1.msra.mxu0 0.0
      %4164 = vmatprep.subr.mxu0 0.0
      %4165 = vmatpush1.msra.mxu0 0.0
      %4166 = vmatprep.subr.mxu0 0.0
      %4167 = vmatpush1.msra.mxu0 0.0
      %4168 = vmatprep.subr.mxu0 0.0
      %4169 = vmatpush1.msra.mxu0 0.0
      %4170 = vmatprep.subr.mxu0 0.0
      %4171 = vmatpush1.msra.mxu0 0.0
      %4172 = vmatprep.subr.mxu0 0.0
      %4173 = vmatpush1.msra.mxu0 0.0
      %4174 = vmatprep.subr.mxu0 0.0
      %4175 = vmatpush1.msra.mxu0 0.0
      %4176 = vmatprep.subr.mxu0 0.0
      %4177 = vmatpush1.msra.mxu0 0.0
      %4178 = vmatprep.subr.mxu0 0.0
      %4179 = vmatpush1.msra.mxu0 0.0
      %4180 = vmatprep.subr.mxu0 0.0
      %4181 = vmatpush1.msra.mxu0 0.0
      %4182 = vmatprep.subr.mxu0 0.0
      %4183 = vmatpush1.msra.mxu0 0.0
      %4184 = vmatprep.subr.mxu0 0.0
      %4185 = vmatpush1.msra.mxu0 0.0
      %4186 = vmatprep.subr.mxu0 0.0
      %4187 = vmatpush1.msra.mxu0 0.0
      %4188 = vmatprep.subr.mxu0 0.0
      %4189 = vmatpush1.msra.mxu0 0.0
      %4190 = vmatprep.subr.mxu0 0.0
      %4191 = vmatpush1.msra.mxu0 0.0
      %4192 = vmatprep.subr.mxu0 0.0
      %4193 = vmatpush1.msra.mxu0 0.0
      %4194 = vmatprep.subr.mxu0 0.0
      %4195 = vmatpush1.msra.mxu0 0.0
      %4196 = vmatprep.subr.mxu0 0.0
      %4197 = vmatpush1.msra.mxu0 0.0
      %4198 = vmatprep.subr.mxu0 0.0
      %4199 = vmatpush1.msra.mxu0 0.0
      %4200 = vmatprep.subr.mxu0 0.0
      %4201 = vmatpush1.msra.mxu0 0.0
      %4202 = vmatprep.subr.mxu0 0.0
      %4203 = vmatpush1.msra.mxu0 0.0
      %4204 = vmatprep.subr.mxu0 0.0
      %4205 = vmatpush1.msra.mxu0 0.0
      %4206 = vmatprep.subr.mxu0 0.0
      %4207 = vmatpush1.msra.mxu0 0.0
      %4208 = vmatprep.mubr.f32.mxu0 0.0
      %v4209 = vand.u32 %v4048, 4294901760
      %4210 = vmatmul.mubr.f32.gmra.mrb[0].mxu0 %v4209
      %v4211 = vpop.f32.mrb[0].mxu0
      %v4212 = vadd.f32 %v4130, %v4211
      %v4213 = vpop.f32.mrb[0].mxu0
      %v4214 = vadd.f32 %v4132, %v4213
      %4215 = vdwg.mxu0
      %v4216 = vand.u32 %v4052, 4294901760
      %v4217 = vsub.f32 %v4052, %v4216
      %4218 = vmatprep.subr.mxu0 %v4217
      %v4219 = vand.u32 %v4050, 4294901760
      %v4220 = vsub.f32 %v4050, %v4219
      %4221 = vmatpush1.msra.mxu0 %v4220
      %4222 = vmatprep.subr.mxu0 0.0
      %4223 = vmatpush1.msra.mxu0 0.0
      %4224 = vmatprep.subr.mxu0 0.0
      %4225 = vmatpush1.msra.mxu0 0.0
      %4226 = vmatprep.subr.mxu0 0.0
      %4227 = vmatpush1.msra.mxu0 0.0
      %4228 = vmatprep.subr.mxu0 0.0
      %4229 = vmatpush1.msra.mxu0 0.0
      %4230 = vmatprep.subr.mxu0 0.0
      %4231 = vmatpush1.msra.mxu0 0.0
      %4232 = vmatprep.subr.mxu0 0.0
      %4233 = vmatpush1.msra.mxu0 0.0
      %4234 = vmatprep.subr.mxu0 0.0
      %4235 = vmatpush1.msra.mxu0 0.0
      %4236 = vmatprep.subr.mxu0 0.0
      %4237 = vmatpush1.msra.mxu0 0.0
      %4238 = vmatprep.subr.mxu0 0.0
      %4239 = vmatpush1.msra.mxu0 0.0
      %4240 = vmatprep.subr.mxu0 0.0
      %4241 = vmatpush1.msra.mxu0 0.0
      %4242 = vmatprep.subr.mxu0 0.0
      %4243 = vmatpush1.msra.mxu0 0.0
      %4244 = vmatprep.subr.mxu0 0.0
      %4245 = vmatpush1.msra.mxu0 0.0
      %4246 = vmatprep.subr.mxu0 0.0
      %4247 = vmatpush1.msra.mxu0 0.0
      %4248 = vmatprep.subr.mxu0 0.0
      %4249 = vmatpush1.msra.mxu0 0.0
      %4250 = vmatprep.subr.mxu0 0.0
      %4251 = vmatpush1.msra.mxu0 0.0
      %4252 = vmatprep.subr.mxu0 0.0
      %4253 = vmatpush1.msra.mxu0 0.0
      %4254 = vmatprep.subr.mxu0 0.0
      %4255 = vmatpush1.msra.mxu0 0.0
      %4256 = vmatprep.subr.mxu0 0.0
      %4257 = vmatpush1.msra.mxu0 0.0
      %4258 = vmatprep.subr.mxu0 0.0
      %4259 = vmatpush1.msra.mxu0 0.0
      %4260 = vmatprep.subr.mxu0 0.0
      %4261 = vmatpush1.msra.mxu0 0.0
      %4262 = vmatprep.subr.mxu0 0.0
      %4263 = vmatpush1.msra.mxu0 0.0
      %4264 = vmatprep.subr.mxu0 0.0
      %4265 = vmatpush1.msra.mxu0 0.0
      %4266 = vmatprep.subr.mxu0 0.0
      %4267 = vmatpush1.msra.mxu0 0.0
      %4268 = vmatprep.subr.mxu0 0.0
      %4269 = vmatpush1.msra.mxu0 0.0
      %4270 = vmatprep.subr.mxu0 0.0
      %4271 = vmatpush1.msra.mxu0 0.0
      %4272 = vmatprep.subr.mxu0 0.0
      %4273 = vmatpush1.msra.mxu0 0.0
      %4274 = vmatprep.subr.mxu0 0.0
      %4275 = vmatpush1.msra.mxu0 0.0
      %4276 = vmatprep.subr.mxu0 0.0
      %4277 = vmatpush1.msra.mxu0 0.0
      %4278 = vmatprep.subr.mxu0 0.0
      %4279 = vmatpush1.msra.mxu0 0.0
      %4280 = vmatprep.subr.mxu0 0.0
      %4281 = vmatpush1.msra.mxu0 0.0
      %4282 = vmatprep.subr.mxu0 0.0
      %4283 = vmatpush1.msra.mxu0 0.0
      %4284 = vmatprep.mubr.f32.mxu0 0.0
      %v4285 = vand.u32 %v4048, 4294901760
      %v4286 = vsub.f32 %v4048, %v4285
      %4287 = vmatmul.mubr.f32.gmra.mrb[0].mxu0 %v4286
      %v4288 = vpop.f32.mrb[0].mxu0
      %v4289 = vadd.f32 %v4212, %v4288
      %v4290 = vpop.f32.mrb[0].mxu0
      %v4291 = vadd.f32 %v4214, %v4290
      %4292 = vdwg.mxu0
      %v4293 = vand.u32 %v4052, 4294901760
      %4294 = vmatprep.subr.mxu0 %v4293
      %v4295 = vand.u32 %v4050, 4294901760
      %4296 = vmatpush1.msra.mxu0 %v4295
      %4297 = vmatprep.subr.mxu0 0.0
      %4298 = vmatpush1.msra.mxu0 0.0
      %4299 = vmatprep.subr.mxu0 0.0
      %4300 = vmatpush1.msra.mxu0 0.0
      %4301 = vmatprep.subr.mxu0 0.0
      %4302 = vmatpush1.msra.mxu0 0.0
      %4303 = vmatprep.subr.mxu0 0.0
      %4304 = vmatpush1.msra.mxu0 0.0
      %4305 = vmatprep.subr.mxu0 0.0
      %4306 = vmatpush1.msra.mxu0 0.0
      %4307 = vmatprep.subr.mxu0 0.0
      %4308 = vmatpush1.msra.mxu0 0.0
      %4309 = vmatprep.subr.mxu0 0.0
      %4310 = vmatpush1.msra.mxu0 0.0
      %4311 = vmatprep.subr.mxu0 0.0
      %4312 = vmatpush1.msra.mxu0 0.0
      %4313 = vmatprep.subr.mxu0 0.0
      %4314 = vmatpush1.msra.mxu0 0.0
      %4315 = vmatprep.subr.mxu0 0.0
      %4316 = vmatpush1.msra.mxu0 0.0
      %4317 = vmatprep.subr.mxu0 0.0
      %4318 = vmatpush1.msra.mxu0 0.0
      %4319 = vmatprep.subr.mxu0 0.0
      %4320 = vmatpush1.msra.mxu0 0.0
      %4321 = vmatprep.subr.mxu0 0.0
      %4322 = vmatpush1.msra.mxu0 0.0
      %4323 = vmatprep.subr.mxu0 0.0
      %4324 = vmatpush1.msra.mxu0 0.0
      %4325 = vmatprep.subr.mxu0 0.0
      %4326 = vmatpush1.msra.mxu0 0.0
      %4327 = vmatprep.subr.mxu0 0.0
      %4328 = vmatpush1.msra.mxu0 0.0
      %4329 = vmatprep.subr.mxu0 0.0
      %4330 = vmatpush1.msra.mxu0 0.0
      %4331 = vmatprep.subr.mxu0 0.0
      %4332 = vmatpush1.msra.mxu0 0.0
      %4333 = vmatprep.subr.mxu0 0.0
      %4334 = vmatpush1.msra.mxu0 0.0
      %4335 = vmatprep.subr.mxu0 0.0
      %4336 = vmatpush1.msra.mxu0 0.0
      %4337 = vmatprep.subr.mxu0 0.0
      %4338 = vmatpush1.msra.mxu0 0.0
      %4339 = vmatprep.subr.mxu0 0.0
      %4340 = vmatpush1.msra.mxu0 0.0
      %4341 = vmatprep.subr.mxu0 0.0
      %4342 = vmatpush1.msra.mxu0 0.0
      %4343 = vmatprep.subr.mxu0 0.0
      %4344 = vmatpush1.msra.mxu0 0.0
      %4345 = vmatprep.subr.mxu0 0.0
      %4346 = vmatpush1.msra.mxu0 0.0
      %4347 = vmatprep.subr.mxu0 0.0
      %4348 = vmatpush1.msra.mxu0 0.0
      %4349 = vmatprep.subr.mxu0 0.0
      %4350 = vmatpush1.msra.mxu0 0.0
      %4351 = vmatprep.subr.mxu0 0.0
      %4352 = vmatpush1.msra.mxu0 0.0
      %4353 = vmatprep.subr.mxu0 0.0
      %4354 = vmatpush1.msra.mxu0 0.0
      %4355 = vmatprep.subr.mxu0 0.0
      %4356 = vmatpush1.msra.mxu0 0.0
      %4357 = vmatprep.subr.mxu0 0.0
      %4358 = vmatpush1.msra.mxu0 0.0
      %4359 = vmatprep.mubr.f32.mxu0 0.0
      %v4360 = vand.u32 %v4048, 4294901760
      %v4361 = vsub.f32 %v4048, %v4360
      %v4362 = vand.u32 %v4361, 4294901760
      %4363 = vmatmul.mubr.f32.gmra.mrb[0].mxu0 %v4362
      %v4364 = vpop.f32.mrb[0].mxu0
      %v4365 = vadd.f32 %v4289, %v4364
      %v4366 = vpop.f32.mrb[0].mxu0
      %v4367 = vadd.f32 %v4291, %v4366
      %4368 = vdwg.mxu0
      %v4369 = vand.u32 %v4052, 4294901760
      %v4370 = vsub.f32 %v4052, %v4369
      %v4371 = vand.u32 %v4370, 4294901760
      %4372 = vmatprep.subr.mxu0 %v4371
      %v4373 = vand.u32 %v4050, 4294901760
      %v4374 = vsub.f32 %v4050, %v4373
      %v4375 = vand.u32 %v4374, 4294901760
      %4376 = vmatpush1.msra.mxu0 %v4375
      %4377 = vmatprep.subr.mxu0 0.0
      %4378 = vmatpush1.msra.mxu0 0.0
      %4379 = vmatprep.subr.mxu0 0.0
      %4380 = vmatpush1.msra.mxu0 0.0
      %4381 = vmatprep.subr.mxu0 0.0
      %4382 = vmatpush1.msra.mxu0 0.0
      %4383 = vmatprep.subr.mxu0 0.0
      %4384 = vmatpush1.msra.mxu0 0.0
      %4385 = vmatprep.subr.mxu0 0.0
      %4386 = vmatpush1.msra.mxu0 0.0
      %4387 = vmatprep.subr.mxu0 0.0
      %4388 = vmatpush1.msra.mxu0 0.0
      %4389 = vmatprep.subr.mxu0 0.0
      %4390 = vmatpush1.msra.mxu0 0.0
      %4391 = vmatprep.subr.mxu0 0.0
      %4392 = vmatpush1.msra.mxu0 0.0
      %4393 = vmatprep.subr.mxu0 0.0
      %4394 = vmatpush1.msra.mxu0 0.0
      %4395 = vmatprep.subr.mxu0 0.0
      %4396 = vmatpush1.msra.mxu0 0.0
      %4397 = vmatprep.subr.mxu0 0.0
      %4398 = vmatpush1.msra.mxu0 0.0
      %4399 = vmatprep.subr.mxu0 0.0
      %4400 = vmatpush1.msra.mxu0 0.0
      %4401 = vmatprep.subr.mxu0 0.0
      %4402 = vmatpush1.msra.mxu0 0.0
      %4403 = vmatprep.subr.mxu0 0.0
      %4404 = vmatpush1.msra.mxu0 0.0
      %4405 = vmatprep.subr.mxu0 0.0
      %4406 = vmatpush1.msra.mxu0 0.0
      %4407 = vmatprep.subr.mxu0 0.0
      %4408 = vmatpush1.msra.mxu0 0.0
      %4409 = vmatprep.subr.mxu0 0.0
      %4410 = vmatpush1.msra.mxu0 0.0
      %4411 = vmatprep.subr.mxu0 0.0
      %4412 = vmatpush1.msra.mxu0 0.0
      %4413 = vmatprep.subr.mxu0 0.0
      %4414 = vmatpush1.msra.mxu0 0.0
      %4415 = vmatprep.subr.mxu0 0.0
      %4416 = vmatpush1.msra.mxu0 0.0
      %4417 = vmatprep.subr.mxu0 0.0
      %4418 = vmatpush1.msra.mxu0 0.0
      %4419 = vmatprep.subr.mxu0 0.0
      %4420 = vmatpush1.msra.mxu0 0.0
      %4421 = vmatprep.subr.mxu0 0.0
      %4422 = vmatpush1.msra.mxu0 0.0
      %4423 = vmatprep.subr.mxu0 0.0
      %4424 = vmatpush1.msra.mxu0 0.0
      %4425 = vmatprep.subr.mxu0 0.0
      %4426 = vmatpush1.msra.mxu0 0.0
      %4427 = vmatprep.subr.mxu0 0.0
      %4428 = vmatpush1.msra.mxu0 0.0
      %4429 = vmatprep.subr.mxu0 0.0
      %4430 = vmatpush1.msra.mxu0 0.0
      %4431 = vmatprep.subr.mxu0 0.0
      %4432 = vmatpush1.msra.mxu0 0.0
      %4433 = vmatprep.subr.mxu0 0.0
      %4434 = vmatpush1.msra.mxu0 0.0
      %4435 = vmatprep.subr.mxu0 0.0
      %4436 = vmatpush1.msra.mxu0 0.0
      %4437 = vmatprep.subr.mxu0 0.0
      %4438 = vmatpush1.msra.mxu0 0.0
      %4439 = vmatprep.mubr.f32.mxu0 0.0
      %v4440 = vand.u32 %v4048, 4294901760
      %4441 = vmatmul.mubr.f32.gmra.mrb[0].mxu0 %v4440
      %v4442 = vpop.f32.mrb[0].mxu0
      %v4443 = vadd.f32 %v4365, %v4442
      %v4444 = vpop.f32.mrb[0].mxu0
      %v4445 = vadd.f32 %v4367, %v4444
      %4446 = vdwg.mxu0
      %v4447 = vand.u32 %v4052, 4294901760
      %4448 = vmatprep.subr.mxu0 %v4447
      %v4449 = vand.u32 %v4050, 4294901760
      %4450 = vmatpush1.msra.mxu0 %v4449
      %4451 = vmatprep.subr.mxu0 0.0
      %4452 = vmatpush1.msra.mxu0 0.0
      %4453 = vmatprep.subr.mxu0 0.0
      %4454 = vmatpush1.msra.mxu0 0.0
      %4455 = vmatprep.subr.mxu0 0.0
      %4456 = vmatpush1.msra.mxu0 0.0
      %4457 = vmatprep.subr.mxu0 0.0
      %4458 = vmatpush1.msra.mxu0 0.0
      %4459 = vmatprep.subr.mxu0 0.0
      %4460 = vmatpush1.msra.mxu0 0.0
      %4461 = vmatprep.subr.mxu0 0.0
      %4462 = vmatpush1.msra.mxu0 0.0
      %4463 = vmatprep.subr.mxu0 0.0
      %4464 = vmatpush1.msra.mxu0 0.0
      %4465 = vmatprep.subr.mxu0 0.0
      %4466 = vmatpush1.msra.mxu0 0.0
      %4467 = vmatprep.subr.mxu0 0.0
      %4468 = vmatpush1.msra.mxu0 0.0
      %4469 = vmatprep.subr.mxu0 0.0
      %4470 = vmatpush1.msra.mxu0 0.0
      %4471 = vmatprep.subr.mxu0 0.0
      %4472 = vmatpush1.msra.mxu0 0.0
      %4473 = vmatprep.subr.mxu0 0.0
      %4474 = vmatpush1.msra.mxu0 0.0
      %4475 = vmatprep.subr.mxu0 0.0
      %4476 = vmatpush1.msra.mxu0 0.0
      %4477 = vmatprep.subr.mxu0 0.0
      %4478 = vmatpush1.msra.mxu0 0.0
      %4479 = vmatprep.subr.mxu0 0.0
      %4480 = vmatpush1.msra.mxu0 0.0
      %4481 = vmatprep.subr.mxu0 0.0
      %4482 = vmatpush1.msra.mxu0 0.0
      %4483 = vmatprep.subr.mxu0 0.0
      %4484 = vmatpush1.msra.mxu0 0.0
      %4485 = vmatprep.subr.mxu0 0.0
      %4486 = vmatpush1.msra.mxu0 0.0
      %4487 = vmatprep.subr.mxu0 0.0
      %4488 = vmatpush1.msra.mxu0 0.0
      %4489 = vmatprep.subr.mxu0 0.0
      %4490 = vmatpush1.msra.mxu0 0.0
      %4491 = vmatprep.subr.mxu0 0.0
      %4492 = vmatpush1.msra.mxu0 0.0
      %4493 = vmatprep.subr.mxu0 0.0
      %4494 = vmatpush1.msra.mxu0 0.0
      %4495 = vmatprep.subr.mxu0 0.0
      %4496 = vmatpush1.msra.mxu0 0.0
      %4497 = vmatprep.subr.mxu0 0.0
      %4498 = vmatpush1.msra.mxu0 0.0
      %4499 = vmatprep.subr.mxu0 0.0
      %4500 = vmatpush1.msra.mxu0 0.0
      %4501 = vmatprep.subr.mxu0 0.0
      %4502 = vmatpush1.msra.mxu0 0.0
      %4503 = vmatprep.subr.mxu0 0.0
      %4504 = vmatpush1.msra.mxu0 0.0
      %4505 = vmatprep.subr.mxu0 0.0
      %4506 = vmatpush1.msra.mxu0 0.0
      %4507 = vmatprep.subr.mxu0 0.0
      %4508 = vmatpush1.msra.mxu0 0.0
      %4509 = vmatprep.subr.mxu0 0.0
      %4510 = vmatpush1.msra.mxu0 0.0
      %4511 = vmatprep.subr.mxu0 0.0
      %4512 = vmatpush1.msra.mxu0 0.0
      %4513 = vmatprep.mubr.f32.mxu0 0.0
      %v4514 = vand.u32 %v4048, 4294901760
      %4515 = vmatmul.mubr.f32.gmra.mrb[0].mxu0 %v4514
      %v4516 = vpop.f32.mrb[0].mxu0
      %v4517 = vadd.f32 %v4443, %v4516
      %v4518 = vpop.f32.mrb[0].mxu0
      %v4519 = vadd.f32 %v4445, %v4518
      %4520 = vdwg.mxu0
      %4521 = vmatprep.subr.mxu0 0.0
      %v4522 = vand.u32 %v4054, 4294901760
      %4523 = vmatpush1.msra.mxu0 %v4522
      %4524 = vmatprep.subr.mxu0 0.0
      %4525 = vmatpush1.msra.mxu0 0.0
      %4526 = vmatprep.subr.mxu0 0.0
      %4527 = vmatpush1.msra.mxu0 0.0
      %4528 = vmatprep.subr.mxu0 0.0
      %4529 = vmatpush1.msra.mxu0 0.0
      %4530 = vmatprep.subr.mxu0 0.0
      %4531 = vmatpush1.msra.mxu0 0.0
      %4532 = vmatprep.subr.mxu0 0.0
      %4533 = vmatpush1.msra.mxu0 0.0
      %4534 = vmatprep.subr.mxu0 0.0
      %4535 = vmatpush1.msra.mxu0 0.0
      %4536 = vmatprep.subr.mxu0 0.0
      %4537 = vmatpush1.msra.mxu0 0.0
      %4538 = vmatprep.subr.mxu0 0.0
      %4539 = vmatpush1.msra.mxu0 0.0
      %4540 = vmatprep.subr.mxu0 0.0
      %4541 = vmatpush1.msra.mxu0 0.0
      %4542 = vmatprep.subr.mxu0 0.0
      %4543 = vmatpush1.msra.mxu0 0.0
      %4544 = vmatprep.subr.mxu0 0.0
      %4545 = vmatpush1.msra.mxu0 0.0
      %4546 = vmatprep.subr.mxu0 0.0
      %4547 = vmatpush1.msra.mxu0 0.0
      %4548 = vmatprep.subr.mxu0 0.0
      %4549 = vmatpush1.msra.mxu0 0.0
      %4550 = vmatprep.subr.mxu0 0.0
      %4551 = vmatpush1.msra.mxu0 0.0
      %4552 = vmatprep.subr.mxu0 0.0
      %4553 = vmatpush1.msra.mxu0 0.0
      %4554 = vmatprep.subr.mxu0 0.0
      %4555 = vmatpush1.msra.mxu0 0.0
      %4556 = vmatprep.subr.mxu0 0.0
      %4557 = vmatpush1.msra.mxu0 0.0
      %4558 = vmatprep.subr.mxu0 0.0
      %4559 = vmatpush1.msra.mxu0 0.0
      %4560 = vmatprep.subr.mxu0 0.0
      %4561 = vmatpush1.msra.mxu0 0.0
      %4562 = vmatprep.subr.mxu0 0.0
      %4563 = vmatpush1.msra.mxu0 0.0
      %4564 = vmatprep.subr.mxu0 0.0
      %4565 = vmatpush1.msra.mxu0 0.0
      %4566 = vmatprep.subr.mxu0 0.0
      %4567 = vmatpush1.msra.mxu0 0.0
      %4568 = vmatprep.subr.mxu0 0.0
      %4569 = vmatpush1.msra.mxu0 0.0
      %4570 = vmatprep.subr.mxu0 0.0
      %4571 = vmatpush1.msra.mxu0 0.0
      %4572 = vmatprep.subr.mxu0 0.0
      %4573 = vmatpush1.msra.mxu0 0.0
      %4574 = vmatprep.subr.mxu0 0.0
      %4575 = vmatpush1.msra.mxu0 0.0
      %4576 = vmatprep.subr.mxu0 0.0
      %4577 = vmatpush1.msra.mxu0 0.0
      %4578 = vmatprep.subr.mxu0 0.0
      %4579 = vmatpush1.msra.mxu0 0.0
      %4580 = vmatprep.subr.mxu0 0.0
      %4581 = vmatpush1.msra.mxu0 0.0
      %4582 = vmatprep.subr.mxu0 0.0
      %4583 = vmatpush1.msra.mxu0 0.0
      %4584 = vmatprep.subr.mxu0 0.0
      %4585 = vmatpush1.msra.mxu0 0.0
      %4586 = vmatprep.mubr.f32.mxu0 0.0
      %v4587 = vand.u32 %v4048, 4294901760
      %v4588 = vsub.f32 %v4048, %v4587
      %v4589 = vand.u32 %v4588, 4294901760
      %v4590 = vsub.f32 %v4588, %v4589
      %v4591 = vand.u32 %v4590, 4294901760
      %4592 = vmatmul.mubr.f32.gmra.mrb[0].mxu0 %v4591
      %v4593 = vpop.f32.mrb[0].mxu0
      %v4594 = vadd.f32 0.0, %v4593
      %v4595 = vpop.f32.mrb[0].mxu0
      %4596 = vdwg.mxu0
      %4597 = vmatprep.subr.mxu0 0.0
      %v4598 = vand.u32 %v4054, 4294901760
      %v4599 = vsub.f32 %v4054, %v4598
      %v4600 = vand.u32 %v4599, 4294901760
      %v4601 = vsub.f32 %v4599, %v4600
      %v4602 = vand.u32 %v4601, 4294901760
      %4603 = vmatpush1.msra.mxu0 %v4602
      %4604 = vmatprep.subr.mxu0 0.0
      %4605 = vmatpush1.msra.mxu0 0.0
      %4606 = vmatprep.subr.mxu0 0.0
      %4607 = vmatpush1.msra.mxu0 0.0
      %4608 = vmatprep.subr.mxu0 0.0
      %4609 = vmatpush1.msra.mxu0 0.0
      %4610 = vmatprep.subr.mxu0 0.0
      %4611 = vmatpush1.msra.mxu0 0.0
      %4612 = vmatprep.subr.mxu0 0.0
      %4613 = vmatpush1.msra.mxu0 0.0
      %4614 = vmatprep.subr.mxu0 0.0
      %4615 = vmatpush1.msra.mxu0 0.0
      %4616 = vmatprep.subr.mxu0 0.0
      %4617 = vmatpush1.msra.mxu0 0.0
      %4618 = vmatprep.subr.mxu0 0.0
      %4619 = vmatpush1.msra.mxu0 0.0
      %4620 = vmatprep.subr.mxu0 0.0
      %4621 = vmatpush1.msra.mxu0 0.0
      %4622 = vmatprep.subr.mxu0 0.0
      %4623 = vmatpush1.msra.mxu0 0.0
      %4624 = vmatprep.subr.mxu0 0.0
      %4625 = vmatpush1.msra.mxu0 0.0
      %4626 = vmatprep.subr.mxu0 0.0
      %4627 = vmatpush1.msra.mxu0 0.0
      %4628 = vmatprep.subr.mxu0 0.0
      %4629 = vmatpush1.msra.mxu0 0.0
      %4630 = vmatprep.subr.mxu0 0.0
      %4631 = vmatpush1.msra.mxu0 0.0
      %4632 = vmatprep.subr.mxu0 0.0
      %4633 = vmatpush1.msra.mxu0 0.0
      %4634 = vmatprep.subr.mxu0 0.0
      %4635 = vmatpush1.msra.mxu0 0.0
      %4636 = vmatprep.subr.mxu0 0.0
      %4637 = vmatpush1.msra.mxu0 0.0
      %4638 = vmatprep.subr.mxu0 0.0
      %4639 = vmatpush1.msra.mxu0 0.0
      %4640 = vmatprep.subr.mxu0 0.0
      %4641 = vmatpush1.msra.mxu0 0.0
      %4642 = vmatprep.subr.mxu0 0.0
      %4643 = vmatpush1.msra.mxu0 0.0
      %4644 = vmatprep.subr.mxu0 0.0
      %4645 = vmatpush1.msra.mxu0 0.0
      %4646 = vmatprep.subr.mxu0 0.0
      %4647 = vmatpush1.msra.mxu0 0.0
      %4648 = vmatprep.subr.mxu0 0.0
      %4649 = vmatpush1.msra.mxu0 0.0
      %4650 = vmatprep.subr.mxu0 0.0
      %4651 = vmatpush1.msra.mxu0 0.0
      %4652 = vmatprep.subr.mxu0 0.0
      %4653 = vmatpush1.msra.mxu0 0.0
      %4654 = vmatprep.subr.mxu0 0.0
      %4655 = vmatpush1.msra.mxu0 0.0
      %4656 = vmatprep.subr.mxu0 0.0
      %4657 = vmatpush1.msra.mxu0 0.0
      %4658 = vmatprep.subr.mxu0 0.0
      %4659 = vmatpush1.msra.mxu0 0.0
      %4660 = vmatprep.subr.mxu0 0.0
      %4661 = vmatpush1.msra.mxu0 0.0
      %4662 = vmatprep.subr.mxu0 0.0
      %4663 = vmatpush1.msra.mxu0 0.0
      %4664 = vmatprep.subr.mxu0 0.0
      %4665 = vmatpush1.msra.mxu0 0.0
      %4666 = vmatprep.mubr.f32.mxu0 0.0
      %v4667 = vand.u32 %v4048, 4294901760
      %4668 = vmatmul.mubr.f32.gmra.mrb[0].mxu0 %v4667
      %v4669 = vpop.f32.mrb[0].mxu0
      %v4670 = vadd.f32 %v4594, %v4669
      %v4671 = vpop.f32.mrb[0].mxu0
      %4672 = vdwg.mxu0
      %4673 = vmatprep.subr.mxu0 0.0
      %v4674 = vand.u32 %v4054, 4294901760
      %v4675 = vsub.f32 %v4054, %v4674
      %4676 = vmatpush1.msra.mxu0 %v4675
      %4677 = vmatprep.subr.mxu0 0.0
      %4678 = vmatpush1.msra.mxu0 0.0
      %4679 = vmatprep.subr.mxu0 0.0
      %4680 = vmatpush1.msra.mxu0 0.0
      %4681 = vmatprep.subr.mxu0 0.0
      %4682 = vmatpush1.msra.mxu0 0.0
      %4683 = vmatprep.subr.mxu0 0.0
      %4684 = vmatpush1.msra.mxu0 0.0
      %4685 = vmatprep.subr.mxu0 0.0
      %4686 = vmatpush1.msra.mxu0 0.0
      %4687 = vmatprep.subr.mxu0 0.0
      %4688 = vmatpush1.msra.mxu0 0.0
      %4689 = vmatprep.subr.mxu0 0.0
      %4690 = vmatpush1.msra.mxu0 0.0
      %4691 = vmatprep.subr.mxu0 0.0
      %4692 = vmatpush1.msra.mxu0 0.0
      %4693 = vmatprep.subr.mxu0 0.0
      %4694 = vmatpush1.msra.mxu0 0.0
      %4695 = vmatprep.subr.mxu0 0.0
      %4696 = vmatpush1.msra.mxu0 0.0
      %4697 = vmatprep.subr.mxu0 0.0
      %4698 = vmatpush1.msra.mxu0 0.0
      %4699 = vmatprep.subr.mxu0 0.0
      %4700 = vmatpush1.msra.mxu0 0.0
      %4701 = vmatprep.subr.mxu0 0.0
      %4702 = vmatpush1.msra.mxu0 0.0
      %4703 = vmatprep.subr.mxu0 0.0
      %4704 = vmatpush1.msra.mxu0 0.0
      %4705 = vmatprep.subr.mxu0 0.0
      %4706 = vmatpush1.msra.mxu0 0.0
      %4707 = vmatprep.subr.mxu0 0.0
      %4708 = vmatpush1.msra.mxu0 0.0
      %4709 = vmatprep.subr.mxu0 0.0
      %4710 = vmatpush1.msra.mxu0 0.0
      %4711 = vmatprep.subr.mxu0 0.0
      %4712 = vmatpush1.msra.mxu0 0.0
      %4713 = vmatprep.subr.mxu0 0.0
      %4714 = vmatpush1.msra.mxu0 0.0
      %4715 = vmatprep.subr.mxu0 0.0
      %4716 = vmatpush1.msra.mxu0 0.0
      %4717 = vmatprep.subr.mxu0 0.0
      %4718 = vmatpush1.msra.mxu0 0.0
      %4719 = vmatprep.subr.mxu0 0.0
      %4720 = vmatpush1.msra.mxu0 0.0
      %4721 = vmatprep.subr.mxu0 0.0
      %4722 = vmatpush1.msra.mxu0 0.0
      %4723 = vmatprep.subr.mxu0 0.0
      %4724 = vmatpush1.msra.mxu0 0.0
      %4725 = vmatprep.subr.mxu0 0.0
      %4726 = vmatpush1.msra.mxu0 0.0
      %4727 = vmatprep.subr.mxu0 0.0
      %4728 = vmatpush1.msra.mxu0 0.0
      %4729 = vmatprep.subr.mxu0 0.0
      %4730 = vmatpush1.msra.mxu0 0.0
      %4731 = vmatprep.subr.mxu0 0.0
      %4732 = vmatpush1.msra.mxu0 0.0
      %4733 = vmatprep.subr.mxu0 0.0
      %4734 = vmatpush1.msra.mxu0 0.0
      %4735 = vmatprep.subr.mxu0 0.0
      %4736 = vmatpush1.msra.mxu0 0.0
      %4737 = vmatprep.subr.mxu0 0.0
      %4738 = vmatpush1.msra.mxu0 0.0
      %4739 = vmatprep.mubr.f32.mxu0 0.0
      %v4740 = vand.u32 %v4048, 4294901760
      %v4741 = vsub.f32 %v4048, %v4740
      %4742 = vmatmul.mubr.f32.gmra.mrb[0].mxu0 %v4741
      %v4743 = vpop.f32.mrb[0].mxu0
      %v4744 = vadd.f32 %v4670, %v4743
      %v4745 = vpop.f32.mrb[0].mxu0
      %4746 = vdwg.mxu0
      %4747 = vmatprep.subr.mxu0 0.0
      %v4748 = vand.u32 %v4054, 4294901760
      %4749 = vmatpush1.msra.mxu0 %v4748
      %4750 = vmatprep.subr.mxu0 0.0
      %4751 = vmatpush1.msra.mxu0 0.0
      %4752 = vmatprep.subr.mxu0 0.0
      %4753 = vmatpush1.msra.mxu0 0.0
      %4754 = vmatprep.subr.mxu0 0.0
      %4755 = vmatpush1.msra.mxu0 0.0
      %4756 = vmatprep.subr.mxu0 0.0
      %4757 = vmatpush1.msra.mxu0 0.0
      %4758 = vmatprep.subr.mxu0 0.0
      %4759 = vmatpush1.msra.mxu0 0.0
      %4760 = vmatprep.subr.mxu0 0.0
      %4761 = vmatpush1.msra.mxu0 0.0
      %4762 = vmatprep.subr.mxu0 0.0
      %4763 = vmatpush1.msra.mxu0 0.0
      %4764 = vmatprep.subr.mxu0 0.0
      %4765 = vmatpush1.msra.mxu0 0.0
      %4766 = vmatprep.subr.mxu0 0.0
      %4767 = vmatpush1.msra.mxu0 0.0
      %4768 = vmatprep.subr.mxu0 0.0
      %4769 = vmatpush1.msra.mxu0 0.0
      %4770 = vmatprep.subr.mxu0 0.0
      %4771 = vmatpush1.msra.mxu0 0.0
      %4772 = vmatprep.subr.mxu0 0.0
      %4773 = vmatpush1.msra.mxu0 0.0
      %4774 = vmatprep.subr.mxu0 0.0
      %4775 = vmatpush1.msra.mxu0 0.0
      %4776 = vmatprep.subr.mxu0 0.0
      %4777 = vmatpush1.msra.mxu0 0.0
      %4778 = vmatprep.subr.mxu0 0.0
      %4779 = vmatpush1.msra.mxu0 0.0
      %4780 = vmatprep.subr.mxu0 0.0
      %4781 = vmatpush1.msra.mxu0 0.0
      %4782 = vmatprep.subr.mxu0 0.0
      %4783 = vmatpush1.msra.mxu0 0.0
      %4784 = vmatprep.subr.mxu0 0.0
      %4785 = vmatpush1.msra.mxu0 0.0
      %4786 = vmatprep.subr.mxu0 0.0
      %4787 = vmatpush1.msra.mxu0 0.0
      %4788 = vmatprep.subr.mxu0 0.0
      %4789 = vmatpush1.msra.mxu0 0.0
      %4790 = vmatprep.subr.mxu0 0.0
      %4791 = vmatpush1.msra.mxu0 0.0
      %4792 = vmatprep.subr.mxu0 0.0
      %4793 = vmatpush1.msra.mxu0 0.0
      %4794 = vmatprep.subr.mxu0 0.0
      %4795 = vmatpush1.msra.mxu0 0.0
      %4796 = vmatprep.subr.mxu0 0.0
      %4797 = vmatpush1.msra.mxu0 0.0
      %4798 = vmatprep.subr.mxu0 0.0
      %4799 = vmatpush1.msra.mxu0 0.0
      %4800 = vmatprep.subr.mxu0 0.0
      %4801 = vmatpush1.msra.mxu0 0.0
      %4802 = vmatprep.subr.mxu0 0.0
      %4803 = vmatpush1.msra.mxu0 0.0
      %4804 = vmatprep.subr.mxu0 0.0
      %4805 = vmatpush1.msra.mxu0 0.0
      %4806 = vmatprep.subr.mxu0 0.0
      %4807 = vmatpush1.msra.mxu0 0.0
      %4808 = vmatprep.subr.mxu0 0.0
      %4809 = vmatpush1.msra.mxu0 0.0
      %4810 = vmatprep.subr.mxu0 0.0
      %4811 = vmatpush1.msra.mxu0 0.0
      %4812 = vmatprep.mubr.f32.mxu0 0.0
      %v4813 = vand.u32 %v4048, 4294901760
      %v4814 = vsub.f32 %v4048, %v4813
      %v4815 = vand.u32 %v4814, 4294901760
      %4816 = vmatmul.mubr.f32.gmra.mrb[0].mxu0 %v4815
      %v4817 = vpop.f32.mrb[0].mxu0
      %v4818 = vadd.f32 %v4744, %v4817
      %v4819 = vpop.f32.mrb[0].mxu0
      %4820 = vdwg.mxu0
      %4821 = vmatprep.subr.mxu0 0.0
      %v4822 = vand.u32 %v4054, 4294901760
      %v4823 = vsub.f32 %v4054, %v4822
      %v4824 = vand.u32 %v4823, 4294901760
      %4825 = vmatpush1.msra.mxu0 %v4824
      %4826 = vmatprep.subr.mxu0 0.0
      %4827 = vmatpush1.msra.mxu0 0.0
      %4828 = vmatprep.subr.mxu0 0.0
      %4829 = vmatpush1.msra.mxu0 0.0
      %4830 = vmatprep.subr.mxu0 0.0
      %4831 = vmatpush1.msra.mxu0 0.0
      %4832 = vmatprep.subr.mxu0 0.0
      %4833 = vmatpush1.msra.mxu0 0.0
      %4834 = vmatprep.subr.mxu0 0.0
      %4835 = vmatpush1.msra.mxu0 0.0
      %4836 = vmatprep.subr.mxu0 0.0
      %4837 = vmatpush1.msra.mxu0 0.0
      %4838 = vmatprep.subr.mxu0 0.0
      %4839 = vmatpush1.msra.mxu0 0.0
      %4840 = vmatprep.subr.mxu0 0.0
      %4841 = vmatpush1.msra.mxu0 0.0
      %4842 = vmatprep.subr.mxu0 0.0
      %4843 = vmatpush1.msra.mxu0 0.0
      %4844 = vmatprep.subr.mxu0 0.0
      %4845 = vmatpush1.msra.mxu0 0.0
      %4846 = vmatprep.subr.mxu0 0.0
      %4847 = vmatpush1.msra.mxu0 0.0
      %4848 = vmatprep.subr.mxu0 0.0
      %4849 = vmatpush1.msra.mxu0 0.0
      %4850 = vmatprep.subr.mxu0 0.0
      %4851 = vmatpush1.msra.mxu0 0.0
      %4852 = vmatprep.subr.mxu0 0.0
      %4853 = vmatpush1.msra.mxu0 0.0
      %4854 = vmatprep.subr.mxu0 0.0
      %4855 = vmatpush1.msra.mxu0 0.0
      %4856 = vmatprep.subr.mxu0 0.0
      %4857 = vmatpush1.msra.mxu0 0.0
      %4858 = vmatprep.subr.mxu0 0.0
      %4859 = vmatpush1.msra.mxu0 0.0
      %4860 = vmatprep.subr.mxu0 0.0
      %4861 = vmatpush1.msra.mxu0 0.0
      %4862 = vmatprep.subr.mxu0 0.0
      %4863 = vmatpush1.msra.mxu0 0.0
      %4864 = vmatprep.subr.mxu0 0.0
      %4865 = vmatpush1.msra.mxu0 0.0
      %4866 = vmatprep.subr.mxu0 0.0
      %4867 = vmatpush1.msra.mxu0 0.0
      %4868 = vmatprep.subr.mxu0 0.0
      %4869 = vmatpush1.msra.mxu0 0.0
      %4870 = vmatprep.subr.mxu0 0.0
      %4871 = vmatpush1.msra.mxu0 0.0
      %4872 = vmatprep.subr.mxu0 0.0
      %4873 = vmatpush1.msra.mxu0 0.0
      %4874 = vmatprep.subr.mxu0 0.0
      %4875 = vmatpush1.msra.mxu0 0.0
      %4876 = vmatprep.subr.mxu0 0.0
      %4877 = vmatpush1.msra.mxu0 0.0
      %4878 = vmatprep.subr.mxu0 0.0
      %4879 = vmatpush1.msra.mxu0 0.0
      %4880 = vmatprep.subr.mxu0 0.0
      %4881 = vmatpush1.msra.mxu0 0.0
      %4882 = vmatprep.subr.mxu0 0.0
      %4883 = vmatpush1.msra.mxu0 0.0
      %4884 = vmatprep.subr.mxu0 0.0
      %4885 = vmatpush1.msra.mxu0 0.0
      %4886 = vmatprep.subr.mxu0 0.0
      %4887 = vmatpush1.msra.mxu0 0.0
      %4888 = vmatprep.mubr.f32.mxu0 0.0
      %v4889 = vand.u32 %v4048, 4294901760
      %4890 = vmatmul.mubr.f32.gmra.mrb[0].mxu0 %v4889
      %v4891 = vpop.f32.mrb[0].mxu0
      %v4892 = vadd.f32 %v4818, %v4891
      %v4893 = vpop.f32.mrb[0].mxu0
      %4894 = vdwg.mxu0
      %4895 = vmatprep.subr.mxu0 0.0
      %v4896 = vand.u32 %v4054, 4294901760
      %4897 = vmatpush1.msra.mxu0 %v4896
      %4898 = vmatprep.subr.mxu0 0.0
      %4899 = vmatpush1.msra.mxu0 0.0
      %4900 = vmatprep.subr.mxu0 0.0
      %4901 = vmatpush1.msra.mxu0 0.0
      %4902 = vmatprep.subr.mxu0 0.0
      %4903 = vmatpush1.msra.mxu0 0.0
      %4904 = vmatprep.subr.mxu0 0.0
      %4905 = vmatpush1.msra.mxu0 0.0
      %4906 = vmatprep.subr.mxu0 0.0
      %4907 = vmatpush1.msra.mxu0 0.0
      %4908 = vmatprep.subr.mxu0 0.0
      %4909 = vmatpush1.msra.mxu0 0.0
      %4910 = vmatprep.subr.mxu0 0.0
      %4911 = vmatpush1.msra.mxu0 0.0
      %4912 = vmatprep.subr.mxu0 0.0
      %4913 = vmatpush1.msra.mxu0 0.0
      %4914 = vmatprep.subr.mxu0 0.0
      %4915 = vmatpush1.msra.mxu0 0.0
      %4916 = vmatprep.subr.mxu0 0.0
      %4917 = vmatpush1.msra.mxu0 0.0
      %4918 = vmatprep.subr.mxu0 0.0
      %4919 = vmatpush1.msra.mxu0 0.0
      %4920 = vmatprep.subr.mxu0 0.0
      %4921 = vmatpush1.msra.mxu0 0.0
      %4922 = vmatprep.subr.mxu0 0.0
      %4923 = vmatpush1.msra.mxu0 0.0
      %4924 = vmatprep.subr.mxu0 0.0
      %4925 = vmatpush1.msra.mxu0 0.0
      %4926 = vmatprep.subr.mxu0 0.0
      %4927 = vmatpush1.msra.mxu0 0.0
      %4928 = vmatprep.subr.mxu0 0.0
      %4929 = vmatpush1.msra.mxu0 0.0
      %4930 = vmatprep.subr.mxu0 0.0
      %4931 = vmatpush1.msra.mxu0 0.0
      %4932 = vmatprep.subr.mxu0 0.0
      %4933 = vmatpush1.msra.mxu0 0.0
      %4934 = vmatprep.subr.mxu0 0.0
      %4935 = vmatpush1.msra.mxu0 0.0
      %4936 = vmatprep.subr.mxu0 0.0
      %4937 = vmatpush1.msra.mxu0 0.0
      %4938 = vmatprep.subr.mxu0 0.0
      %4939 = vmatpush1.msra.mxu0 0.0
      %4940 = vmatprep.subr.mxu0 0.0
      %4941 = vmatpush1.msra.mxu0 0.0
      %4942 = vmatprep.subr.mxu0 0.0
      %4943 = vmatpush1.msra.mxu0 0.0
      %4944 = vmatprep.subr.mxu0 0.0
      %4945 = vmatpush1.msra.mxu0 0.0
      %4946 = vmatprep.subr.mxu0 0.0
      %4947 = vmatpush1.msra.mxu0 0.0
      %4948 = vmatprep.subr.mxu0 0.0
      %4949 = vmatpush1.msra.mxu0 0.0
      %4950 = vmatprep.subr.mxu0 0.0
      %4951 = vmatpush1.msra.mxu0 0.0
      %4952 = vmatprep.subr.mxu0 0.0
      %4953 = vmatpush1.msra.mxu0 0.0
      %4954 = vmatprep.subr.mxu0 0.0
      %4955 = vmatpush1.msra.mxu0 0.0
      %4956 = vmatprep.subr.mxu0 0.0
      %4957 = vmatpush1.msra.mxu0 0.0
      %4958 = vmatprep.subr.mxu0 0.0
      %4959 = vmatpush1.msra.mxu0 0.0
      %4960 = vmatprep.mubr.f32.mxu0 0.0
      %v4961 = vand.u32 %v4048, 4294901760
      %4962 = vmatmul.mubr.f32.gmra.mrb[0].mxu0 %v4961
      %v4963 = vpop.f32.mrb[0].mxu0
      %v4964 = vadd.f32 %v4892, %v4963
      %v4965 = vpop.f32.mrb[0].mxu0
      %4966 = vdwg.mxu0
      %v4967 = vadd.f32 %v4024, %v4517
      %v4968 = vadd.f32 %v4025, %v4519
      %v4969 = vadd.f32 %v4026, %v4964
      %s4970 = scalar_lea.vmem %s1, 40
      %v4971 = vld [vmem:[%s4970] sm:$0xff]
      %v4972 = vld [vmem:[%s259] sm:$0xff]
      %v4973 = vld [vmem:[%s259 + $0x8] sm:$0xff]
      %v4976 = vcombine.high %v4972, %v4972
      %v4977 = vcombine.high %v4973, %v4973
      %4978 = vrot.lane.b32.xlu0 %v4972, 108
      %v4979 = vpop.permute.xlu0 %4978
      %4980 = vrot.lane.b32.xlu0 %v4976, 108
      %v4981 = vpop.permute.xlu0 %4980
      %4982 = vrot.lane.b32.xlu0 %v4973, 108
      %v4983 = vpop.permute.xlu0 %4982
      %4984 = vrot.lane.b32.xlu0 %v4977, 108
      %v4985 = vpop.permute.xlu0 %4984
      %vm4986 = vcmask 883712
      %v4987 = vsel %vm4986, %v4979, %v4981
      %v4988 = vsel %vm4986, %v4981, %v4983
      %v4989 = vsel %vm4986, %v4983, %v4985
      %v4991 = vsel %vm296, %v4971, 0
      %v4993 = vsel %vm300, %v4987, 0
      %v4995 = vsel %vm300, %v4988, 0
      %v4997 = vsel %vm300, %v4989, 0
      %v4999 = vand.u32 %v4995, 4294901760
      %5000 = vmatprep.subr.mxu0 %v4999
      %v5001 = vand.u32 %v4993, 4294901760
      %5002 = vmatpush1.msra.mxu0 %v5001
      %5003 = vmatprep.subr.mxu0 0.0
      %5004 = vmatpush1.msra.mxu0 0.0
      %5005 = vmatprep.subr.mxu0 0.0
      %5006 = vmatpush1.msra.mxu0 0.0
      %5007 = vmatprep.subr.mxu0 0.0
      %5008 = vmatpush1.msra.mxu0 0.0
      %5009 = vmatprep.subr.mxu0 0.0
      %5010 = vmatpush1.msra.mxu0 0.0
      %5011 = vmatprep.subr.mxu0 0.0
      %5012 = vmatpush1.msra.mxu0 0.0
      %5013 = vmatprep.subr.mxu0 0.0
      %5014 = vmatpush1.msra.mxu0 0.0
      %5015 = vmatprep.subr.mxu0 0.0
      %5016 = vmatpush1.msra.mxu0 0.0
      %5017 = vmatprep.subr.mxu0 0.0
      %5018 = vmatpush1.msra.mxu0 0.0
      %5019 = vmatprep.subr.mxu0 0.0
      %5020 = vmatpush1.msra.mxu0 0.0
      %5021 = vmatprep.subr.mxu0 0.0
      %5022 = vmatpush1.msra.mxu0 0.0
      %5023 = vmatprep.subr.mxu0 0.0
      %5024 = vmatpush1.msra.mxu0 0.0
      %5025 = vmatprep.subr.mxu0 0.0
      %5026 = vmatpush1.msra.mxu0 0.0
      %5027 = vmatprep.subr.mxu0 0.0
      %5028 = vmatpush1.msra.mxu0 0.0
      %5029 = vmatprep.subr.mxu0 0.0
      %5030 = vmatpush1.msra.mxu0 0.0
      %5031 = vmatprep.subr.mxu0 0.0
      %5032 = vmatpush1.msra.mxu0 0.0
      %5033 = vmatprep.subr.mxu0 0.0
      %5034 = vmatpush1.msra.mxu0 0.0
      %5035 = vmatprep.subr.mxu0 0.0
      %5036 = vmatpush1.msra.mxu0 0.0
      %5037 = vmatprep.subr.mxu0 0.0
      %5038 = vmatpush1.msra.mxu0 0.0
      %5039 = vmatprep.subr.mxu0 0.0
      %5040 = vmatpush1.msra.mxu0 0.0
      %5041 = vmatprep.subr.mxu0 0.0
      %5042 = vmatpush1.msra.mxu0 0.0
      %5043 = vmatprep.subr.mxu0 0.0
      %5044 = vmatpush1.msra.mxu0 0.0
      %5045 = vmatprep.subr.mxu0 0.0
      %5046 = vmatpush1.msra.mxu0 0.0
      %5047 = vmatprep.subr.mxu0 0.0
      %5048 = vmatpush1.msra.mxu0 0.0
      %5049 = vmatprep.subr.mxu0 0.0
      %5050 = vmatpush1.msra.mxu0 0.0
      %5051 = vmatprep.subr.mxu0 0.0
      %5052 = vmatpush1.msra.mxu0 0.0
      %5053 = vmatprep.subr.mxu0 0.0
      %5054 = vmatpush1.msra.mxu0 0.0
      %5055 = vmatprep.subr.mxu0 0.0
      %5056 = vmatpush1.msra.mxu0 0.0
      %5057 = vmatprep.subr.mxu0 0.0
      %5058 = vmatpush1.msra.mxu0 0.0
      %5059 = vmatprep.subr.mxu0 0.0
      %5060 = vmatpush1.msra.mxu0 0.0
      %5061 = vmatprep.subr.mxu0 0.0
      %5062 = vmatpush1.msra.mxu0 0.0
      %5063 = vmatprep.subr.mxu0 0.0
      %5064 = vmatpush1.msra.mxu0 0.0
      %5065 = vmatprep.mubr.f32.mxu0 0.0
      %v5066 = vand.u32 %v4991, 4294901760
      %v5067 = vsub.f32 %v4991, %v5066
      %v5068 = vand.u32 %v5067, 4294901760
      %v5069 = vsub.f32 %v5067, %v5068
      %v5070 = vand.u32 %v5069, 4294901760
      %5071 = vmatmul.mubr.f32.gmra.mrb[0].mxu0 %v5070
      %v5072 = vpop.f32.mrb[0].mxu0
      %v5073 = vadd.f32 0.0, %v5072
      %v5074 = vpop.f32.mrb[0].mxu0
      %v5075 = vadd.f32 0.0, %v5074
      %5076 = vdwg.mxu0
      %v5077 = vand.u32 %v4995, 4294901760
      %v5078 = vsub.f32 %v4995, %v5077
      %v5079 = vand.u32 %v5078, 4294901760
      %v5080 = vsub.f32 %v5078, %v5079
      %v5081 = vand.u32 %v5080, 4294901760
      %5082 = vmatprep.subr.mxu0 %v5081
      %v5083 = vand.u32 %v4993, 4294901760
      %v5084 = vsub.f32 %v4993, %v5083
      %v5085 = vand.u32 %v5084, 4294901760
      %v5086 = vsub.f32 %v5084, %v5085
      %v5087 = vand.u32 %v5086, 4294901760
      %5088 = vmatpush1.msra.mxu0 %v5087
      %5089 = vmatprep.subr.mxu0 0.0
      %5090 = vmatpush1.msra.mxu0 0.0
      %5091 = vmatprep.subr.mxu0 0.0
      %5092 = vmatpush1.msra.mxu0 0.0
      %5093 = vmatprep.subr.mxu0 0.0
      %5094 = vmatpush1.msra.mxu0 0.0
      %5095 = vmatprep.subr.mxu0 0.0
      %5096 = vmatpush1.msra.mxu0 0.0
      %5097 = vmatprep.subr.mxu0 0.0
      %5098 = vmatpush1.msra.mxu0 0.0
      %5099 = vmatprep.subr.mxu0 0.0
      %5100 = vmatpush1.msra.mxu0 0.0
      %5101 = vmatprep.subr.mxu0 0.0
      %5102 = vmatpush1.msra.mxu0 0.0
      %5103 = vmatprep.subr.mxu0 0.0
      %5104 = vmatpush1.msra.mxu0 0.0
      %5105 = vmatprep.subr.mxu0 0.0
      %5106 = vmatpush1.msra.mxu0 0.0
      %5107 = vmatprep.subr.mxu0 0.0
      %5108 = vmatpush1.msra.mxu0 0.0
      %5109 = vmatprep.subr.mxu0 0.0
      %5110 = vmatpush1.msra.mxu0 0.0
      %5111 = vmatprep.subr.mxu0 0.0
      %5112 = vmatpush1.msra.mxu0 0.0
      %5113 = vmatprep.subr.mxu0 0.0
      %5114 = vmatpush1.msra.mxu0 0.0
      %5115 = vmatprep.subr.mxu0 0.0
      %5116 = vmatpush1.msra.mxu0 0.0
      %5117 = vmatprep.subr.mxu0 0.0
      %5118 = vmatpush1.msra.mxu0 0.0
      %5119 = vmatprep.subr.mxu0 0.0
      %5120 = vmatpush1.msra.mxu0 0.0
      %5121 = vmatprep.subr.mxu0 0.0
      %5122 = vmatpush1.msra.mxu0 0.0
      %5123 = vmatprep.subr.mxu0 0.0
      %5124 = vmatpush1.msra.mxu0 0.0
      %5125 = vmatprep.subr.mxu0 0.0
      %5126 = vmatpush1.msra.mxu0 0.0
      %5127 = vmatprep.subr.mxu0 0.0
      %5128 = vmatpush1.msra.mxu0 0.0
      %5129 = vmatprep.subr.mxu0 0.0
      %5130 = vmatpush1.msra.mxu0 0.0
      %5131 = vmatprep.subr.mxu0 0.0
      %5132 = vmatpush1.msra.mxu0 0.0
      %5133 = vmatprep.subr.mxu0 0.0
      %5134 = vmatpush1.msra.mxu0 0.0
      %5135 = vmatprep.subr.mxu0 0.0
      %5136 = vmatpush1.msra.mxu0 0.0
      %5137 = vmatprep.subr.mxu0 0.0
      %5138 = vmatpush1.msra.mxu0 0.0
      %5139 = vmatprep.subr.mxu0 0.0
      %5140 = vmatpush1.msra.mxu0 0.0
      %5141 = vmatprep.subr.mxu0 0.0
      %5142 = vmatpush1.msra.mxu0 0.0
      %5143 = vmatprep.subr.mxu0 0.0
      %5144 = vmatpush1.msra.mxu0 0.0
      %5145 = vmatprep.subr.mxu0 0.0
      %5146 = vmatpush1.msra.mxu0 0.0
      %5147 = vmatprep.subr.mxu0 0.0
      %5148 = vmatpush1.msra.mxu0 0.0
      %5149 = vmatprep.subr.mxu0 0.0
      %5150 = vmatpush1.msra.mxu0 0.0
      %5151 = vmatprep.mubr.f32.mxu0 0.0
      %v5152 = vand.u32 %v4991, 4294901760
      %5153 = vmatmul.mubr.f32.gmra.mrb[0].mxu0 %v5152
      %v5154 = vpop.f32.mrb[0].mxu0
      %v5155 = vadd.f32 %v5073, %v5154
      %v5156 = vpop.f32.mrb[0].mxu0
      %v5157 = vadd.f32 %v5075, %v5156
      %5158 = vdwg.mxu0
      %v5159 = vand.u32 %v4995, 4294901760
      %v5160 = vsub.f32 %v4995, %v5159
      %5161 = vmatprep.subr.mxu0 %v5160
      %v5162 = vand.u32 %v4993, 4294901760
      %v5163 = vsub.f32 %v4993, %v5162
      %5164 = vmatpush1.msra.mxu0 %v5163
      %5165 = vmatprep.subr.mxu0 0.0
      %5166 = vmatpush1.msra.mxu0 0.0
      %5167 = vmatprep.subr.mxu0 0.0
      %5168 = vmatpush1.msra.mxu0 0.0
      %5169 = vmatprep.subr.mxu0 0.0
      %5170 = vmatpush1.msra.mxu0 0.0
      %5171 = vmatprep.subr.mxu0 0.0
      %5172 = vmatpush1.msra.mxu0 0.0
      %5173 = vmatprep.subr.mxu0 0.0
      %5174 = vmatpush1.msra.mxu0 0.0
      %5175 = vmatprep.subr.mxu0 0.0
      %5176 = vmatpush1.msra.mxu0 0.0
      %5177 = vmatprep.subr.mxu0 0.0
      %5178 = vmatpush1.msra.mxu0 0.0
      %5179 = vmatprep.subr.mxu0 0.0
      %5180 = vmatpush1.msra.mxu0 0.0
      %5181 = vmatprep.subr.mxu0 0.0
      %5182 = vmatpush1.msra.mxu0 0.0
      %5183 = vmatprep.subr.mxu0 0.0
      %5184 = vmatpush1.msra.mxu0 0.0
      %5185 = vmatprep.subr.mxu0 0.0
      %5186 = vmatpush1.msra.mxu0 0.0
      %5187 = vmatprep.subr.mxu0 0.0
      %5188 = vmatpush1.msra.mxu0 0.0
      %5189 = vmatprep.subr.mxu0 0.0
      %5190 = vmatpush1.msra.mxu0 0.0
      %5191 = vmatprep.subr.mxu0 0.0
      %5192 = vmatpush1.msra.mxu0 0.0
      %5193 = vmatprep.subr.mxu0 0.0
      %5194 = vmatpush1.msra.mxu0 0.0
      %5195 = vmatprep.subr.mxu0 0.0
      %5196 = vmatpush1.msra.mxu0 0.0
      %5197 = vmatprep.subr.mxu0 0.0
      %5198 = vmatpush1.msra.mxu0 0.0
      %5199 = vmatprep.subr.mxu0 0.0
      %5200 = vmatpush1.msra.mxu0 0.0
      %5201 = vmatprep.subr.mxu0 0.0
      %5202 = vmatpush1.msra.mxu0 0.0
      %5203 = vmatprep.subr.mxu0 0.0
      %5204 = vmatpush1.msra.mxu0 0.0
      %5205 = vmatprep.subr.mxu0 0.0
      %5206 = vmatpush1.msra.mxu0 0.0
      %5207 = vmatprep.subr.mxu0 0.0
      %5208 = vmatpush1.msra.mxu0 0.0
      %5209 = vmatprep.subr.mxu0 0.0
      %5210 = vmatpush1.msra.mxu0 0.0
      %5211 = vmatprep.subr.mxu0 0.0
      %5212 = vmatpush1.msra.mxu0 0.0
      %5213 = vmatprep.subr.mxu0 0.0
      %5214 = vmatpush1.msra.mxu0 0.0
      %5215 = vmatprep.subr.mxu0 0.0
      %5216 = vmatpush1.msra.mxu0 0.0
      %5217 = vmatprep.subr.mxu0 0.0
      %5218 = vmatpush1.msra.mxu0 0.0
      %5219 = vmatprep.subr.mxu0 0.0
      %5220 = vmatpush1.msra.mxu0 0.0
      %5221 = vmatprep.subr.mxu0 0.0
      %5222 = vmatpush1.msra.mxu0 0.0
      %5223 = vmatprep.subr.mxu0 0.0
      %5224 = vmatpush1.msra.mxu0 0.0
      %5225 = vmatprep.subr.mxu0 0.0
      %5226 = vmatpush1.msra.mxu0 0.0
      %5227 = vmatprep.mubr.f32.mxu0 0.0
      %v5228 = vand.u32 %v4991, 4294901760
      %v5229 = vsub.f32 %v4991, %v5228
      %5230 = vmatmul.mubr.f32.gmra.mrb[0].mxu0 %v5229
      %v5231 = vpop.f32.mrb[0].mxu0
      %v5232 = vadd.f32 %v5155, %v5231
      %v5233 = vpop.f32.mrb[0].mxu0
      %v5234 = vadd.f32 %v5157, %v5233
      %5235 = vdwg.mxu0
      %v5236 = vand.u32 %v4995, 4294901760
      %5237 = vmatprep.subr.mxu0 %v5236
      %v5238 = vand.u32 %v4993, 4294901760
      %5239 = vmatpush1.msra.mxu0 %v5238
      %5240 = vmatprep.subr.mxu0 0.0
      %5241 = vmatpush1.msra.mxu0 0.0
      %5242 = vmatprep.subr.mxu0 0.0
      %5243 = vmatpush1.msra.mxu0 0.0
      %5244 = vmatprep.subr.mxu0 0.0
      %5245 = vmatpush1.msra.mxu0 0.0
      %5246 = vmatprep.subr.mxu0 0.0
      %5247 = vmatpush1.msra.mxu0 0.0
      %5248 = vmatprep.subr.mxu0 0.0
      %5249 = vmatpush1.msra.mxu0 0.0
      %5250 = vmatprep.subr.mxu0 0.0
      %5251 = vmatpush1.msra.mxu0 0.0
      %5252 = vmatprep.subr.mxu0 0.0
      %5253 = vmatpush1.msra.mxu0 0.0
      %5254 = vmatprep.subr.mxu0 0.0
      %5255 = vmatpush1.msra.mxu0 0.0
      %5256 = vmatprep.subr.mxu0 0.0
      %5257 = vmatpush1.msra.mxu0 0.0
      %5258 = vmatprep.subr.mxu0 0.0
      %5259 = vmatpush1.msra.mxu0 0.0
      %5260 = vmatprep.subr.mxu0 0.0
      %5261 = vmatpush1.msra.mxu0 0.0
      %5262 = vmatprep.subr.mxu0 0.0
      %5263 = vmatpush1.msra.mxu0 0.0
      %5264 = vmatprep.subr.mxu0 0.0
      %5265 = vmatpush1.msra.mxu0 0.0
      %5266 = vmatprep.subr.mxu0 0.0
      %5267 = vmatpush1.msra.mxu0 0.0
      %5268 = vmatprep.subr.mxu0 0.0
      %5269 = vmatpush1.msra.mxu0 0.0
      %5270 = vmatprep.subr.mxu0 0.0
      %5271 = vmatpush1.msra.mxu0 0.0
      %5272 = vmatprep.subr.mxu0 0.0
      %5273 = vmatpush1.msra.mxu0 0.0
      %5274 = vmatprep.subr.mxu0 0.0
      %5275 = vmatpush1.msra.mxu0 0.0
      %5276 = vmatprep.subr.mxu0 0.0
      %5277 = vmatpush1.msra.mxu0 0.0
      %5278 = vmatprep.subr.mxu0 0.0
      %5279 = vmatpush1.msra.mxu0 0.0
      %5280 = vmatprep.subr.mxu0 0.0
      %5281 = vmatpush1.msra.mxu0 0.0
      %5282 = vmatprep.subr.mxu0 0.0
      %5283 = vmatpush1.msra.mxu0 0.0
      %5284 = vmatprep.subr.mxu0 0.0
      %5285 = vmatpush1.msra.mxu0 0.0
      %5286 = vmatprep.subr.mxu0 0.0
      %5287 = vmatpush1.msra.mxu0 0.0
      %5288 = vmatprep.subr.mxu0 0.0
      %5289 = vmatpush1.msra.mxu0 0.0
      %5290 = vmatprep.subr.mxu0 0.0
      %5291 = vmatpush1.msra.mxu0 0.0
      %5292 = vmatprep.subr.mxu0 0.0
      %5293 = vmatpush1.msra.mxu0 0.0
      %5294 = vmatprep.subr.mxu0 0.0
      %5295 = vmatpush1.msra.mxu0 0.0
      %5296 = vmatprep.subr.mxu0 0.0
      %5297 = vmatpush1.msra.mxu0 0.0
      %5298 = vmatprep.subr.mxu0 0.0
      %5299 = vmatpush1.msra.mxu0 0.0
      %5300 = vmatprep.subr.mxu0 0.0
      %5301 = vmatpush1.msra.mxu0 0.0
      %5302 = vmatprep.mubr.f32.mxu0 0.0
      %v5303 = vand.u32 %v4991, 4294901760
      %v5304 = vsub.f32 %v4991, %v5303
      %v5305 = vand.u32 %v5304, 4294901760
      %5306 = vmatmul.mubr.f32.gmra.mrb[0].mxu0 %v5305
      %v5307 = vpop.f32.mrb[0].mxu0
      %v5308 = vadd.f32 %v5232, %v5307
      %v5309 = vpop.f32.mrb[0].mxu0
      %v5310 = vadd.f32 %v5234, %v5309
      %5311 = vdwg.mxu0
      %v5312 = vand.u32 %v4995, 4294901760
      %v5313 = vsub.f32 %v4995, %v5312
      %v5314 = vand.u32 %v5313, 4294901760
      %5315 = vmatprep.subr.mxu0 %v5314
      %v5316 = vand.u32 %v4993, 4294901760
      %v5317 = vsub.f32 %v4993, %v5316
      %v5318 = vand.u32 %v5317, 4294901760
      %5319 = vmatpush1.msra.mxu0 %v5318
      %5320 = vmatprep.subr.mxu0 0.0
      %5321 = vmatpush1.msra.mxu0 0.0
      %5322 = vmatprep.subr.mxu0 0.0
      %5323 = vmatpush1.msra.mxu0 0.0
      %5324 = vmatprep.subr.mxu0 0.0
      %5325 = vmatpush1.msra.mxu0 0.0
      %5326 = vmatprep.subr.mxu0 0.0
      %5327 = vmatpush1.msra.mxu0 0.0
      %5328 = vmatprep.subr.mxu0 0.0
      %5329 = vmatpush1.msra.mxu0 0.0
      %5330 = vmatprep.subr.mxu0 0.0
      %5331 = vmatpush1.msra.mxu0 0.0
      %5332 = vmatprep.subr.mxu0 0.0
      %5333 = vmatpush1.msra.mxu0 0.0
      %5334 = vmatprep.subr.mxu0 0.0
      %5335 = vmatpush1.msra.mxu0 0.0
      %5336 = vmatprep.subr.mxu0 0.0
      %5337 = vmatpush1.msra.mxu0 0.0
      %5338 = vmatprep.subr.mxu0 0.0
      %5339 = vmatpush1.msra.mxu0 0.0
      %5340 = vmatprep.subr.mxu0 0.0
      %5341 = vmatpush1.msra.mxu0 0.0
      %5342 = vmatprep.subr.mxu0 0.0
      %5343 = vmatpush1.msra.mxu0 0.0
      %5344 = vmatprep.subr.mxu0 0.0
      %5345 = vmatpush1.msra.mxu0 0.0
      %5346 = vmatprep.subr.mxu0 0.0
      %5347 = vmatpush1.msra.mxu0 0.0
      %5348 = vmatprep.subr.mxu0 0.0
      %5349 = vmatpush1.msra.mxu0 0.0
      %5350 = vmatprep.subr.mxu0 0.0
      %5351 = vmatpush1.msra.mxu0 0.0
      %5352 = vmatprep.subr.mxu0 0.0
      %5353 = vmatpush1.msra.mxu0 0.0
      %5354 = vmatprep.subr.mxu0 0.0
      %5355 = vmatpush1.msra.mxu0 0.0
      %5356 = vmatprep.subr.mxu0 0.0
      %5357 = vmatpush1.msra.mxu0 0.0
      %5358 = vmatprep.subr.mxu0 0.0
      %5359 = vmatpush1.msra.mxu0 0.0
      %5360 = vmatprep.subr.mxu0 0.0
      %5361 = vmatpush1.msra.mxu0 0.0
      %5362 = vmatprep.subr.mxu0 0.0
      %5363 = vmatpush1.msra.mxu0 0.0
      %5364 = vmatprep.subr.mxu0 0.0
      %5365 = vmatpush1.msra.mxu0 0.0
      %5366 = vmatprep.subr.mxu0 0.0
      %5367 = vmatpush1.msra.mxu0 0.0
      %5368 = vmatprep.subr.mxu0 0.0
      %5369 = vmatpush1.msra.mxu0 0.0
      %5370 = vmatprep.subr.mxu0 0.0
      %5371 = vmatpush1.msra.mxu0 0.0
      %5372 = vmatprep.subr.mxu0 0.0
      %5373 = vmatpush1.msra.mxu0 0.0
      %5374 = vmatprep.subr.mxu0 0.0
      %5375 = vmatpush1.msra.mxu0 0.0
      %5376 = vmatprep.subr.mxu0 0.0
      %5377 = vmatpush1.msra.mxu0 0.0
      %5378 = vmatprep.subr.mxu0 0.0
      %5379 = vmatpush1.msra.mxu0 0.0
      %5380 = vmatprep.subr.mxu0 0.0
      %5381 = vmatpush1.msra.mxu0 0.0
      %5382 = vmatprep.mubr.f32.mxu0 0.0
      %v5383 = vand.u32 %v4991, 4294901760
      %5384 = vmatmul.mubr.f32.gmra.mrb[0].mxu0 %v5383
      %v5385 = vpop.f32.mrb[0].mxu0
      %v5386 = vadd.f32 %v5308, %v5385
      %v5387 = vpop.f32.mrb[0].mxu0
      %v5388 = vadd.f32 %v5310, %v5387
      %5389 = vdwg.mxu0
      %v5390 = vand.u32 %v4995, 4294901760
      %5391 = vmatprep.subr.mxu0 %v5390
      %v5392 = vand.u32 %v4993, 4294901760
      %5393 = vmatpush1.msra.mxu0 %v5392
      %5394 = vmatprep.subr.mxu0 0.0
      %5395 = vmatpush1.msra.mxu0 0.0
      %5396 = vmatprep.subr.mxu0 0.0
      %5397 = vmatpush1.msra.mxu0 0.0
      %5398 = vmatprep.subr.mxu0 0.0
      %5399 = vmatpush1.msra.mxu0 0.0
      %5400 = vmatprep.subr.mxu0 0.0
      %5401 = vmatpush1.msra.mxu0 0.0
      %5402 = vmatprep.subr.mxu0 0.0
      %5403 = vmatpush1.msra.mxu0 0.0
      %5404 = vmatprep.subr.mxu0 0.0
      %5405 = vmatpush1.msra.mxu0 0.0
      %5406 = vmatprep.subr.mxu0 0.0
      %5407 = vmatpush1.msra.mxu0 0.0
      %5408 = vmatprep.subr.mxu0 0.0
      %5409 = vmatpush1.msra.mxu0 0.0
      %5410 = vmatprep.subr.mxu0 0.0
      %5411 = vmatpush1.msra.mxu0 0.0
      %5412 = vmatprep.subr.mxu0 0.0
      %5413 = vmatpush1.msra.mxu0 0.0
      %5414 = vmatprep.subr.mxu0 0.0
      %5415 = vmatpush1.msra.mxu0 0.0
      %5416 = vmatprep.subr.mxu0 0.0
      %5417 = vmatpush1.msra.mxu0 0.0
      %5418 = vmatprep.subr.mxu0 0.0
      %5419 = vmatpush1.msra.mxu0 0.0
      %5420 = vmatprep.subr.mxu0 0.0
      %5421 = vmatpush1.msra.mxu0 0.0
      %5422 = vmatprep.subr.mxu0 0.0
      %5423 = vmatpush1.msra.mxu0 0.0
      %5424 = vmatprep.subr.mxu0 0.0
      %5425 = vmatpush1.msra.mxu0 0.0
      %5426 = vmatprep.subr.mxu0 0.0
      %5427 = vmatpush1.msra.mxu0 0.0
      %5428 = vmatprep.subr.mxu0 0.0
      %5429 = vmatpush1.msra.mxu0 0.0
      %5430 = vmatprep.subr.mxu0 0.0
      %5431 = vmatpush1.msra.mxu0 0.0
      %5432 = vmatprep.subr.mxu0 0.0
      %5433 = vmatpush1.msra.mxu0 0.0
      %5434 = vmatprep.subr.mxu0 0.0
      %5435 = vmatpush1.msra.mxu0 0.0
      %5436 = vmatprep.subr.mxu0 0.0
      %5437 = vmatpush1.msra.mxu0 0.0
      %5438 = vmatprep.subr.mxu0 0.0
      %5439 = vmatpush1.msra.mxu0 0.0
      %5440 = vmatprep.subr.mxu0 0.0
      %5441 = vmatpush1.msra.mxu0 0.0
      %5442 = vmatprep.subr.mxu0 0.0
      %5443 = vmatpush1.msra.mxu0 0.0
      %5444 = vmatprep.subr.mxu0 0.0
      %5445 = vmatpush1.msra.mxu0 0.0
      %5446 = vmatprep.subr.mxu0 0.0
      %5447 = vmatpush1.msra.mxu0 0.0
      %5448 = vmatprep.subr.mxu0 0.0
      %5449 = vmatpush1.msra.mxu0 0.0
      %5450 = vmatprep.subr.mxu0 0.0
      %5451 = vmatpush1.msra.mxu0 0.0
      %5452 = vmatprep.subr.mxu0 0.0
      %5453 = vmatpush1.msra.mxu0 0.0
      %5454 = vmatprep.subr.mxu0 0.0
      %5455 = vmatpush1.msra.mxu0 0.0
      %5456 = vmatprep.mubr.f32.mxu0 0.0
      %v5457 = vand.u32 %v4991, 4294901760
      %5458 = vmatmul.mubr.f32.gmra.mrb[0].mxu0 %v5457
      %v5459 = vpop.f32.mrb[0].mxu0
      %v5460 = vadd.f32 %v5386, %v5459
      %v5461 = vpop.f32.mrb[0].mxu0
      %v5462 = vadd.f32 %v5388, %v5461
      %5463 = vdwg.mxu0
      %5464 = vmatprep.subr.mxu0 0.0
      %v5465 = vand.u32 %v4997, 4294901760
      %5466 = vmatpush1.msra.mxu0 %v5465
      %5467 = vmatprep.subr.mxu0 0.0
      %5468 = vmatpush1.msra.mxu0 0.0
      %5469 = vmatprep.subr.mxu0 0.0
      %5470 = vmatpush1.msra.mxu0 0.0
      %5471 = vmatprep.subr.mxu0 0.0
      %5472 = vmatpush1.msra.mxu0 0.0
      %5473 = vmatprep.subr.mxu0 0.0
      %5474 = vmatpush1.msra.mxu0 0.0
      %5475 = vmatprep.subr.mxu0 0.0
      %5476 = vmatpush1.msra.mxu0 0.0
      %5477 = vmatprep.subr.mxu0 0.0
      %5478 = vmatpush1.msra.mxu0 0.0
      %5479 = vmatprep.subr.mxu0 0.0
      %5480 = vmatpush1.msra.mxu0 0.0
      %5481 = vmatprep.subr.mxu0 0.0
      %5482 = vmatpush1.msra.mxu0 0.0
      %5483 = vmatprep.subr.mxu0 0.0
      %5484 = vmatpush1.msra.mxu0 0.0
      %5485 = vmatprep.subr.mxu0 0.0
      %5486 = vmatpush1.msra.mxu0 0.0
      %5487 = vmatprep.subr.mxu0 0.0
      %5488 = vmatpush1.msra.mxu0 0.0
      %5489 = vmatprep.subr.mxu0 0.0
      %5490 = vmatpush1.msra.mxu0 0.0
      %5491 = vmatprep.subr.mxu0 0.0
      %5492 = vmatpush1.msra.mxu0 0.0
      %5493 = vmatprep.subr.mxu0 0.0
      %5494 = vmatpush1.msra.mxu0 0.0
      %5495 = vmatprep.subr.mxu0 0.0
      %5496 = vmatpush1.msra.mxu0 0.0
      %5497 = vmatprep.subr.mxu0 0.0
      %5498 = vmatpush1.msra.mxu0 0.0
      %5499 = vmatprep.subr.mxu0 0.0
      %5500 = vmatpush1.msra.mxu0 0.0
      %5501 = vmatprep.subr.mxu0 0.0
      %5502 = vmatpush1.msra.mxu0 0.0
      %5503 = vmatprep.subr.mxu0 0.0
      %5504 = vmatpush1.msra.mxu0 0.0
      %5505 = vmatprep.subr.mxu0 0.0
      %5506 = vmatpush1.msra.mxu0 0.0
      %5507 = vmatprep.subr.mxu0 0.0
      %5508 = vmatpush1.msra.mxu0 0.0
      %5509 = vmatprep.subr.mxu0 0.0
      %5510 = vmatpush1.msra.mxu0 0.0
      %5511 = vmatprep.subr.mxu0 0.0
      %5512 = vmatpush1.msra.mxu0 0.0
      %5513 = vmatprep.subr.mxu0 0.0
      %5514 = vmatpush1.msra.mxu0 0.0
      %5515 = vmatprep.subr.mxu0 0.0
      %5516 = vmatpush1.msra.mxu0 0.0
      %5517 = vmatprep.subr.mxu0 0.0
      %5518 = vmatpush1.msra.mxu0 0.0
      %5519 = vmatprep.subr.mxu0 0.0
      %5520 = vmatpush1.msra.mxu0 0.0
      %5521 = vmatprep.subr.mxu0 0.0
      %5522 = vmatpush1.msra.mxu0 0.0
      %5523 = vmatprep.subr.mxu0 0.0
      %5524 = vmatpush1.msra.mxu0 0.0
      %5525 = vmatprep.subr.mxu0 0.0
      %5526 = vmatpush1.msra.mxu0 0.0
      %5527 = vmatprep.subr.mxu0 0.0
      %5528 = vmatpush1.msra.mxu0 0.0
      %5529 = vmatprep.mubr.f32.mxu0 0.0
      %v5530 = vand.u32 %v4991, 4294901760
      %v5531 = vsub.f32 %v4991, %v5530
      %v5532 = vand.u32 %v5531, 4294901760
      %v5533 = vsub.f32 %v5531, %v5532
      %v5534 = vand.u32 %v5533, 4294901760
      %5535 = vmatmul.mubr.f32.gmra.mrb[0].mxu0 %v5534
      %v5536 = vpop.f32.mrb[0].mxu0
      %v5537 = vadd.f32 0.0, %v5536
      %v5538 = vpop.f32.mrb[0].mxu0
      %5539 = vdwg.mxu0
      %5540 = vmatprep.subr.mxu0 0.0
      %v5541 = vand.u32 %v4997, 4294901760
      %v5542 = vsub.f32 %v4997, %v5541
      %v5543 = vand.u32 %v5542, 4294901760
      %v5544 = vsub.f32 %v5542, %v5543
      %v5545 = vand.u32 %v5544, 4294901760
      %5546 = vmatpush1.msra.mxu0 %v5545
      %5547 = vmatprep.subr.mxu0 0.0
      %5548 = vmatpush1.msra.mxu0 0.0
      %5549 = vmatprep.subr.mxu0 0.0
      %5550 = vmatpush1.msra.mxu0 0.0
      %5551 = vmatprep.subr.mxu0 0.0
      %5552 = vmatpush1.msra.mxu0 0.0
      %5553 = vmatprep.subr.mxu0 0.0
      %5554 = vmatpush1.msra.mxu0 0.0
      %5555 = vmatprep.subr.mxu0 0.0
      %5556 = vmatpush1.msra.mxu0 0.0
      %5557 = vmatprep.subr.mxu0 0.0
      %5558 = vmatpush1.msra.mxu0 0.0
      %5559 = vmatprep.subr.mxu0 0.0
      %5560 = vmatpush1.msra.mxu0 0.0
      %5561 = vmatprep.subr.mxu0 0.0
      %5562 = vmatpush1.msra.mxu0 0.0
      %5563 = vmatprep.subr.mxu0 0.0
      %5564 = vmatpush1.msra.mxu0 0.0
      %5565 = vmatprep.subr.mxu0 0.0
      %5566 = vmatpush1.msra.mxu0 0.0
      %5567 = vmatprep.subr.mxu0 0.0
      %5568 = vmatpush1.msra.mxu0 0.0
      %5569 = vmatprep.subr.mxu0 0.0
      %5570 = vmatpush1.msra.mxu0 0.0
      %5571 = vmatprep.subr.mxu0 0.0
      %5572 = vmatpush1.msra.mxu0 0.0
      %5573 = vmatprep.subr.mxu0 0.0
      %5574 = vmatpush1.msra.mxu0 0.0
      %5575 = vmatprep.subr.mxu0 0.0
      %5576 = vmatpush1.msra.mxu0 0.0
      %5577 = vmatprep.subr.mxu0 0.0
      %5578 = vmatpush1.msra.mxu0 0.0
      %5579 = vmatprep.subr.mxu0 0.0
      %5580 = vmatpush1.msra.mxu0 0.0
      %5581 = vmatprep.subr.mxu0 0.0
      %5582 = vmatpush1.msra.mxu0 0.0
      %5583 = vmatprep.subr.mxu0 0.0
      %5584 = vmatpush1.msra.mxu0 0.0
      %5585 = vmatprep.subr.mxu0 0.0
      %5586 = vmatpush1.msra.mxu0 0.0
      %5587 = vmatprep.subr.mxu0 0.0
      %5588 = vmatpush1.msra.mxu0 0.0
      %5589 = vmatprep.subr.mxu0 0.0
      %5590 = vmatpush1.msra.mxu0 0.0
      %5591 = vmatprep.subr.mxu0 0.0
      %5592 = vmatpush1.msra.mxu0 0.0
      %5593 = vmatprep.subr.mxu0 0.0
      %5594 = vmatpush1.msra.mxu0 0.0
      %5595 = vmatprep.subr.mxu0 0.0
      %5596 = vmatpush1.msra.mxu0 0.0
      %5597 = vmatprep.subr.mxu0 0.0
      %5598 = vmatpush1.msra.mxu0 0.0
      %5599 = vmatprep.subr.mxu0 0.0
      %5600 = vmatpush1.msra.mxu0 0.0
      %5601 = vmatprep.subr.mxu0 0.0
      %5602 = vmatpush1.msra.mxu0 0.0
      %5603 = vmatprep.subr.mxu0 0.0
      %5604 = vmatpush1.msra.mxu0 0.0
      %5605 = vmatprep.subr.mxu0 0.0
      %5606 = vmatpush1.msra.mxu0 0.0
      %5607 = vmatprep.subr.mxu0 0.0
      %5608 = vmatpush1.msra.mxu0 0.0
      %5609 = vmatprep.mubr.f32.mxu0 0.0
      %v5610 = vand.u32 %v4991, 4294901760
      %5611 = vmatmul.mubr.f32.gmra.mrb[0].mxu0 %v5610
      %v5612 = vpop.f32.mrb[0].mxu0
      %v5613 = vadd.f32 %v5537, %v5612
      %v5614 = vpop.f32.mrb[0].mxu0
      %5615 = vdwg.mxu0
      %5616 = vmatprep.subr.mxu0 0.0
      %v5617 = vand.u32 %v4997, 4294901760
      %v5618 = vsub.f32 %v4997, %v5617
      %5619 = vmatpush1.msra.mxu0 %v5618
      %5620 = vmatprep.subr.mxu0 0.0
      %5621 = vmatpush1.msra.mxu0 0.0
      %5622 = vmatprep.subr.mxu0 0.0
      %5623 = vmatpush1.msra.mxu0 0.0
      %5624 = vmatprep.subr.mxu0 0.0
      %5625 = vmatpush1.msra.mxu0 0.0
      %5626 = vmatprep.subr.mxu0 0.0
      %5627 = vmatpush1.msra.mxu0 0.0
      %5628 = vmatprep.subr.mxu0 0.0
      %5629 = vmatpush1.msra.mxu0 0.0
      %5630 = vmatprep.subr.mxu0 0.0
      %5631 = vmatpush1.msra.mxu0 0.0
      %5632 = vmatprep.subr.mxu0 0.0
      %5633 = vmatpush1.msra.mxu0 0.0
      %5634 = vmatprep.subr.mxu0 0.0
      %5635 = vmatpush1.msra.mxu0 0.0
      %5636 = vmatprep.subr.mxu0 0.0
      %5637 = vmatpush1.msra.mxu0 0.0
      %5638 = vmatprep.subr.mxu0 0.0
      %5639 = vmatpush1.msra.mxu0 0.0
      %5640 = vmatprep.subr.mxu0 0.0
      %5641 = vmatpush1.msra.mxu0 0.0
      %5642 = vmatprep.subr.mxu0 0.0
      %5643 = vmatpush1.msra.mxu0 0.0
      %5644 = vmatprep.subr.mxu0 0.0
      %5645 = vmatpush1.msra.mxu0 0.0
      %5646 = vmatprep.subr.mxu0 0.0
      %5647 = vmatpush1.msra.mxu0 0.0
      %5648 = vmatprep.subr.mxu0 0.0
      %5649 = vmatpush1.msra.mxu0 0.0
      %5650 = vmatprep.subr.mxu0 0.0
      %5651 = vmatpush1.msra.mxu0 0.0
      %5652 = vmatprep.subr.mxu0 0.0
      %5653 = vmatpush1.msra.mxu0 0.0
      %5654 = vmatprep.subr.mxu0 0.0
      %5655 = vmatpush1.msra.mxu0 0.0
      %5656 = vmatprep.subr.mxu0 0.0
      %5657 = vmatpush1.msra.mxu0 0.0
      %5658 = vmatprep.subr.mxu0 0.0
      %5659 = vmatpush1.msra.mxu0 0.0
      %5660 = vmatprep.subr.mxu0 0.0
      %5661 = vmatpush1.msra.mxu0 0.0
      %5662 = vmatprep.subr.mxu0 0.0
      %5663 = vmatpush1.msra.mxu0 0.0
      %5664 = vmatprep.subr.mxu0 0.0
      %5665 = vmatpush1.msra.mxu0 0.0
      %5666 = vmatprep.subr.mxu0 0.0
      %5667 = vmatpush1.msra.mxu0 0.0
      %5668 = vmatprep.subr.mxu0 0.0
      %5669 = vmatpush1.msra.mxu0 0.0
      %5670 = vmatprep.subr.mxu0 0.0
      %5671 = vmatpush1.msra.mxu0 0.0
      %5672 = vmatprep.subr.mxu0 0.0
      %5673 = vmatpush1.msra.mxu0 0.0
      %5674 = vmatprep.subr.mxu0 0.0
      %5675 = vmatpush1.msra.mxu0 0.0
      %5676 = vmatprep.subr.mxu0 0.0
      %5677 = vmatpush1.msra.mxu0 0.0
      %5678 = vmatprep.subr.mxu0 0.0
      %5679 = vmatpush1.msra.mxu0 0.0
      %5680 = vmatprep.subr.mxu0 0.0
      %5681 = vmatpush1.msra.mxu0 0.0
      %5682 = vmatprep.mubr.f32.mxu0 0.0
      %v5683 = vand.u32 %v4991, 4294901760
      %v5684 = vsub.f32 %v4991, %v5683
      %5685 = vmatmul.mubr.f32.gmra.mrb[0].mxu0 %v5684
      %v5686 = vpop.f32.mrb[0].mxu0
      %v5687 = vadd.f32 %v5613, %v5686
      %v5688 = vpop.f32.mrb[0].mxu0
      %5689 = vdwg.mxu0
      %5690 = vmatprep.subr.mxu0 0.0
      %v5691 = vand.u32 %v4997, 4294901760
      %5692 = vmatpush1.msra.mxu0 %v5691
      %5693 = vmatprep.subr.mxu0 0.0
      %5694 = vmatpush1.msra.mxu0 0.0
      %5695 = vmatprep.subr.mxu0 0.0
      %5696 = vmatpush1.msra.mxu0 0.0
      %5697 = vmatprep.subr.mxu0 0.0
      %5698 = vmatpush1.msra.mxu0 0.0
      %5699 = vmatprep.subr.mxu0 0.0
      %5700 = vmatpush1.msra.mxu0 0.0
      %5701 = vmatprep.subr.mxu0 0.0
      %5702 = vmatpush1.msra.mxu0 0.0
      %5703 = vmatprep.subr.mxu0 0.0
      %5704 = vmatpush1.msra.mxu0 0.0
      %5705 = vmatprep.subr.mxu0 0.0
      %5706 = vmatpush1.msra.mxu0 0.0
      %5707 = vmatprep.subr.mxu0 0.0
      %5708 = vmatpush1.msra.mxu0 0.0
      %5709 = vmatprep.subr.mxu0 0.0
      %5710 = vmatpush1.msra.mxu0 0.0
      %5711 = vmatprep.subr.mxu0 0.0
      %5712 = vmatpush1.msra.mxu0 0.0
      %5713 = vmatprep.subr.mxu0 0.0
      %5714 = vmatpush1.msra.mxu0 0.0
      %5715 = vmatprep.subr.mxu0 0.0
      %5716 = vmatpush1.msra.mxu0 0.0
      %5717 = vmatprep.subr.mxu0 0.0
      %5718 = vmatpush1.msra.mxu0 0.0
      %5719 = vmatprep.subr.mxu0 0.0
      %5720 = vmatpush1.msra.mxu0 0.0
      %5721 = vmatprep.subr.mxu0 0.0
      %5722 = vmatpush1.msra.mxu0 0.0
      %5723 = vmatprep.subr.mxu0 0.0
      %5724 = vmatpush1.msra.mxu0 0.0
      %5725 = vmatprep.subr.mxu0 0.0
      %5726 = vmatpush1.msra.mxu0 0.0
      %5727 = vmatprep.subr.mxu0 0.0
      %5728 = vmatpush1.msra.mxu0 0.0
      %5729 = vmatprep.subr.mxu0 0.0
      %5730 = vmatpush1.msra.mxu0 0.0
      %5731 = vmatprep.subr.mxu0 0.0
      %5732 = vmatpush1.msra.mxu0 0.0
      %5733 = vmatprep.subr.mxu0 0.0
      %5734 = vmatpush1.msra.mxu0 0.0
      %5735 = vmatprep.subr.mxu0 0.0
      %5736 = vmatpush1.msra.mxu0 0.0
      %5737 = vmatprep.subr.mxu0 0.0
      %5738 = vmatpush1.msra.mxu0 0.0
      %5739 = vmatprep.subr.mxu0 0.0
      %5740 = vmatpush1.msra.mxu0 0.0
      %5741 = vmatprep.subr.mxu0 0.0
      %5742 = vmatpush1.msra.mxu0 0.0
      %5743 = vmatprep.subr.mxu0 0.0
      %5744 = vmatpush1.msra.mxu0 0.0
      %5745 = vmatprep.subr.mxu0 0.0
      %5746 = vmatpush1.msra.mxu0 0.0
      %5747 = vmatprep.subr.mxu0 0.0
      %5748 = vmatpush1.msra.mxu0 0.0
      %5749 = vmatprep.subr.mxu0 0.0
      %5750 = vmatpush1.msra.mxu0 0.0
      %5751 = vmatprep.subr.mxu0 0.0
      %5752 = vmatpush1.msra.mxu0 0.0
      %5753 = vmatprep.subr.mxu0 0.0
      %5754 = vmatpush1.msra.mxu0 0.0
      %5755 = vmatprep.mubr.f32.mxu0 0.0
      %v5756 = vand.u32 %v4991, 4294901760
      %v5757 = vsub.f32 %v4991, %v5756
      %v5758 = vand.u32 %v5757, 4294901760
      %5759 = vmatmul.mubr.f32.gmra.mrb[0].mxu0 %v5758
      %v5760 = vpop.f32.mrb[0].mxu0
      %v5761 = vadd.f32 %v5687, %v5760
      %v5762 = vpop.f32.mrb[0].mxu0
      %5763 = vdwg.mxu0
      %5764 = vmatprep.subr.mxu0 0.0
      %v5765 = vand.u32 %v4997, 4294901760
      %v5766 = vsub.f32 %v4997, %v5765
      %v5767 = vand.u32 %v5766, 4294901760
      %5768 = vmatpush1.msra.mxu0 %v5767
      %5769 = vmatprep.subr.mxu0 0.0
      %5770 = vmatpush1.msra.mxu0 0.0
      %5771 = vmatprep.subr.mxu0 0.0
      %5772 = vmatpush1.msra.mxu0 0.0
      %5773 = vmatprep.subr.mxu0 0.0
      %5774 = vmatpush1.msra.mxu0 0.0
      %5775 = vmatprep.subr.mxu0 0.0
      %5776 = vmatpush1.msra.mxu0 0.0
      %5777 = vmatprep.subr.mxu0 0.0
      %5778 = vmatpush1.msra.mxu0 0.0
      %5779 = vmatprep.subr.mxu0 0.0
      %5780 = vmatpush1.msra.mxu0 0.0
      %5781 = vmatprep.subr.mxu0 0.0
      %5782 = vmatpush1.msra.mxu0 0.0
      %5783 = vmatprep.subr.mxu0 0.0
      %5784 = vmatpush1.msra.mxu0 0.0
      %5785 = vmatprep.subr.mxu0 0.0
      %5786 = vmatpush1.msra.mxu0 0.0
      %5787 = vmatprep.subr.mxu0 0.0
      %5788 = vmatpush1.msra.mxu0 0.0
      %5789 = vmatprep.subr.mxu0 0.0
      %5790 = vmatpush1.msra.mxu0 0.0
      %5791 = vmatprep.subr.mxu0 0.0
      %5792 = vmatpush1.msra.mxu0 0.0
      %5793 = vmatprep.subr.mxu0 0.0
      %5794 = vmatpush1.msra.mxu0 0.0
      %5795 = vmatprep.subr.mxu0 0.0
      %5796 = vmatpush1.msra.mxu0 0.0
      %5797 = vmatprep.subr.mxu0 0.0
      %5798 = vmatpush1.msra.mxu0 0.0
      %5799 = vmatprep.subr.mxu0 0.0
      %5800 = vmatpush1.msra.mxu0 0.0
      %5801 = vmatprep.subr.mxu0 0.0
      %5802 = vmatpush1.msra.mxu0 0.0
      %5803 = vmatprep.subr.mxu0 0.0
      %5804 = vmatpush1.msra.mxu0 0.0
      %5805 = vmatprep.subr.mxu0 0.0
      %5806 = vmatpush1.msra.mxu0 0.0
      %5807 = vmatprep.subr.mxu0 0.0
      %5808 = vmatpush1.msra.mxu0 0.0
      %5809 = vmatprep.subr.mxu0 0.0
      %5810 = vmatpush1.msra.mxu0 0.0
      %5811 = vmatprep.subr.mxu0 0.0
      %5812 = vmatpush1.msra.mxu0 0.0
      %5813 = vmatprep.subr.mxu0 0.0
      %5814 = vmatpush1.msra.mxu0 0.0
      %5815 = vmatprep.subr.mxu0 0.0
      %5816 = vmatpush1.msra.mxu0 0.0
      %5817 = vmatprep.subr.mxu0 0.0
      %5818 = vmatpush1.msra.mxu0 0.0
      %5819 = vmatprep.subr.mxu0 0.0
      %5820 = vmatpush1.msra.mxu0 0.0
      %5821 = vmatprep.subr.mxu0 0.0
      %5822 = vmatpush1.msra.mxu0 0.0
      %5823 = vmatprep.subr.mxu0 0.0
      %5824 = vmatpush1.msra.mxu0 0.0
      %5825 = vmatprep.subr.mxu0 0.0
      %5826 = vmatpush1.msra.mxu0 0.0
      %5827 = vmatprep.subr.mxu0 0.0
      %5828 = vmatpush1.msra.mxu0 0.0
      %5829 = vmatprep.subr.mxu0 0.0
      %5830 = vmatpush1.msra.mxu0 0.0
      %5831 = vmatprep.mubr.f32.mxu0 0.0
      %v5832 = vand.u32 %v4991, 4294901760
      %5833 = vmatmul.mubr.f32.gmra.mrb[0].mxu0 %v5832
      %v5834 = vpop.f32.mrb[0].mxu0
      %v5835 = vadd.f32 %v5761, %v5834
      %v5836 = vpop.f32.mrb[0].mxu0
      %5837 = vdwg.mxu0
      %5838 = vmatprep.subr.mxu0 0.0
      %v5839 = vand.u32 %v4997, 4294901760
      %5840 = vmatpush1.msra.mxu0 %v5839
      %5841 = vmatprep.subr.mxu0 0.0
      %5842 = vmatpush1.msra.mxu0 0.0
      %5843 = vmatprep.subr.mxu0 0.0
      %5844 = vmatpush1.msra.mxu0 0.0
      %5845 = vmatprep.subr.mxu0 0.0
      %5846 = vmatpush1.msra.mxu0 0.0
      %5847 = vmatprep.subr.mxu0 0.0
      %5848 = vmatpush1.msra.mxu0 0.0
      %5849 = vmatprep.subr.mxu0 0.0
      %5850 = vmatpush1.msra.mxu0 0.0
      %5851 = vmatprep.subr.mxu0 0.0
      %5852 = vmatpush1.msra.mxu0 0.0
      %5853 = vmatprep.subr.mxu0 0.0
      %5854 = vmatpush1.msra.mxu0 0.0
      %5855 = vmatprep.subr.mxu0 0.0
      %5856 = vmatpush1.msra.mxu0 0.0
      %5857 = vmatprep.subr.mxu0 0.0
      %5858 = vmatpush1.msra.mxu0 0.0
      %5859 = vmatprep.subr.mxu0 0.0
      %5860 = vmatpush1.msra.mxu0 0.0
      %5861 = vmatprep.subr.mxu0 0.0
      %5862 = vmatpush1.msra.mxu0 0.0
      %5863 = vmatprep.subr.mxu0 0.0
      %5864 = vmatpush1.msra.mxu0 0.0
      %5865 = vmatprep.subr.mxu0 0.0
      %5866 = vmatpush1.msra.mxu0 0.0
      %5867 = vmatprep.subr.mxu0 0.0
      %5868 = vmatpush1.msra.mxu0 0.0
      %5869 = vmatprep.subr.mxu0 0.0
      %5870 = vmatpush1.msra.mxu0 0.0
      %5871 = vmatprep.subr.mxu0 0.0
      %5872 = vmatpush1.msra.mxu0 0.0
      %5873 = vmatprep.subr.mxu0 0.0
      %5874 = vmatpush1.msra.mxu0 0.0
      %5875 = vmatprep.subr.mxu0 0.0
      %5876 = vmatpush1.msra.mxu0 0.0
      %5877 = vmatprep.subr.mxu0 0.0
      %5878 = vmatpush1.msra.mxu0 0.0
      %5879 = vmatprep.subr.mxu0 0.0
      %5880 = vmatpush1.msra.mxu0 0.0
      %5881 = vmatprep.subr.mxu0 0.0
      %5882 = vmatpush1.msra.mxu0 0.0
      %5883 = vmatprep.subr.mxu0 0.0
      %5884 = vmatpush1.msra.mxu0 0.0
      %5885 = vmatprep.subr.mxu0 0.0
      %5886 = vmatpush1.msra.mxu0 0.0
      %5887 = vmatprep.subr.mxu0 0.0
      %5888 = vmatpush1.msra.mxu0 0.0
      %5889 = vmatprep.subr.mxu0 0.0
      %5890 = vmatpush1.msra.mxu0 0.0
      %5891 = vmatprep.subr.mxu0 0.0
      %5892 = vmatpush1.msra.mxu0 0.0
      %5893 = vmatprep.subr.mxu0 0.0
      %5894 = vmatpush1.msra.mxu0 0.0
      %5895 = vmatprep.subr.mxu0 0.0
      %5896 = vmatpush1.msra.mxu0 0.0
      %5897 = vmatprep.subr.mxu0 0.0
      %5898 = vmatpush1.msra.mxu0 0.0
      %5899 = vmatprep.subr.mxu0 0.0
      %5900 = vmatpush1.msra.mxu0 0.0
      %5901 = vmatprep.subr.mxu0 0.0
      %5902 = vmatpush1.msra.mxu0 0.0
      %5903 = vmatprep.mubr.f32.mxu0 0.0
      %v5904 = vand.u32 %v4991, 4294901760
      %5905 = vmatmul.mubr.f32.gmra.mrb[0].mxu0 %v5904
      %v5906 = vpop.f32.mrb[0].mxu0
      %v5907 = vadd.f32 %v5835, %v5906
      %v5908 = vpop.f32.mrb[0].mxu0
      %5909 = vdwg.mxu0
      %v5910 = vadd.f32 %v4967, %v5460
      %v5911 = vadd.f32 %v4968, %v5462
      %v5912 = vadd.f32 %v4969, %v5907
      %s5913 = scalar_lea.vmem %s1, 48
      %v5914 = vld [vmem:[%s5913] sm:$0xff]
      %v5915 = vld [vmem:[%s259] sm:$0xff]
      %v5916 = vld [vmem:[%s259 + $0x8] sm:$0xff]
      %v5919 = vcombine.high %v5915, %v5915
      %v5920 = vcombine.high %v5916, %v5916
      %5921 = vrot.lane.b32.xlu0 %v5915, 92
      %v5922 = vpop.permute.xlu0 %5921
      %5923 = vrot.lane.b32.xlu0 %v5919, 92
      %v5924 = vpop.permute.xlu0 %5923
      %5925 = vrot.lane.b32.xlu0 %v5916, 92
      %v5926 = vpop.permute.xlu0 %5925
      %5927 = vrot.lane.b32.xlu0 %v5920, 92
      %v5928 = vpop.permute.xlu0 %5927
      %vm5929 = vcmask 752640
      %v5930 = vsel %vm5929, %v5922, %v5924
      %v5931 = vsel %vm5929, %v5924, %v5926
      %v5932 = vsel %vm5929, %v5926, %v5928
      %v5934 = vsel %vm296, %v5914, 0
      %v5936 = vsel %vm300, %v5930, 0
      %v5938 = vsel %vm300, %v5931, 0
      %v5940 = vsel %vm300, %v5932, 0
      %v5942 = vand.u32 %v5938, 4294901760
      %5943 = vmatprep.subr.mxu0 %v5942
      %v5944 = vand.u32 %v5936, 4294901760
      %5945 = vmatpush1.msra.mxu0 %v5944
      %5946 = vmatprep.subr.mxu0 0.0
      %5947 = vmatpush1.msra.mxu0 0.0
      %5948 = vmatprep.subr.mxu0 0.0
      %5949 = vmatpush1.msra.mxu0 0.0
      %5950 = vmatprep.subr.mxu0 0.0
      %5951 = vmatpush1.msra.mxu0 0.0
      %5952 = vmatprep.subr.mxu0 0.0
      %5953 = vmatpush1.msra.mxu0 0.0
      %5954 = vmatprep.subr.mxu0 0.0
      %5955 = vmatpush1.msra.mxu0 0.0
      %5956 = vmatprep.subr.mxu0 0.0
      %5957 = vmatpush1.msra.mxu0 0.0
      %5958 = vmatprep.subr.mxu0 0.0
      %5959 = vmatpush1.msra.mxu0 0.0
      %5960 = vmatprep.subr.mxu0 0.0
      %5961 = vmatpush1.msra.mxu0 0.0
      %5962 = vmatprep.subr.mxu0 0.0
      %5963 = vmatpush1.msra.mxu0 0.0
      %5964 = vmatprep.subr.mxu0 0.0
      %5965 = vmatpush1.msra.mxu0 0.0
      %5966 = vmatprep.subr.mxu0 0.0
      %5967 = vmatpush1.msra.mxu0 0.0
      %5968 = vmatprep.subr.mxu0 0.0
      %5969 = vmatpush1.msra.mxu0 0.0
      %5970 = vmatprep.subr.mxu0 0.0
      %5971 = vmatpush1.msra.mxu0 0.0
      %5972 = vmatprep.subr.mxu0 0.0
      %5973 = vmatpush1.msra.mxu0 0.0
      %5974 = vmatprep.subr.mxu0 0.0
      %5975 = vmatpush1.msra.mxu0 0.0
      %5976 = vmatprep.subr.mxu0 0.0
      %5977 = vmatpush1.msra.mxu0 0.0
      %5978 = vmatprep.subr.mxu0 0.0
      %5979 = vmatpush1.msra.mxu0 0.0
      %5980 = vmatprep.subr.mxu0 0.0
      %5981 = vmatpush1.msra.mxu0 0.0
      %5982 = vmatprep.subr.mxu0 0.0
      %5983 = vmatpush1.msra.mxu0 0.0
      %5984 = vmatprep.subr.mxu0 0.0
      %5985 = vmatpush1.msra.mxu0 0.0
      %5986 = vmatprep.subr.mxu0 0.0
      %5987 = vmatpush1.msra.mxu0 0.0
      %5988 = vmatprep.subr.mxu0 0.0
      %5989 = vmatpush1.msra.mxu0 0.0
      %5990 = vmatprep.subr.mxu0 0.0
      %5991 = vmatpush1.msra.mxu0 0.0
      %5992 = vmatprep.subr.mxu0 0.0
      %5993 = vmatpush1.msra.mxu0 0.0
      %5994 = vmatprep.subr.mxu0 0.0
      %5995 = vmatpush1.msra.mxu0 0.0
      %5996 = vmatprep.subr.mxu0 0.0
      %5997 = vmatpush1.msra.mxu0 0.0
      %5998 = vmatprep.subr.mxu0 0.0
      %5999 = vmatpush1.msra.mxu0 0.0
      %6000 = vmatprep.subr.mxu0 0.0
      %6001 = vmatpush1.msra.mxu0 0.0
      %6002 = vmatprep.subr.mxu0 0.0
      %6003 = vmatpush1.msra.mxu0 0.0
      %6004 = vmatprep.subr.mxu0 0.0
      %6005 = vmatpush1.msra.mxu0 0.0
      %6006 = vmatprep.subr.mxu0 0.0
      %6007 = vmatpush1.msra.mxu0 0.0
      %6008 = vmatprep.mubr.f32.mxu0 0.0
      %v6009 = vand.u32 %v5934, 4294901760
      %v6010 = vsub.f32 %v5934, %v6009
      %v6011 = vand.u32 %v6010, 4294901760
      %v6012 = vsub.f32 %v6010, %v6011
      %v6013 = vand.u32 %v6012, 4294901760
      %6014 = vmatmul.mubr.f32.gmra.mrb[0].mxu0 %v6013
      %v6015 = vpop.f32.mrb[0].mxu0
      %v6016 = vadd.f32 0.0, %v6015
      %v6017 = vpop.f32.mrb[0].mxu0
      %v6018 = vadd.f32 0.0, %v6017
      %6019 = vdwg.mxu0
      %v6020 = vand.u32 %v5938, 4294901760
      %v6021 = vsub.f32 %v5938, %v6020
      %v6022 = vand.u32 %v6021, 4294901760
      %v6023 = vsub.f32 %v6021, %v6022
      %v6024 = vand.u32 %v6023, 4294901760
      %6025 = vmatprep.subr.mxu0 %v6024
      %v6026 = vand.u32 %v5936, 4294901760
      %v6027 = vsub.f32 %v5936, %v6026
      %v6028 = vand.u32 %v6027, 4294901760
      %v6029 = vsub.f32 %v6027, %v6028
      %v6030 = vand.u32 %v6029, 4294901760
      %6031 = vmatpush1.msra.mxu0 %v6030
      %6032 = vmatprep.subr.mxu0 0.0
      %6033 = vmatpush1.msra.mxu0 0.0
      %6034 = vmatprep.subr.mxu0 0.0
      %6035 = vmatpush1.msra.mxu0 0.0
      %6036 = vmatprep.subr.mxu0 0.0
      %6037 = vmatpush1.msra.mxu0 0.0
      %6038 = vmatprep.subr.mxu0 0.0
      %6039 = vmatpush1.msra.mxu0 0.0
      %6040 = vmatprep.subr.mxu0 0.0
      %6041 = vmatpush1.msra.mxu0 0.0
      %6042 = vmatprep.subr.mxu0 0.0
      %6043 = vmatpush1.msra.mxu0 0.0
      %6044 = vmatprep.subr.mxu0 0.0
      %6045 = vmatpush1.msra.mxu0 0.0
      %6046 = vmatprep.subr.mxu0 0.0
      %6047 = vmatpush1.msra.mxu0 0.0
      %6048 = vmatprep.subr.mxu0 0.0
      %6049 = vmatpush1.msra.mxu0 0.0
      %6050 = vmatprep.subr.mxu0 0.0
      %6051 = vmatpush1.msra.mxu0 0.0
      %6052 = vmatprep.subr.mxu0 0.0
      %6053 = vmatpush1.msra.mxu0 0.0
      %6054 = vmatprep.subr.mxu0 0.0
      %6055 = vmatpush1.msra.mxu0 0.0
      %6056 = vmatprep.subr.mxu0 0.0
      %6057 = vmatpush1.msra.mxu0 0.0
      %6058 = vmatprep.subr.mxu0 0.0
      %6059 = vmatpush1.msra.mxu0 0.0
      %6060 = vmatprep.subr.mxu0 0.0
      %6061 = vmatpush1.msra.mxu0 0.0
      %6062 = vmatprep.subr.mxu0 0.0
      %6063 = vmatpush1.msra.mxu0 0.0
      %6064 = vmatprep.subr.mxu0 0.0
      %6065 = vmatpush1.msra.mxu0 0.0
      %6066 = vmatprep.subr.mxu0 0.0
      %6067 = vmatpush1.msra.mxu0 0.0
      %6068 = vmatprep.subr.mxu0 0.0
      %6069 = vmatpush1.msra.mxu0 0.0
      %6070 = vmatprep.subr.mxu0 0.0
      %6071 = vmatpush1.msra.mxu0 0.0
      %6072 = vmatprep.subr.mxu0 0.0
      %6073 = vmatpush1.msra.mxu0 0.0
      %6074 = vmatprep.subr.mxu0 0.0
      %6075 = vmatpush1.msra.mxu0 0.0
      %6076 = vmatprep.subr.mxu0 0.0
      %6077 = vmatpush1.msra.mxu0 0.0
      %6078 = vmatprep.subr.mxu0 0.0
      %6079 = vmatpush1.msra.mxu0 0.0
      %6080 = vmatprep.subr.mxu0 0.0
      %6081 = vmatpush1.msra.mxu0 0.0
      %6082 = vmatprep.subr.mxu0 0.0
      %6083 = vmatpush1.msra.mxu0 0.0
      %6084 = vmatprep.subr.mxu0 0.0
      %6085 = vmatpush1.msra.mxu0 0.0
      %6086 = vmatprep.subr.mxu0 0.0
      %6087 = vmatpush1.msra.mxu0 0.0
      %6088 = vmatprep.subr.mxu0 0.0
      %6089 = vmatpush1.msra.mxu0 0.0
      %6090 = vmatprep.subr.mxu0 0.0
      %6091 = vmatpush1.msra.mxu0 0.0
      %6092 = vmatprep.subr.mxu0 0.0
      %6093 = vmatpush1.msra.mxu0 0.0
      %6094 = vmatprep.mubr.f32.mxu0 0.0
      %v6095 = vand.u32 %v5934, 4294901760
      %6096 = vmatmul.mubr.f32.gmra.mrb[0].mxu0 %v6095
      %v6097 = vpop.f32.mrb[0].mxu0
      %v6098 = vadd.f32 %v6016, %v6097
      %v6099 = vpop.f32.mrb[0].mxu0
      %v6100 = vadd.f32 %v6018, %v6099
      %6101 = vdwg.mxu0
      %v6102 = vand.u32 %v5938, 4294901760
      %v6103 = vsub.f32 %v5938, %v6102
      %6104 = vmatprep.subr.mxu0 %v6103
      %v6105 = vand.u32 %v5936, 4294901760
      %v6106 = vsub.f32 %v5936, %v6105
      %6107 = vmatpush1.msra.mxu0 %v6106
      %6108 = vmatprep.subr.mxu0 0.0
      %6109 = vmatpush1.msra.mxu0 0.0
      %6110 = vmatprep.subr.mxu0 0.0
      %6111 = vmatpush1.msra.mxu0 0.0
      %6112 = vmatprep.subr.mxu0 0.0
      %6113 = vmatpush1.msra.mxu0 0.0
      %6114 = vmatprep.subr.mxu0 0.0
      %6115 = vmatpush1.msra.mxu0 0.0
      %6116 = vmatprep.subr.mxu0 0.0
      %6117 = vmatpush1.msra.mxu0 0.0
      %6118 = vmatprep.subr.mxu0 0.0
      %6119 = vmatpush1.msra.mxu0 0.0
      %6120 = vmatprep.subr.mxu0 0.0
      %6121 = vmatpush1.msra.mxu0 0.0
      %6122 = vmatprep.subr.mxu0 0.0
      %6123 = vmatpush1.msra.mxu0 0.0
      %6124 = vmatprep.subr.mxu0 0.0
      %6125 = vmatpush1.msra.mxu0 0.0
      %6126 = vmatprep.subr.mxu0 0.0
      %6127 = vmatpush1.msra.mxu0 0.0
      %6128 = vmatprep.subr.mxu0 0.0
      %6129 = vmatpush1.msra.mxu0 0.0
      %6130 = vmatprep.subr.mxu0 0.0
      %6131 = vmatpush1.msra.mxu0 0.0
      %6132 = vmatprep.subr.mxu0 0.0
      %6133 = vmatpush1.msra.mxu0 0.0
      %6134 = vmatprep.subr.mxu0 0.0
      %6135 = vmatpush1.msra.mxu0 0.0
      %6136 = vmatprep.subr.mxu0 0.0
      %6137 = vmatpush1.msra.mxu0 0.0
      %6138 = vmatprep.subr.mxu0 0.0
      %6139 = vmatpush1.msra.mxu0 0.0
      %6140 = vmatprep.subr.mxu0 0.0
      %6141 = vmatpush1.msra.mxu0 0.0
      %6142 = vmatprep.subr.mxu0 0.0
      %6143 = vmatpush1.msra.mxu0 0.0
      %6144 = vmatprep.subr.mxu0 0.0
      %6145 = vmatpush1.msra.mxu0 0.0
      %6146 = vmatprep.subr.mxu0 0.0
      %6147 = vmatpush1.msra.mxu0 0.0
      %6148 = vmatprep.subr.mxu0 0.0
      %6149 = vmatpush1.msra.mxu0 0.0
      %6150 = vmatprep.subr.mxu0 0.0
      %6151 = vmatpush1.msra.mxu0 0.0
      %6152 = vmatprep.subr.mxu0 0.0
      %6153 = vmatpush1.msra.mxu0 0.0
      %6154 = vmatprep.subr.mxu0 0.0
      %6155 = vmatpush1.msra.mxu0 0.0
      %6156 = vmatprep.subr.mxu0 0.0
      %6157 = vmatpush1.msra.mxu0 0.0
      %6158 = vmatprep.subr.mxu0 0.0
      %6159 = vmatpush1.msra.mxu0 0.0
      %6160 = vmatprep.subr.mxu0 0.0
      %6161 = vmatpush1.msra.mxu0 0.0
      %6162 = vmatprep.subr.mxu0 0.0
      %6163 = vmatpush1.msra.mxu0 0.0
      %6164 = vmatprep.subr.mxu0 0.0
      %6165 = vmatpush1.msra.mxu0 0.0
      %6166 = vmatprep.subr.mxu0 0.0
      %6167 = vmatpush1.msra.mxu0 0.0
      %6168 = vmatprep.subr.mxu0 0.0
      %6169 = vmatpush1.msra.mxu0 0.0
      %6170 = vmatprep.mubr.f32.mxu0 0.0
      %v6171 = vand.u32 %v5934, 4294901760
      %v6172 = vsub.f32 %v5934, %v6171
      %6173 = vmatmul.mubr.f32.gmra.mrb[0].mxu0 %v6172
      %v6174 = vpop.f32.mrb[0].mxu0
      %v6175 = vadd.f32 %v6098, %v6174
      %v6176 = vpop.f32.mrb[0].mxu0
      %v6177 = vadd.f32 %v6100, %v6176
      %6178 = vdwg.mxu0
      %v6179 = vand.u32 %v5938, 4294901760
      %6180 = vmatprep.subr.mxu0 %v6179
      %v6181 = vand.u32 %v5936, 4294901760
      %6182 = vmatpush1.msra.mxu0 %v6181
      %6183 = vmatprep.subr.mxu0 0.0
      %6184 = vmatpush1.msra.mxu0 0.0
      %6185 = vmatprep.subr.mxu0 0.0
      %6186 = vmatpush1.msra.mxu0 0.0
      %6187 = vmatprep.subr.mxu0 0.0
      %6188 = vmatpush1.msra.mxu0 0.0
      %6189 = vmatprep.subr.mxu0 0.0
      %6190 = vmatpush1.msra.mxu0 0.0
      %6191 = vmatprep.subr.mxu0 0.0
      %6192 = vmatpush1.msra.mxu0 0.0
      %6193 = vmatprep.subr.mxu0 0.0
      %6194 = vmatpush1.msra.mxu0 0.0
      %6195 = vmatprep.subr.mxu0 0.0
      %6196 = vmatpush1.msra.mxu0 0.0
      %6197 = vmatprep.subr.mxu0 0.0
      %6198 = vmatpush1.msra.mxu0 0.0
      %6199 = vmatprep.subr.mxu0 0.0
      %6200 = vmatpush1.msra.mxu0 0.0
      %6201 = vmatprep.subr.mxu0 0.0
      %6202 = vmatpush1.msra.mxu0 0.0
      %6203 = vmatprep.subr.mxu0 0.0
      %6204 = vmatpush1.msra.mxu0 0.0
      %6205 = vmatprep.subr.mxu0 0.0
      %6206 = vmatpush1.msra.mxu0 0.0
      %6207 = vmatprep.subr.mxu0 0.0
      %6208 = vmatpush1.msra.mxu0 0.0
      %6209 = vmatprep.subr.mxu0 0.0
      %6210 = vmatpush1.msra.mxu0 0.0
      %6211 = vmatprep.subr.mxu0 0.0
      %6212 = vmatpush1.msra.mxu0 0.0
      %6213 = vmatprep.subr.mxu0 0.0
      %6214 = vmatpush1.msra.mxu0 0.0
      %6215 = vmatprep.subr.mxu0 0.0
      %6216 = vmatpush1.msra.mxu0 0.0
      %6217 = vmatprep.subr.mxu0 0.0
      %6218 = vmatpush1.msra.mxu0 0.0
      %6219 = vmatprep.subr.mxu0 0.0
      %6220 = vmatpush1.msra.mxu0 0.0
      %6221 = vmatprep.subr.mxu0 0.0
      %6222 = vmatpush1.msra.mxu0 0.0
      %6223 = vmatprep.subr.mxu0 0.0
      %6224 = vmatpush1.msra.mxu0 0.0
      %6225 = vmatprep.subr.mxu0 0.0
      %6226 = vmatpush1.msra.mxu0 0.0
      %6227 = vmatprep.subr.mxu0 0.0
      %6228 = vmatpush1.msra.mxu0 0.0
      %6229 = vmatprep.subr.mxu0 0.0
      %6230 = vmatpush1.msra.mxu0 0.0
      %6231 = vmatprep.subr.mxu0 0.0
      %6232 = vmatpush1.msra.mxu0 0.0
      %6233 = vmatprep.subr.mxu0 0.0
      %6234 = vmatpush1.msra.mxu0 0.0
      %6235 = vmatprep.subr.mxu0 0.0
      %6236 = vmatpush1.msra.mxu0 0.0
      %6237 = vmatprep.subr.mxu0 0.0
      %6238 = vmatpush1.msra.mxu0 0.0
      %6239 = vmatprep.subr.mxu0 0.0
      %6240 = vmatpush1.msra.mxu0 0.0
      %6241 = vmatprep.subr.mxu0 0.0
      %6242 = vmatpush1.msra.mxu0 0.0
      %6243 = vmatprep.subr.mxu0 0.0
      %6244 = vmatpush1.msra.mxu0 0.0
      %6245 = vmatprep.mubr.f32.mxu0 0.0
      %v6246 = vand.u32 %v5934, 4294901760
      %v6247 = vsub.f32 %v5934, %v6246
      %v6248 = vand.u32 %v6247, 4294901760
      %6249 = vmatmul.mubr.f32.gmra.mrb[0].mxu0 %v6248
      %v6250 = vpop.f32.mrb[0].mxu0
      %v6251 = vadd.f32 %v6175, %v6250
      %v6252 = vpop.f32.mrb[0].mxu0
      %v6253 = vadd.f32 %v6177, %v6252
      %6254 = vdwg.mxu0
      %v6255 = vand.u32 %v5938, 4294901760
      %v6256 = vsub.f32 %v5938, %v6255
      %v6257 = vand.u32 %v6256, 4294901760
      %6258 = vmatprep.subr.mxu0 %v6257
      %v6259 = vand.u32 %v5936, 4294901760
      %v6260 = vsub.f32 %v5936, %v6259
      %v6261 = vand.u32 %v6260, 4294901760
      %6262 = vmatpush1.msra.mxu0 %v6261
      %6263 = vmatprep.subr.mxu0 0.0
      %6264 = vmatpush1.msra.mxu0 0.0
      %6265 = vmatprep.subr.mxu0 0.0
      %6266 = vmatpush1.msra.mxu0 0.0
      %6267 = vmatprep.subr.mxu0 0.0
      %6268 = vmatpush1.msra.mxu0 0.0
      %6269 = vmatprep.subr.mxu0 0.0
      %6270 = vmatpush1.msra.mxu0 0.0
      %6271 = vmatprep.subr.mxu0 0.0
      %6272 = vmatpush1.msra.mxu0 0.0
      %6273 = vmatprep.subr.mxu0 0.0
      %6274 = vmatpush1.msra.mxu0 0.0
      %6275 = vmatprep.subr.mxu0 0.0
      %6276 = vmatpush1.msra.mxu0 0.0
      %6277 = vmatprep.subr.mxu0 0.0
      %6278 = vmatpush1.msra.mxu0 0.0
      %6279 = vmatprep.subr.mxu0 0.0
      %6280 = vmatpush1.msra.mxu0 0.0
      %6281 = vmatprep.subr.mxu0 0.0
      %6282 = vmatpush1.msra.mxu0 0.0
      %6283 = vmatprep.subr.mxu0 0.0
      %6284 = vmatpush1.msra.mxu0 0.0
      %6285 = vmatprep.subr.mxu0 0.0
      %6286 = vmatpush1.msra.mxu0 0.0
      %6287 = vmatprep.subr.mxu0 0.0
      %6288 = vmatpush1.msra.mxu0 0.0
      %6289 = vmatprep.subr.mxu0 0.0
      %6290 = vmatpush1.msra.mxu0 0.0
      %6291 = vmatprep.subr.mxu0 0.0
      %6292 = vmatpush1.msra.mxu0 0.0
      %6293 = vmatprep.subr.mxu0 0.0
      %6294 = vmatpush1.msra.mxu0 0.0
      %6295 = vmatprep.subr.mxu0 0.0
      %6296 = vmatpush1.msra.mxu0 0.0
      %6297 = vmatprep.subr.mxu0 0.0
      %6298 = vmatpush1.msra.mxu0 0.0
      %6299 = vmatprep.subr.mxu0 0.0
      %6300 = vmatpush1.msra.mxu0 0.0
      %6301 = vmatprep.subr.mxu0 0.0
      %6302 = vmatpush1.msra.mxu0 0.0
      %6303 = vmatprep.subr.mxu0 0.0
      %6304 = vmatpush1.msra.mxu0 0.0
      %6305 = vmatprep.subr.mxu0 0.0
      %6306 = vmatpush1.msra.mxu0 0.0
      %6307 = vmatprep.subr.mxu0 0.0
      %6308 = vmatpush1.msra.mxu0 0.0
      %6309 = vmatprep.subr.mxu0 0.0
      %6310 = vmatpush1.msra.mxu0 0.0
      %6311 = vmatprep.subr.mxu0 0.0
      %6312 = vmatpush1.msra.mxu0 0.0
      %6313 = vmatprep.subr.mxu0 0.0
      %6314 = vmatpush1.msra.mxu0 0.0
      %6315 = vmatprep.subr.mxu0 0.0
      %6316 = vmatpush1.msra.mxu0 0.0
      %6317 = vmatprep.subr.mxu0 0.0
      %6318 = vmatpush1.msra.mxu0 0.0
      %6319 = vmatprep.subr.mxu0 0.0
      %6320 = vmatpush1.msra.mxu0 0.0
      %6321 = vmatprep.subr.mxu0 0.0
      %6322 = vmatpush1.msra.mxu0 0.0
      %6323 = vmatprep.subr.mxu0 0.0
      %6324 = vmatpush1.msra.mxu0 0.0
      %6325 = vmatprep.mubr.f32.mxu0 0.0
      %v6326 = vand.u32 %v5934, 4294901760
      %6327 = vmatmul.mubr.f32.gmra.mrb[0].mxu0 %v6326
      %v6328 = vpop.f32.mrb[0].mxu0
      %v6329 = vadd.f32 %v6251, %v6328
      %v6330 = vpop.f32.mrb[0].mxu0
      %v6331 = vadd.f32 %v6253, %v6330
      %6332 = vdwg.mxu0
      %v6333 = vand.u32 %v5938, 4294901760
      %6334 = vmatprep.subr.mxu0 %v6333
      %v6335 = vand.u32 %v5936, 4294901760
      %6336 = vmatpush1.msra.mxu0 %v6335
      %6337 = vmatprep.subr.mxu0 0.0
      %6338 = vmatpush1.msra.mxu0 0.0
      %6339 = vmatprep.subr.mxu0 0.0
      %6340 = vmatpush1.msra.mxu0 0.0
      %6341 = vmatprep.subr.mxu0 0.0
      %6342 = vmatpush1.msra.mxu0 0.0
      %6343 = vmatprep.subr.mxu0 0.0
      %6344 = vmatpush1.msra.mxu0 0.0
      %6345 = vmatprep.subr.mxu0 0.0
      %6346 = vmatpush1.msra.mxu0 0.0
      %6347 = vmatprep.subr.mxu0 0.0
      %6348 = vmatpush1.msra.mxu0 0.0
      %6349 = vmatprep.subr.mxu0 0.0
      %6350 = vmatpush1.msra.mxu0 0.0
      %6351 = vmatprep.subr.mxu0 0.0
      %6352 = vmatpush1.msra.mxu0 0.0
      %6353 = vmatprep.subr.mxu0 0.0
      %6354 = vmatpush1.msra.mxu0 0.0
      %6355 = vmatprep.subr.mxu0 0.0
      %6356 = vmatpush1.msra.mxu0 0.0
      %6357 = vmatprep.subr.mxu0 0.0
      %6358 = vmatpush1.msra.mxu0 0.0
      %6359 = vmatprep.subr.mxu0 0.0
      %6360 = vmatpush1.msra.mxu0 0.0
      %6361 = vmatprep.subr.mxu0 0.0
      %6362 = vmatpush1.msra.mxu0 0.0
      %6363 = vmatprep.subr.mxu0 0.0
      %6364 = vmatpush1.msra.mxu0 0.0
      %6365 = vmatprep.subr.mxu0 0.0
      %6366 = vmatpush1.msra.mxu0 0.0
      %6367 = vmatprep.subr.mxu0 0.0
      %6368 = vmatpush1.msra.mxu0 0.0
      %6369 = vmatprep.subr.mxu0 0.0
      %6370 = vmatpush1.msra.mxu0 0.0
      %6371 = vmatprep.subr.mxu0 0.0
      %6372 = vmatpush1.msra.mxu0 0.0
      %6373 = vmatprep.subr.mxu0 0.0
      %6374 = vmatpush1.msra.mxu0 0.0
      %6375 = vmatprep.subr.mxu0 0.0
      %6376 = vmatpush1.msra.mxu0 0.0
      %6377 = vmatprep.subr.mxu0 0.0
      %6378 = vmatpush1.msra.mxu0 0.0
      %6379 = vmatprep.subr.mxu0 0.0
      %6380 = vmatpush1.msra.mxu0 0.0
      %6381 = vmatprep.subr.mxu0 0.0
      %6382 = vmatpush1.msra.mxu0 0.0
      %6383 = vmatprep.subr.mxu0 0.0
      %6384 = vmatpush1.msra.mxu0 0.0
      %6385 = vmatprep.subr.mxu0 0.0
      %6386 = vmatpush1.msra.mxu0 0.0
      %6387 = vmatprep.subr.mxu0 0.0
      %6388 = vmatpush1.msra.mxu0 0.0
      %6389 = vmatprep.subr.mxu0 0.0
      %6390 = vmatpush1.msra.mxu0 0.0
      %6391 = vmatprep.subr.mxu0 0.0
      %6392 = vmatpush1.msra.mxu0 0.0
      %6393 = vmatprep.subr.mxu0 0.0
      %6394 = vmatpush1.msra.mxu0 0.0
      %6395 = vmatprep.subr.mxu0 0.0
      %6396 = vmatpush1.msra.mxu0 0.0
      %6397 = vmatprep.subr.mxu0 0.0
      %6398 = vmatpush1.msra.mxu0 0.0
      %6399 = vmatprep.mubr.f32.mxu0 0.0
      %v6400 = vand.u32 %v5934, 4294901760
      %6401 = vmatmul.mubr.f32.gmra.mrb[0].mxu0 %v6400
      %v6402 = vpop.f32.mrb[0].mxu0
      %v6403 = vadd.f32 %v6329, %v6402
      %v6404 = vpop.f32.mrb[0].mxu0
      %v6405 = vadd.f32 %v6331, %v6404
      %6406 = vdwg.mxu0
      %6407 = vmatprep.subr.mxu0 0.0
      %v6408 = vand.u32 %v5940, 4294901760
      %6409 = vmatpush1.msra.mxu0 %v6408
      %6410 = vmatprep.subr.mxu0 0.0
      %6411 = vmatpush1.msra.mxu0 0.0
      %6412 = vmatprep.subr.mxu0 0.0
      %6413 = vmatpush1.msra.mxu0 0.0
      %6414 = vmatprep.subr.mxu0 0.0
      %6415 = vmatpush1.msra.mxu0 0.0
      %6416 = vmatprep.subr.mxu0 0.0
      %6417 = vmatpush1.msra.mxu0 0.0
      %6418 = vmatprep.subr.mxu0 0.0
      %6419 = vmatpush1.msra.mxu0 0.0
      %6420 = vmatprep.subr.mxu0 0.0
      %6421 = vmatpush1.msra.mxu0 0.0
      %6422 = vmatprep.subr.mxu0 0.0
      %6423 = vmatpush1.msra.mxu0 0.0
      %6424 = vmatprep.subr.mxu0 0.0
      %6425 = vmatpush1.msra.mxu0 0.0
      %6426 = vmatprep.subr.mxu0 0.0
      %6427 = vmatpush1.msra.mxu0 0.0
      %6428 = vmatprep.subr.mxu0 0.0
      %6429 = vmatpush1.msra.mxu0 0.0
      %6430 = vmatprep.subr.mxu0 0.0
      %6431 = vmatpush1.msra.mxu0 0.0
      %6432 = vmatprep.subr.mxu0 0.0
      %6433 = vmatpush1.msra.mxu0 0.0
      %6434 = vmatprep.subr.mxu0 0.0
      %6435 = vmatpush1.msra.mxu0 0.0
      %6436 = vmatprep.subr.mxu0 0.0
      %6437 = vmatpush1.msra.mxu0 0.0
      %6438 = vmatprep.subr.mxu0 0.0
      %6439 = vmatpush1.msra.mxu0 0.0
      %6440 = vmatprep.subr.mxu0 0.0
      %6441 = vmatpush1.msra.mxu0 0.0
      %6442 = vmatprep.subr.mxu0 0.0
      %6443 = vmatpush1.msra.mxu0 0.0
      %6444 = vmatprep.subr.mxu0 0.0
      %6445 = vmatpush1.msra.mxu0 0.0
      %6446 = vmatprep.subr.mxu0 0.0
      %6447 = vmatpush1.msra.mxu0 0.0
      %6448 = vmatprep.subr.mxu0 0.0
      %6449 = vmatpush1.msra.mxu0 0.0
      %6450 = vmatprep.subr.mxu0 0.0
      %6451 = vmatpush1.msra.mxu0 0.0
      %6452 = vmatprep.subr.mxu0 0.0
      %6453 = vmatpush1.msra.mxu0 0.0
      %6454 = vmatprep.subr.mxu0 0.0
      %6455 = vmatpush1.msra.mxu0 0.0
      %6456 = vmatprep.subr.mxu0 0.0
      %6457 = vmatpush1.msra.mxu0 0.0
      %6458 = vmatprep.subr.mxu0 0.0
      %6459 = vmatpush1.msra.mxu0 0.0
      %6460 = vmatprep.subr.mxu0 0.0
      %6461 = vmatpush1.msra.mxu0 0.0
      %6462 = vmatprep.subr.mxu0 0.0
      %6463 = vmatpush1.msra.mxu0 0.0
      %6464 = vmatprep.subr.mxu0 0.0
      %6465 = vmatpush1.msra.mxu0 0.0
      %6466 = vmatprep.subr.mxu0 0.0
      %6467 = vmatpush1.msra.mxu0 0.0
      %6468 = vmatprep.subr.mxu0 0.0
      %6469 = vmatpush1.msra.mxu0 0.0
      %6470 = vmatprep.subr.mxu0 0.0
      %6471 = vmatpush1.msra.mxu0 0.0
      %6472 = vmatprep.mubr.f32.mxu0 0.0
      %v6473 = vand.u32 %v5934, 4294901760
      %v6474 = vsub.f32 %v5934, %v6473
      %v6475 = vand.u32 %v6474, 4294901760
      %v6476 = vsub.f32 %v6474, %v6475
      %v6477 = vand.u32 %v6476, 4294901760
      %6478 = vmatmul.mubr.f32.gmra.mrb[0].mxu0 %v6477
      %v6479 = vpop.f32.mrb[0].mxu0
      %v6480 = vadd.f32 0.0, %v6479
      %v6481 = vpop.f32.mrb[0].mxu0
      %6482 = vdwg.mxu0
      %6483 = vmatprep.subr.mxu0 0.0
      %v6484 = vand.u32 %v5940, 4294901760
      %v6485 = vsub.f32 %v5940, %v6484
      %v6486 = vand.u32 %v6485, 4294901760
      %v6487 = vsub.f32 %v6485, %v6486
      %v6488 = vand.u32 %v6487, 4294901760
      %6489 = vmatpush1.msra.mxu0 %v6488
      %6490 = vmatprep.subr.mxu0 0.0
      %6491 = vmatpush1.msra.mxu0 0.0
      %6492 = vmatprep.subr.mxu0 0.0
      %6493 = vmatpush1.msra.mxu0 0.0
      %6494 = vmatprep.subr.mxu0 0.0
      %6495 = vmatpush1.msra.mxu0 0.0
      %6496 = vmatprep.subr.mxu0 0.0
      %6497 = vmatpush1.msra.mxu0 0.0
      %6498 = vmatprep.subr.mxu0 0.0
      %6499 = vmatpush1.msra.mxu0 0.0
      %6500 = vmatprep.subr.mxu0 0.0
      %6501 = vmatpush1.msra.mxu0 0.0
      %6502 = vmatprep.subr.mxu0 0.0
      %6503 = vmatpush1.msra.mxu0 0.0
      %6504 = vmatprep.subr.mxu0 0.0
      %6505 = vmatpush1.msra.mxu0 0.0
      %6506 = vmatprep.subr.mxu0 0.0
      %6507 = vmatpush1.msra.mxu0 0.0
      %6508 = vmatprep.subr.mxu0 0.0
      %6509 = vmatpush1.msra.mxu0 0.0
      %6510 = vmatprep.subr.mxu0 0.0
      %6511 = vmatpush1.msra.mxu0 0.0
      %6512 = vmatprep.subr.mxu0 0.0
      %6513 = vmatpush1.msra.mxu0 0.0
      %6514 = vmatprep.subr.mxu0 0.0
      %6515 = vmatpush1.msra.mxu0 0.0
      %6516 = vmatprep.subr.mxu0 0.0
      %6517 = vmatpush1.msra.mxu0 0.0
      %6518 = vmatprep.subr.mxu0 0.0
      %6519 = vmatpush1.msra.mxu0 0.0
      %6520 = vmatprep.subr.mxu0 0.0
      %6521 = vmatpush1.msra.mxu0 0.0
      %6522 = vmatprep.subr.mxu0 0.0
      %6523 = vmatpush1.msra.mxu0 0.0
      %6524 = vmatprep.subr.mxu0 0.0
      %6525 = vmatpush1.msra.mxu0 0.0
      %6526 = vmatprep.subr.mxu0 0.0
      %6527 = vmatpush1.msra.mxu0 0.0
      %6528 = vmatprep.subr.mxu0 0.0
      %6529 = vmatpush1.msra.mxu0 0.0
      %6530 = vmatprep.subr.mxu0 0.0
      %6531 = vmatpush1.msra.mxu0 0.0
      %6532 = vmatprep.subr.mxu0 0.0
      %6533 = vmatpush1.msra.mxu0 0.0
      %6534 = vmatprep.subr.mxu0 0.0
      %6535 = vmatpush1.msra.mxu0 0.0
      %6536 = vmatprep.subr.mxu0 0.0
      %6537 = vmatpush1.msra.mxu0 0.0
      %6538 = vmatprep.subr.mxu0 0.0
      %6539 = vmatpush1.msra.mxu0 0.0
      %6540 = vmatprep.subr.mxu0 0.0
      %6541 = vmatpush1.msra.mxu0 0.0
      %6542 = vmatprep.subr.mxu0 0.0
      %6543 = vmatpush1.msra.mxu0 0.0
      %6544 = vmatprep.subr.mxu0 0.0
      %6545 = vmatpush1.msra.mxu0 0.0
      %6546 = vmatprep.subr.mxu0 0.0
      %6547 = vmatpush1.msra.mxu0 0.0
      %6548 = vmatprep.subr.mxu0 0.0
      %6549 = vmatpush1.msra.mxu0 0.0
      %6550 = vmatprep.subr.mxu0 0.0
      %6551 = vmatpush1.msra.mxu0 0.0
      %6552 = vmatprep.mubr.f32.mxu0 0.0
      %v6553 = vand.u32 %v5934, 4294901760
      %6554 = vmatmul.mubr.f32.gmra.mrb[0].mxu0 %v6553
      %v6555 = vpop.f32.mrb[0].mxu0
      %v6556 = vadd.f32 %v6480, %v6555
      %v6557 = vpop.f32.mrb[0].mxu0
      %6558 = vdwg.mxu0
      %6559 = vmatprep.subr.mxu0 0.0
      %v6560 = vand.u32 %v5940, 4294901760
      %v6561 = vsub.f32 %v5940, %v6560
      %6562 = vmatpush1.msra.mxu0 %v6561
      %6563 = vmatprep.subr.mxu0 0.0
      %6564 = vmatpush1.msra.mxu0 0.0
      %6565 = vmatprep.subr.mxu0 0.0
      %6566 = vmatpush1.msra.mxu0 0.0
      %6567 = vmatprep.subr.mxu0 0.0
      %6568 = vmatpush1.msra.mxu0 0.0
      %6569 = vmatprep.subr.mxu0 0.0
      %6570 = vmatpush1.msra.mxu0 0.0
      %6571 = vmatprep.subr.mxu0 0.0
      %6572 = vmatpush1.msra.mxu0 0.0
      %6573 = vmatprep.subr.mxu0 0.0
      %6574 = vmatpush1.msra.mxu0 0.0
      %6575 = vmatprep.subr.mxu0 0.0
      %6576 = vmatpush1.msra.mxu0 0.0
      %6577 = vmatprep.subr.mxu0 0.0
      %6578 = vmatpush1.msra.mxu0 0.0
      %6579 = vmatprep.subr.mxu0 0.0
      %6580 = vmatpush1.msra.mxu0 0.0
      %6581 = vmatprep.subr.mxu0 0.0
      %6582 = vmatpush1.msra.mxu0 0.0
      %6583 = vmatprep.subr.mxu0 0.0
      %6584 = vmatpush1.msra.mxu0 0.0
      %6585 = vmatprep.subr.mxu0 0.0
      %6586 = vmatpush1.msra.mxu0 0.0
      %6587 = vmatprep.subr.mxu0 0.0
      %6588 = vmatpush1.msra.mxu0 0.0
      %6589 = vmatprep.subr.mxu0 0.0
      %6590 = vmatpush1.msra.mxu0 0.0
      %6591 = vmatprep.subr.mxu0 0.0
      %6592 = vmatpush1.msra.mxu0 0.0
      %6593 = vmatprep.subr.mxu0 0.0
      %6594 = vmatpush1.msra.mxu0 0.0
      %6595 = vmatprep.subr.mxu0 0.0
      %6596 = vmatpush1.msra.mxu0 0.0
      %6597 = vmatprep.subr.mxu0 0.0
      %6598 = vmatpush1.msra.mxu0 0.0
      %6599 = vmatprep.subr.mxu0 0.0
      %6600 = vmatpush1.msra.mxu0 0.0
      %6601 = vmatprep.subr.mxu0 0.0
      %6602 = vmatpush1.msra.mxu0 0.0
      %6603 = vmatprep.subr.mxu0 0.0
      %6604 = vmatpush1.msra.mxu0 0.0
      %6605 = vmatprep.subr.mxu0 0.0
      %6606 = vmatpush1.msra.mxu0 0.0
      %6607 = vmatprep.subr.mxu0 0.0
      %6608 = vmatpush1.msra.mxu0 0.0
      %6609 = vmatprep.subr.mxu0 0.0
      %6610 = vmatpush1.msra.mxu0 0.0
      %6611 = vmatprep.subr.mxu0 0.0
      %6612 = vmatpush1.msra.mxu0 0.0
      %6613 = vmatprep.subr.mxu0 0.0
      %6614 = vmatpush1.msra.mxu0 0.0
      %6615 = vmatprep.subr.mxu0 0.0
      %6616 = vmatpush1.msra.mxu0 0.0
      %6617 = vmatprep.subr.mxu0 0.0
      %6618 = vmatpush1.msra.mxu0 0.0
      %6619 = vmatprep.subr.mxu0 0.0
      %6620 = vmatpush1.msra.mxu0 0.0
      %6621 = vmatprep.subr.mxu0 0.0
      %6622 = vmatpush1.msra.mxu0 0.0
      %6623 = vmatprep.subr.mxu0 0.0
      %6624 = vmatpush1.msra.mxu0 0.0
      %6625 = vmatprep.mubr.f32.mxu0 0.0
      %v6626 = vand.u32 %v5934, 4294901760
      %v6627 = vsub.f32 %v5934, %v6626
      %6628 = vmatmul.mubr.f32.gmra.mrb[0].mxu0 %v6627
      %v6629 = vpop.f32.mrb[0].mxu0
      %v6630 = vadd.f32 %v6556, %v6629
      %v6631 = vpop.f32.mrb[0].mxu0
      %6632 = vdwg.mxu0
      %6633 = vmatprep.subr.mxu0 0.0
      %v6634 = vand.u32 %v5940, 4294901760
      %6635 = vmatpush1.msra.mxu0 %v6634
      %6636 = vmatprep.subr.mxu0 0.0
      %6637 = vmatpush1.msra.mxu0 0.0
      %6638 = vmatprep.subr.mxu0 0.0
      %6639 = vmatpush1.msra.mxu0 0.0
      %6640 = vmatprep.subr.mxu0 0.0
      %6641 = vmatpush1.msra.mxu0 0.0
      %6642 = vmatprep.subr.mxu0 0.0
      %6643 = vmatpush1.msra.mxu0 0.0
      %6644 = vmatprep.subr.mxu0 0.0
      %6645 = vmatpush1.msra.mxu0 0.0
      %6646 = vmatprep.subr.mxu0 0.0
      %6647 = vmatpush1.msra.mxu0 0.0
      %6648 = vmatprep.subr.mxu0 0.0
      %6649 = vmatpush1.msra.mxu0 0.0
      %6650 = vmatprep.subr.mxu0 0.0
      %6651 = vmatpush1.msra.mxu0 0.0
      %6652 = vmatprep.subr.mxu0 0.0
      %6653 = vmatpush1.msra.mxu0 0.0
      %6654 = vmatprep.subr.mxu0 0.0
      %6655 = vmatpush1.msra.mxu0 0.0
      %6656 = vmatprep.subr.mxu0 0.0
      %6657 = vmatpush1.msra.mxu0 0.0
      %6658 = vmatprep.subr.mxu0 0.0
      %6659 = vmatpush1.msra.mxu0 0.0
      %6660 = vmatprep.subr.mxu0 0.0
      %6661 = vmatpush1.msra.mxu0 0.0
      %6662 = vmatprep.subr.mxu0 0.0
      %6663 = vmatpush1.msra.mxu0 0.0
      %6664 = vmatprep.subr.mxu0 0.0
      %6665 = vmatpush1.msra.mxu0 0.0
      %6666 = vmatprep.subr.mxu0 0.0
      %6667 = vmatpush1.msra.mxu0 0.0
      %6668 = vmatprep.subr.mxu0 0.0
      %6669 = vmatpush1.msra.mxu0 0.0
      %6670 = vmatprep.subr.mxu0 0.0
      %6671 = vmatpush1.msra.mxu0 0.0
      %6672 = vmatprep.subr.mxu0 0.0
      %6673 = vmatpush1.msra.mxu0 0.0
      %6674 = vmatprep.subr.mxu0 0.0
      %6675 = vmatpush1.msra.mxu0 0.0
      %6676 = vmatprep.subr.mxu0 0.0
      %6677 = vmatpush1.msra.mxu0 0.0
      %6678 = vmatprep.subr.mxu0 0.0
      %6679 = vmatpush1.msra.mxu0 0.0
      %6680 = vmatprep.subr.mxu0 0.0
      %6681 = vmatpush1.msra.mxu0 0.0
      %6682 = vmatprep.subr.mxu0 0.0
      %6683 = vmatpush1.msra.mxu0 0.0
      %6684 = vmatprep.subr.mxu0 0.0
      %6685 = vmatpush1.msra.mxu0 0.0
      %6686 = vmatprep.subr.mxu0 0.0
      %6687 = vmatpush1.msra.mxu0 0.0
      %6688 = vmatprep.subr.mxu0 0.0
      %6689 = vmatpush1.msra.mxu0 0.0
      %6690 = vmatprep.subr.mxu0 0.0
      %6691 = vmatpush1.msra.mxu0 0.0
      %6692 = vmatprep.subr.mxu0 0.0
      %6693 = vmatpush1.msra.mxu0 0.0
      %6694 = vmatprep.subr.mxu0 0.0
      %6695 = vmatpush1.msra.mxu0 0.0
      %6696 = vmatprep.subr.mxu0 0.0
      %6697 = vmatpush1.msra.mxu0 0.0
      %6698 = vmatprep.mubr.f32.mxu0 0.0
      %v6699 = vand.u32 %v5934, 4294901760
      %v6700 = vsub.f32 %v5934, %v6699
      %v6701 = vand.u32 %v6700, 4294901760
      %6702 = vmatmul.mubr.f32.gmra.mrb[0].mxu0 %v6701
      %v6703 = vpop.f32.mrb[0].mxu0
      %v6704 = vadd.f32 %v6630, %v6703
      %v6705 = vpop.f32.mrb[0].mxu0
      %6706 = vdwg.mxu0
      %6707 = vmatprep.subr.mxu0 0.0
      %v6708 = vand.u32 %v5940, 4294901760
      %v6709 = vsub.f32 %v5940, %v6708
      %v6710 = vand.u32 %v6709, 4294901760
      %6711 = vmatpush1.msra.mxu0 %v6710
      %6712 = vmatprep.subr.mxu0 0.0
      %6713 = vmatpush1.msra.mxu0 0.0
      %6714 = vmatprep.subr.mxu0 0.0
      %6715 = vmatpush1.msra.mxu0 0.0
      %6716 = vmatprep.subr.mxu0 0.0
      %6717 = vmatpush1.msra.mxu0 0.0
      %6718 = vmatprep.subr.mxu0 0.0
      %6719 = vmatpush1.msra.mxu0 0.0
      %6720 = vmatprep.subr.mxu0 0.0
      %6721 = vmatpush1.msra.mxu0 0.0
      %6722 = vmatprep.subr.mxu0 0.0
      %6723 = vmatpush1.msra.mxu0 0.0
      %6724 = vmatprep.subr.mxu0 0.0
      %6725 = vmatpush1.msra.mxu0 0.0
      %6726 = vmatprep.subr.mxu0 0.0
      %6727 = vmatpush1.msra.mxu0 0.0
      %6728 = vmatprep.subr.mxu0 0.0
      %6729 = vmatpush1.msra.mxu0 0.0
      %6730 = vmatprep.subr.mxu0 0.0
      %6731 = vmatpush1.msra.mxu0 0.0
      %6732 = vmatprep.subr.mxu0 0.0
      %6733 = vmatpush1.msra.mxu0 0.0
      %6734 = vmatprep.subr.mxu0 0.0
      %6735 = vmatpush1.msra.mxu0 0.0
      %6736 = vmatprep.subr.mxu0 0.0
      %6737 = vmatpush1.msra.mxu0 0.0
      %6738 = vmatprep.subr.mxu0 0.0
      %6739 = vmatpush1.msra.mxu0 0.0
      %6740 = vmatprep.subr.mxu0 0.0
      %6741 = vmatpush1.msra.mxu0 0.0
      %6742 = vmatprep.subr.mxu0 0.0
      %6743 = vmatpush1.msra.mxu0 0.0
      %6744 = vmatprep.subr.mxu0 0.0
      %6745 = vmatpush1.msra.mxu0 0.0
      %6746 = vmatprep.subr.mxu0 0.0
      %6747 = vmatpush1.msra.mxu0 0.0
      %6748 = vmatprep.subr.mxu0 0.0
      %6749 = vmatpush1.msra.mxu0 0.0
      %6750 = vmatprep.subr.mxu0 0.0
      %6751 = vmatpush1.msra.mxu0 0.0
      %6752 = vmatprep.subr.mxu0 0.0
      %6753 = vmatpush1.msra.mxu0 0.0
      %6754 = vmatprep.subr.mxu0 0.0
      %6755 = vmatpush1.msra.mxu0 0.0
      %6756 = vmatprep.subr.mxu0 0.0
      %6757 = vmatpush1.msra.mxu0 0.0
      %6758 = vmatprep.subr.mxu0 0.0
      %6759 = vmatpush1.msra.mxu0 0.0
      %6760 = vmatprep.subr.mxu0 0.0
      %6761 = vmatpush1.msra.mxu0 0.0
      %6762 = vmatprep.subr.mxu0 0.0
      %6763 = vmatpush1.msra.mxu0 0.0
      %6764 = vmatprep.subr.mxu0 0.0
      %6765 = vmatpush1.msra.mxu0 0.0
      %6766 = vmatprep.subr.mxu0 0.0
      %6767 = vmatpush1.msra.mxu0 0.0
      %6768 = vmatprep.subr.mxu0 0.0
      %6769 = vmatpush1.msra.mxu0 0.0
      %6770 = vmatprep.subr.mxu0 0.0
      %6771 = vmatpush1.msra.mxu0 0.0
      %6772 = vmatprep.subr.mxu0 0.0
      %6773 = vmatpush1.msra.mxu0 0.0
      %6774 = vmatprep.mubr.f32.mxu0 0.0
      %v6775 = vand.u32 %v5934, 4294901760
      %6776 = vmatmul.mubr.f32.gmra.mrb[0].mxu0 %v6775
      %v6777 = vpop.f32.mrb[0].mxu0
      %v6778 = vadd.f32 %v6704, %v6777
      %v6779 = vpop.f32.mrb[0].mxu0
      %6780 = vdwg.mxu0
      %6781 = vmatprep.subr.mxu0 0.0
      %v6782 = vand.u32 %v5940, 4294901760
      %6783 = vmatpush1.msra.mxu0 %v6782
      %6784 = vmatprep.subr.mxu0 0.0
      %6785 = vmatpush1.msra.mxu0 0.0
      %6786 = vmatprep.subr.mxu0 0.0
      %6787 = vmatpush1.msra.mxu0 0.0
      %6788 = vmatprep.subr.mxu0 0.0
      %6789 = vmatpush1.msra.mxu0 0.0
      %6790 = vmatprep.subr.mxu0 0.0
      %6791 = vmatpush1.msra.mxu0 0.0
      %6792 = vmatprep.subr.mxu0 0.0
      %6793 = vmatpush1.msra.mxu0 0.0
      %6794 = vmatprep.subr.mxu0 0.0
      %6795 = vmatpush1.msra.mxu0 0.0
      %6796 = vmatprep.subr.mxu0 0.0
      %6797 = vmatpush1.msra.mxu0 0.0
      %6798 = vmatprep.subr.mxu0 0.0
      %6799 = vmatpush1.msra.mxu0 0.0
      %6800 = vmatprep.subr.mxu0 0.0
      %6801 = vmatpush1.msra.mxu0 0.0
      %6802 = vmatprep.subr.mxu0 0.0
      %6803 = vmatpush1.msra.mxu0 0.0
      %6804 = vmatprep.subr.mxu0 0.0
      %6805 = vmatpush1.msra.mxu0 0.0
      %6806 = vmatprep.subr.mxu0 0.0
      %6807 = vmatpush1.msra.mxu0 0.0
      %6808 = vmatprep.subr.mxu0 0.0
      %6809 = vmatpush1.msra.mxu0 0.0
      %6810 = vmatprep.subr.mxu0 0.0
      %6811 = vmatpush1.msra.mxu0 0.0
      %6812 = vmatprep.subr.mxu0 0.0
      %6813 = vmatpush1.msra.mxu0 0.0
      %6814 = vmatprep.subr.mxu0 0.0
      %6815 = vmatpush1.msra.mxu0 0.0
      %6816 = vmatprep.subr.mxu0 0.0
      %6817 = vmatpush1.msra.mxu0 0.0
      %6818 = vmatprep.subr.mxu0 0.0
      %6819 = vmatpush1.msra.mxu0 0.0
      %6820 = vmatprep.subr.mxu0 0.0
      %6821 = vmatpush1.msra.mxu0 0.0
      %6822 = vmatprep.subr.mxu0 0.0
      %6823 = vmatpush1.msra.mxu0 0.0
      %6824 = vmatprep.subr.mxu0 0.0
      %6825 = vmatpush1.msra.mxu0 0.0
      %6826 = vmatprep.subr.mxu0 0.0
      %6827 = vmatpush1.msra.mxu0 0.0
      %6828 = vmatprep.subr.mxu0 0.0
      %6829 = vmatpush1.msra.mxu0 0.0
      %6830 = vmatprep.subr.mxu0 0.0
      %6831 = vmatpush1.msra.mxu0 0.0
      %6832 = vmatprep.subr.mxu0 0.0
      %6833 = vmatpush1.msra.mxu0 0.0
      %6834 = vmatprep.subr.mxu0 0.0
      %6835 = vmatpush1.msra.mxu0 0.0
      %6836 = vmatprep.subr.mxu0 0.0
      %6837 = vmatpush1.msra.mxu0 0.0
      %6838 = vmatprep.subr.mxu0 0.0
      %6839 = vmatpush1.msra.mxu0 0.0
      %6840 = vmatprep.subr.mxu0 0.0
      %6841 = vmatpush1.msra.mxu0 0.0
      %6842 = vmatprep.subr.mxu0 0.0
      %6843 = vmatpush1.msra.mxu0 0.0
      %6844 = vmatprep.subr.mxu0 0.0
      %6845 = vmatpush1.msra.mxu0 0.0
      %6846 = vmatprep.mubr.f32.mxu0 0.0
      %v6847 = vand.u32 %v5934, 4294901760
      %6848 = vmatmul.mubr.f32.gmra.mrb[0].mxu0 %v6847
      %v6849 = vpop.f32.mrb[0].mxu0
      %v6850 = vadd.f32 %v6778, %v6849
      %v6851 = vpop.f32.mrb[0].mxu0
      %6852 = vdwg.mxu0
      %v6853 = vadd.f32 %v5910, %v6403
      %v6854 = vadd.f32 %v5911, %v6405
      %v6855 = vadd.f32 %v5912, %v6850
      %s6856 = scalar_lea.vmem %s1, 56
      %v6857 = vld [vmem:[%s6856] sm:$0xff]
      %v6858 = vld [vmem:[%s259] sm:$0xff]
      %v6859 = vld [vmem:[%s259 + $0x8] sm:$0xff]
      %v6862 = vcombine.high %v6858, %v6858
      %v6863 = vcombine.high %v6859, %v6859
      %6864 = vrot.lane.b32.xlu0 %v6858, 91
      %v6865 = vpop.permute.xlu0 %6864
      %6866 = vrot.lane.b32.xlu0 %v6862, 91
      %v6867 = vpop.permute.xlu0 %6866
      %6868 = vrot.lane.b32.xlu0 %v6859, 91
      %v6869 = vpop.permute.xlu0 %6868
      %6870 = vrot.lane.b32.xlu0 %v6863, 91
      %v6871 = vpop.permute.xlu0 %6870
      %vm6872 = vcmask 744448
      %v6873 = vsel %vm6872, %v6865, %v6867
      %v6874 = vsel %vm6872, %v6867, %v6869
      %v6875 = vsel %vm6872, %v6869, %v6871
      %v6877 = vsel %vm296, %v6857, 0
      %v6879 = vsel %vm300, %v6873, 0
      %v6881 = vsel %vm300, %v6874, 0
      %v6883 = vsel %vm300, %v6875, 0
      %v6885 = vand.u32 %v6881, 4294901760
      %6886 = vmatprep.subr.mxu0 %v6885
      %v6887 = vand.u32 %v6879, 4294901760
      %6888 = vmatpush1.msra.mxu0 %v6887
      %6889 = vmatprep.subr.mxu0 0.0
      %6890 = vmatpush1.msra.mxu0 0.0
      %6891 = vmatprep.subr.mxu0 0.0
      %6892 = vmatpush1.msra.mxu0 0.0
      %6893 = vmatprep.subr.mxu0 0.0
      %6894 = vmatpush1.msra.mxu0 0.0
      %6895 = vmatprep.subr.mxu0 0.0
      %6896 = vmatpush1.msra.mxu0 0.0
      %6897 = vmatprep.subr.mxu0 0.0
      %6898 = vmatpush1.msra.mxu0 0.0
      %6899 = vmatprep.subr.mxu0 0.0
      %6900 = vmatpush1.msra.mxu0 0.0
      %6901 = vmatprep.subr.mxu0 0.0
      %6902 = vmatpush1.msra.mxu0 0.0
      %6903 = vmatprep.subr.mxu0 0.0
      %6904 = vmatpush1.msra.mxu0 0.0
      %6905 = vmatprep.subr.mxu0 0.0
      %6906 = vmatpush1.msra.mxu0 0.0
      %6907 = vmatprep.subr.mxu0 0.0
      %6908 = vmatpush1.msra.mxu0 0.0
      %6909 = vmatprep.subr.mxu0 0.0
      %6910 = vmatpush1.msra.mxu0 0.0
      %6911 = vmatprep.subr.mxu0 0.0
      %6912 = vmatpush1.msra.mxu0 0.0
      %6913 = vmatprep.subr.mxu0 0.0
      %6914 = vmatpush1.msra.mxu0 0.0
      %6915 = vmatprep.subr.mxu0 0.0
      %6916 = vmatpush1.msra.mxu0 0.0
      %6917 = vmatprep.subr.mxu0 0.0
      %6918 = vmatpush1.msra.mxu0 0.0
      %6919 = vmatprep.subr.mxu0 0.0
      %6920 = vmatpush1.msra.mxu0 0.0
      %6921 = vmatprep.subr.mxu0 0.0
      %6922 = vmatpush1.msra.mxu0 0.0
      %6923 = vmatprep.subr.mxu0 0.0
      %6924 = vmatpush1.msra.mxu0 0.0
      %6925 = vmatprep.subr.mxu0 0.0
      %6926 = vmatpush1.msra.mxu0 0.0
      %6927 = vmatprep.subr.mxu0 0.0
      %6928 = vmatpush1.msra.mxu0 0.0
      %6929 = vmatprep.subr.mxu0 0.0
      %6930 = vmatpush1.msra.mxu0 0.0
      %6931 = vmatprep.subr.mxu0 0.0
      %6932 = vmatpush1.msra.mxu0 0.0
      %6933 = vmatprep.subr.mxu0 0.0
      %6934 = vmatpush1.msra.mxu0 0.0
      %6935 = vmatprep.subr.mxu0 0.0
      %6936 = vmatpush1.msra.mxu0 0.0
      %6937 = vmatprep.subr.mxu0 0.0
      %6938 = vmatpush1.msra.mxu0 0.0
      %6939 = vmatprep.subr.mxu0 0.0
      %6940 = vmatpush1.msra.mxu0 0.0
      %6941 = vmatprep.subr.mxu0 0.0
      %6942 = vmatpush1.msra.mxu0 0.0
      %6943 = vmatprep.subr.mxu0 0.0
      %6944 = vmatpush1.msra.mxu0 0.0
      %6945 = vmatprep.subr.mxu0 0.0
      %6946 = vmatpush1.msra.mxu0 0.0
      %6947 = vmatprep.subr.mxu0 0.0
      %6948 = vmatpush1.msra.mxu0 0.0
      %6949 = vmatprep.subr.mxu0 0.0
      %6950 = vmatpush1.msra.mxu0 0.0
      %6951 = vmatprep.mubr.f32.mxu0 0.0
      %v6952 = vand.u32 %v6877, 4294901760
      %v6953 = vsub.f32 %v6877, %v6952
      %v6954 = vand.u32 %v6953, 4294901760
      %v6955 = vsub.f32 %v6953, %v6954
      %v6956 = vand.u32 %v6955, 4294901760
      %6957 = vmatmul.mubr.f32.gmra.mrb[0].mxu0 %v6956
      %v6958 = vpop.f32.mrb[0].mxu0
      %v6959 = vadd.f32 0.0, %v6958
      %v6960 = vpop.f32.mrb[0].mxu0
      %v6961 = vadd.f32 0.0, %v6960
      %6962 = vdwg.mxu0
      %v6963 = vand.u32 %v6881, 4294901760
      %v6964 = vsub.f32 %v6881, %v6963
      %v6965 = vand.u32 %v6964, 4294901760
      %v6966 = vsub.f32 %v6964, %v6965
      %v6967 = vand.u32 %v6966, 4294901760
      %6968 = vmatprep.subr.mxu0 %v6967
      %v6969 = vand.u32 %v6879, 4294901760
      %v6970 = vsub.f32 %v6879, %v6969
      %v6971 = vand.u32 %v6970, 4294901760
      %v6972 = vsub.f32 %v6970, %v6971
      %v6973 = vand.u32 %v6972, 4294901760
      %6974 = vmatpush1.msra.mxu0 %v6973
      %6975 = vmatprep.subr.mxu0 0.0
      %6976 = vmatpush1.msra.mxu0 0.0
      %6977 = vmatprep.subr.mxu0 0.0
      %6978 = vmatpush1.msra.mxu0 0.0
      %6979 = vmatprep.subr.mxu0 0.0
      %6980 = vmatpush1.msra.mxu0 0.0
      %6981 = vmatprep.subr.mxu0 0.0
      %6982 = vmatpush1.msra.mxu0 0.0
      %6983 = vmatprep.subr.mxu0 0.0
      %6984 = vmatpush1.msra.mxu0 0.0
      %6985 = vmatprep.subr.mxu0 0.0
      %6986 = vmatpush1.msra.mxu0 0.0
      %6987 = vmatprep.subr.mxu0 0.0
      %6988 = vmatpush1.msra.mxu0 0.0
      %6989 = vmatprep.subr.mxu0 0.0
      %6990 = vmatpush1.msra.mxu0 0.0
      %6991 = vmatprep.subr.mxu0 0.0
      %6992 = vmatpush1.msra.mxu0 0.0
      %6993 = vmatprep.subr.mxu0 0.0
      %6994 = vmatpush1.msra.mxu0 0.0
      %6995 = vmatprep.subr.mxu0 0.0
      %6996 = vmatpush1.msra.mxu0 0.0
      %6997 = vmatprep.subr.mxu0 0.0
      %6998 = vmatpush1.msra.mxu0 0.0
      %6999 = vmatprep.subr.mxu0 0.0
      %7000 = vmatpush1.msra.mxu0 0.0
      %7001 = vmatprep.subr.mxu0 0.0
      %7002 = vmatpush1.msra.mxu0 0.0
      %7003 = vmatprep.subr.mxu0 0.0
      %7004 = vmatpush1.msra.mxu0 0.0
      %7005 = vmatprep.subr.mxu0 0.0
      %7006 = vmatpush1.msra.mxu0 0.0
      %7007 = vmatprep.subr.mxu0 0.0
      %7008 = vmatpush1.msra.mxu0 0.0
      %7009 = vmatprep.subr.mxu0 0.0
      %7010 = vmatpush1.msra.mxu0 0.0
      %7011 = vmatprep.subr.mxu0 0.0
      %7012 = vmatpush1.msra.mxu0 0.0
      %7013 = vmatprep.subr.mxu0 0.0
      %7014 = vmatpush1.msra.mxu0 0.0
      %7015 = vmatprep.subr.mxu0 0.0
      %7016 = vmatpush1.msra.mxu0 0.0
      %7017 = vmatprep.subr.mxu0 0.0
      %7018 = vmatpush1.msra.mxu0 0.0
      %7019 = vmatprep.subr.mxu0 0.0
      %7020 = vmatpush1.msra.mxu0 0.0
      %7021 = vmatprep.subr.mxu0 0.0
      %7022 = vmatpush1.msra.mxu0 0.0
      %7023 = vmatprep.subr.mxu0 0.0
      %7024 = vmatpush1.msra.mxu0 0.0
      %7025 = vmatprep.subr.mxu0 0.0
      %7026 = vmatpush1.msra.mxu0 0.0
      %7027 = vmatprep.subr.mxu0 0.0
      %7028 = vmatpush1.msra.mxu0 0.0
      %7029 = vmatprep.subr.mxu0 0.0
      %7030 = vmatpush1.msra.mxu0 0.0
      %7031 = vmatprep.subr.mxu0 0.0
      %7032 = vmatpush1.msra.mxu0 0.0
      %7033 = vmatprep.subr.mxu0 0.0
      %7034 = vmatpush1.msra.mxu0 0.0
      %7035 = vmatprep.subr.mxu0 0.0
      %7036 = vmatpush1.msra.mxu0 0.0
      %7037 = vmatprep.mubr.f32.mxu0 0.0
      %v7038 = vand.u32 %v6877, 4294901760
      %7039 = vmatmul.mubr.f32.gmra.mrb[0].mxu0 %v7038
      %v7040 = vpop.f32.mrb[0].mxu0
      %v7041 = vadd.f32 %v6959, %v7040
      %v7042 = vpop.f32.mrb[0].mxu0
      %v7043 = vadd.f32 %v6961, %v7042
      %7044 = vdwg.mxu0
      %v7045 = vand.u32 %v6881, 4294901760
      %v7046 = vsub.f32 %v6881, %v7045
      %7047 = vmatprep.subr.mxu0 %v7046
      %v7048 = vand.u32 %v6879, 4294901760
      %v7049 = vsub.f32 %v6879, %v7048
      %7050 = vmatpush1.msra.mxu0 %v7049
      %7051 = vmatprep.subr.mxu0 0.0
      %7052 = vmatpush1.msra.mxu0 0.0
      %7053 = vmatprep.subr.mxu0 0.0
      %7054 = vmatpush1.msra.mxu0 0.0
      %7055 = vmatprep.subr.mxu0 0.0
      %7056 = vmatpush1.msra.mxu0 0.0
      %7057 = vmatprep.subr.mxu0 0.0
      %7058 = vmatpush1.msra.mxu0 0.0
      %7059 = vmatprep.subr.mxu0 0.0
      %7060 = vmatpush1.msra.mxu0 0.0
      %7061 = vmatprep.subr.mxu0 0.0
      %7062 = vmatpush1.msra.mxu0 0.0
      %7063 = vmatprep.subr.mxu0 0.0
      %7064 = vmatpush1.msra.mxu0 0.0
      %7065 = vmatprep.subr.mxu0 0.0
      %7066 = vmatpush1.msra.mxu0 0.0
      %7067 = vmatprep.subr.mxu0 0.0
      %7068 = vmatpush1.msra.mxu0 0.0
      %7069 = vmatprep.subr.mxu0 0.0
      %7070 = vmatpush1.msra.mxu0 0.0
      %7071 = vmatprep.subr.mxu0 0.0
      %7072 = vmatpush1.msra.mxu0 0.0
      %7073 = vmatprep.subr.mxu0 0.0
      %7074 = vmatpush1.msra.mxu0 0.0
      %7075 = vmatprep.subr.mxu0 0.0
      %7076 = vmatpush1.msra.mxu0 0.0
      %7077 = vmatprep.subr.mxu0 0.0
      %7078 = vmatpush1.msra.mxu0 0.0
      %7079 = vmatprep.subr.mxu0 0.0
      %7080 = vmatpush1.msra.mxu0 0.0
      %7081 = vmatprep.subr.mxu0 0.0
      %7082 = vmatpush1.msra.mxu0 0.0
      %7083 = vmatprep.subr.mxu0 0.0
      %7084 = vmatpush1.msra.mxu0 0.0
      %7085 = vmatprep.subr.mxu0 0.0
      %7086 = vmatpush1.msra.mxu0 0.0
      %7087 = vmatprep.subr.mxu0 0.0
      %7088 = vmatpush1.msra.mxu0 0.0
      %7089 = vmatprep.subr.mxu0 0.0
      %7090 = vmatpush1.msra.mxu0 0.0
      %7091 = vmatprep.subr.mxu0 0.0
      %7092 = vmatpush1.msra.mxu0 0.0
      %7093 = vmatprep.subr.mxu0 0.0
      %7094 = vmatpush1.msra.mxu0 0.0
      %7095 = vmatprep.subr.mxu0 0.0
      %7096 = vmatpush1.msra.mxu0 0.0
      %7097 = vmatprep.subr.mxu0 0.0
      %7098 = vmatpush1.msra.mxu0 0.0
      %7099 = vmatprep.subr.mxu0 0.0
      %7100 = vmatpush1.msra.mxu0 0.0
      %7101 = vmatprep.subr.mxu0 0.0
      %7102 = vmatpush1.msra.mxu0 0.0
      %7103 = vmatprep.subr.mxu0 0.0
      %7104 = vmatpush1.msra.mxu0 0.0
      %7105 = vmatprep.subr.mxu0 0.0
      %7106 = vmatpush1.msra.mxu0 0.0
      %7107 = vmatprep.subr.mxu0 0.0
      %7108 = vmatpush1.msra.mxu0 0.0
      %7109 = vmatprep.subr.mxu0 0.0
      %7110 = vmatpush1.msra.mxu0 0.0
      %7111 = vmatprep.subr.mxu0 0.0
      %7112 = vmatpush1.msra.mxu0 0.0
      %7113 = vmatprep.mubr.f32.mxu0 0.0
      %v7114 = vand.u32 %v6877, 4294901760
      %v7115 = vsub.f32 %v6877, %v7114
      %7116 = vmatmul.mubr.f32.gmra.mrb[0].mxu0 %v7115
      %v7117 = vpop.f32.mrb[0].mxu0
      %v7118 = vadd.f32 %v7041, %v7117
      %v7119 = vpop.f32.mrb[0].mxu0
      %v7120 = vadd.f32 %v7043, %v7119
      %7121 = vdwg.mxu0
      %v7122 = vand.u32 %v6881, 4294901760
      %7123 = vmatprep.subr.mxu0 %v7122
      %v7124 = vand.u32 %v6879, 4294901760
      %7125 = vmatpush1.msra.mxu0 %v7124
      %7126 = vmatprep.subr.mxu0 0.0
      %7127 = vmatpush1.msra.mxu0 0.0
      %7128 = vmatprep.subr.mxu0 0.0
      %7129 = vmatpush1.msra.mxu0 0.0
      %7130 = vmatprep.subr.mxu0 0.0
      %7131 = vmatpush1.msra.mxu0 0.0
      %7132 = vmatprep.subr.mxu0 0.0
      %7133 = vmatpush1.msra.mxu0 0.0
      %7134 = vmatprep.subr.mxu0 0.0
      %7135 = vmatpush1.msra.mxu0 0.0
      %7136 = vmatprep.subr.mxu0 0.0
      %7137 = vmatpush1.msra.mxu0 0.0
      %7138 = vmatprep.subr.mxu0 0.0
      %7139 = vmatpush1.msra.mxu0 0.0
      %7140 = vmatprep.subr.mxu0 0.0
      %7141 = vmatpush1.msra.mxu0 0.0
      %7142 = vmatprep.subr.mxu0 0.0
      %7143 = vmatpush1.msra.mxu0 0.0
      %7144 = vmatprep.subr.mxu0 0.0
      %7145 = vmatpush1.msra.mxu0 0.0
      %7146 = vmatprep.subr.mxu0 0.0
      %7147 = vmatpush1.msra.mxu0 0.0
      %7148 = vmatprep.subr.mxu0 0.0
      %7149 = vmatpush1.msra.mxu0 0.0
      %7150 = vmatprep.subr.mxu0 0.0
      %7151 = vmatpush1.msra.mxu0 0.0
      %7152 = vmatprep.subr.mxu0 0.0
      %7153 = vmatpush1.msra.mxu0 0.0
      %7154 = vmatprep.subr.mxu0 0.0
      %7155 = vmatpush1.msra.mxu0 0.0
      %7156 = vmatprep.subr.mxu0 0.0
      %7157 = vmatpush1.msra.mxu0 0.0
      %7158 = vmatprep.subr.mxu0 0.0
      %7159 = vmatpush1.msra.mxu0 0.0
      %7160 = vmatprep.subr.mxu0 0.0
      %7161 = vmatpush1.msra.mxu0 0.0
      %7162 = vmatprep.subr.mxu0 0.0
      %7163 = vmatpush1.msra.mxu0 0.0
      %7164 = vmatprep.subr.mxu0 0.0
      %7165 = vmatpush1.msra.mxu0 0.0
      %7166 = vmatprep.subr.mxu0 0.0
      %7167 = vmatpush1.msra.mxu0 0.0
      %7168 = vmatprep.subr.mxu0 0.0
      %7169 = vmatpush1.msra.mxu0 0.0
      %7170 = vmatprep.subr.mxu0 0.0
      %7171 = vmatpush1.msra.mxu0 0.0
      %7172 = vmatprep.subr.mxu0 0.0
      %7173 = vmatpush1.msra.mxu0 0.0
      %7174 = vmatprep.subr.mxu0 0.0
      %7175 = vmatpush1.msra.mxu0 0.0
      %7176 = vmatprep.subr.mxu0 0.0
      %7177 = vmatpush1.msra.mxu0 0.0
      %7178 = vmatprep.subr.mxu0 0.0
      %7179 = vmatpush1.msra.mxu0 0.0
      %7180 = vmatprep.subr.mxu0 0.0
      %7181 = vmatpush1.msra.mxu0 0.0
      %7182 = vmatprep.subr.mxu0 0.0
      %7183 = vmatpush1.msra.mxu0 0.0
      %7184 = vmatprep.subr.mxu0 0.0
      %7185 = vmatpush1.msra.mxu0 0.0
      %7186 = vmatprep.subr.mxu0 0.0
      %7187 = vmatpush1.msra.mxu0 0.0
      %7188 = vmatprep.mubr.f32.mxu0 0.0
      %v7189 = vand.u32 %v6877, 4294901760
      %v7190 = vsub.f32 %v6877, %v7189
      %v7191 = vand.u32 %v7190, 4294901760
      %7192 = vmatmul.mubr.f32.gmra.mrb[0].mxu0 %v7191
      %v7193 = vpop.f32.mrb[0].mxu0
      %v7194 = vadd.f32 %v7118, %v7193
      %v7195 = vpop.f32.mrb[0].mxu0
      %v7196 = vadd.f32 %v7120, %v7195
      %7197 = vdwg.mxu0
      %v7198 = vand.u32 %v6881, 4294901760
      %v7199 = vsub.f32 %v6881, %v7198
      %v7200 = vand.u32 %v7199, 4294901760
      %7201 = vmatprep.subr.mxu0 %v7200
      %v7202 = vand.u32 %v6879, 4294901760
      %v7203 = vsub.f32 %v6879, %v7202
      %v7204 = vand.u32 %v7203, 4294901760
      %7205 = vmatpush1.msra.mxu0 %v7204
      %7206 = vmatprep.subr.mxu0 0.0
      %7207 = vmatpush1.msra.mxu0 0.0
      %7208 = vmatprep.subr.mxu0 0.0
      %7209 = vmatpush1.msra.mxu0 0.0
      %7210 = vmatprep.subr.mxu0 0.0
      %7211 = vmatpush1.msra.mxu0 0.0
      %7212 = vmatprep.subr.mxu0 0.0
      %7213 = vmatpush1.msra.mxu0 0.0
      %7214 = vmatprep.subr.mxu0 0.0
      %7215 = vmatpush1.msra.mxu0 0.0
      %7216 = vmatprep.subr.mxu0 0.0
      %7217 = vmatpush1.msra.mxu0 0.0
      %7218 = vmatprep.subr.mxu0 0.0
      %7219 = vmatpush1.msra.mxu0 0.0
      %7220 = vmatprep.subr.mxu0 0.0
      %7221 = vmatpush1.msra.mxu0 0.0
      %7222 = vmatprep.subr.mxu0 0.0
      %7223 = vmatpush1.msra.mxu0 0.0
      %7224 = vmatprep.subr.mxu0 0.0
      %7225 = vmatpush1.msra.mxu0 0.0
      %7226 = vmatprep.subr.mxu0 0.0
      %7227 = vmatpush1.msra.mxu0 0.0
      %7228 = vmatprep.subr.mxu0 0.0
      %7229 = vmatpush1.msra.mxu0 0.0
      %7230 = vmatprep.subr.mxu0 0.0
      %7231 = vmatpush1.msra.mxu0 0.0
      %7232 = vmatprep.subr.mxu0 0.0
      %7233 = vmatpush1.msra.mxu0 0.0
      %7234 = vmatprep.subr.mxu0 0.0
      %7235 = vmatpush1.msra.mxu0 0.0
      %7236 = vmatprep.subr.mxu0 0.0
      %7237 = vmatpush1.msra.mxu0 0.0
      %7238 = vmatprep.subr.mxu0 0.0
      %7239 = vmatpush1.msra.mxu0 0.0
      %7240 = vmatprep.subr.mxu0 0.0
      %7241 = vmatpush1.msra.mxu0 0.0
      %7242 = vmatprep.subr.mxu0 0.0
      %7243 = vmatpush1.msra.mxu0 0.0
      %7244 = vmatprep.subr.mxu0 0.0
      %7245 = vmatpush1.msra.mxu0 0.0
      %7246 = vmatprep.subr.mxu0 0.0
      %7247 = vmatpush1.msra.mxu0 0.0
      %7248 = vmatprep.subr.mxu0 0.0
      %7249 = vmatpush1.msra.mxu0 0.0
      %7250 = vmatprep.subr.mxu0 0.0
      %7251 = vmatpush1.msra.mxu0 0.0
      %7252 = vmatprep.subr.mxu0 0.0
      %7253 = vmatpush1.msra.mxu0 0.0
      %7254 = vmatprep.subr.mxu0 0.0
      %7255 = vmatpush1.msra.mxu0 0.0
      %7256 = vmatprep.subr.mxu0 0.0
      %7257 = vmatpush1.msra.mxu0 0.0
      %7258 = vmatprep.subr.mxu0 0.0
      %7259 = vmatpush1.msra.mxu0 0.0
      %7260 = vmatprep.subr.mxu0 0.0
      %7261 = vmatpush1.msra.mxu0 0.0
      %7262 = vmatprep.subr.mxu0 0.0
      %7263 = vmatpush1.msra.mxu0 0.0
      %7264 = vmatprep.subr.mxu0 0.0
      %7265 = vmatpush1.msra.mxu0 0.0
      %7266 = vmatprep.subr.mxu0 0.0
      %7267 = vmatpush1.msra.mxu0 0.0
      %7268 = vmatprep.mubr.f32.mxu0 0.0
      %v7269 = vand.u32 %v6877, 4294901760
      %7270 = vmatmul.mubr.f32.gmra.mrb[0].mxu0 %v7269
      %v7271 = vpop.f32.mrb[0].mxu0
      %v7272 = vadd.f32 %v7194, %v7271
      %v7273 = vpop.f32.mrb[0].mxu0
      %v7274 = vadd.f32 %v7196, %v7273
      %7275 = vdwg.mxu0
      %v7276 = vand.u32 %v6881, 4294901760
      %7277 = vmatprep.subr.mxu0 %v7276
      %v7278 = vand.u32 %v6879, 4294901760
      %7279 = vmatpush1.msra.mxu0 %v7278
      %7280 = vmatprep.subr.mxu0 0.0
      %7281 = vmatpush1.msra.mxu0 0.0
      %7282 = vmatprep.subr.mxu0 0.0
      %7283 = vmatpush1.msra.mxu0 0.0
      %7284 = vmatprep.subr.mxu0 0.0
      %7285 = vmatpush1.msra.mxu0 0.0
      %7286 = vmatprep.subr.mxu0 0.0
      %7287 = vmatpush1.msra.mxu0 0.0
      %7288 = vmatprep.subr.mxu0 0.0
      %7289 = vmatpush1.msra.mxu0 0.0
      %7290 = vmatprep.subr.mxu0 0.0
      %7291 = vmatpush1.msra.mxu0 0.0
      %7292 = vmatprep.subr.mxu0 0.0
      %7293 = vmatpush1.msra.mxu0 0.0
      %7294 = vmatprep.subr.mxu0 0.0
      %7295 = vmatpush1.msra.mxu0 0.0
      %7296 = vmatprep.subr.mxu0 0.0
      %7297 = vmatpush1.msra.mxu0 0.0
      %7298 = vmatprep.subr.mxu0 0.0
      %7299 = vmatpush1.msra.mxu0 0.0
      %7300 = vmatprep.subr.mxu0 0.0
      %7301 = vmatpush1.msra.mxu0 0.0
      %7302 = vmatprep.subr.mxu0 0.0
      %7303 = vmatpush1.msra.mxu0 0.0
      %7304 = vmatprep.subr.mxu0 0.0
      %7305 = vmatpush1.msra.mxu0 0.0
      %7306 = vmatprep.subr.mxu0 0.0
      %7307 = vmatpush1.msra.mxu0 0.0
      %7308 = vmatprep.subr.mxu0 0.0
      %7309 = vmatpush1.msra.mxu0 0.0
      %7310 = vmatprep.subr.mxu0 0.0
      %7311 = vmatpush1.msra.mxu0 0.0
      %7312 = vmatprep.subr.mxu0 0.0
      %7313 = vmatpush1.msra.mxu0 0.0
      %7314 = vmatprep.subr.mxu0 0.0
      %7315 = vmatpush1.msra.mxu0 0.0
      %7316 = vmatprep.subr.mxu0 0.0
      %7317 = vmatpush1.msra.mxu0 0.0
      %7318 = vmatprep.subr.mxu0 0.0
      %7319 = vmatpush1.msra.mxu0 0.0
      %7320 = vmatprep.subr.mxu0 0.0
      %7321 = vmatpush1.msra.mxu0 0.0
      %7322 = vmatprep.subr.mxu0 0.0
      %7323 = vmatpush1.msra.mxu0 0.0
      %7324 = vmatprep.subr.mxu0 0.0
      %7325 = vmatpush1.msra.mxu0 0.0
      %7326 = vmatprep.subr.mxu0 0.0
      %7327 = vmatpush1.msra.mxu0 0.0
      %7328 = vmatprep.subr.mxu0 0.0
      %7329 = vmatpush1.msra.mxu0 0.0
      %7330 = vmatprep.subr.mxu0 0.0
      %7331 = vmatpush1.msra.mxu0 0.0
      %7332 = vmatprep.subr.mxu0 0.0
      %7333 = vmatpush1.msra.mxu0 0.0
      %7334 = vmatprep.subr.mxu0 0.0
      %7335 = vmatpush1.msra.mxu0 0.0
      %7336 = vmatprep.subr.mxu0 0.0
      %7337 = vmatpush1.msra.mxu0 0.0
      %7338 = vmatprep.subr.mxu0 0.0
      %7339 = vmatpush1.msra.mxu0 0.0
      %7340 = vmatprep.subr.mxu0 0.0
      %7341 = vmatpush1.msra.mxu0 0.0
      %7342 = vmatprep.mubr.f32.mxu0 0.0
      %v7343 = vand.u32 %v6877, 4294901760
      %7344 = vmatmul.mubr.f32.gmra.mrb[0].mxu0 %v7343
      %v7345 = vpop.f32.mrb[0].mxu0
      %v7346 = vadd.f32 %v7272, %v7345
      %v7347 = vpop.f32.mrb[0].mxu0
      %v7348 = vadd.f32 %v7274, %v7347
      %7349 = vdwg.mxu0
      %7350 = vmatprep.subr.mxu0 0.0
      %v7351 = vand.u32 %v6883, 4294901760
      %7352 = vmatpush1.msra.mxu0 %v7351
      %7353 = vmatprep.subr.mxu0 0.0
      %7354 = vmatpush1.msra.mxu0 0.0
      %7355 = vmatprep.subr.mxu0 0.0
      %7356 = vmatpush1.msra.mxu0 0.0
      %7357 = vmatprep.subr.mxu0 0.0
      %7358 = vmatpush1.msra.mxu0 0.0
      %7359 = vmatprep.subr.mxu0 0.0
      %7360 = vmatpush1.msra.mxu0 0.0
      %7361 = vmatprep.subr.mxu0 0.0
      %7362 = vmatpush1.msra.mxu0 0.0
      %7363 = vmatprep.subr.mxu0 0.0
      %7364 = vmatpush1.msra.mxu0 0.0
      %7365 = vmatprep.subr.mxu0 0.0
      %7366 = vmatpush1.msra.mxu0 0.0
      %7367 = vmatprep.subr.mxu0 0.0
      %7368 = vmatpush1.msra.mxu0 0.0
      %7369 = vmatprep.subr.mxu0 0.0
      %7370 = vmatpush1.msra.mxu0 0.0
      %7371 = vmatprep.subr.mxu0 0.0
      %7372 = vmatpush1.msra.mxu0 0.0
      %7373 = vmatprep.subr.mxu0 0.0
      %7374 = vmatpush1.msra.mxu0 0.0
      %7375 = vmatprep.subr.mxu0 0.0
      %7376 = vmatpush1.msra.mxu0 0.0
      %7377 = vmatprep.subr.mxu0 0.0
      %7378 = vmatpush1.msra.mxu0 0.0
      %7379 = vmatprep.subr.mxu0 0.0
      %7380 = vmatpush1.msra.mxu0 0.0
      %7381 = vmatprep.subr.mxu0 0.0
      %7382 = vmatpush1.msra.mxu0 0.0
      %7383 = vmatprep.subr.mxu0 0.0
      %7384 = vmatpush1.msra.mxu0 0.0
      %7385 = vmatprep.subr.mxu0 0.0
      %7386 = vmatpush1.msra.mxu0 0.0
      %7387 = vmatprep.subr.mxu0 0.0
      %7388 = vmatpush1.msra.mxu0 0.0
      %7389 = vmatprep.subr.mxu0 0.0
      %7390 = vmatpush1.msra.mxu0 0.0
      %7391 = vmatprep.subr.mxu0 0.0
      %7392 = vmatpush1.msra.mxu0 0.0
      %7393 = vmatprep.subr.mxu0 0.0
      %7394 = vmatpush1.msra.mxu0 0.0
      %7395 = vmatprep.subr.mxu0 0.0
      %7396 = vmatpush1.msra.mxu0 0.0
      %7397 = vmatprep.subr.mxu0 0.0
      %7398 = vmatpush1.msra.mxu0 0.0
      %7399 = vmatprep.subr.mxu0 0.0
      %7400 = vmatpush1.msra.mxu0 0.0
      %7401 = vmatprep.subr.mxu0 0.0
      %7402 = vmatpush1.msra.mxu0 0.0
      %7403 = vmatprep.subr.mxu0 0.0
      %7404 = vmatpush1.msra.mxu0 0.0
      %7405 = vmatprep.subr.mxu0 0.0
      %7406 = vmatpush1.msra.mxu0 0.0
      %7407 = vmatprep.subr.mxu0 0.0
      %7408 = vmatpush1.msra.mxu0 0.0
      %7409 = vmatprep.subr.mxu0 0.0
      %7410 = vmatpush1.msra.mxu0 0.0
      %7411 = vmatprep.subr.mxu0 0.0
      %7412 = vmatpush1.msra.mxu0 0.0
      %7413 = vmatprep.subr.mxu0 0.0
      %7414 = vmatpush1.msra.mxu0 0.0
      %7415 = vmatprep.mubr.f32.mxu0 0.0
      %v7416 = vand.u32 %v6877, 4294901760
      %v7417 = vsub.f32 %v6877, %v7416
      %v7418 = vand.u32 %v7417, 4294901760
      %v7419 = vsub.f32 %v7417, %v7418
      %v7420 = vand.u32 %v7419, 4294901760
      %7421 = vmatmul.mubr.f32.gmra.mrb[0].mxu0 %v7420
      %v7422 = vpop.f32.mrb[0].mxu0
      %v7423 = vadd.f32 0.0, %v7422
      %v7424 = vpop.f32.mrb[0].mxu0
      %7425 = vdwg.mxu0
      %7426 = vmatprep.subr.mxu0 0.0
      %v7427 = vand.u32 %v6883, 4294901760
      %v7428 = vsub.f32 %v6883, %v7427
      %v7429 = vand.u32 %v7428, 4294901760
      %v7430 = vsub.f32 %v7428, %v7429
      %v7431 = vand.u32 %v7430, 4294901760
      %7432 = vmatpush1.msra.mxu0 %v7431
      %7433 = vmatprep.subr.mxu0 0.0
      %7434 = vmatpush1.msra.mxu0 0.0
      %7435 = vmatprep.subr.mxu0 0.0
      %7436 = vmatpush1.msra.mxu0 0.0
      %7437 = vmatprep.subr.mxu0 0.0
      %7438 = vmatpush1.msra.mxu0 0.0
      %7439 = vmatprep.subr.mxu0 0.0
      %7440 = vmatpush1.msra.mxu0 0.0
      %7441 = vmatprep.subr.mxu0 0.0
      %7442 = vmatpush1.msra.mxu0 0.0
      %7443 = vmatprep.subr.mxu0 0.0
      %7444 = vmatpush1.msra.mxu0 0.0
      %7445 = vmatprep.subr.mxu0 0.0
      %7446 = vmatpush1.msra.mxu0 0.0
      %7447 = vmatprep.subr.mxu0 0.0
      %7448 = vmatpush1.msra.mxu0 0.0
      %7449 = vmatprep.subr.mxu0 0.0
      %7450 = vmatpush1.msra.mxu0 0.0
      %7451 = vmatprep.subr.mxu0 0.0
      %7452 = vmatpush1.msra.mxu0 0.0
      %7453 = vmatprep.subr.mxu0 0.0
      %7454 = vmatpush1.msra.mxu0 0.0
      %7455 = vmatprep.subr.mxu0 0.0
      %7456 = vmatpush1.msra.mxu0 0.0
      %7457 = vmatprep.subr.mxu0 0.0
      %7458 = vmatpush1.msra.mxu0 0.0
      %7459 = vmatprep.subr.mxu0 0.0
      %7460 = vmatpush1.msra.mxu0 0.0
      %7461 = vmatprep.subr.mxu0 0.0
      %7462 = vmatpush1.msra.mxu0 0.0
      %7463 = vmatprep.subr.mxu0 0.0
      %7464 = vmatpush1.msra.mxu0 0.0
      %7465 = vmatprep.subr.mxu0 0.0
      %7466 = vmatpush1.msra.mxu0 0.0
      %7467 = vmatprep.subr.mxu0 0.0
      %7468 = vmatpush1.msra.mxu0 0.0
      %7469 = vmatprep.subr.mxu0 0.0
      %7470 = vmatpush1.msra.mxu0 0.0
      %7471 = vmatprep.subr.mxu0 0.0
      %7472 = vmatpush1.msra.mxu0 0.0
      %7473 = vmatprep.subr.mxu0 0.0
      %7474 = vmatpush1.msra.mxu0 0.0
      %7475 = vmatprep.subr.mxu0 0.0
      %7476 = vmatpush1.msra.mxu0 0.0
      %7477 = vmatprep.subr.mxu0 0.0
      %7478 = vmatpush1.msra.mxu0 0.0
      %7479 = vmatprep.subr.mxu0 0.0
      %7480 = vmatpush1.msra.mxu0 0.0
      %7481 = vmatprep.subr.mxu0 0.0
      %7482 = vmatpush1.msra.mxu0 0.0
      %7483 = vmatprep.subr.mxu0 0.0
      %7484 = vmatpush1.msra.mxu0 0.0
      %7485 = vmatprep.subr.mxu0 0.0
      %7486 = vmatpush1.msra.mxu0 0.0
      %7487 = vmatprep.subr.mxu0 0.0
      %7488 = vmatpush1.msra.mxu0 0.0
      %7489 = vmatprep.subr.mxu0 0.0
      %7490 = vmatpush1.msra.mxu0 0.0
      %7491 = vmatprep.subr.mxu0 0.0
      %7492 = vmatpush1.msra.mxu0 0.0
      %7493 = vmatprep.subr.mxu0 0.0
      %7494 = vmatpush1.msra.mxu0 0.0
      %7495 = vmatprep.mubr.f32.mxu0 0.0
      %v7496 = vand.u32 %v6877, 4294901760
      %7497 = vmatmul.mubr.f32.gmra.mrb[0].mxu0 %v7496
      %v7498 = vpop.f32.mrb[0].mxu0
      %v7499 = vadd.f32 %v7423, %v7498
      %v7500 = vpop.f32.mrb[0].mxu0
      %7501 = vdwg.mxu0
      %7502 = vmatprep.subr.mxu0 0.0
      %v7503 = vand.u32 %v6883, 4294901760
      %v7504 = vsub.f32 %v6883, %v7503
      %7505 = vmatpush1.msra.mxu0 %v7504
      %7506 = vmatprep.subr.mxu0 0.0
      %7507 = vmatpush1.msra.mxu0 0.0
      %7508 = vmatprep.subr.mxu0 0.0
      %7509 = vmatpush1.msra.mxu0 0.0
      %7510 = vmatprep.subr.mxu0 0.0
      %7511 = vmatpush1.msra.mxu0 0.0
      %7512 = vmatprep.subr.mxu0 0.0
      %7513 = vmatpush1.msra.mxu0 0.0
      %7514 = vmatprep.subr.mxu0 0.0
      %7515 = vmatpush1.msra.mxu0 0.0
      %7516 = vmatprep.subr.mxu0 0.0
      %7517 = vmatpush1.msra.mxu0 0.0
      %7518 = vmatprep.subr.mxu0 0.0
      %7519 = vmatpush1.msra.mxu0 0.0
      %7520 = vmatprep.subr.mxu0 0.0
      %7521 = vmatpush1.msra.mxu0 0.0
      %7522 = vmatprep.subr.mxu0 0.0
      %7523 = vmatpush1.msra.mxu0 0.0
      %7524 = vmatprep.subr.mxu0 0.0
      %7525 = vmatpush1.msra.mxu0 0.0
      %7526 = vmatprep.subr.mxu0 0.0
      %7527 = vmatpush1.msra.mxu0 0.0
      %7528 = vmatprep.subr.mxu0 0.0
      %7529 = vmatpush1.msra.mxu0 0.0
      %7530 = vmatprep.subr.mxu0 0.0
      %7531 = vmatpush1.msra.mxu0 0.0
      %7532 = vmatprep.subr.mxu0 0.0
      %7533 = vmatpush1.msra.mxu0 0.0
      %7534 = vmatprep.subr.mxu0 0.0
      %7535 = vmatpush1.msra.mxu0 0.0
      %7536 = vmatprep.subr.mxu0 0.0
      %7537 = vmatpush1.msra.mxu0 0.0
      %7538 = vmatprep.subr.mxu0 0.0
      %7539 = vmatpush1.msra.mxu0 0.0
      %7540 = vmatprep.subr.mxu0 0.0
      %7541 = vmatpush1.msra.mxu0 0.0
      %7542 = vmatprep.subr.mxu0 0.0
      %7543 = vmatpush1.msra.mxu0 0.0
      %7544 = vmatprep.subr.mxu0 0.0
      %7545 = vmatpush1.msra.mxu0 0.0
      %7546 = vmatprep.subr.mxu0 0.0
      %7547 = vmatpush1.msra.mxu0 0.0
      %7548 = vmatprep.subr.mxu0 0.0
      %7549 = vmatpush1.msra.mxu0 0.0
      %7550 = vmatprep.subr.mxu0 0.0
      %7551 = vmatpush1.msra.mxu0 0.0
      %7552 = vmatprep.subr.mxu0 0.0
      %7553 = vmatpush1.msra.mxu0 0.0
      %7554 = vmatprep.subr.mxu0 0.0
      %7555 = vmatpush1.msra.mxu0 0.0
      %7556 = vmatprep.subr.mxu0 0.0
      %7557 = vmatpush1.msra.mxu0 0.0
      %7558 = vmatprep.subr.mxu0 0.0
      %7559 = vmatpush1.msra.mxu0 0.0
      %7560 = vmatprep.subr.mxu0 0.0
      %7561 = vmatpush1.msra.mxu0 0.0
      %7562 = vmatprep.subr.mxu0 0.0
      %7563 = vmatpush1.msra.mxu0 0.0
      %7564 = vmatprep.subr.mxu0 0.0
      %7565 = vmatpush1.msra.mxu0 0.0
      %7566 = vmatprep.subr.mxu0 0.0
      %7567 = vmatpush1.msra.mxu0 0.0
      %7568 = vmatprep.mubr.f32.mxu0 0.0
      %v7569 = vand.u32 %v6877, 4294901760
      %v7570 = vsub.f32 %v6877, %v7569
      %7571 = vmatmul.mubr.f32.gmra.mrb[0].mxu0 %v7570
      %v7572 = vpop.f32.mrb[0].mxu0
      %v7573 = vadd.f32 %v7499, %v7572
      %v7574 = vpop.f32.mrb[0].mxu0
      %7575 = vdwg.mxu0
      %7576 = vmatprep.subr.mxu0 0.0
      %v7577 = vand.u32 %v6883, 4294901760
      %7578 = vmatpush1.msra.mxu0 %v7577
      %7579 = vmatprep.subr.mxu0 0.0
      %7580 = vmatpush1.msra.mxu0 0.0
      %7581 = vmatprep.subr.mxu0 0.0
      %7582 = vmatpush1.msra.mxu0 0.0
      %7583 = vmatprep.subr.mxu0 0.0
      %7584 = vmatpush1.msra.mxu0 0.0
      %7585 = vmatprep.subr.mxu0 0.0
      %7586 = vmatpush1.msra.mxu0 0.0
      %7587 = vmatprep.subr.mxu0 0.0
      %7588 = vmatpush1.msra.mxu0 0.0
      %7589 = vmatprep.subr.mxu0 0.0
      %7590 = vmatpush1.msra.mxu0 0.0
      %7591 = vmatprep.subr.mxu0 0.0
      %7592 = vmatpush1.msra.mxu0 0.0
      %7593 = vmatprep.subr.mxu0 0.0
      %7594 = vmatpush1.msra.mxu0 0.0
      %7595 = vmatprep.subr.mxu0 0.0
      %7596 = vmatpush1.msra.mxu0 0.0
      %7597 = vmatprep.subr.mxu0 0.0
      %7598 = vmatpush1.msra.mxu0 0.0
      %7599 = vmatprep.subr.mxu0 0.0
      %7600 = vmatpush1.msra.mxu0 0.0
      %7601 = vmatprep.subr.mxu0 0.0
      %7602 = vmatpush1.msra.mxu0 0.0
      %7603 = vmatprep.subr.mxu0 0.0
      %7604 = vmatpush1.msra.mxu0 0.0
      %7605 = vmatprep.subr.mxu0 0.0
      %7606 = vmatpush1.msra.mxu0 0.0
      %7607 = vmatprep.subr.mxu0 0.0
      %7608 = vmatpush1.msra.mxu0 0.0
      %7609 = vmatprep.subr.mxu0 0.0
      %7610 = vmatpush1.msra.mxu0 0.0
      %7611 = vmatprep.subr.mxu0 0.0
      %7612 = vmatpush1.msra.mxu0 0.0
      %7613 = vmatprep.subr.mxu0 0.0
      %7614 = vmatpush1.msra.mxu0 0.0
      %7615 = vmatprep.subr.mxu0 0.0
      %7616 = vmatpush1.msra.mxu0 0.0
      %7617 = vmatprep.subr.mxu0 0.0
      %7618 = vmatpush1.msra.mxu0 0.0
      %7619 = vmatprep.subr.mxu0 0.0
      %7620 = vmatpush1.msra.mxu0 0.0
      %7621 = vmatprep.subr.mxu0 0.0
      %7622 = vmatpush1.msra.mxu0 0.0
      %7623 = vmatprep.subr.mxu0 0.0
      %7624 = vmatpush1.msra.mxu0 0.0
      %7625 = vmatprep.subr.mxu0 0.0
      %7626 = vmatpush1.msra.mxu0 0.0
      %7627 = vmatprep.subr.mxu0 0.0
      %7628 = vmatpush1.msra.mxu0 0.0
      %7629 = vmatprep.subr.mxu0 0.0
      %7630 = vmatpush1.msra.mxu0 0.0
      %7631 = vmatprep.subr.mxu0 0.0
      %7632 = vmatpush1.msra.mxu0 0.0
      %7633 = vmatprep.subr.mxu0 0.0
      %7634 = vmatpush1.msra.mxu0 0.0
      %7635 = vmatprep.subr.mxu0 0.0
      %7636 = vmatpush1.msra.mxu0 0.0
      %7637 = vmatprep.subr.mxu0 0.0
      %7638 = vmatpush1.msra.mxu0 0.0
      %7639 = vmatprep.subr.mxu0 0.0
      %7640 = vmatpush1.msra.mxu0 0.0
      %7641 = vmatprep.mubr.f32.mxu0 0.0
      %v7642 = vand.u32 %v6877, 4294901760
      %v7643 = vsub.f32 %v6877, %v7642
      %v7644 = vand.u32 %v7643, 4294901760
      %7645 = vmatmul.mubr.f32.gmra.mrb[0].mxu0 %v7644
      %v7646 = vpop.f32.mrb[0].mxu0
      %v7647 = vadd.f32 %v7573, %v7646
      %v7648 = vpop.f32.mrb[0].mxu0
      %7649 = vdwg.mxu0
      %7650 = vmatprep.subr.mxu0 0.0
      %v7651 = vand.u32 %v6883, 4294901760
      %v7652 = vsub.f32 %v6883, %v7651
      %v7653 = vand.u32 %v7652, 4294901760
      %7654 = vmatpush1.msra.mxu0 %v7653
      %7655 = vmatprep.subr.mxu0 0.0
      %7656 = vmatpush1.msra.mxu0 0.0
      %7657 = vmatprep.subr.mxu0 0.0
      %7658 = vmatpush1.msra.mxu0 0.0
      %7659 = vmatprep.subr.mxu0 0.0
      %7660 = vmatpush1.msra.mxu0 0.0
      %7661 = vmatprep.subr.mxu0 0.0
      %7662 = vmatpush1.msra.mxu0 0.0
      %7663 = vmatprep.subr.mxu0 0.0
      %7664 = vmatpush1.msra.mxu0 0.0
      %7665 = vmatprep.subr.mxu0 0.0
      %7666 = vmatpush1.msra.mxu0 0.0
      %7667 = vmatprep.subr.mxu0 0.0
      %7668 = vmatpush1.msra.mxu0 0.0
      %7669 = vmatprep.subr.mxu0 0.0
      %7670 = vmatpush1.msra.mxu0 0.0
      %7671 = vmatprep.subr.mxu0 0.0
      %7672 = vmatpush1.msra.mxu0 0.0
      %7673 = vmatprep.subr.mxu0 0.0
      %7674 = vmatpush1.msra.mxu0 0.0
      %7675 = vmatprep.subr.mxu0 0.0
      %7676 = vmatpush1.msra.mxu0 0.0
      %7677 = vmatprep.subr.mxu0 0.0
      %7678 = vmatpush1.msra.mxu0 0.0
      %7679 = vmatprep.subr.mxu0 0.0
      %7680 = vmatpush1.msra.mxu0 0.0
      %7681 = vmatprep.subr.mxu0 0.0
      %7682 = vmatpush1.msra.mxu0 0.0
      %7683 = vmatprep.subr.mxu0 0.0
      %7684 = vmatpush1.msra.mxu0 0.0
      %7685 = vmatprep.subr.mxu0 0.0
      %7686 = vmatpush1.msra.mxu0 0.0
      %7687 = vmatprep.subr.mxu0 0.0
      %7688 = vmatpush1.msra.mxu0 0.0
      %7689 = vmatprep.subr.mxu0 0.0
      %7690 = vmatpush1.msra.mxu0 0.0
      %7691 = vmatprep.subr.mxu0 0.0
      %7692 = vmatpush1.msra.mxu0 0.0
      %7693 = vmatprep.subr.mxu0 0.0
      %7694 = vmatpush1.msra.mxu0 0.0
      %7695 = vmatprep.subr.mxu0 0.0
      %7696 = vmatpush1.msra.mxu0 0.0
      %7697 = vmatprep.subr.mxu0 0.0
      %7698 = vmatpush1.msra.mxu0 0.0
      %7699 = vmatprep.subr.mxu0 0.0
      %7700 = vmatpush1.msra.mxu0 0.0
      %7701 = vmatprep.subr.mxu0 0.0
      %7702 = vmatpush1.msra.mxu0 0.0
      %7703 = vmatprep.subr.mxu0 0.0
      %7704 = vmatpush1.msra.mxu0 0.0
      %7705 = vmatprep.subr.mxu0 0.0
      %7706 = vmatpush1.msra.mxu0 0.0
      %7707 = vmatprep.subr.mxu0 0.0
      %7708 = vmatpush1.msra.mxu0 0.0
      %7709 = vmatprep.subr.mxu0 0.0
      %7710 = vmatpush1.msra.mxu0 0.0
      %7711 = vmatprep.subr.mxu0 0.0
      %7712 = vmatpush1.msra.mxu0 0.0
      %7713 = vmatprep.subr.mxu0 0.0
      %7714 = vmatpush1.msra.mxu0 0.0
      %7715 = vmatprep.subr.mxu0 0.0
      %7716 = vmatpush1.msra.mxu0 0.0
      %7717 = vmatprep.mubr.f32.mxu0 0.0
      %v7718 = vand.u32 %v6877, 4294901760
      %7719 = vmatmul.mubr.f32.gmra.mrb[0].mxu0 %v7718
      %v7720 = vpop.f32.mrb[0].mxu0
      %v7721 = vadd.f32 %v7647, %v7720
      %v7722 = vpop.f32.mrb[0].mxu0
      %7723 = vdwg.mxu0
      %7724 = vmatprep.subr.mxu0 0.0
      %v7725 = vand.u32 %v6883, 4294901760
      %7726 = vmatpush1.msra.mxu0 %v7725
      %7727 = vmatprep.subr.mxu0 0.0
      %7728 = vmatpush1.msra.mxu0 0.0
      %7729 = vmatprep.subr.mxu0 0.0
      %7730 = vmatpush1.msra.mxu0 0.0
      %7731 = vmatprep.subr.mxu0 0.0
      %7732 = vmatpush1.msra.mxu0 0.0
      %7733 = vmatprep.subr.mxu0 0.0
      %7734 = vmatpush1.msra.mxu0 0.0
      %7735 = vmatprep.subr.mxu0 0.0
      %7736 = vmatpush1.msra.mxu0 0.0
      %7737 = vmatprep.subr.mxu0 0.0
      %7738 = vmatpush1.msra.mxu0 0.0
      %7739 = vmatprep.subr.mxu0 0.0
      %7740 = vmatpush1.msra.mxu0 0.0
      %7741 = vmatprep.subr.mxu0 0.0
      %7742 = vmatpush1.msra.mxu0 0.0
      %7743 = vmatprep.subr.mxu0 0.0
      %7744 = vmatpush1.msra.mxu0 0.0
      %7745 = vmatprep.subr.mxu0 0.0
      %7746 = vmatpush1.msra.mxu0 0.0
      %7747 = vmatprep.subr.mxu0 0.0
      %7748 = vmatpush1.msra.mxu0 0.0
      %7749 = vmatprep.subr.mxu0 0.0
      %7750 = vmatpush1.msra.mxu0 0.0
      %7751 = vmatprep.subr.mxu0 0.0
      %7752 = vmatpush1.msra.mxu0 0.0
      %7753 = vmatprep.subr.mxu0 0.0
      %7754 = vmatpush1.msra.mxu0 0.0
      %7755 = vmatprep.subr.mxu0 0.0
      %7756 = vmatpush1.msra.mxu0 0.0
      %7757 = vmatprep.subr.mxu0 0.0
      %7758 = vmatpush1.msra.mxu0 0.0
      %7759 = vmatprep.subr.mxu0 0.0
      %7760 = vmatpush1.msra.mxu0 0.0
      %7761 = vmatprep.subr.mxu0 0.0
      %7762 = vmatpush1.msra.mxu0 0.0
      %7763 = vmatprep.subr.mxu0 0.0
      %7764 = vmatpush1.msra.mxu0 0.0
      %7765 = vmatprep.subr.mxu0 0.0
      %7766 = vmatpush1.msra.mxu0 0.0
      %7767 = vmatprep.subr.mxu0 0.0
      %7768 = vmatpush1.msra.mxu0 0.0
      %7769 = vmatprep.subr.mxu0 0.0
      %7770 = vmatpush1.msra.mxu0 0.0
      %7771 = vmatprep.subr.mxu0 0.0
      %7772 = vmatpush1.msra.mxu0 0.0
      %7773 = vmatprep.subr.mxu0 0.0
      %7774 = vmatpush1.msra.mxu0 0.0
      %7775 = vmatprep.subr.mxu0 0.0
      %7776 = vmatpush1.msra.mxu0 0.0
      %7777 = vmatprep.subr.mxu0 0.0
      %7778 = vmatpush1.msra.mxu0 0.0
      %7779 = vmatprep.subr.mxu0 0.0
      %7780 = vmatpush1.msra.mxu0 0.0
      %7781 = vmatprep.subr.mxu0 0.0
      %7782 = vmatpush1.msra.mxu0 0.0
      %7783 = vmatprep.subr.mxu0 0.0
      %7784 = vmatpush1.msra.mxu0 0.0
      %7785 = vmatprep.subr.mxu0 0.0
      %7786 = vmatpush1.msra.mxu0 0.0
      %7787 = vmatprep.subr.mxu0 0.0
      %7788 = vmatpush1.msra.mxu0 0.0
      %7789 = vmatprep.mubr.f32.mxu0 0.0
      %v7790 = vand.u32 %v6877, 4294901760
      %7791 = vmatmul.mubr.f32.gmra.mrb[0].mxu0 %v7790
      %v7792 = vpop.f32.mrb[0].mxu0
      %v7793 = vadd.f32 %v7721, %v7792
      %v7794 = vpop.f32.mrb[0].mxu0
      %7795 = vdwg.mxu0
      %v7796 = vadd.f32 %v6853, %v7346
      %v7797 = vadd.f32 %v6854, %v7348
      %v7798 = vadd.f32 %v6855, %v7793
      %s7799 = scalar_lea.vmem %s1, 64
      %v7800 = vld [vmem:[%s7799] sm:$0xff]
      %v7801 = vld [vmem:[%s259] sm:$0xff]
      %v7802 = vld [vmem:[%s259 + $0x8] sm:$0xff]
      %v7805 = vcombine.high %v7801, %v7801
      %v7806 = vcombine.high %v7802, %v7802
      %7807 = vrot.lane.b32.xlu0 %v7801, 90
      %v7808 = vpop.permute.xlu0 %7807
      %7809 = vrot.lane.b32.xlu0 %v7805, 90
      %v7810 = vpop.permute.xlu0 %7809
      %7811 = vrot.lane.b32.xlu0 %v7802, 90
      %v7812 = vpop.permute.xlu0 %7811
      %7813 = vrot.lane.b32.xlu0 %v7806, 90
      %v7814 = vpop.permute.xlu0 %7813
      %vm7815 = vcmask 736256
      %v7816 = vsel %vm7815, %v7808, %v7810
      %v7817 = vsel %vm7815, %v7810, %v7812
      %v7818 = vsel %vm7815, %v7812, %v7814
      %v7820 = vsel %vm296, %v7800, 0
      %v7822 = vsel %vm300, %v7816, 0
      %v7824 = vsel %vm300, %v7817, 0
      %v7826 = vsel %vm300, %v7818, 0
      %v7828 = vand.u32 %v7824, 4294901760
      %7829 = vmatprep.subr.mxu0 %v7828
      %v7830 = vand.u32 %v7822, 4294901760
      %7831 = vmatpush1.msra.mxu0 %v7830
      %7832 = vmatprep.subr.mxu0 0.0
      %7833 = vmatpush1.msra.mxu0 0.0
      %7834 = vmatprep.subr.mxu0 0.0
      %7835 = vmatpush1.msra.mxu0 0.0
      %7836 = vmatprep.subr.mxu0 0.0
      %7837 = vmatpush1.msra.mxu0 0.0
      %7838 = vmatprep.subr.mxu0 0.0
      %7839 = vmatpush1.msra.mxu0 0.0
      %7840 = vmatprep.subr.mxu0 0.0
      %7841 = vmatpush1.msra.mxu0 0.0
      %7842 = vmatprep.subr.mxu0 0.0
      %7843 = vmatpush1.msra.mxu0 0.0
      %7844 = vmatprep.subr.mxu0 0.0
      %7845 = vmatpush1.msra.mxu0 0.0
      %7846 = vmatprep.subr.mxu0 0.0
      %7847 = vmatpush1.msra.mxu0 0.0
      %7848 = vmatprep.subr.mxu0 0.0
      %7849 = vmatpush1.msra.mxu0 0.0
      %7850 = vmatprep.subr.mxu0 0.0
      %7851 = vmatpush1.msra.mxu0 0.0
      %7852 = vmatprep.subr.mxu0 0.0
      %7853 = vmatpush1.msra.mxu0 0.0
      %7854 = vmatprep.subr.mxu0 0.0
      %7855 = vmatpush1.msra.mxu0 0.0
      %7856 = vmatprep.subr.mxu0 0.0
      %7857 = vmatpush1.msra.mxu0 0.0
      %7858 = vmatprep.subr.mxu0 0.0
      %7859 = vmatpush1.msra.mxu0 0.0
      %7860 = vmatprep.subr.mxu0 0.0
      %7861 = vmatpush1.msra.mxu0 0.0
      %7862 = vmatprep.subr.mxu0 0.0
      %7863 = vmatpush1.msra.mxu0 0.0
      %7864 = vmatprep.subr.mxu0 0.0
      %7865 = vmatpush1.msra.mxu0 0.0
      %7866 = vmatprep.subr.mxu0 0.0
      %7867 = vmatpush1.msra.mxu0 0.0
      %7868 = vmatprep.subr.mxu0 0.0
      %7869 = vmatpush1.msra.mxu0 0.0
      %7870 = vmatprep.subr.mxu0 0.0
      %7871 = vmatpush1.msra.mxu0 0.0
      %7872 = vmatprep.subr.mxu0 0.0
      %7873 = vmatpush1.msra.mxu0 0.0
      %7874 = vmatprep.subr.mxu0 0.0
      %7875 = vmatpush1.msra.mxu0 0.0
      %7876 = vmatprep.subr.mxu0 0.0
      %7877 = vmatpush1.msra.mxu0 0.0
      %7878 = vmatprep.subr.mxu0 0.0
      %7879 = vmatpush1.msra.mxu0 0.0
      %7880 = vmatprep.subr.mxu0 0.0
      %7881 = vmatpush1.msra.mxu0 0.0
      %7882 = vmatprep.subr.mxu0 0.0
      %7883 = vmatpush1.msra.mxu0 0.0
      %7884 = vmatprep.subr.mxu0 0.0
      %7885 = vmatpush1.msra.mxu0 0.0
      %7886 = vmatprep.subr.mxu0 0.0
      %7887 = vmatpush1.msra.mxu0 0.0
      %7888 = vmatprep.subr.mxu0 0.0
      %7889 = vmatpush1.msra.mxu0 0.0
      %7890 = vmatprep.subr.mxu0 0.0
      %7891 = vmatpush1.msra.mxu0 0.0
      %7892 = vmatprep.subr.mxu0 0.0
      %7893 = vmatpush1.msra.mxu0 0.0
      %7894 = vmatprep.mubr.f32.mxu0 0.0
      %v7895 = vand.u32 %v7820, 4294901760
      %v7896 = vsub.f32 %v7820, %v7895
      %v7897 = vand.u32 %v7896, 4294901760
      %v7898 = vsub.f32 %v7896, %v7897
      %v7899 = vand.u32 %v7898, 4294901760
      %7900 = vmatmul.mubr.f32.gmra.mrb[0].mxu0 %v7899
      %v7901 = vpop.f32.mrb[0].mxu0
      %v7902 = vadd.f32 0.0, %v7901
      %v7903 = vpop.f32.mrb[0].mxu0
      %v7904 = vadd.f32 0.0, %v7903
      %7905 = vdwg.mxu0
      %v7906 = vand.u32 %v7824, 4294901760
      %v7907 = vsub.f32 %v7824, %v7906
      %v7908 = vand.u32 %v7907, 4294901760
      %v7909 = vsub.f32 %v7907, %v7908
      %v7910 = vand.u32 %v7909, 4294901760
      %7911 = vmatprep.subr.mxu0 %v7910
      %v7912 = vand.u32 %v7822, 4294901760
      %v7913 = vsub.f32 %v7822, %v7912
      %v7914 = vand.u32 %v7913, 4294901760
      %v7915 = vsub.f32 %v7913, %v7914
      %v7916 = vand.u32 %v7915, 4294901760
      %7917 = vmatpush1.msra.mxu0 %v7916
      %7918 = vmatprep.subr.mxu0 0.0
      %7919 = vmatpush1.msra.mxu0 0.0
      %7920 = vmatprep.subr.mxu0 0.0
      %7921 = vmatpush1.msra.mxu0 0.0
      %7922 = vmatprep.subr.mxu0 0.0
      %7923 = vmatpush1.msra.mxu0 0.0
      %7924 = vmatprep.subr.mxu0 0.0
      %7925 = vmatpush1.msra.mxu0 0.0
      %7926 = vmatprep.subr.mxu0 0.0
      %7927 = vmatpush1.msra.mxu0 0.0
      %7928 = vmatprep.subr.mxu0 0.0
      %7929 = vmatpush1.msra.mxu0 0.0
      %7930 = vmatprep.subr.mxu0 0.0
      %7931 = vmatpush1.msra.mxu0 0.0
      %7932 = vmatprep.subr.mxu0 0.0
      %7933 = vmatpush1.msra.mxu0 0.0
      %7934 = vmatprep.subr.mxu0 0.0
      %7935 = vmatpush1.msra.mxu0 0.0
      %7936 = vmatprep.subr.mxu0 0.0
      %7937 = vmatpush1.msra.mxu0 0.0
      %7938 = vmatprep.subr.mxu0 0.0
      %7939 = vmatpush1.msra.mxu0 0.0
      %7940 = vmatprep.subr.mxu0 0.0
      %7941 = vmatpush1.msra.mxu0 0.0
      %7942 = vmatprep.subr.mxu0 0.0
      %7943 = vmatpush1.msra.mxu0 0.0
      %7944 = vmatprep.subr.mxu0 0.0
      %7945 = vmatpush1.msra.mxu0 0.0
      %7946 = vmatprep.subr.mxu0 0.0
      %7947 = vmatpush1.msra.mxu0 0.0
      %7948 = vmatprep.subr.mxu0 0.0
      %7949 = vmatpush1.msra.mxu0 0.0
      %7950 = vmatprep.subr.mxu0 0.0
      %7951 = vmatpush1.msra.mxu0 0.0
      %7952 = vmatprep.subr.mxu0 0.0
      %7953 = vmatpush1.msra.mxu0 0.0
      %7954 = vmatprep.subr.mxu0 0.0
      %7955 = vmatpush1.msra.mxu0 0.0
      %7956 = vmatprep.subr.mxu0 0.0
      %7957 = vmatpush1.msra.mxu0 0.0
      %7958 = vmatprep.subr.mxu0 0.0
      %7959 = vmatpush1.msra.mxu0 0.0
      %7960 = vmatprep.subr.mxu0 0.0
      %7961 = vmatpush1.msra.mxu0 0.0
      %7962 = vmatprep.subr.mxu0 0.0
      %7963 = vmatpush1.msra.mxu0 0.0
      %7964 = vmatprep.subr.mxu0 0.0
      %7965 = vmatpush1.msra.mxu0 0.0
      %7966 = vmatprep.subr.mxu0 0.0
      %7967 = vmatpush1.msra.mxu0 0.0
      %7968 = vmatprep.subr.mxu0 0.0
      %7969 = vmatpush1.msra.mxu0 0.0
      %7970 = vmatprep.subr.mxu0 0.0
      %7971 = vmatpush1.msra.mxu0 0.0
      %7972 = vmatprep.subr.mxu0 0.0
      %7973 = vmatpush1.msra.mxu0 0.0
      %7974 = vmatprep.subr.mxu0 0.0
      %7975 = vmatpush1.msra.mxu0 0.0
      %7976 = vmatprep.subr.mxu0 0.0
      %7977 = vmatpush1.msra.mxu0 0.0
      %7978 = vmatprep.subr.mxu0 0.0
      %7979 = vmatpush1.msra.mxu0 0.0
      %7980 = vmatprep.mubr.f32.mxu0 0.0
      %v7981 = vand.u32 %v7820, 4294901760
      %7982 = vmatmul.mubr.f32.gmra.mrb[0].mxu0 %v7981
      %v7983 = vpop.f32.mrb[0].mxu0
      %v7984 = vadd.f32 %v7902, %v7983
      %v7985 = vpop.f32.mrb[0].mxu0
      %v7986 = vadd.f32 %v7904, %v7985
      %7987 = vdwg.mxu0
      %v7988 = vand.u32 %v7824, 4294901760
      %v7989 = vsub.f32 %v7824, %v7988
      %7990 = vmatprep.subr.mxu0 %v7989
      %v7991 = vand.u32 %v7822, 4294901760
      %v7992 = vsub.f32 %v7822, %v7991
      %7993 = vmatpush1.msra.mxu0 %v7992
      %7994 = vmatprep.subr.mxu0 0.0
      %7995 = vmatpush1.msra.mxu0 0.0
      %7996 = vmatprep.subr.mxu0 0.0
      %7997 = vmatpush1.msra.mxu0 0.0
      %7998 = vmatprep.subr.mxu0 0.0
      %7999 = vmatpush1.msra.mxu0 0.0
      %8000 = vmatprep.subr.mxu0 0.0
      %8001 = vmatpush1.msra.mxu0 0.0
      %8002 = vmatprep.subr.mxu0 0.0
      %8003 = vmatpush1.msra.mxu0 0.0
      %8004 = vmatprep.subr.mxu0 0.0
      %8005 = vmatpush1.msra.mxu0 0.0
      %8006 = vmatprep.subr.mxu0 0.0
      %8007 = vmatpush1.msra.mxu0 0.0
      %8008 = vmatprep.subr.mxu0 0.0
      %8009 = vmatpush1.msra.mxu0 0.0
      %8010 = vmatprep.subr.mxu0 0.0
      %8011 = vmatpush1.msra.mxu0 0.0
      %8012 = vmatprep.subr.mxu0 0.0
      %8013 = vmatpush1.msra.mxu0 0.0
      %8014 = vmatprep.subr.mxu0 0.0
      %8015 = vmatpush1.msra.mxu0 0.0
      %8016 = vmatprep.subr.mxu0 0.0
      %8017 = vmatpush1.msra.mxu0 0.0
      %8018 = vmatprep.subr.mxu0 0.0
      %8019 = vmatpush1.msra.mxu0 0.0
      %8020 = vmatprep.subr.mxu0 0.0
      %8021 = vmatpush1.msra.mxu0 0.0
      %8022 = vmatprep.subr.mxu0 0.0
      %8023 = vmatpush1.msra.mxu0 0.0
      %8024 = vmatprep.subr.mxu0 0.0
      %8025 = vmatpush1.msra.mxu0 0.0
      %8026 = vmatprep.subr.mxu0 0.0
      %8027 = vmatpush1.msra.mxu0 0.0
      %8028 = vmatprep.subr.mxu0 0.0
      %8029 = vmatpush1.msra.mxu0 0.0
      %8030 = vmatprep.subr.mxu0 0.0
      %8031 = vmatpush1.msra.mxu0 0.0
      %8032 = vmatprep.subr.mxu0 0.0
      %8033 = vmatpush1.msra.mxu0 0.0
      %8034 = vmatprep.subr.mxu0 0.0
      %8035 = vmatpush1.msra.mxu0 0.0
      %8036 = vmatprep.subr.mxu0 0.0
      %8037 = vmatpush1.msra.mxu0 0.0
      %8038 = vmatprep.subr.mxu0 0.0
      %8039 = vmatpush1.msra.mxu0 0.0
      %8040 = vmatprep.subr.mxu0 0.0
      %8041 = vmatpush1.msra.mxu0 0.0
      %8042 = vmatprep.subr.mxu0 0.0
      %8043 = vmatpush1.msra.mxu0 0.0
      %8044 = vmatprep.subr.mxu0 0.0
      %8045 = vmatpush1.msra.mxu0 0.0
      %8046 = vmatprep.subr.mxu0 0.0
      %8047 = vmatpush1.msra.mxu0 0.0
      %8048 = vmatprep.subr.mxu0 0.0
      %8049 = vmatpush1.msra.mxu0 0.0
      %8050 = vmatprep.subr.mxu0 0.0
      %8051 = vmatpush1.msra.mxu0 0.0
      %8052 = vmatprep.subr.mxu0 0.0
      %8053 = vmatpush1.msra.mxu0 0.0
      %8054 = vmatprep.subr.mxu0 0.0
      %8055 = vmatpush1.msra.mxu0 0.0
      %8056 = vmatprep.mubr.f32.mxu0 0.0
      %v8057 = vand.u32 %v7820, 4294901760
      %v8058 = vsub.f32 %v7820, %v8057
      %8059 = vmatmul.mubr.f32.gmra.mrb[0].mxu0 %v8058
      %v8060 = vpop.f32.mrb[0].mxu0
      %v8061 = vadd.f32 %v7984, %v8060
      %v8062 = vpop.f32.mrb[0].mxu0
      %v8063 = vadd.f32 %v7986, %v8062
      %8064 = vdwg.mxu0
      %v8065 = vand.u32 %v7824, 4294901760
      %8066 = vmatprep.subr.mxu0 %v8065
      %v8067 = vand.u32 %v7822, 4294901760
      %8068 = vmatpush1.msra.mxu0 %v8067
      %8069 = vmatprep.subr.mxu0 0.0
      %8070 = vmatpush1.msra.mxu0 0.0
      %8071 = vmatprep.subr.mxu0 0.0
      %8072 = vmatpush1.msra.mxu0 0.0
      %8073 = vmatprep.subr.mxu0 0.0
      %8074 = vmatpush1.msra.mxu0 0.0
      %8075 = vmatprep.subr.mxu0 0.0
      %8076 = vmatpush1.msra.mxu0 0.0
      %8077 = vmatprep.subr.mxu0 0.0
      %8078 = vmatpush1.msra.mxu0 0.0
      %8079 = vmatprep.subr.mxu0 0.0
      %8080 = vmatpush1.msra.mxu0 0.0
      %8081 = vmatprep.subr.mxu0 0.0
      %8082 = vmatpush1.msra.mxu0 0.0
      %8083 = vmatprep.subr.mxu0 0.0
      %8084 = vmatpush1.msra.mxu0 0.0
      %8085 = vmatprep.subr.mxu0 0.0
      %8086 = vmatpush1.msra.mxu0 0.0
      %8087 = vmatprep.subr.mxu0 0.0
      %8088 = vmatpush1.msra.mxu0 0.0
      %8089 = vmatprep.subr.mxu0 0.0
      %8090 = vmatpush1.msra.mxu0 0.0
      %8091 = vmatprep.subr.mxu0 0.0
      %8092 = vmatpush1.msra.mxu0 0.0
      %8093 = vmatprep.subr.mxu0 0.0
      %8094 = vmatpush1.msra.mxu0 0.0
      %8095 = vmatprep.subr.mxu0 0.0
      %8096 = vmatpush1.msra.mxu0 0.0
      %8097 = vmatprep.subr.mxu0 0.0
      %8098 = vmatpush1.msra.mxu0 0.0
      %8099 = vmatprep.subr.mxu0 0.0
      %8100 = vmatpush1.msra.mxu0 0.0
      %8101 = vmatprep.subr.mxu0 0.0
      %8102 = vmatpush1.msra.mxu0 0.0
      %8103 = vmatprep.subr.mxu0 0.0
      %8104 = vmatpush1.msra.mxu0 0.0
      %8105 = vmatprep.subr.mxu0 0.0
      %8106 = vmatpush1.msra.mxu0 0.0
      %8107 = vmatprep.subr.mxu0 0.0
      %8108 = vmatpush1.msra.mxu0 0.0
      %8109 = vmatprep.subr.mxu0 0.0
      %8110 = vmatpush1.msra.mxu0 0.0
      %8111 = vmatprep.subr.mxu0 0.0
      %8112 = vmatpush1.msra.mxu0 0.0
      %8113 = vmatprep.subr.mxu0 0.0
      %8114 = vmatpush1.msra.mxu0 0.0
      %8115 = vmatprep.subr.mxu0 0.0
      %8116 = vmatpush1.msra.mxu0 0.0
      %8117 = vmatprep.subr.mxu0 0.0
      %8118 = vmatpush1.msra.mxu0 0.0
      %8119 = vmatprep.subr.mxu0 0.0
      %8120 = vmatpush1.msra.mxu0 0.0
      %8121 = vmatprep.subr.mxu0 0.0
      %8122 = vmatpush1.msra.mxu0 0.0
      %8123 = vmatprep.subr.mxu0 0.0
      %8124 = vmatpush1.msra.mxu0 0.0
      %8125 = vmatprep.subr.mxu0 0.0
      %8126 = vmatpush1.msra.mxu0 0.0
      %8127 = vmatprep.subr.mxu0 0.0
      %8128 = vmatpush1.msra.mxu0 0.0
      %8129 = vmatprep.subr.mxu0 0.0
      %8130 = vmatpush1.msra.mxu0 0.0
      %8131 = vmatprep.mubr.f32.mxu0 0.0
      %v8132 = vand.u32 %v7820, 4294901760
      %v8133 = vsub.f32 %v7820, %v8132
      %v8134 = vand.u32 %v8133, 4294901760
      %8135 = vmatmul.mubr.f32.gmra.mrb[0].mxu0 %v8134
      %v8136 = vpop.f32.mrb[0].mxu0
      %v8137 = vadd.f32 %v8061, %v8136
      %v8138 = vpop.f32.mrb[0].mxu0
      %v8139 = vadd.f32 %v8063, %v8138
      %8140 = vdwg.mxu0
      %v8141 = vand.u32 %v7824, 4294901760
      %v8142 = vsub.f32 %v7824, %v8141
      %v8143 = vand.u32 %v8142, 4294901760
      %8144 = vmatprep.subr.mxu0 %v8143
      %v8145 = vand.u32 %v7822, 4294901760
      %v8146 = vsub.f32 %v7822, %v8145
      %v8147 = vand.u32 %v8146, 4294901760
      %8148 = vmatpush1.msra.mxu0 %v8147
      %8149 = vmatprep.subr.mxu0 0.0
      %8150 = vmatpush1.msra.mxu0 0.0
      %8151 = vmatprep.subr.mxu0 0.0
      %8152 = vmatpush1.msra.mxu0 0.0
      %8153 = vmatprep.subr.mxu0 0.0
      %8154 = vmatpush1.msra.mxu0 0.0
      %8155 = vmatprep.subr.mxu0 0.0
      %8156 = vmatpush1.msra.mxu0 0.0
      %8157 = vmatprep.subr.mxu0 0.0
      %8158 = vmatpush1.msra.mxu0 0.0
      %8159 = vmatprep.subr.mxu0 0.0
      %8160 = vmatpush1.msra.mxu0 0.0
      %8161 = vmatprep.subr.mxu0 0.0
      %8162 = vmatpush1.msra.mxu0 0.0
      %8163 = vmatprep.subr.mxu0 0.0
      %8164 = vmatpush1.msra.mxu0 0.0
      %8165 = vmatprep.subr.mxu0 0.0
      %8166 = vmatpush1.msra.mxu0 0.0
      %8167 = vmatprep.subr.mxu0 0.0
      %8168 = vmatpush1.msra.mxu0 0.0
      %8169 = vmatprep.subr.mxu0 0.0
      %8170 = vmatpush1.msra.mxu0 0.0
      %8171 = vmatprep.subr.mxu0 0.0
      %8172 = vmatpush1.msra.mxu0 0.0
      %8173 = vmatprep.subr.mxu0 0.0
      %8174 = vmatpush1.msra.mxu0 0.0
      %8175 = vmatprep.subr.mxu0 0.0
      %8176 = vmatpush1.msra.mxu0 0.0
      %8177 = vmatprep.subr.mxu0 0.0
      %8178 = vmatpush1.msra.mxu0 0.0
      %8179 = vmatprep.subr.mxu0 0.0
      %8180 = vmatpush1.msra.mxu0 0.0
      %8181 = vmatprep.subr.mxu0 0.0
      %8182 = vmatpush1.msra.mxu0 0.0
      %8183 = vmatprep.subr.mxu0 0.0
      %8184 = vmatpush1.msra.mxu0 0.0
      %8185 = vmatprep.subr.mxu0 0.0
      %8186 = vmatpush1.msra.mxu0 0.0
      %8187 = vmatprep.subr.mxu0 0.0
      %8188 = vmatpush1.msra.mxu0 0.0
      %8189 = vmatprep.subr.mxu0 0.0
      %8190 = vmatpush1.msra.mxu0 0.0
      %8191 = vmatprep.subr.mxu0 0.0
      %8192 = vmatpush1.msra.mxu0 0.0
      %8193 = vmatprep.subr.mxu0 0.0
      %8194 = vmatpush1.msra.mxu0 0.0
      %8195 = vmatprep.subr.mxu0 0.0
      %8196 = vmatpush1.msra.mxu0 0.0
      %8197 = vmatprep.subr.mxu0 0.0
      %8198 = vmatpush1.msra.mxu0 0.0
      %8199 = vmatprep.subr.mxu0 0.0
      %8200 = vmatpush1.msra.mxu0 0.0
      %8201 = vmatprep.subr.mxu0 0.0
      %8202 = vmatpush1.msra.mxu0 0.0
      %8203 = vmatprep.subr.mxu0 0.0
      %8204 = vmatpush1.msra.mxu0 0.0
      %8205 = vmatprep.subr.mxu0 0.0
      %8206 = vmatpush1.msra.mxu0 0.0
      %8207 = vmatprep.subr.mxu0 0.0
      %8208 = vmatpush1.msra.mxu0 0.0
      %8209 = vmatprep.subr.mxu0 0.0
      %8210 = vmatpush1.msra.mxu0 0.0
      %8211 = vmatprep.mubr.f32.mxu0 0.0
      %v8212 = vand.u32 %v7820, 4294901760
      %8213 = vmatmul.mubr.f32.gmra.mrb[0].mxu0 %v8212
      %v8214 = vpop.f32.mrb[0].mxu0
      %v8215 = vadd.f32 %v8137, %v8214
      %v8216 = vpop.f32.mrb[0].mxu0
      %v8217 = vadd.f32 %v8139, %v8216
      %8218 = vdwg.mxu0
      %v8219 = vand.u32 %v7824, 4294901760
      %8220 = vmatprep.subr.mxu0 %v8219
      %v8221 = vand.u32 %v7822, 4294901760
      %8222 = vmatpush1.msra.mxu0 %v8221
      %8223 = vmatprep.subr.mxu0 0.0
      %8224 = vmatpush1.msra.mxu0 0.0
      %8225 = vmatprep.subr.mxu0 0.0
      %8226 = vmatpush1.msra.mxu0 0.0
      %8227 = vmatprep.subr.mxu0 0.0
      %8228 = vmatpush1.msra.mxu0 0.0
      %8229 = vmatprep.subr.mxu0 0.0
      %8230 = vmatpush1.msra.mxu0 0.0
      %8231 = vmatprep.subr.mxu0 0.0
      %8232 = vmatpush1.msra.mxu0 0.0
      %8233 = vmatprep.subr.mxu0 0.0
      %8234 = vmatpush1.msra.mxu0 0.0
      %8235 = vmatprep.subr.mxu0 0.0
      %8236 = vmatpush1.msra.mxu0 0.0
      %8237 = vmatprep.subr.mxu0 0.0
      %8238 = vmatpush1.msra.mxu0 0.0
      %8239 = vmatprep.subr.mxu0 0.0
      %8240 = vmatpush1.msra.mxu0 0.0
      %8241 = vmatprep.subr.mxu0 0.0
      %8242 = vmatpush1.msra.mxu0 0.0
      %8243 = vmatprep.subr.mxu0 0.0
      %8244 = vmatpush1.msra.mxu0 0.0
      %8245 = vmatprep.subr.mxu0 0.0
      %8246 = vmatpush1.msra.mxu0 0.0
      %8247 = vmatprep.subr.mxu0 0.0
      %8248 = vmatpush1.msra.mxu0 0.0
      %8249 = vmatprep.subr.mxu0 0.0
      %8250 = vmatpush1.msra.mxu0 0.0
      %8251 = vmatprep.subr.mxu0 0.0
      %8252 = vmatpush1.msra.mxu0 0.0
      %8253 = vmatprep.subr.mxu0 0.0
      %8254 = vmatpush1.msra.mxu0 0.0
      %8255 = vmatprep.subr.mxu0 0.0
      %8256 = vmatpush1.msra.mxu0 0.0
      %8257 = vmatprep.subr.mxu0 0.0
      %8258 = vmatpush1.msra.mxu0 0.0
      %8259 = vmatprep.subr.mxu0 0.0
      %8260 = vmatpush1.msra.mxu0 0.0
      %8261 = vmatprep.subr.mxu0 0.0
      %8262 = vmatpush1.msra.mxu0 0.0
      %8263 = vmatprep.subr.mxu0 0.0
      %8264 = vmatpush1.msra.mxu0 0.0
      %8265 = vmatprep.subr.mxu0 0.0
      %8266 = vmatpush1.msra.mxu0 0.0
      %8267 = vmatprep.subr.mxu0 0.0
      %8268 = vmatpush1.msra.mxu0 0.0
      %8269 = vmatprep.subr.mxu0 0.0
      %8270 = vmatpush1.msra.mxu0 0.0
      %8271 = vmatprep.subr.mxu0 0.0
      %8272 = vmatpush1.msra.mxu0 0.0
      %8273 = vmatprep.subr.mxu0 0.0
      %8274 = vmatpush1.msra.mxu0 0.0
      %8275 = vmatprep.subr.mxu0 0.0
      %8276 = vmatpush1.msra.mxu0 0.0
      %8277 = vmatprep.subr.mxu0 0.0
      %8278 = vmatpush1.msra.mxu0 0.0
      %8279 = vmatprep.subr.mxu0 0.0
      %8280 = vmatpush1.msra.mxu0 0.0
      %8281 = vmatprep.subr.mxu0 0.0
      %8282 = vmatpush1.msra.mxu0 0.0
      %8283 = vmatprep.subr.mxu0 0.0
      %8284 = vmatpush1.msra.mxu0 0.0
      %8285 = vmatprep.mubr.f32.mxu0 0.0
      %v8286 = vand.u32 %v7820, 4294901760
      %8287 = vmatmul.mubr.f32.gmra.mrb[0].mxu0 %v8286
      %v8288 = vpop.f32.mrb[0].mxu0
      %v8289 = vadd.f32 %v8215, %v8288
      %v8290 = vpop.f32.mrb[0].mxu0
      %v8291 = vadd.f32 %v8217, %v8290
      %8292 = vdwg.mxu0
      %8293 = vmatprep.subr.mxu0 0.0
      %v8294 = vand.u32 %v7826, 4294901760
      %8295 = vmatpush1.msra.mxu0 %v8294
      %8296 = vmatprep.subr.mxu0 0.0
      %8297 = vmatpush1.msra.mxu0 0.0
      %8298 = vmatprep.subr.mxu0 0.0
      %8299 = vmatpush1.msra.mxu0 0.0
      %8300 = vmatprep.subr.mxu0 0.0
      %8301 = vmatpush1.msra.mxu0 0.0
      %8302 = vmatprep.subr.mxu0 0.0
      %8303 = vmatpush1.msra.mxu0 0.0
      %8304 = vmatprep.subr.mxu0 0.0
      %8305 = vmatpush1.msra.mxu0 0.0
      %8306 = vmatprep.subr.mxu0 0.0
      %8307 = vmatpush1.msra.mxu0 0.0
      %8308 = vmatprep.subr.mxu0 0.0
      %8309 = vmatpush1.msra.mxu0 0.0
      %8310 = vmatprep.subr.mxu0 0.0
      %8311 = vmatpush1.msra.mxu0 0.0
      %8312 = vmatprep.subr.mxu0 0.0
      %8313 = vmatpush1.msra.mxu0 0.0
      %8314 = vmatprep.subr.mxu0 0.0
      %8315 = vmatpush1.msra.mxu0 0.0
      %8316 = vmatprep.subr.mxu0 0.0
      %8317 = vmatpush1.msra.mxu0 0.0
      %8318 = vmatprep.subr.mxu0 0.0
      %8319 = vmatpush1.msra.mxu0 0.0
      %8320 = vmatprep.subr.mxu0 0.0
      %8321 = vmatpush1.msra.mxu0 0.0
      %8322 = vmatprep.subr.mxu0 0.0
      %8323 = vmatpush1.msra.mxu0 0.0
      %8324 = vmatprep.subr.mxu0 0.0
      %8325 = vmatpush1.msra.mxu0 0.0
      %8326 = vmatprep.subr.mxu0 0.0
      %8327 = vmatpush1.msra.mxu0 0.0
      %8328 = vmatprep.subr.mxu0 0.0
      %8329 = vmatpush1.msra.mxu0 0.0
      %8330 = vmatprep.subr.mxu0 0.0
      %8331 = vmatpush1.msra.mxu0 0.0
      %8332 = vmatprep.subr.mxu0 0.0
      %8333 = vmatpush1.msra.mxu0 0.0
      %8334 = vmatprep.subr.mxu0 0.0
      %8335 = vmatpush1.msra.mxu0 0.0
      %8336 = vmatprep.subr.mxu0 0.0
      %8337 = vmatpush1.msra.mxu0 0.0
      %8338 = vmatprep.subr.mxu0 0.0
      %8339 = vmatpush1.msra.mxu0 0.0
      %8340 = vmatprep.subr.mxu0 0.0
      %8341 = vmatpush1.msra.mxu0 0.0
      %8342 = vmatprep.subr.mxu0 0.0
      %8343 = vmatpush1.msra.mxu0 0.0
      %8344 = vmatprep.subr.mxu0 0.0
      %8345 = vmatpush1.msra.mxu0 0.0
      %8346 = vmatprep.subr.mxu0 0.0
      %8347 = vmatpush1.msra.mxu0 0.0
      %8348 = vmatprep.subr.mxu0 0.0
      %8349 = vmatpush1.msra.mxu0 0.0
      %8350 = vmatprep.subr.mxu0 0.0
      %8351 = vmatpush1.msra.mxu0 0.0
      %8352 = vmatprep.subr.mxu0 0.0
      %8353 = vmatpush1.msra.mxu0 0.0
      %8354 = vmatprep.subr.mxu0 0.0
      %8355 = vmatpush1.msra.mxu0 0.0
      %8356 = vmatprep.subr.mxu0 0.0
      %8357 = vmatpush1.msra.mxu0 0.0
      %8358 = vmatprep.mubr.f32.mxu0 0.0
      %v8359 = vand.u32 %v7820, 4294901760
      %v8360 = vsub.f32 %v7820, %v8359
      %v8361 = vand.u32 %v8360, 4294901760
      %v8362 = vsub.f32 %v8360, %v8361
      %v8363 = vand.u32 %v8362, 4294901760
      %8364 = vmatmul.mubr.f32.gmra.mrb[0].mxu0 %v8363
      %v8365 = vpop.f32.mrb[0].mxu0
      %v8366 = vadd.f32 0.0, %v8365
      %v8367 = vpop.f32.mrb[0].mxu0
      %8368 = vdwg.mxu0
      %8369 = vmatprep.subr.mxu0 0.0
      %v8370 = vand.u32 %v7826, 4294901760
      %v8371 = vsub.f32 %v7826, %v8370
      %v8372 = vand.u32 %v8371, 4294901760
      %v8373 = vsub.f32 %v8371, %v8372
      %v8374 = vand.u32 %v8373, 4294901760
      %8375 = vmatpush1.msra.mxu0 %v8374
      %8376 = vmatprep.subr.mxu0 0.0
      %8377 = vmatpush1.msra.mxu0 0.0
      %8378 = vmatprep.subr.mxu0 0.0
      %8379 = vmatpush1.msra.mxu0 0.0
      %8380 = vmatprep.subr.mxu0 0.0
      %8381 = vmatpush1.msra.mxu0 0.0
      %8382 = vmatprep.subr.mxu0 0.0
      %8383 = vmatpush1.msra.mxu0 0.0
      %8384 = vmatprep.subr.mxu0 0.0
      %8385 = vmatpush1.msra.mxu0 0.0
      %8386 = vmatprep.subr.mxu0 0.0
      %8387 = vmatpush1.msra.mxu0 0.0
      %8388 = vmatprep.subr.mxu0 0.0
      %8389 = vmatpush1.msra.mxu0 0.0
      %8390 = vmatprep.subr.mxu0 0.0
      %8391 = vmatpush1.msra.mxu0 0.0
      %8392 = vmatprep.subr.mxu0 0.0
      %8393 = vmatpush1.msra.mxu0 0.0
      %8394 = vmatprep.subr.mxu0 0.0
      %8395 = vmatpush1.msra.mxu0 0.0
      %8396 = vmatprep.subr.mxu0 0.0
      %8397 = vmatpush1.msra.mxu0 0.0
      %8398 = vmatprep.subr.mxu0 0.0
      %8399 = vmatpush1.msra.mxu0 0.0
      %8400 = vmatprep.subr.mxu0 0.0
      %8401 = vmatpush1.msra.mxu0 0.0
      %8402 = vmatprep.subr.mxu0 0.0
      %8403 = vmatpush1.msra.mxu0 0.0
      %8404 = vmatprep.subr.mxu0 0.0
      %8405 = vmatpush1.msra.mxu0 0.0
      %8406 = vmatprep.subr.mxu0 0.0
      %8407 = vmatpush1.msra.mxu0 0.0
      %8408 = vmatprep.subr.mxu0 0.0
      %8409 = vmatpush1.msra.mxu0 0.0
      %8410 = vmatprep.subr.mxu0 0.0
      %8411 = vmatpush1.msra.mxu0 0.0
      %8412 = vmatprep.subr.mxu0 0.0
      %8413 = vmatpush1.msra.mxu0 0.0
      %8414 = vmatprep.subr.mxu0 0.0
      %8415 = vmatpush1.msra.mxu0 0.0
      %8416 = vmatprep.subr.mxu0 0.0
      %8417 = vmatpush1.msra.mxu0 0.0
      %8418 = vmatprep.subr.mxu0 0.0
      %8419 = vmatpush1.msra.mxu0 0.0
      %8420 = vmatprep.subr.mxu0 0.0
      %8421 = vmatpush1.msra.mxu0 0.0
      %8422 = vmatprep.subr.mxu0 0.0
      %8423 = vmatpush1.msra.mxu0 0.0
      %8424 = vmatprep.subr.mxu0 0.0
      %8425 = vmatpush1.msra.mxu0 0.0
      %8426 = vmatprep.subr.mxu0 0.0
      %8427 = vmatpush1.msra.mxu0 0.0
      %8428 = vmatprep.subr.mxu0 0.0
      %8429 = vmatpush1.msra.mxu0 0.0
      %8430 = vmatprep.subr.mxu0 0.0
      %8431 = vmatpush1.msra.mxu0 0.0
      %8432 = vmatprep.subr.mxu0 0.0
      %8433 = vmatpush1.msra.mxu0 0.0
      %8434 = vmatprep.subr.mxu0 0.0
      %8435 = vmatpush1.msra.mxu0 0.0
      %8436 = vmatprep.subr.mxu0 0.0
      %8437 = vmatpush1.msra.mxu0 0.0
      %8438 = vmatprep.mubr.f32.mxu0 0.0
      %v8439 = vand.u32 %v7820, 4294901760
      %8440 = vmatmul.mubr.f32.gmra.mrb[0].mxu0 %v8439
      %v8441 = vpop.f32.mrb[0].mxu0
      %v8442 = vadd.f32 %v8366, %v8441
      %v8443 = vpop.f32.mrb[0].mxu0
      %8444 = vdwg.mxu0
      %8445 = vmatprep.subr.mxu0 0.0
      %v8446 = vand.u32 %v7826, 4294901760
      %v8447 = vsub.f32 %v7826, %v8446
      %8448 = vmatpush1.msra.mxu0 %v8447
      %8449 = vmatprep.subr.mxu0 0.0
      %8450 = vmatpush1.msra.mxu0 0.0
      %8451 = vmatprep.subr.mxu0 0.0
      %8452 = vmatpush1.msra.mxu0 0.0
      %8453 = vmatprep.subr.mxu0 0.0
      %8454 = vmatpush1.msra.mxu0 0.0
      %8455 = vmatprep.subr.mxu0 0.0
      %8456 = vmatpush1.msra.mxu0 0.0
      %8457 = vmatprep.subr.mxu0 0.0
      %8458 = vmatpush1.msra.mxu0 0.0
      %8459 = vmatprep.subr.mxu0 0.0
      %8460 = vmatpush1.msra.mxu0 0.0
      %8461 = vmatprep.subr.mxu0 0.0
      %8462 = vmatpush1.msra.mxu0 0.0
      %8463 = vmatprep.subr.mxu0 0.0
      %8464 = vmatpush1.msra.mxu0 0.0
      %8465 = vmatprep.subr.mxu0 0.0
      %8466 = vmatpush1.msra.mxu0 0.0
      %8467 = vmatprep.subr.mxu0 0.0
      %8468 = vmatpush1.msra.mxu0 0.0
      %8469 = vmatprep.subr.mxu0 0.0
      %8470 = vmatpush1.msra.mxu0 0.0
      %8471 = vmatprep.subr.mxu0 0.0
      %8472 = vmatpush1.msra.mxu0 0.0
      %8473 = vmatprep.subr.mxu0 0.0
      %8474 = vmatpush1.msra.mxu0 0.0
      %8475 = vmatprep.subr.mxu0 0.0
      %8476 = vmatpush1.msra.mxu0 0.0
      %8477 = vmatprep.subr.mxu0 0.0
      %8478 = vmatpush1.msra.mxu0 0.0
      %8479 = vmatprep.subr.mxu0 0.0
      %8480 = vmatpush1.msra.mxu0 0.0
      %8481 = vmatprep.subr.mxu0 0.0
      %8482 = vmatpush1.msra.mxu0 0.0
      %8483 = vmatprep.subr.mxu0 0.0
      %8484 = vmatpush1.msra.mxu0 0.0
      %8485 = vmatprep.subr.mxu0 0.0
      %8486 = vmatpush1.msra.mxu0 0.0
      %8487 = vmatprep.subr.mxu0 0.0
      %8488 = vmatpush1.msra.mxu0 0.0
      %8489 = vmatprep.subr.mxu0 0.0
      %8490 = vmatpush1.msra.mxu0 0.0
      %8491 = vmatprep.subr.mxu0 0.0
      %8492 = vmatpush1.msra.mxu0 0.0
      %8493 = vmatprep.subr.mxu0 0.0
      %8494 = vmatpush1.msra.mxu0 0.0
      %8495 = vmatprep.subr.mxu0 0.0
      %8496 = vmatpush1.msra.mxu0 0.0
      %8497 = vmatprep.subr.mxu0 0.0
      %8498 = vmatpush1.msra.mxu0 0.0
      %8499 = vmatprep.subr.mxu0 0.0
      %8500 = vmatpush1.msra.mxu0 0.0
      %8501 = vmatprep.subr.mxu0 0.0
      %8502 = vmatpush1.msra.mxu0 0.0
      %8503 = vmatprep.subr.mxu0 0.0
      %8504 = vmatpush1.msra.mxu0 0.0
      %8505 = vmatprep.subr.mxu0 0.0
      %8506 = vmatpush1.msra.mxu0 0.0
      %8507 = vmatprep.subr.mxu0 0.0
      %8508 = vmatpush1.msra.mxu0 0.0
      %8509 = vmatprep.subr.mxu0 0.0
      %8510 = vmatpush1.msra.mxu0 0.0
      %8511 = vmatprep.mubr.f32.mxu0 0.0
      %v8512 = vand.u32 %v7820, 4294901760
      %v8513 = vsub.f32 %v7820, %v8512
      %8514 = vmatmul.mubr.f32.gmra.mrb[0].mxu0 %v8513
      %v8515 = vpop.f32.mrb[0].mxu0
      %v8516 = vadd.f32 %v8442, %v8515
      %v8517 = vpop.f32.mrb[0].mxu0
      %8518 = vdwg.mxu0
      %8519 = vmatprep.subr.mxu0 0.0
      %v8520 = vand.u32 %v7826, 4294901760
      %8521 = vmatpush1.msra.mxu0 %v8520
      %8522 = vmatprep.subr.mxu0 0.0
      %8523 = vmatpush1.msra.mxu0 0.0
      %8524 = vmatprep.subr.mxu0 0.0
      %8525 = vmatpush1.msra.mxu0 0.0
      %8526 = vmatprep.subr.mxu0 0.0
      %8527 = vmatpush1.msra.mxu0 0.0
      %8528 = vmatprep.subr.mxu0 0.0
      %8529 = vmatpush1.msra.mxu0 0.0
      %8530 = vmatprep.subr.mxu0 0.0
      %8531 = vmatpush1.msra.mxu0 0.0
      %8532 = vmatprep.subr.mxu0 0.0
      %8533 = vmatpush1.msra.mxu0 0.0
      %8534 = vmatprep.subr.mxu0 0.0
      %8535 = vmatpush1.msra.mxu0 0.0
      %8536 = vmatprep.subr.mxu0 0.0
      %8537 = vmatpush1.msra.mxu0 0.0
      %8538 = vmatprep.subr.mxu0 0.0
      %8539 = vmatpush1.msra.mxu0 0.0
      %8540 = vmatprep.subr.mxu0 0.0
      %8541 = vmatpush1.msra.mxu0 0.0
      %8542 = vmatprep.subr.mxu0 0.0
      %8543 = vmatpush1.msra.mxu0 0.0
      %8544 = vmatprep.subr.mxu0 0.0
      %8545 = vmatpush1.msra.mxu0 0.0
      %8546 = vmatprep.subr.mxu0 0.0
      %8547 = vmatpush1.msra.mxu0 0.0
      %8548 = vmatprep.subr.mxu0 0.0
      %8549 = vmatpush1.msra.mxu0 0.0
      %8550 = vmatprep.subr.mxu0 0.0
      %8551 = vmatpush1.msra.mxu0 0.0
      %8552 = vmatprep.subr.mxu0 0.0
      %8553 = vmatpush1.msra.mxu0 0.0
      %8554 = vmatprep.subr.mxu0 0.0
      %8555 = vmatpush1.msra.mxu0 0.0
      %8556 = vmatprep.subr.mxu0 0.0
      %8557 = vmatpush1.msra.mxu0 0.0
      %8558 = vmatprep.subr.mxu0 0.0
      %8559 = vmatpush1.msra.mxu0 0.0
      %8560 = vmatprep.subr.mxu0 0.0
      %8561 = vmatpush1.msra.mxu0 0.0
      %8562 = vmatprep.subr.mxu0 0.0
      %8563 = vmatpush1.msra.mxu0 0.0
      %8564 = vmatprep.subr.mxu0 0.0
      %8565 = vmatpush1.msra.mxu0 0.0
      %8566 = vmatprep.subr.mxu0 0.0
      %8567 = vmatpush1.msra.mxu0 0.0
      %8568 = vmatprep.subr.mxu0 0.0
      %8569 = vmatpush1.msra.mxu0 0.0
      %8570 = vmatprep.subr.mxu0 0.0
      %8571 = vmatpush1.msra.mxu0 0.0
      %8572 = vmatprep.subr.mxu0 0.0
      %8573 = vmatpush1.msra.mxu0 0.0
      %8574 = vmatprep.subr.mxu0 0.0
      %8575 = vmatpush1.msra.mxu0 0.0
      %8576 = vmatprep.subr.mxu0 0.0
      %8577 = vmatpush1.msra.mxu0 0.0
      %8578 = vmatprep.subr.mxu0 0.0
      %8579 = vmatpush1.msra.mxu0 0.0
      %8580 = vmatprep.subr.mxu0 0.0
      %8581 = vmatpush1.msra.mxu0 0.0
      %8582 = vmatprep.subr.mxu0 0.0
      %8583 = vmatpush1.msra.mxu0 0.0
      %8584 = vmatprep.mubr.f32.mxu0 0.0
      %v8585 = vand.u32 %v7820, 4294901760
      %v8586 = vsub.f32 %v7820, %v8585
      %v8587 = vand.u32 %v8586, 4294901760
      %8588 = vmatmul.mubr.f32.gmra.mrb[0].mxu0 %v8587
      %v8589 = vpop.f32.mrb[0].mxu0
      %v8590 = vadd.f32 %v8516, %v8589
      %v8591 = vpop.f32.mrb[0].mxu0
      %8592 = vdwg.mxu0
      %8593 = vmatprep.subr.mxu0 0.0
      %v8594 = vand.u32 %v7826, 4294901760
      %v8595 = vsub.f32 %v7826, %v8594
      %v8596 = vand.u32 %v8595, 4294901760
      %8597 = vmatpush1.msra.mxu0 %v8596
      %8598 = vmatprep.subr.mxu0 0.0
      %8599 = vmatpush1.msra.mxu0 0.0
      %8600 = vmatprep.subr.mxu0 0.0
      %8601 = vmatpush1.msra.mxu0 0.0
      %8602 = vmatprep.subr.mxu0 0.0
      %8603 = vmatpush1.msra.mxu0 0.0
      %8604 = vmatprep.subr.mxu0 0.0
      %8605 = vmatpush1.msra.mxu0 0.0
      %8606 = vmatprep.subr.mxu0 0.0
      %8607 = vmatpush1.msra.mxu0 0.0
      %8608 = vmatprep.subr.mxu0 0.0
      %8609 = vmatpush1.msra.mxu0 0.0
      %8610 = vmatprep.subr.mxu0 0.0
      %8611 = vmatpush1.msra.mxu0 0.0
      %8612 = vmatprep.subr.mxu0 0.0
      %8613 = vmatpush1.msra.mxu0 0.0
      %8614 = vmatprep.subr.mxu0 0.0
      %8615 = vmatpush1.msra.mxu0 0.0
      %8616 = vmatprep.subr.mxu0 0.0
      %8617 = vmatpush1.msra.mxu0 0.0
      %8618 = vmatprep.subr.mxu0 0.0
      %8619 = vmatpush1.msra.mxu0 0.0
      %8620 = vmatprep.subr.mxu0 0.0
      %8621 = vmatpush1.msra.mxu0 0.0
      %8622 = vmatprep.subr.mxu0 0.0
      %8623 = vmatpush1.msra.mxu0 0.0
      %8624 = vmatprep.subr.mxu0 0.0
      %8625 = vmatpush1.msra.mxu0 0.0
      %8626 = vmatprep.subr.mxu0 0.0
      %8627 = vmatpush1.msra.mxu0 0.0
      %8628 = vmatprep.subr.mxu0 0.0
      %8629 = vmatpush1.msra.mxu0 0.0
      %8630 = vmatprep.subr.mxu0 0.0
      %8631 = vmatpush1.msra.mxu0 0.0
      %8632 = vmatprep.subr.mxu0 0.0
      %8633 = vmatpush1.msra.mxu0 0.0
      %8634 = vmatprep.subr.mxu0 0.0
      %8635 = vmatpush1.msra.mxu0 0.0
      %8636 = vmatprep.subr.mxu0 0.0
      %8637 = vmatpush1.msra.mxu0 0.0
      %8638 = vmatprep.subr.mxu0 0.0
      %8639 = vmatpush1.msra.mxu0 0.0
      %8640 = vmatprep.subr.mxu0 0.0
      %8641 = vmatpush1.msra.mxu0 0.0
      %8642 = vmatprep.subr.mxu0 0.0
      %8643 = vmatpush1.msra.mxu0 0.0
      %8644 = vmatprep.subr.mxu0 0.0
      %8645 = vmatpush1.msra.mxu0 0.0
      %8646 = vmatprep.subr.mxu0 0.0
      %8647 = vmatpush1.msra.mxu0 0.0
      %8648 = vmatprep.subr.mxu0 0.0
      %8649 = vmatpush1.msra.mxu0 0.0
      %8650 = vmatprep.subr.mxu0 0.0
      %8651 = vmatpush1.msra.mxu0 0.0
      %8652 = vmatprep.subr.mxu0 0.0
      %8653 = vmatpush1.msra.mxu0 0.0
      %8654 = vmatprep.subr.mxu0 0.0
      %8655 = vmatpush1.msra.mxu0 0.0
      %8656 = vmatprep.subr.mxu0 0.0
      %8657 = vmatpush1.msra.mxu0 0.0
      %8658 = vmatprep.subr.mxu0 0.0
      %8659 = vmatpush1.msra.mxu0 0.0
      %8660 = vmatprep.mubr.f32.mxu0 0.0
      %v8661 = vand.u32 %v7820, 4294901760
      %8662 = vmatmul.mubr.f32.gmra.mrb[0].mxu0 %v8661
      %v8663 = vpop.f32.mrb[0].mxu0
      %v8664 = vadd.f32 %v8590, %v8663
      %v8665 = vpop.f32.mrb[0].mxu0
      %8666 = vdwg.mxu0
      %8667 = vmatprep.subr.mxu0 0.0
      %v8668 = vand.u32 %v7826, 4294901760
      %8669 = vmatpush1.msra.mxu0 %v8668
      %8670 = vmatprep.subr.mxu0 0.0
      %8671 = vmatpush1.msra.mxu0 0.0
      %8672 = vmatprep.subr.mxu0 0.0
      %8673 = vmatpush1.msra.mxu0 0.0
      %8674 = vmatprep.subr.mxu0 0.0
      %8675 = vmatpush1.msra.mxu0 0.0
      %8676 = vmatprep.subr.mxu0 0.0
      %8677 = vmatpush1.msra.mxu0 0.0
      %8678 = vmatprep.subr.mxu0 0.0
      %8679 = vmatpush1.msra.mxu0 0.0
      %8680 = vmatprep.subr.mxu0 0.0
      %8681 = vmatpush1.msra.mxu0 0.0
      %8682 = vmatprep.subr.mxu0 0.0
      %8683 = vmatpush1.msra.mxu0 0.0
      %8684 = vmatprep.subr.mxu0 0.0
      %8685 = vmatpush1.msra.mxu0 0.0
      %8686 = vmatprep.subr.mxu0 0.0
      %8687 = vmatpush1.msra.mxu0 0.0
      %8688 = vmatprep.subr.mxu0 0.0
      %8689 = vmatpush1.msra.mxu0 0.0
      %8690 = vmatprep.subr.mxu0 0.0
      %8691 = vmatpush1.msra.mxu0 0.0
      %8692 = vmatprep.subr.mxu0 0.0
      %8693 = vmatpush1.msra.mxu0 0.0
      %8694 = vmatprep.subr.mxu0 0.0
      %8695 = vmatpush1.msra.mxu0 0.0
      %8696 = vmatprep.subr.mxu0 0.0
      %8697 = vmatpush1.msra.mxu0 0.0
      %8698 = vmatprep.subr.mxu0 0.0
      %8699 = vmatpush1.msra.mxu0 0.0
      %8700 = vmatprep.subr.mxu0 0.0
      %8701 = vmatpush1.msra.mxu0 0.0
      %8702 = vmatprep.subr.mxu0 0.0
      %8703 = vmatpush1.msra.mxu0 0.0
      %8704 = vmatprep.subr.mxu0 0.0
      %8705 = vmatpush1.msra.mxu0 0.0
      %8706 = vmatprep.subr.mxu0 0.0
      %8707 = vmatpush1.msra.mxu0 0.0
      %8708 = vmatprep.subr.mxu0 0.0
      %8709 = vmatpush1.msra.mxu0 0.0
      %8710 = vmatprep.subr.mxu0 0.0
      %8711 = vmatpush1.msra.mxu0 0.0
      %8712 = vmatprep.subr.mxu0 0.0
      %8713 = vmatpush1.msra.mxu0 0.0
      %8714 = vmatprep.subr.mxu0 0.0
      %8715 = vmatpush1.msra.mxu0 0.0
      %8716 = vmatprep.subr.mxu0 0.0
      %8717 = vmatpush1.msra.mxu0 0.0
      %8718 = vmatprep.subr.mxu0 0.0
      %8719 = vmatpush1.msra.mxu0 0.0
      %8720 = vmatprep.subr.mxu0 0.0
      %8721 = vmatpush1.msra.mxu0 0.0
      %8722 = vmatprep.subr.mxu0 0.0
      %8723 = vmatpush1.msra.mxu0 0.0
      %8724 = vmatprep.subr.mxu0 0.0
      %8725 = vmatpush1.msra.mxu0 0.0
      %8726 = vmatprep.subr.mxu0 0.0
      %8727 = vmatpush1.msra.mxu0 0.0
      %8728 = vmatprep.subr.mxu0 0.0
      %8729 = vmatpush1.msra.mxu0 0.0
      %8730 = vmatprep.subr.mxu0 0.0
      %8731 = vmatpush1.msra.mxu0 0.0
      %8732 = vmatprep.mubr.f32.mxu0 0.0
      %v8733 = vand.u32 %v7820, 4294901760
      %8734 = vmatmul.mubr.f32.gmra.mrb[0].mxu0 %v8733
      %v8735 = vpop.f32.mrb[0].mxu0
      %v8736 = vadd.f32 %v8664, %v8735
      %v8737 = vpop.f32.mrb[0].mxu0
      %8738 = vdwg.mxu0
      %v8739 = vadd.f32 %v7796, %v8289
      %v8740 = vadd.f32 %v7797, %v8291
      %v8741 = vadd.f32 %v7798, %v8736
      %v8742 = vld [vmem:[%s2] sm:$0xff]
      %8744 = vset.pattern.permute.xlu0 0
      %8745 = vperm.xlu0 %8744, %v8742
      %v8746 = vpop.permute.xlu0 %8745
      %v8748 = vadd.f32 %v8739, %v8746
      %v8749 = vadd.f32 %v8740, %v8746
      %v8750 = vadd.f32 %v8741, %v8746
      %v8751 = vmax.f32 %v8748, 0.0
      %v8752 = vmax.f32 %v8749, 0.0
      %v8753 = vmax.f32 %v8750, 0.0
      %8754 = vst [vmem:[%s264] sm:$0xff] %v8751
      %8755 = vst [vmem:[%s264 + $0x8] sm:$0xff] %v8752
      %8756 = vst [vmem:[%s264 + $0x10] sm:$0xff] %v8753
      %v8757 = vld [vmem:[%s3] sm:$0x7]
      %v8759 = vlaneseq
      %v8760 = vshrl.u32 %v8759, 7
      %v8761 = vsub.s32 0, %v8760
      %v8762 = vrot.slane %v8757, %v8761
      %v8763 = vlaneseq
      %v8764 = vshrl.u32 %v8763, 7
      %v8765 = vsub.s32 1, %v8764
      %v8766 = vrot.slane %v8757, %v8765
      %v8767 = vlaneseq
      %v8768 = vshrl.u32 %v8767, 7
      %v8769 = vsub.s32 2, %v8768
      %v8770 = vrot.slane %v8757, %v8769
      %v8774 = vmul.f32 %v8751, %v8762
      %v8775 = vmul.f32 %v8752, %v8766
      %v8776 = vmul.f32 %v8753, %v8770
      %v8777 = vadd.f32 %v8774, %v8775
      %v8778 = vadd.f32 %v8777, %v8776
      %8779 = vadd.xlane.f32.xlu0 %v8778
      %v8780 = vpop.xlane.xlu0 %8779
      %v8781 = vmul.f32 %v8780, 0.00390625
      %v8782 = vsub.f32 %v8751, %v8781
      %v8783 = vsub.f32 %v8752, %v8781
      %v8784 = vsub.f32 %v8753, %v8781
      %v8785 = vmul.f32 %v8782, %v8762
      %v8786 = vmul.f32 %v8783, %v8766
      %v8787 = vmul.f32 %v8784, %v8770
      %vm8788 = vcmask 7168
      %8789 = vst.msk [vmem:[%s268] sm:$0xff] %vm8788, %v8781
      %v8790 = vmul.f32 %v8785, %v8785
      %v8791 = vmul.f32 %v8786, %v8786
      %v8792 = vmul.f32 %v8787, %v8787
      %v8793 = vadd.f32 %v8790, %v8791
      %v8794 = vadd.f32 %v8793, %v8792
      %8795 = vadd.xlane.f32.xlu0 %v8794
      %v8796 = vpop.xlane.xlu0 %8795
      %8797 = vst.msk [vmem:[%s272] sm:$0xff] %vm8788, %v8796
      %p8798 = scmp.lt.s32.totalorder %s18, 1
      %s8799 = scalar_select %p8798, %s18, 1
      %s8800 = smul.addr %s8799, 3
      %s8801 = smul.addr %s8800, 8
      %s8802 = scalar_lea.vmem %s4, %s8801
      %p8803 = scmp.lt.s32.totalorder %s18, 1
      %s8804 = scalar_select %p8803, %s18, 1
      %s8805 = smul.addr %s8804, 8
      %s8806 = scalar_lea.vmem %s5, %s8805
      %p8807 = scmp.lt.s32.totalorder %s18, 1
      %s8808 = scalar_select %p8807, %s18, 1
      %s8809 = smul.addr %s8808, 8
      %s8810 = scalar_lea.vmem %s6, %s8809
      // Predicated region
      $region37: #{_farkas_conv_fwd.2} parent=35 // pred_check
        %p8811 = pneg %p125
      $region38: #{_farkas_conv_fwd.2} parent=35 // pred_check_branch
        %8813 = sbr.rel (%p8811) target = $region40
      $region39: #{_farkas_conv_fwd.2} parent=35 // pred_region
        _
      $region40: #{_farkas_conv_fwd.2} parent=35 // pred_fallthru
        _
      // Predicated region
      $region41: #{_farkas_conv_fwd.2} parent=35 // pred_check
        %p8814 = pneg %p151
      $region42: #{_farkas_conv_fwd.2} parent=35 // pred_check_branch
        %8816 = sbr.rel (%p8814) target = $region44
      $region43: #{_farkas_conv_fwd.2} parent=35 // pred_region
        _
      $region44: #{_farkas_conv_fwd.2} parent=35 // pred_fallthru
        _
      // Predicated region
      $region45: #{_farkas_conv_fwd.2} parent=35 // pred_check
        %p8817 = pneg %p177
      $region46: #{_farkas_conv_fwd.2} parent=35 // pred_check_branch
        %8819 = sbr.rel (%p8817) target = $region48
      $region47: #{_farkas_conv_fwd.2} parent=35 // pred_region
        _
      $region48: #{_farkas_conv_fwd.2} parent=35 // pred_fallthru
        _
    $region36: #{_farkas_conv_fwd.2} parent=5 // pred_fallthru
      _
    %p8820 = scmp.le.s32.totalorder 2, %s13
    // Predicated region
    $region49: #{_farkas_conv_fwd.2} parent=5 // pred_check
      %p8821 = pneg %p8820
    $region50: #{_farkas_conv_fwd.2} parent=5 // pred_check_branch
      %8823 = sbr.rel (%p8821) target = $region52
    $region51: #{_farkas_conv_fwd.2} parent=5 // pred_region
      %s8824 = ssub.s32 %s13, 2
      // Predicated region
      $region53: #{_farkas_conv_fwd.2} parent=51 // pred_check
        %p8825 = pneg %p131
      $region54: #{_farkas_conv_fwd.2} parent=51 // pred_check_branch
        %8827 = sbr.rel (%p8825) target = $region56
      $region55: #{_farkas_conv_fwd.2} parent=51 // pred_region
        %p8828 = scmp.lt.s32.totalorder %s19, 1
        %s8829 = scalar_select %p8828, %s19, 1
        %s8830 = smul.addr %s8829, 3
        %s8831 = smul.addr %s8830, 8
        %s8832 = scalar_lea.vmem %s4, %s8831
      $region56: #{_farkas_conv_fwd.2} parent=51 // pred_fallthru
        _
      // Predicated region
      $region57: #{_farkas_conv_fwd.2} parent=51 // pred_check
        %p8833 = pneg %p157
      $region58: #{_farkas_conv_fwd.2} parent=51 // pred_check_branch
        %8835 = sbr.rel (%p8833) target = $region60
      $region59: #{_farkas_conv_fwd.2} parent=51 // pred_region
        %p8836 = scmp.lt.s32.totalorder %s19, 1
        %s8837 = scalar_select %p8836, %s19, 1
        %s8838 = smul.addr %s8837, 8
        %s8839 = scalar_lea.vmem %s5, %s8838
      $region60: #{_farkas_conv_fwd.2} parent=51 // pred_fallthru
        _
      // Predicated region
      $region61: #{_farkas_conv_fwd.2} parent=51 // pred_check
        %p8840 = pneg %p183
      $region62: #{_farkas_conv_fwd.2} parent=51 // pred_check_branch
        %8842 = sbr.rel (%p8840) target = $region64
      $region63: #{_farkas_conv_fwd.2} parent=51 // pred_region
        %p8843 = scmp.lt.s32.totalorder %s19, 1
        %s8844 = scalar_select %p8843, %s19, 1
        %s8845 = smul.addr %s8844, 8
        %s8846 = scalar_lea.vmem %s6, %s8845
      $region64: #{_farkas_conv_fwd.2} parent=51 // pred_fallthru
        _
    $region52: #{_farkas_conv_fwd.2} parent=5 // pred_fallthru
      _
  $region6: #{_farkas_conv_fwd.2} parent=0 // loop_footer
    %s17 = sadd.s32 1, %s13
  $region7: #{_farkas_conv_fwd.2} parent=0 // loop_footer_branch
    %12 = sbr.rel target = $region3
  $region8: #{_farkas_conv_fwd.2} parent=0 // loop_exit
    _

</llo_original>
